<compile_context>
chip_gen: v5e
topology: v5e:2x2
jax: 0.10.0
libtpu: 0.0.40
codegen_flags: <defaults>
</compile_context>

<pallas_src>
import functools

import jax
import jax.numpy as jnp
from jax.experimental import pallas as pl
from jax.experimental.pallas import tpu as pltpu

BASE = 32


def _round_up(x, m):
    return (x + m - 1) // m * m


def _pick_tile(dim, cap=512):
    """Largest tile <= cap dividing dim that still leaves >=2 grid blocks
    (so both v7x TensorCores get work); falls back to the full extent."""
    for t in (512, 256, 128, 64, 32, 16):
        if t <= cap and t <= dim // 2 and dim % t == 0:
            return t
    return dim


# ---------------------------------------------------------------------------
# Kernel 1: single-K-block matmul with fused bias + activation epilogue.
# No accumulator scratch, no K grid axis: o = act(a @ b + bias).
# ---------------------------------------------------------------------------
def _mm_act_kernel(a_ref, b_ref, bias_ref, o_ref, *, act):
    r = jnp.dot(a_ref[...], b_ref[...], preferred_element_type=jnp.float32)
    r = r + bias_ref[...]                                   # f32 epilogue
    if act == "elu":
        r = jnp.where(r > 0.0, r, jnp.exp(jnp.minimum(r, 0.0)) - 1.0)
    elif act == "sigmoid":
        r = pl.reciprocal(1.0 + jnp.exp(-r), approx=True)   # EUP exp + rcp
    o_ref[...] = r.astype(o_ref.dtype)


def matmul_bias_act(a, b, bias, *, act, out_dtype=jnp.bfloat16):
    """act(a @ b + bias).  a:(M,K), b:(K,N) bf16 weights, bias:(N,) f32.
    Single full-extent K block; 2-D (M, N) parallel grid."""
    M, K = a.shape
    K2, N = b.shape
    assert K2 == K and bias.shape == (N,)

    a = a.astype(jnp.bfloat16)
    b = b.astype(jnp.bfloat16)
    bias2d = bias.astype(jnp.float32).reshape(1, N)

    Mp = _round_up(M, 16)
    if Mp != M:
        a = jnp.pad(a, ((0, Mp - M), (0, 0)))

    tm = _pick_tile(Mp) if Mp > 16 else Mp
    # N is either the real (small) channel count -> one full-extent block, or a
    # multiple of 128 -> lane-dense tiles.
    tn = N if N < 256 else 128
    grid = (Mp // tm, N // tn)

    out = pl.pallas_call(
        functools.partial(_mm_act_kernel, act=act),
        out_shape=jax.ShapeDtypeStruct((Mp, N), out_dtype),
        grid_spec=pltpu.PrefetchScalarGridSpec(
            num_scalar_prefetch=0,
            grid=grid,
            in_specs=[
                pl.BlockSpec((tm, K), lambda i, j: (i, 0)),
                pl.BlockSpec((K, tn), lambda i, j: (0, j)),
                pl.BlockSpec((1, tn), lambda i, j: (0, j)),
            ],
            out_specs=pl.BlockSpec((tm, tn), lambda i, j: (i, j)),
        ),
        compiler_params=pltpu.CompilerParams(
            dimension_semantics=("parallel", "parallel"),
        ),
    )(a, b, bias2d)

    if Mp != M:
        out = out[:M]
    return out


# ---------------------------------------------------------------------------
# Kernel 2: fused conv4 (3x3,s2,p1 + BN + ELU) + conv5 (4x4 valid + sigmoid).
# One grid step per batch element; conv4's activation never leaves VMEM.
# ---------------------------------------------------------------------------
def _conv45_kernel(a_ref, b4_ref, bias4_ref, w5_ref, bias5_ref, o_ref, *, taps):
    # conv4: (taps, K4) @ (K4, C4) + bias -> ELU   (f32)
    y = jnp.dot(a_ref[0], b4_ref[...], preferred_element_type=jnp.float32)
    y = y + bias4_ref[...]
    y = jnp.where(y > 0.0, y, jnp.exp(jnp.minimum(y, 0.0)) - 1.0)   # (taps, C4)

    # conv5: 4x4 valid conv over exactly the 4x4 conv4 output == FC over the
    # `taps` spatial positions, accumulated with small per-tap MXU dots while
    # y is still resident.
    acc = bias5_ref[...]                                            # (1, C5) f32
    for p in range(taps):
        acc = acc + jnp.dot(y[p:p + 1, :].astype(jnp.bfloat16), w5_ref[p],
                            preferred_element_type=jnp.float32)
    o_ref[0] = pl.reciprocal(1.0 + jnp.exp(-acc), approx=True).astype(o_ref.dtype)


def conv45_fused(x, layer4, layer5):
    """x: conv3 output (N, 8, 8, 128) bf16.  Returns (N, C5pad) f32."""
    w4, b4 = layer4                     # (1152, 256) bf16, (256,) f32
    w5, b5 = layer5                     # (16, 256, 128) bf16, (128,) f32
    N = x.shape[0]
    patches, Ho, Wo = _im2col(x, 3, 2, 1)          # (N*16, 1152), Ho = Wo = 4
    taps = Ho * Wo
    K4 = patches.shape[1]
    C4 = w4.shape[1]
    C5 = w5.shape[2]
    a = patches.reshape(N, taps, K4)

    out = pl.pallas_call(
        functools.partial(_conv45_kernel, taps=taps),
        out_shape=jax.ShapeDtypeStruct((N, 1, C5), jnp.float32),
        grid_spec=pltpu.PrefetchScalarGridSpec(
            num_scalar_prefetch=0,
            grid=(N,),
            in_specs=[
                pl.BlockSpec((1, taps, K4), lambda n: (n, 0, 0)),
                pl.BlockSpec((K4, C4), lambda n: (0, 0)),
                pl.BlockSpec((1, C4), lambda n: (0, 0)),
                pl.BlockSpec((taps, C4, C5), lambda n: (0, 0, 0)),
                pl.BlockSpec((1, C5), lambda n: (0, 0)),
            ],
            out_specs=pl.BlockSpec((1, 1, C5), lambda n: (n, 0, 0)),
        ),
        compiler_params=pltpu.CompilerParams(
            dimension_semantics=("parallel",),
        ),
    )(a, w4, b4.reshape(1, C4), w5, b5.reshape(1, C5))
    return out.reshape(N, C5)


# ---------------------------------------------------------------------------
# im2col glue (bf16, real channel counts, no padding needed for these shapes)
# ---------------------------------------------------------------------------
def _im2col(x, k, stride, pad):
    N, H, W, C = x.shape
    Ho = (H + 2 * pad - k) // stride + 1
    Wo = (W + 2 * pad - k) // stride + 1
    if pad:
        x = jnp.pad(x, ((0, 0), (pad, pad), (pad, pad), (0, 0)))
    cols = [x[:, dy:dy + stride * (Ho - 1) + 1:stride,
              dx:dx + stride * (Wo - 1) + 1:stride, :]
            for dy in range(k) for dx in range(k)]
    patches = jnp.concatenate(cols, axis=-1).reshape(N * Ho * Wo, k * k * C)
    return patches, Ho, Wo


def conv_bn_elu(x, layer, k, stride, pad):
    wm, bm = layer                      # (k*k*Cin, Cout) bf16, (Cout,) f32
    N = x.shape[0]
    patches, Ho, Wo = _im2col(x, k, stride, pad)
    out = matmul_bias_act(patches, wm, bm, act="elu", out_dtype=jnp.bfloat16)
    return out.reshape(N, Ho, Wo, wm.shape[1])


# ---------------------------------------------------------------------------
# Parameters: raw (PyTorch-layout) init + one-time hoisted preparation
# ---------------------------------------------------------------------------
def init_raw_params(key, channels):
    keys = iter(jax.random.split(key, 32))

    def conv(cout, cin, k):
        w = jax.random.normal(next(keys), (cout, cin, k, k),
                              jnp.float32) / jnp.sqrt(cin * k * k)
        b = 0.01 * jax.random.normal(next(keys), (cout,), jnp.float32)
        return w, b

    def bn(c):
        gamma = 1.0 + 0.1 * jax.random.normal(next(keys), (c,), jnp.float32)
        beta = 0.01 * jax.random.normal(next(keys), (c,), jnp.float32)
        mean = 0.01 * jax.random.normal(next(keys), (c,), jnp.float32)
        var = 1.0 + 0.1 * jax.random.uniform(next(keys), (c,), jnp.float32)
        return (gamma, beta, mean, var, 1e-5)

    raw = {}
    w, b = conv(BASE, channels, 5);      raw["conv1"] = (w, b, bn(BASE))
    w, b = conv(2 * BASE, BASE, 3);      raw["conv2"] = (w, b, bn(2 * BASE))
    w, b = conv(4 * BASE, 2 * BASE, 3);  raw["conv3"] = (w, b, bn(4 * BASE))
    w, b = conv(8 * BASE, 4 * BASE, 3);  raw["conv4"] = (w, b, bn(8 * BASE))
    w, b = conv(1, 8 * BASE, 4);         raw["conv5"] = (w, b, None)
    return raw


def prepare_params(raw):
    """Fold eval-mode BN, reshape to im2col layout ((dy,dx,cin) row order),
    cast to bf16.  Real channel counts everywhere; only conv5's single output
    channel is zero-padded to 128 lanes.  Runs ONCE, outside the forward."""
    prep = {}
    for name, (w, b, bn) in raw.items():
        cout, cin, kh, kw = w.shape
        if bn is not None:
            gamma, beta, mean, var, eps = bn
            scale = gamma / jnp.sqrt(var + eps)
            shift = beta - mean * scale
            w = w * scale[:, None, None, None]
            b = b * scale + shift
        if name == "conv5":
            c5 = 128                                   # lane-dense padded Cout
            w5 = jnp.transpose(w, (2, 3, 1, 0)).reshape(kh * kw, cin, cout)
            w5 = jnp.pad(w5, ((0, 0), (0, 0), (0, c5 - cout)))
            b5 = jnp.pad(b, ((0, c5 - cout),))
            prep[name] = (w5.astype(jnp.bfloat16), b5.astype(jnp.float32))
        else:
            wm = jnp.transpose(w, (2, 3, 1, 0)).reshape(kh * kw * cin, cout)
            prep[name] = (wm.astype(jnp.bfloat16), b.astype(jnp.float32))
    return prep


# ---------------------------------------------------------------------------
# Forward pass
# ---------------------------------------------------------------------------
def lapgan_discriminator_level3(prep, x):
    """x: (N, channels, 32, 32) float32, NCHW as in the PyTorch module."""
    n = x.shape[0]
    h = jnp.transpose(x.astype(jnp.bfloat16), (0, 2, 3, 1))       # NHWC bf16
    h = conv_bn_elu(h, prep["conv1"], 5, 1, 2)                    # (N,32,32, 32)
    h = conv_bn_elu(h, prep["conv2"], 3, 2, 1)                    # (N,16,16, 64)
    h = conv_bn_elu(h, prep["conv3"], 3, 2, 1)                    # (N, 8, 8,128)
    out = conv45_fused(h, prep["conv4"], prep["conv5"])           # (N, 128) f32
    # take the single real output channel, then view(-1, 1)
    return out[:, :1].reshape(n, 1)


# ---------------------------------------------------------------------------
if __name__ == "__main__":
    channels = 3
    batch = 2

    key = jax.random.PRNGKey(0)
    kx, kp = jax.random.split(key)
    x = jax.random.normal(kx, (batch, channels, 32, 32), jnp.float32)

    raw = init_raw_params(kp, channels)
    prep = prepare_params(raw)             # hoisted: weight prep happens once

    fwd = jax.jit(lapgan_discriminator_level3)
    out = jax.block_until_ready(fwd(prep, x))

    assert out.shape == (batch, 1), out.shape
    assert bool(jnp.all(jnp.isfinite(out)))
    # approx reciprocal in the sigmoid may overshoot [0,1] by ~1e-3
    assert bool(jnp.all((out >= -1e-2) & (out <= 1.0 + 1e-2)))
    print("KERNEL_OK")
</pallas_src>

<mosaic_0001>
module attributes {stable_mosaic.version = 11 : i64} {
  func.func @_mm_act_kernel(%arg0: i32, %arg1: i32, %arg2: memref<512x75xbf16, #tpu.memory_space<vmem>>, %arg3: memref<75x32xbf16, #tpu.memory_space<vmem>>, %arg4: memref<1x32xf32, #tpu.memory_space<vmem>>, %arg5: memref<512x32xbf16, #tpu.memory_space<vmem>>) attributes {dimension_semantics = [#tpu.dimension_semantics<parallel>, #tpu.dimension_semantics<parallel>], iteration_bounds = array<i64: 4, 1>, scalar_prefetch = 0 : i64, scratch_operands = 0 : i64, tpu.core_type = #tpu.core_type<tc>, window_params = [{transform_indices = @transform_0, window_bounds = array<i64: 512, 75>}, {transform_indices = @transform_1, window_bounds = array<i64: 75, 32>}, {transform_indices = @transform_2, window_bounds = array<i64: 1, 32>}, {transform_indices = @transform_3, window_bounds = array<i64: 512, 32>}]} {
    %c0 = arith.constant 0 : index
    %c0_0 = arith.constant 0 : index
    %0 = vector.load %arg2[%c0, %c0_0] : memref<512x75xbf16, #tpu.memory_space<vmem>>, vector<512x75xbf16>
    %c0_1 = arith.constant 0 : index
    %c0_2 = arith.constant 0 : index
    %1 = vector.load %arg3[%c0_1, %c0_2] : memref<75x32xbf16, #tpu.memory_space<vmem>>, vector<75x32xbf16>
    %cst = arith.constant dense<0.000000e+00> : vector<512x32xf32>
    %2 = tpu.matmul %0, %1, %cst {dimension_numbers = #tpu.dot_dimension_numbers<[1], [0], [0], [1], [0, 0, 1, 1], [], []>} : vector<512x75xbf16>, vector<75x32xbf16>, vector<512x32xf32> -> vector<512x32xf32>
    %c0_3 = arith.constant 0 : index
    %c0_4 = arith.constant 0 : index
    %3 = vector.load %arg4[%c0_3, %c0_4] : memref<1x32xf32, #tpu.memory_space<vmem>>, vector<1x32xf32>
    %4 = vector.broadcast %3 : vector<1x32xf32> to vector<512x32xf32>
    %5 = arith.addf %2, %4 : vector<512x32xf32>
    %cst_5 = arith.constant 0.000000e+00 : f32
    %6 = vector.broadcast %cst_5 : f32 to vector<512x32xf32>
    %7 = arith.cmpf ogt, %5, %6 : vector<512x32xf32>
    %cst_6 = arith.constant 0.000000e+00 : f32
    %8 = vector.broadcast %cst_6 : f32 to vector<512x32xf32>
    %9 = arith.minimumf %5, %8 : vector<512x32xf32>
    %10 = math.exp %9 : vector<512x32xf32>
    %cst_7 = arith.constant 1.000000e+00 : f32
    %11 = vector.broadcast %cst_7 : f32 to vector<512x32xf32>
    %12 = arith.subf %10, %11 : vector<512x32xf32>
    %13 = arith.select %7, %5, %12 : vector<512x32xi1>, vector<512x32xf32>
    %14 = arith.truncf %13 : vector<512x32xf32> to vector<512x32xbf16>
    %c0_8 = arith.constant 0 : index
    %c0_9 = arith.constant 0 : index
    %15 = vector.load %arg5[%c0_8, %c0_9] : memref<512x32xbf16, #tpu.memory_space<vmem>>, vector<512x32xbf16>
    tpu.vector_store %arg5[%c0_8, %c0_9], %14 {strides = array<i32>} : memref<512x32xbf16, #tpu.memory_space<vmem>>, vector<512x32xbf16>,
    return
  }
  func.func @transform_0(%arg0: i32, %arg1: i32) -> (i32, i32) {
    %c0_i32 = arith.constant 0 : i32
    %c0_i32_0 = arith.constant 0 : i32
    return %arg0, %c0_i32 : i32, i32
  }
  func.func @transform_1(%arg0: i32, %arg1: i32) -> (i32, i32) {
    %c0_i32 = arith.constant 0 : i32
    %c0_i32_0 = arith.constant 0 : i32
    return %c0_i32, %arg1 : i32, i32
  }
  func.func @transform_2(%arg0: i32, %arg1: i32) -> (i32, i32) {
    %c0_i32 = arith.constant 0 : i32
    %c0_i32_0 = arith.constant 0 : i32
    return %c0_i32, %arg1 : i32, i32
  }
  func.func @transform_3(%arg0: i32, %arg1: i32) -> (i32, i32) {
    %c0_i32 = arith.constant 0 : i32
    return %arg0, %arg1 : i32, i32
  }
}

module attributes {stable_mosaic.version = 11 : i64} {
  func.func @_mm_act_kernel(%arg0: i32, %arg1: i32, %arg2: memref<256x288xbf16, #tpu.memory_space<vmem>>, %arg3: memref<288x64xbf16, #tpu.memory_space<vmem>>, %arg4: memref<1x64xf32, #tpu.memory_space<vmem>>, %arg5: memref<256x64xbf16, #tpu.memory_space<vmem>>) attributes {dimension_semantics = [#tpu.dimension_semantics<parallel>, #tpu.dimension_semantics<parallel>], iteration_bounds = array<i64: 2, 1>, scalar_prefetch = 0 : i64, scratch_operands = 0 : i64, tpu.core_type = #tpu.core_type<tc>, window_params = [{transform_indices = @transform_0, window_bounds = array<i64: 256, 288>}, {transform_indices = @transform_1, window_bounds = array<i64: 288, 64>}, {transform_indices = @transform_2, window_bounds = array<i64: 1, 64>}, {transform_indices = @transform_3, window_bounds = array<i64: 256, 64>}]} {
    %c0 = arith.constant 0 : index
    %c0_0 = arith.constant 0 : index
    %0 = vector.load %arg2[%c0, %c0_0] : memref<256x288xbf16, #tpu.memory_space<vmem>>, vector<256x288xbf16>
    %c0_1 = arith.constant 0 : index
    %c0_2 = arith.constant 0 : index
    %1 = vector.load %arg3[%c0_1, %c0_2] : memref<288x64xbf16, #tpu.memory_space<vmem>>, vector<288x64xbf16>
    %cst = arith.constant dense<0.000000e+00> : vector<256x64xf32>
    %2 = tpu.matmul %0, %1, %cst {dimension_numbers = #tpu.dot_dimension_numbers<[1], [0], [0], [1], [0, 0, 1, 1], [], []>} : vector<256x288xbf16>, vector<288x64xbf16>, vector<256x64xf32> -> vector<256x64xf32>
    %c0_3 = arith.constant 0 : index
    %c0_4 = arith.constant 0 : index
    %3 = vector.load %arg4[%c0_3, %c0_4] : memref<1x64xf32, #tpu.memory_space<vmem>>, vector<1x64xf32>
    %4 = vector.broadcast %3 : vector<1x64xf32> to vector<256x64xf32>
    %5 = arith.addf %2, %4 : vector<256x64xf32>
    %cst_5 = arith.constant 0.000000e+00 : f32
    %6 = vector.broadcast %cst_5 : f32 to vector<256x64xf32>
    %7 = arith.cmpf ogt, %5, %6 : vector<256x64xf32>
    %cst_6 = arith.constant 0.000000e+00 : f32
    %8 = vector.broadcast %cst_6 : f32 to vector<256x64xf32>
    %9 = arith.minimumf %5, %8 : vector<256x64xf32>
    %10 = math.exp %9 : vector<256x64xf32>
    %cst_7 = arith.constant 1.000000e+00 : f32
    %11 = vector.broadcast %cst_7 : f32 to vector<256x64xf32>
    %12 = arith.subf %10, %11 : vector<256x64xf32>
    %13 = arith.select %7, %5, %12 : vector<256x64xi1>, vector<256x64xf32>
    %14 = arith.truncf %13 : vector<256x64xf32> to vector<256x64xbf16>
    %c0_8 = arith.constant 0 : index
    %c0_9 = arith.constant 0 : index
    %15 = vector.load %arg5[%c0_8, %c0_9] : memref<256x64xbf16, #tpu.memory_space<vmem>>, vector<256x64xbf16>
    tpu.vector_store %arg5[%c0_8, %c0_9], %14 {strides = array<i32>} : memref<256x64xbf16, #tpu.memory_space<vmem>>, vector<256x64xbf16>,
    return
  }
  func.func @transform_0(%arg0: i32, %arg1: i32) -> (i32, i32) {
    %c0_i32 = arith.constant 0 : i32
    %c0_i32_0 = arith.constant 0 : i32
    return %arg0, %c0_i32 : i32, i32
  }
  func.func @transform_1(%arg0: i32, %arg1: i32) -> (i32, i32) {
    %c0_i32 = arith.constant 0 : i32
    %c0_i32_0 = arith.constant 0 : i32
    return %c0_i32, %arg1 : i32, i32
  }
  func.func @transform_2(%arg0: i32, %arg1: i32) -> (i32, i32) {
    %c0_i32 = arith.constant 0 : i32
    %c0_i32_0 = arith.constant 0 : i32
    return %c0_i32, %arg1 : i32, i32
  }
  func.func @transform_3(%arg0: i32, %arg1: i32) -> (i32, i32) {
    %c0_i32 = arith.constant 0 : i32
    return %arg0, %arg1 : i32, i32
  }
}

module attributes {stable_mosaic.version = 11 : i64} {
  func.func @_mm_act_kernel(%arg0: i32, %arg1: i32, %arg2: memref<64x576xbf16, #tpu.memory_space<vmem>>, %arg3: memref<576x128xbf16, #tpu.memory_space<vmem>>, %arg4: memref<1x128xf32, #tpu.memory_space<vmem>>, %arg5: memref<64x128xbf16, #tpu.memory_space<vmem>>) attributes {dimension_semantics = [#tpu.dimension_semantics<parallel>, #tpu.dimension_semantics<parallel>], iteration_bounds = array<i64: 2, 1>, scalar_prefetch = 0 : i64, scratch_operands = 0 : i64, tpu.core_type = #tpu.core_type<tc>, window_params = [{transform_indices = @transform_0, window_bounds = array<i64: 64, 576>}, {transform_indices = @transform_1, window_bounds = array<i64: 576, 128>}, {transform_indices = @transform_2, window_bounds = array<i64: 1, 128>}, {transform_indices = @transform_3, window_bounds = array<i64: 64, 128>}]} {
    %c0 = arith.constant 0 : index
    %c0_0 = arith.constant 0 : index
    %0 = vector.load %arg2[%c0, %c0_0] : memref<64x576xbf16, #tpu.memory_space<vmem>>, vector<64x576xbf16>
    %c0_1 = arith.constant 0 : index
    %c0_2 = arith.constant 0 : index
    %1 = vector.load %arg3[%c0_1, %c0_2] : memref<576x128xbf16, #tpu.memory_space<vmem>>, vector<576x128xbf16>
    %cst = arith.constant dense<0.000000e+00> : vector<64x128xf32>
    %2 = tpu.matmul %0, %1, %cst {dimension_numbers = #tpu.dot_dimension_numbers<[1], [0], [0], [1], [0, 0, 1, 1], [], []>} : vector<64x576xbf16>, vector<576x128xbf16>, vector<64x128xf32> -> vector<64x128xf32>
    %c0_3 = arith.constant 0 : index
    %c0_4 = arith.constant 0 : index
    %3 = vector.load %arg4[%c0_3, %c0_4] : memref<1x128xf32, #tpu.memory_space<vmem>>, vector<1x128xf32>
    %4 = vector.broadcast %3 : vector<1x128xf32> to vector<64x128xf32>
    %5 = arith.addf %2, %4 : vector<64x128xf32>
    %cst_5 = arith.constant 0.000000e+00 : f32
    %6 = vector.broadcast %cst_5 : f32 to vector<64x128xf32>
    %7 = arith.cmpf ogt, %5, %6 : vector<64x128xf32>
    %cst_6 = arith.constant 0.000000e+00 : f32
    %8 = vector.broadcast %cst_6 : f32 to vector<64x128xf32>
    %9 = arith.minimumf %5, %8 : vector<64x128xf32>
    %10 = math.exp %9 : vector<64x128xf32>
    %cst_7 = arith.constant 1.000000e+00 : f32
    %11 = vector.broadcast %cst_7 : f32 to vector<64x128xf32>
    %12 = arith.subf %10, %11 : vector<64x128xf32>
    %13 = arith.select %7, %5, %12 : vector<64x128xi1>, vector<64x128xf32>
    %14 = arith.truncf %13 : vector<64x128xf32> to vector<64x128xbf16>
    %c0_8 = arith.constant 0 : index
    %c0_9 = arith.constant 0 : index
    %15 = vector.load %arg5[%c0_8, %c0_9] : memref<64x128xbf16, #tpu.memory_space<vmem>>, vector<64x128xbf16>
    tpu.vector_store %arg5[%c0_8, %c0_9], %14 {strides = array<i32>} : memref<64x128xbf16, #tpu.memory_space<vmem>>, vector<64x128xbf16>,
    return
  }
  func.func @transform_0(%arg0: i32, %arg1: i32) -> (i32, i32) {
    %c0_i32 = arith.constant 0 : i32
    %c0_i32_0 = arith.constant 0 : i32
    return %arg0, %c0_i32 : i32, i32
  }
  func.func @transform_1(%arg0: i32, %arg1: i32) -> (i32, i32) {
    %c0_i32 = arith.constant 0 : i32
    %c0_i32_0 = arith.constant 0 : i32
    return %c0_i32, %arg1 : i32, i32
  }
  func.func @transform_2(%arg0: i32, %arg1: i32) -> (i32, i32) {
    %c0_i32 = arith.constant 0 : i32
    %c0_i32_0 = arith.constant 0 : i32
    return %c0_i32, %arg1 : i32, i32
  }
  func.func @transform_3(%arg0: i32, %arg1: i32) -> (i32, i32) {
    %c0_i32 = arith.constant 0 : i32
    return %arg0, %arg1 : i32, i32
  }
}

module attributes {stable_mosaic.version = 11 : i64} {
  func.func @_conv45_kernel(%arg0: i32, %arg1: memref<1x16x1152xbf16, #tpu.memory_space<vmem>>, %arg2: memref<1152x256xbf16, #tpu.memory_space<vmem>>, %arg3: memref<1x256xf32, #tpu.memory_space<vmem>>, %arg4: memref<16x256x128xbf16, #tpu.memory_space<vmem>>, %arg5: memref<1x128xf32, #tpu.memory_space<vmem>>, %arg6: memref<1x1x128xf32, #tpu.memory_space<vmem>>) attributes {dimension_semantics = [#tpu.dimension_semantics<parallel>], iteration_bounds = array<i64: 2>, scalar_prefetch = 0 : i64, scratch_operands = 0 : i64, tpu.core_type = #tpu.core_type<tc>, window_params = [{transform_indices = @transform_0, window_bounds = array<i64: 1, 16, 1152>}, {pipeline_mode = #tpu.pipeline_mode<synchronous>, transform_indices = @transform_1, window_bounds = array<i64: 1152, 256>}, {pipeline_mode = #tpu.pipeline_mode<synchronous>, transform_indices = @transform_2, window_bounds = array<i64: 1, 256>}, {pipeline_mode = #tpu.pipeline_mode<synchronous>, transform_indices = @transform_3, window_bounds = array<i64: 16, 256, 128>}, {pipeline_mode = #tpu.pipeline_mode<synchronous>, transform_indices = @transform_4, window_bounds = array<i64: 1, 128>}, {transform_indices = @transform_5, window_bounds = array<i64: 1, 1, 128>}]} {
    %c0 = arith.constant 0 : index
    %c0_0 = arith.constant 0 : index
    %c0_1 = arith.constant 0 : index
    %0 = vector.load %arg1[%c0, %c0_0, %c0_1] : memref<1x16x1152xbf16, #tpu.memory_space<vmem>>, vector<1x16x1152xbf16>
    %1 = vector.shape_cast %0 : vector<1x16x1152xbf16> to vector<16x1152xbf16>
    %c0_2 = arith.constant 0 : index
    %c0_3 = arith.constant 0 : index
    %2 = vector.load %arg2[%c0_2, %c0_3] : memref<1152x256xbf16, #tpu.memory_space<vmem>>, vector<1152x256xbf16>
    %cst = arith.constant dense<0.000000e+00> : vector<16x256xf32>
    %3 = tpu.matmul %1, %2, %cst {dimension_numbers = #tpu.dot_dimension_numbers<[1], [0], [0], [1], [0, 0, 1, 1], [], []>} : vector<16x1152xbf16>, vector<1152x256xbf16>, vector<16x256xf32> -> vector<16x256xf32>
    %c0_4 = arith.constant 0 : index
    %c0_5 = arith.constant 0 : index
    %4 = vector.load %arg3[%c0_4, %c0_5] : memref<1x256xf32, #tpu.memory_space<vmem>>, vector<1x256xf32>
    %5 = vector.broadcast %4 : vector<1x256xf32> to vector<16x256xf32>
    %6 = arith.addf %3, %5 : vector<16x256xf32>
    %cst_6 = arith.constant 0.000000e+00 : f32
    %7 = vector.broadcast %cst_6 : f32 to vector<16x256xf32>
    %8 = arith.cmpf ogt, %6, %7 : vector<16x256xf32>
    %cst_7 = arith.constant 0.000000e+00 : f32
    %9 = vector.broadcast %cst_7 : f32 to vector<16x256xf32>
    %10 = arith.minimumf %6, %9 : vector<16x256xf32>
    %11 = math.exp %10 : vector<16x256xf32>
    %cst_8 = arith.constant 1.000000e+00 : f32
    %12 = vector.broadcast %cst_8 : f32 to vector<16x256xf32>
    %13 = arith.subf %11, %12 : vector<16x256xf32>
    %14 = arith.select %8, %6, %13 : vector<16x256xi1>, vector<16x256xf32>
    %c0_9 = arith.constant 0 : index
    %c0_10 = arith.constant 0 : index
    %15 = vector.load %arg5[%c0_9, %c0_10] : memref<1x128xf32, #tpu.memory_space<vmem>>, vector<1x128xf32>
    %16 = vector.extract_strided_slice %14 {offsets = [0, 0], sizes = [1, 256], strides = [1, 1]} : vector<16x256xf32> to vector<1x256xf32>
    %17 = arith.truncf %16 : vector<1x256xf32> to vector<1x256xbf16>
    %c0_11 = arith.constant 0 : index
    %c0_12 = arith.constant 0 : index
    %c0_13 = arith.constant 0 : index
    %18 = vector.load %arg4[%c0_11, %c0_12, %c0_13] : memref<16x256x128xbf16, #tpu.memory_space<vmem>>, vector<1x256x128xbf16>
    %19 = vector.shape_cast %18 : vector<1x256x128xbf16> to vector<256x128xbf16>
    %cst_14 = arith.constant dense<0.000000e+00> : vector<1x128xf32>
    %20 = tpu.matmul %17, %19, %cst_14 {dimension_numbers = #tpu.dot_dimension_numbers<[1], [0], [0], [1], [0, 0, 1, 1], [], []>} : vector<1x256xbf16>, vector<256x128xbf16>, vector<1x128xf32> -> vector<1x128xf32>
    %21 = arith.addf %15, %20 : vector<1x128xf32>
    %22 = vector.extract_strided_slice %14 {offsets = [1, 0], sizes = [1, 256], strides = [1, 1]} : vector<16x256xf32> to vector<1x256xf32>
    %23 = arith.truncf %22 : vector<1x256xf32> to vector<1x256xbf16>
    %c1 = arith.constant 1 : index
    %c0_15 = arith.constant 0 : index
    %c0_16 = arith.constant 0 : index
    %24 = vector.load %arg4[%c1, %c0_15, %c0_16] : memref<16x256x128xbf16, #tpu.memory_space<vmem>>, vector<1x256x128xbf16>
    %25 = vector.shape_cast %24 : vector<1x256x128xbf16> to vector<256x128xbf16>
    %cst_17 = arith.constant dense<0.000000e+00> : vector<1x128xf32>
    %26 = tpu.matmul %23, %25, %cst_17 {dimension_numbers = #tpu.dot_dimension_numbers<[1], [0], [0], [1], [0, 0, 1, 1], [], []>} : vector<1x256xbf16>, vector<256x128xbf16>, vector<1x128xf32> -> vector<1x128xf32>
    %27 = arith.addf %21, %26 : vector<1x128xf32>
    %28 = vector.extract_strided_slice %14 {offsets = [2, 0], sizes = [1, 256], strides = [1, 1]} : vector<16x256xf32> to vector<1x256xf32>
    %29 = arith.truncf %28 : vector<1x256xf32> to vector<1x256xbf16>
    %c2 = arith.constant 2 : index
    %c0_18 = arith.constant 0 : index
    %c0_19 = arith.constant 0 : index
    %30 = vector.load %arg4[%c2, %c0_18, %c0_19] : memref<16x256x128xbf16, #tpu.memory_space<vmem>>, vector<1x256x128xbf16>
    %31 = vector.shape_cast %30 : vector<1x256x128xbf16> to vector<256x128xbf16>
    %cst_20 = arith.constant dense<0.000000e+00> : vector<1x128xf32>
    %32 = tpu.matmul %29, %31, %cst_20 {dimension_numbers = #tpu.dot_dimension_numbers<[1], [0], [0], [1], [0, 0, 1, 1], [], []>} : vector<1x256xbf16>, vector<256x128xbf16>, vector<1x128xf32> -> vector<1x128xf32>
    %33 = arith.addf %27, %32 : vector<1x128xf32>
    %34 = vector.extract_strided_slice %14 {offsets = [3, 0], sizes = [1, 256], strides = [1, 1]} : vector<16x256xf32> to vector<1x256xf32>
    %35 = arith.truncf %34 : vector<1x256xf32> to vector<1x256xbf16>
    %c3 = arith.constant 3 : index
    %c0_21 = arith.constant 0 : index
    %c0_22 = arith.constant 0 : index
    %36 = vector.load %arg4[%c3, %c0_21, %c0_22] : memref<16x256x128xbf16, #tpu.memory_space<vmem>>, vector<1x256x128xbf16>
    %37 = vector.shape_cast %36 : vector<1x256x128xbf16> to vector<256x128xbf16>
    %cst_23 = arith.constant dense<0.000000e+00> : vector<1x128xf32>
    %38 = tpu.matmul %35, %37, %cst_23 {dimension_numbers = #tpu.dot_dimension_numbers<[1], [0], [0], [1], [0, 0, 1, 1], [], []>} : vector<1x256xbf16>, vector<256x128xbf16>, vector<1x128xf32> -> vector<1x128xf32>
    %39 = arith.addf %33, %38 : vector<1x128xf32>
    %40 = vector.extract_strided_slice %14 {offsets = [4, 0], sizes = [1, 256], strides = [1, 1]} : vector<16x256xf32> to vector<1x256xf32>
    %41 = arith.truncf %40 : vector<1x256xf32> to vector<1x256xbf16>
    %c4 = arith.constant 4 : index
    %c0_24 = arith.constant 0 : index
    %c0_25 = arith.constant 0 : index
    %42 = vector.load %arg4[%c4, %c0_24, %c0_25] : memref<16x256x128xbf16, #tpu.memory_space<vmem>>, vector<1x256x128xbf16>
    %43 = vector.shape_cast %42 : vector<1x256x128xbf16> to vector<256x128xbf16>
    %cst_26 = arith.constant dense<0.000000e+00> : vector<1x128xf32>
    %44 = tpu.matmul %41, %43, %cst_26 {dimension_numbers = #tpu.dot_dimension_numbers<[1], [0], [0], [1], [0, 0, 1, 1], [], []>} : vector<1x256xbf16>, vector<256x128xbf16>, vector<1x128xf32> -> vector<1x128xf32>
    %45 = arith.addf %39, %44 : vector<1x128xf32>
    %46 = vector.extract_strided_slice %14 {offsets = [5, 0], sizes = [1, 256], strides = [1, 1]} : vector<16x256xf32> to vector<1x256xf32>
    %47 = arith.truncf %46 : vector<1x256xf32> to vector<1x256xbf16>
    %c5 = arith.constant 5 : index
    %c0_27 = arith.constant 0 : index
    %c0_28 = arith.constant 0 : index
    %48 = vector.load %arg4[%c5, %c0_27, %c0_28] : memref<16x256x128xbf16, #tpu.memory_space<vmem>>, vector<1x256x128xbf16>
    %49 = vector.shape_cast %48 : vector<1x256x128xbf16> to vector<256x128xbf16>
    %cst_29 = arith.constant dense<0.000000e+00> : vector<1x128xf32>
    %50 = tpu.matmul %47, %49, %cst_29 {dimension_numbers = #tpu.dot_dimension_numbers<[1], [0], [0], [1], [0, 0, 1, 1], [], []>} : vector<1x256xbf16>, vector<256x128xbf16>, vector<1x128xf32> -> vector<1x128xf32>
    %51 = arith.addf %45, %50 : vector<1x128xf32>
    %52 = vector.extract_strided_slice %14 {offsets = [6, 0], sizes = [1, 256], strides = [1, 1]} : vector<16x256xf32> to vector<1x256xf32>
    %53 = arith.truncf %52 : vector<1x256xf32> to vector<1x256xbf16>
    %c6 = arith.constant 6 : index
    %c0_30 = arith.constant 0 : index
    %c0_31 = arith.constant 0 : index
    %54 = vector.load %arg4[%c6, %c0_30, %c0_31] : memref<16x256x128xbf16, #tpu.memory_space<vmem>>, vector<1x256x128xbf16>
    %55 = vector.shape_cast %54 : vector<1x256x128xbf16> to vector<256x128xbf16>
    %cst_32 = arith.constant dense<0.000000e+00> : vector<1x128xf32>
    %56 = tpu.matmul %53, %55, %cst_32 {dimension_numbers = #tpu.dot_dimension_numbers<[1], [0], [0], [1], [0, 0, 1, 1], [], []>} : vector<1x256xbf16>, vector<256x128xbf16>, vector<1x128xf32> -> vector<1x128xf32>
    %57 = arith.addf %51, %56 : vector<1x128xf32>
    %58 = vector.extract_strided_slice %14 {offsets = [7, 0], sizes = [1, 256], strides = [1, 1]} : vector<16x256xf32> to vector<1x256xf32>
    %59 = arith.truncf %58 : vector<1x256xf32> to vector<1x256xbf16>
    %c7 = arith.constant 7 : index
    %c0_33 = arith.constant 0 : index
    %c0_34 = arith.constant 0 : index
    %60 = vector.load %arg4[%c7, %c0_33, %c0_34] : memref<16x256x128xbf16, #tpu.memory_space<vmem>>, vector<1x256x128xbf16>
    %61 = vector.shape_cast %60 : vector<1x256x128xbf16> to vector<256x128xbf16>
    %cst_35 = arith.constant dense<0.000000e+00> : vector<1x128xf32>
    %62 = tpu.matmul %59, %61, %cst_35 {dimension_numbers = #tpu.dot_dimension_numbers<[1], [0], [0], [1], [0, 0, 1, 1], [], []>} : vector<1x256xbf16>, vector<256x128xbf16>, vector<1x128xf32> -> vector<1x128xf32>
    %63 = arith.addf %57, %62 : vector<1x128xf32>
    %64 = vector.extract_strided_slice %14 {offsets = [8, 0], sizes = [1, 256], strides = [1, 1]} : vector<16x256xf32> to vector<1x256xf32>
    %65 = arith.truncf %64 : vector<1x256xf32> to vector<1x256xbf16>
    %c8 = arith.constant 8 : index
    %c0_36 = arith.constant 0 : index
    %c0_37 = arith.constant 0 : index
    %66 = vector.load %arg4[%c8, %c0_36, %c0_37] : memref<16x256x128xbf16, #tpu.memory_space<vmem>>, vector<1x256x128xbf16>
    %67 = vector.shape_cast %66 : vector<1x256x128xbf16> to vector<256x128xbf16>
    %cst_38 = arith.constant dense<0.000000e+00> : vector<1x128xf32>
    %68 = tpu.matmul %65, %67, %cst_38 {dimension_numbers = #tpu.dot_dimension_numbers<[1], [0], [0], [1], [0, 0, 1, 1], [], []>} : vector<1x256xbf16>, vector<256x128xbf16>, vector<1x128xf32> -> vector<1x128xf32>
    %69 = arith.addf %63, %68 : vector<1x128xf32>
    %70 = vector.extract_strided_slice %14 {offsets = [9, 0], sizes = [1, 256], strides = [1, 1]} : vector<16x256xf32> to vector<1x256xf32>
    %71 = arith.truncf %70 : vector<1x256xf32> to vector<1x256xbf16>
    %c9 = arith.constant 9 : index
    %c0_39 = arith.constant 0 : index
    %c0_40 = arith.constant 0 : index
    %72 = vector.load %arg4[%c9, %c0_39, %c0_40] : memref<16x256x128xbf16, #tpu.memory_space<vmem>>, vector<1x256x128xbf16>
    %73 = vector.shape_cast %72 : vector<1x256x128xbf16> to vector<256x128xbf16>
    %cst_41 = arith.constant dense<0.000000e+00> : vector<1x128xf32>
    %74 = tpu.matmul %71, %73, %cst_41 {dimension_numbers = #tpu.dot_dimension_numbers<[1], [0], [0], [1], [0, 0, 1, 1], [], []>} : vector<1x256xbf16>, vector<256x128xbf16>, vector<1x128xf32> -> vector<1x128xf32>
    %75 = arith.addf %69, %74 : vector<1x128xf32>
    %76 = vector.extract_strided_slice %14 {offsets = [10, 0], sizes = [1, 256], strides = [1, 1]} : vector<16x256xf32> to vector<1x256xf32>
    %77 = arith.truncf %76 : vector<1x256xf32> to vector<1x256xbf16>
    %c10 = arith.constant 10 : index
    %c0_42 = arith.constant 0 : index
    %c0_43 = arith.constant 0 : index
    %78 = vector.load %arg4[%c10, %c0_42, %c0_43] : memref<16x256x128xbf16, #tpu.memory_space<vmem>>, vector<1x256x128xbf16>
    %79 = vector.shape_cast %78 : vector<1x256x128xbf16> to vector<256x128xbf16>
    %cst_44 = arith.constant dense<0.000000e+00> : vector<1x128xf32>
    %80 = tpu.matmul %77, %79, %cst_44 {dimension_numbers = #tpu.dot_dimension_numbers<[1], [0], [0], [1], [0, 0, 1, 1], [], []>} : vector<1x256xbf16>, vector<256x128xbf16>, vector<1x128xf32> -> vector<1x128xf32>
    %81 = arith.addf %75, %80 : vector<1x128xf32>
    %82 = vector.extract_strided_slice %14 {offsets = [11, 0], sizes = [1, 256], strides = [1, 1]} : vector<16x256xf32> to vector<1x256xf32>
    %83 = arith.truncf %82 : vector<1x256xf32> to vector<1x256xbf16>
    %c11 = arith.constant 11 : index
    %c0_45 = arith.constant 0 : index
    %c0_46 = arith.constant 0 : index
    %84 = vector.load %arg4[%c11, %c0_45, %c0_46] : memref<16x256x128xbf16, #tpu.memory_space<vmem>>, vector<1x256x128xbf16>
    %85 = vector.shape_cast %84 : vector<1x256x128xbf16> to vector<256x128xbf16>
    %cst_47 = arith.constant dense<0.000000e+00> : vector<1x128xf32>
    %86 = tpu.matmul %83, %85, %cst_47 {dimension_numbers = #tpu.dot_dimension_numbers<[1], [0], [0], [1], [0, 0, 1, 1], [], []>} : vector<1x256xbf16>, vector<256x128xbf16>, vector<1x128xf32> -> vector<1x128xf32>
    %87 = arith.addf %81, %86 : vector<1x128xf32>
    %88 = vector.extract_strided_slice %14 {offsets = [12, 0], sizes = [1, 256], strides = [1, 1]} : vector<16x256xf32> to vector<1x256xf32>
    %89 = arith.truncf %88 : vector<1x256xf32> to vector<1x256xbf16>
    %c12 = arith.constant 12 : index
    %c0_48 = arith.constant 0 : index
    %c0_49 = arith.constant 0 : index
    %90 = vector.load %arg4[%c12, %c0_48, %c0_49] : memref<16x256x128xbf16, #tpu.memory_space<vmem>>, vector<1x256x128xbf16>
    %91 = vector.shape_cast %90 : vector<1x256x128xbf16> to vector<256x128xbf16>
    %cst_50 = arith.constant dense<0.000000e+00> : vector<1x128xf32>
    %92 = tpu.matmul %89, %91, %cst_50 {dimension_numbers = #tpu.dot_dimension_numbers<[1], [0], [0], [1], [0, 0, 1, 1], [], []>} : vector<1x256xbf16>, vector<256x128xbf16>, vector<1x128xf32> -> vector<1x128xf32>
    %93 = arith.addf %87, %92 : vector<1x128xf32>
    %94 = vector.extract_strided_slice %14 {offsets = [13, 0], sizes = [1, 256], strides = [1, 1]} : vector<16x256xf32> to vector<1x256xf32>
    %95 = arith.truncf %94 : vector<1x256xf32> to vector<1x256xbf16>
    %c13 = arith.constant 13 : index
    %c0_51 = arith.constant 0 : index
    %c0_52 = arith.constant 0 : index
    %96 = vector.load %arg4[%c13, %c0_51, %c0_52] : memref<16x256x128xbf16, #tpu.memory_space<vmem>>, vector<1x256x128xbf16>
    %97 = vector.shape_cast %96 : vector<1x256x128xbf16> to vector<256x128xbf16>
    %cst_53 = arith.constant dense<0.000000e+00> : vector<1x128xf32>
    %98 = tpu.matmul %95, %97, %cst_53 {dimension_numbers = #tpu.dot_dimension_numbers<[1], [0], [0], [1], [0, 0, 1, 1], [], []>} : vector<1x256xbf16>, vector<256x128xbf16>, vector<1x128xf32> -> vector<1x128xf32>
    %99 = arith.addf %93, %98 : vector<1x128xf32>
    %100 = vector.extract_strided_slice %14 {offsets = [14, 0], sizes = [1, 256], strides = [1, 1]} : vector<16x256xf32> to vector<1x256xf32>
    %101 = arith.truncf %100 : vector<1x256xf32> to vector<1x256xbf16>
    %c14 = arith.constant 14 : index
    %c0_54 = arith.constant 0 : index
    %c0_55 = arith.constant 0 : index
    %102 = vector.load %arg4[%c14, %c0_54, %c0_55] : memref<16x256x128xbf16, #tpu.memory_space<vmem>>, vector<1x256x128xbf16>
    %103 = vector.shape_cast %102 : vector<1x256x128xbf16> to vector<256x128xbf16>
    %cst_56 = arith.constant dense<0.000000e+00> : vector<1x128xf32>
    %104 = tpu.matmul %101, %103, %cst_56 {dimension_numbers = #tpu.dot_dimension_numbers<[1], [0], [0], [1], [0, 0, 1, 1], [], []>} : vector<1x256xbf16>, vector<256x128xbf16>, vector<1x128xf32> -> vector<1x128xf32>
    %105 = arith.addf %99, %104 : vector<1x128xf32>
    %106 = vector.extract_strided_slice %14 {offsets = [15, 0], sizes = [1, 256], strides = [1, 1]} : vector<16x256xf32> to vector<1x256xf32>
    %107 = arith.truncf %106 : vector<1x256xf32> to vector<1x256xbf16>
    %c15 = arith.constant 15 : index
    %c0_57 = arith.constant 0 : index
    %c0_58 = arith.constant 0 : index
    %108 = vector.load %arg4[%c15, %c0_57, %c0_58] : memref<16x256x128xbf16, #tpu.memory_space<vmem>>, vector<1x256x128xbf16>
    %109 = vector.shape_cast %108 : vector<1x256x128xbf16> to vector<256x128xbf16>
    %cst_59 = arith.constant dense<0.000000e+00> : vector<1x128xf32>
    %110 = tpu.matmul %107, %109, %cst_59 {dimension_numbers = #tpu.dot_dimension_numbers<[1], [0], [0], [1], [0, 0, 1, 1], [], []>} : vector<1x256xbf16>, vector<256x128xbf16>, vector<1x128xf32> -> vector<1x128xf32>
    %111 = arith.addf %105, %110 : vector<1x128xf32>
    %cst_60 = arith.constant 0.000000e+00 : f32
    %112 = vector.broadcast %cst_60 : f32 to vector<1x128xf32>
    %113 = arith.subf %112, %111 : vector<1x128xf32>
    %114 = math.exp %113 : vector<1x128xf32>
    %cst_61 = arith.constant 1.000000e+00 : f32
    %115 = vector.broadcast %cst_61 : f32 to vector<1x128xf32>
    %116 = arith.addf %115, %114 : vector<1x128xf32>
    %117 = tpu.reciprocal %116 {approx = true} : vector<1x128xf32> -> vector<1x128xf32>
    %c0_62 = arith.constant 0 : index
    %c0_63 = arith.constant 0 : index
    %c0_64 = arith.constant 0 : index
    %118 = vector.load %arg6[%c0_62, %c0_63, %c0_64] : memref<1x1x128xf32, #tpu.memory_space<vmem>>, vector<1x1x128xf32>
    %119 = vector.shape_cast %118 : vector<1x1x128xf32> to vector<1x128xf32>
    %120 = vector.shape_cast %117 : vector<1x128xf32> to vector<1x1x128xf32>
    tpu.vector_store %arg6[%c0_62, %c0_63, %c0_64], %120 {strides = array<i32>} : memref<1x1x128xf32, #tpu.memory_space<vmem>>, vector<1x1x128xf32>,
    return
  }
  func.func @transform_0(%arg0: i32) -> (i32, i32, i32) {
    %c0_i32 = arith.constant 0 : i32
    %c0_i32_0 = arith.constant 0 : i32
    %c0_i32_1 = arith.constant 0 : i32
    return %arg0, %c0_i32, %c0_i32_0 : i32, i32, i32
  }
  func.func @transform_1(%arg0: i32) -> (i32, i32) {
    %c0_i32 = arith.constant 0 : i32
    %c0_i32_0 = arith.constant 0 : i32
    %c0_i32_1 = arith.constant 0 : i32
    return %c0_i32, %c0_i32_0 : i32, i32
  }
  func.func @transform_2(%arg0: i32) -> (i32, i32) {
    %c0_i32 = arith.constant 0 : i32
    %c0_i32_0 = arith.constant 0 : i32
    %c0_i32_1 = arith.constant 0 : i32
    return %c0_i32, %c0_i32_0 : i32, i32
  }
  func.func @transform_3(%arg0: i32) -> (i32, i32, i32) {
    %c0_i32 = arith.constant 0 : i32
    %c0_i32_0 = arith.constant 0 : i32
    %c0_i32_1 = arith.constant 0 : i32
    %c0_i32_2 = arith.constant 0 : i32
    return %c0_i32, %c0_i32_0, %c0_i32_1 : i32, i32, i32
  }
  func.func @transform_4(%arg0: i32) -> (i32, i32) {
    %c0_i32 = arith.constant 0 : i32
    %c0_i32_0 = arith.constant 0 : i32
    %c0_i32_1 = arith.constant 0 : i32
    return %c0_i32, %c0_i32_0 : i32, i32
  }
  func.func @transform_5(%arg0: i32) -> (i32, i32, i32) {
    %c0_i32 = arith.constant 0 : i32
    %c0_i32_0 = arith.constant 0 : i32
    %c0_i32_1 = arith.constant 0 : i32
    return %arg0, %c0_i32, %c0_i32_0 : i32, i32, i32
  }
}

</mosaic_0001>

<llo_original>
// kernel: lapgan_discriminator_level3.4
$region0: #{lapgan_discriminator_level3.4}
  #allocation0 [shape = 'u32[]', space=smem, size = 0x4, offset = 0x4, fixed_abs, tag = 'smem constant byte address 0x4 - core index']
  #allocation1 [shape = 'u32[72,128]{1,0:T(1,128)}', space=vmem, size = 0x9000, scoped, tag = 'internal scratch']
  %s0 = inlined_call_operand.vmem [shape: bf16[2048,75], index: 0, kind: input, shape index: {}]
  %s1 = inlined_call_operand.vmem [shape: bf16[75,32], index: 1, kind: input, shape index: {}]
  %s2 = inlined_call_operand.vmem [shape: f32[1,32], index: 2, kind: input, shape index: {}]
  %s3 = inlined_call_operand.vmem [shape: bf16[2048,32], index: 3, kind: output, shape index: {}]
  %s4 = sld [smem:[#allocation0]]
  $region45: #{lapgan_discriminator_level3.4} parent=0
    _
  %s6 = ssub.s32 1, %s4
  %s7 = scalar_select 0, %s6, %s4
  loop: start=0, step=1, limit=6
  $region2: #{lapgan_discriminator_level3.4} parent=0 // loop_pre_header
    _
  $region3: #{lapgan_discriminator_level3.4} parent=0 // loop_header
    %s9 = sphi 0, %s13
    %p10 = scmp.ge.s32.totalorder %s9, 6
    %s16 = sphi 0, %s28
    %s17 = sphi 0, %s24
    %s18 = sphi 0, %s16
    %s19 = sphi 0, %s17
    %s20 = sphi 0, %s18
    %s21 = sphi 0, %s19
    %s31 = sphi 0, %s33
    %s34 = sphi 0, %s31
    %s35 = sphi 0, %s34
    %s51 = sphi 0, %s35
    %s57 = sphi 0, %s59
    %s60 = sphi 0, %s57
    %s61 = sphi 0, %s60
    %s77 = sphi 0, %s61
    %s83 = sphi 0, %s85
    %s86 = sphi 0, %s83
    %s87 = sphi 0, %s86
    %s103 = sphi 0, %s87
    %s111 = sphi 0, %s113
    %s114 = sphi 0, %s111
    %s115 = sphi 0, %s114
    %s131 = sphi 0, %s115
  $region4: #{lapgan_discriminator_level3.4} parent=0 // loop_header_branch
    %12 = sbr.rel (%p10) target = $region8
  $region5: #{lapgan_discriminator_level3.4} parent=0 // loop_body
    %s14 = ssub.s32 %s9, 1
    %s15 = ssub.s32 %s9, 2
    %s22 = sadd.s32 1, %s17
    %p23 = scmp.ge.s32.totalorder %s22, 1
    %s24 = scalar_select %p23, 0, %s22
    %s25 = sadd.s32 1, %s16
    %s26 = scalar_select %p23, %s25, %s16
    %p27 = scmp.ge.s32.totalorder %s26, 4
    %s28 = scalar_select %p27, 0, %s26
    %s29 = ssub.s32 %s16, %s28
    %p30 = scmp.eq.s32.totalorder %s29, 0
    %s32 = sadd.s32 %s31, 1
    %s33 = scalar_select %p30, %s31, %s32
    %p36 = pneg %p30
    %p37 = scmp.eq.s32.totalorder %s9, 3
    %p38 = por %p36, %p37
    %p39 = scmp.ne.s32.totalorder %s31, %s34
    %p40 = scmp.eq.s32.totalorder %s9, 0
    %p41 = por %p39, %p40
    %p42 = scmp.ne.s32.totalorder %s31, %s34
    %p43 = scmp.eq.s32.totalorder %s14, 3
    %p44 = por %p42, %p43
    %p45 = scmp.ne.s32.totalorder %s34, %s35
    %p46 = scmp.eq.s32.totalorder %s14, 0
    %p47 = por %p45, %p46
    %p48 = scmp.ne.s32.totalorder %s34, %s35
    %p49 = scmp.eq.s32.totalorder %s15, 3
    %p50 = por %p48, %p49
    %p52 = scmp.ne.s32.totalorder %s35, %s51
    %p53 = scmp.eq.s32.totalorder %s15, 0
    %p54 = por %p52, %p53
    %s55 = ssub.s32 %s17, %s24
    %p56 = scmp.eq.s32.totalorder %s55, 0
    %s58 = sadd.s32 %s57, 1
    %s59 = scalar_select %p56, %s57, %s58
    %p62 = pneg %p56
    %p63 = scmp.eq.s32.totalorder %s9, 3
    %p64 = por %p62, %p63
    %p65 = scmp.ne.s32.totalorder %s57, %s60
    %p66 = scmp.eq.s32.totalorder %s9, 0
    %p67 = por %p65, %p66
    %p68 = scmp.ne.s32.totalorder %s57, %s60
    %p69 = scmp.eq.s32.totalorder %s14, 3
    %p70 = por %p68, %p69
    %p71 = scmp.ne.s32.totalorder %s60, %s61
    %p72 = scmp.eq.s32.totalorder %s14, 0
    %p73 = por %p71, %p72
    %p74 = scmp.ne.s32.totalorder %s60, %s61
    %p75 = scmp.eq.s32.totalorder %s15, 3
    %p76 = por %p74, %p75
    %p78 = scmp.ne.s32.totalorder %s61, %s77
    %p79 = scmp.eq.s32.totalorder %s15, 0
    %p80 = por %p78, %p79
    %s81 = ssub.s32 %s17, %s24
    %p82 = scmp.eq.s32.totalorder %s81, 0
    %s84 = sadd.s32 %s83, 1
    %s85 = scalar_select %p82, %s83, %s84
    %p88 = pneg %p82
    %p89 = scmp.eq.s32.totalorder %s9, 3
    %p90 = por %p88, %p89
    %p91 = scmp.ne.s32.totalorder %s83, %s86
    %p92 = scmp.eq.s32.totalorder %s9, 0
    %p93 = por %p91, %p92
    %p94 = scmp.ne.s32.totalorder %s83, %s86
    %p95 = scmp.eq.s32.totalorder %s14, 3
    %p96 = por %p94, %p95
    %p97 = scmp.ne.s32.totalorder %s86, %s87
    %p98 = scmp.eq.s32.totalorder %s14, 0
    %p99 = por %p97, %p98
    %p100 = scmp.ne.s32.totalorder %s86, %s87
    %p101 = scmp.eq.s32.totalorder %s15, 3
    %p102 = por %p100, %p101
    %p104 = scmp.ne.s32.totalorder %s87, %s103
    %p105 = scmp.eq.s32.totalorder %s15, 0
    %p106 = por %p104, %p105
    %s107 = ssub.s32 %s16, %s28
    %s108 = ssub.s32 %s17, %s24
    %s109 = sor.u32 %s107, %s108
    %p110 = scmp.eq.s32.totalorder %s109, 0
    %s112 = sadd.s32 %s111, 1
    %s113 = scalar_select %p110, %s111, %s112
    %p116 = pneg %p110
    %p117 = scmp.eq.s32.totalorder %s9, 3
    %p118 = por %p116, %p117
    %p119 = scmp.ne.s32.totalorder %s111, %s114
    %p120 = scmp.eq.s32.totalorder %s9, 0
    %p121 = por %p119, %p120
    %p122 = scmp.ne.s32.totalorder %s111, %s114
    %p123 = scmp.eq.s32.totalorder %s14, 3
    %p124 = por %p122, %p123
    %p125 = scmp.ne.s32.totalorder %s114, %s115
    %p126 = scmp.eq.s32.totalorder %s14, 0
    %p127 = por %p125, %p126
    %p128 = scmp.ne.s32.totalorder %s114, %s115
    %p129 = scmp.eq.s32.totalorder %s15, 3
    %p130 = por %p128, %p129
    %p132 = scmp.ne.s32.totalorder %s115, %s131
    %p133 = scmp.eq.s32.totalorder %s15, 0
    %p134 = por %p132, %p133
    %p135 = scmp.le.s32.totalorder 1, %s9
    %p136 = scmp.lt.s32.totalorder %s9, 5
    %p137 = pnand %p135, %p136
    %p138 = pneg %p137
    // Predicated region
    $region9: #{lapgan_discriminator_level3.4} parent=5 // pred_check
      _
    $region10: #{lapgan_discriminator_level3.4} parent=5 // pred_check_branch
      %140 = sbr.rel (%p137) target = $region12
    $region11: #{lapgan_discriminator_level3.4} parent=5 // pred_region
      %s141 = ssub.s32 %s9, 1
      // Predicated region
      $region13: #{lapgan_discriminator_level3.4} parent=11 // pred_check
        %p142 = pneg %p73
      $region14: #{lapgan_discriminator_level3.4} parent=11 // pred_check_branch
        %144 = sbr.rel (%p142) target = $region16
      $region15: #{lapgan_discriminator_level3.4} parent=11 // pred_region
        %p145 = scmp.lt.s32.totalorder %s19, 0
        %s146 = scalar_select %p145, %s19, 0
        %s147 = smul.addr %s146, 4
        %s148 = scalar_lea.vmem %s1, %s147
      $region16: #{lapgan_discriminator_level3.4} parent=11 // pred_fallthru
        _
      // Predicated region
      $region17: #{lapgan_discriminator_level3.4} parent=11 // pred_check
        %p149 = pneg %p99
      $region18: #{lapgan_discriminator_level3.4} parent=11 // pred_check_branch
        %151 = sbr.rel (%p149) target = $region20
      $region19: #{lapgan_discriminator_level3.4} parent=11 // pred_region
        %p152 = scmp.lt.s32.totalorder %s19, 0
        %s153 = scalar_select %p152, %s19, 0
        %s154 = scalar_lea.vmem %s2, %s153
      $region20: #{lapgan_discriminator_level3.4} parent=11 // pred_fallthru
        _
    $region12: #{lapgan_discriminator_level3.4} parent=5 // pred_fallthru
      _
    %p155 = scmp.lt.s32.totalorder %s9, 4
    // Predicated region
    $region21: #{lapgan_discriminator_level3.4} parent=5 // pred_check
      %p156 = pneg %p155
    $region22: #{lapgan_discriminator_level3.4} parent=5 // pred_check_branch
      %158 = sbr.rel (%p156) target = $region24
    $region23: #{lapgan_discriminator_level3.4} parent=5 // pred_region
      // Predicated region
      $region25: #{lapgan_discriminator_level3.4} parent=23 // pred_check
        %p159 = pneg %p41
      $region26: #{lapgan_discriminator_level3.4} parent=23 // pred_check_branch
        %161 = sbr.rel (%p159) target = $region28
      $region27: #{lapgan_discriminator_level3.4} parent=23 // pred_region
        %s162 = smul.u32 64, %s16
        %p163 = scmp.lt.s32.totalorder %s162, 255
        %s164 = scalar_select %p163, %s162, 255
        %s165 = smul.addr %s164, 4
        %s166 = scalar_lea.vmem %s0, %s165
        %s167 = smul.u32 64, %s16
      $region28: #{lapgan_discriminator_level3.4} parent=23 // pred_fallthru
        _
    $region24: #{lapgan_discriminator_level3.4} parent=5 // pred_fallthru
      _
    %p168 = scmp.le.s32.totalorder 1, %s9
    %p169 = scmp.lt.s32.totalorder %s9, 5
    %p170 = pnand %p168, %p169
    %p171 = pneg %p170
    // Predicated region
    $region29: #{lapgan_discriminator_level3.4} parent=5 // pred_check
      _
    $region30: #{lapgan_discriminator_level3.4} parent=5 // pred_check_branch
      %173 = sbr.rel (%p170) target = $region32
    $region31: #{lapgan_discriminator_level3.4} parent=5 // pred_region
      %s174 = ssub.s32 %s9, 1
      %s175 = smul.u32 64, %s18
      %p176 = scmp.lt.s32.totalorder %s175, 255
      %s177 = scalar_select %p176, %s175, 255
      %s178 = smul.addr %s177, 4
      %s179 = scalar_lea.vmem %s0, %s178
      %p180 = pneg %p47
      %p181 = pneg %p44
      %p182 = scmp.lt.s32.totalorder %s19, 0
      %s183 = scalar_select %p182, %s19, 0
      %s184 = smul.addr %s183, 4
      %s185 = scalar_lea.vmem %s1, %s184
      %p186 = pneg %p73
      %p187 = pneg %p70
      %p188 = scmp.lt.s32.totalorder %s19, 0
      %s189 = scalar_select %p188, %s19, 0
      %s190 = scalar_lea.vmem %s2, %s189
      %p191 = pneg %p99
      %p192 = pneg %p96
      %p193 = pneg %p127
      %p194 = pneg %p124
      %s195 = smul.u32 64, %s18
      %p196 = scmp.lt.s32.totalorder %s195, 255
      %s197 = scalar_select %p196, %s195, 255
      %p198 = scmp.lt.s32.totalorder %s19, 0
      %s199 = scalar_select %p198, %s19, 0
      %s200 = sadd.s32 %s199, %s197
      %s201 = smul.addr %s200, 4
      %s202 = scalar_lea.vmem %s3, %s201
      %s203 = smul.u32 64, %s18
      %p204 = scmp.lt.s32.totalorder %s203, 255
      %s205 = scalar_select %p204, %s203, 255
      %s206 = smul.addr %s205, 4
      %s207 = scalar_lea.vmem %s0, %s206
      %s208 = smul.u32 64, %s18
      %p209 = scmp.lt.s32.totalorder %s19, 0
      %s210 = scalar_select %p209, %s19, 0
      %s211 = smul.addr %s210, 4
      %s212 = scalar_lea.vmem %s1, %s211
      %p213 = scmp.lt.s32.totalorder %s19, 0
      %s214 = scalar_select %p213, %s19, 0
      %s215 = scalar_lea.vmem %s2, %s214
      %s216 = smul.u32 64, %s18
      %p217 = scmp.lt.s32.totalorder %s216, 255
      %s218 = scalar_select %p217, %s216, 255
      %p219 = scmp.lt.s32.totalorder %s19, 0
      %s220 = scalar_select %p219, %s19, 0
      %s221 = sadd.s32 %s220, %s218
      %s222 = smul.addr %s221, 4
      %s223 = scalar_lea.vmem %s3, %s222
      %s224 = smul.u32 64, %s18
      %v226 = vld [vmem:[%s207] sm:$0xf]
      %v227 = vld [vmem:[%s207 + $0x4] sm:$0xf]
      %v228 = vld [vmem:[%s207 + $0x8] sm:$0xf]
      %v229 = vld [vmem:[%s207 + $0xc] sm:$0xf]
      %v230 = vld [vmem:[%s207 + $0x10] sm:$0xf]
      %v231 = vld [vmem:[%s207 + $0x14] sm:$0xf]
      %v232 = vld [vmem:[%s207 + $0x18] sm:$0xf]
      %v233 = vld [vmem:[%s207 + $0x1c] sm:$0xf]
      %v234 = vld [vmem:[%s207 + $0x20] sm:$0xf]
      %v235 = vld [vmem:[%s207 + $0x24] sm:$0xf]
      %v236 = vld [vmem:[%s207 + $0x28] sm:$0xf]
      %v237 = vld [vmem:[%s207 + $0x2c] sm:$0xf]
      %v238 = vld [vmem:[%s207 + $0x30] sm:$0xf]
      %v239 = vld [vmem:[%s207 + $0x34] sm:$0xf]
      %v240 = vld [vmem:[%s207 + $0x38] sm:$0xf]
      %v241 = vld [vmem:[%s207 + $0x3c] sm:$0xf]
      %v242 = vld [vmem:[%s207 + $0x40] sm:$0xf]
      %v243 = vld [vmem:[%s207 + $0x44] sm:$0xf]
      %v244 = vld [vmem:[%s207 + $0x48] sm:$0xf]
      %v245 = vld [vmem:[%s207 + $0x4c] sm:$0xf]
      %v246 = vld [vmem:[%s207 + $0x50] sm:$0xf]
      %v247 = vld [vmem:[%s207 + $0x54] sm:$0xf]
      %v248 = vld [vmem:[%s207 + $0x58] sm:$0xf]
      %v249 = vld [vmem:[%s207 + $0x5c] sm:$0xf]
      %v250 = vld [vmem:[%s207 + $0x60] sm:$0xf]
      %v251 = vld [vmem:[%s207 + $0x64] sm:$0xf]
      %v252 = vld [vmem:[%s207 + $0x68] sm:$0xf]
      %v253 = vld [vmem:[%s207 + $0x6c] sm:$0xf]
      %v254 = vld [vmem:[%s207 + $0x70] sm:$0xf]
      %v255 = vld [vmem:[%s207 + $0x74] sm:$0xf]
      %v256 = vld [vmem:[%s207 + $0x78] sm:$0xf]
      %v257 = vld [vmem:[%s207 + $0x7c] sm:$0xf]
      %v258 = vld [vmem:[%s207 + $0x80] sm:$0xf]
      %v259 = vld [vmem:[%s207 + $0x84] sm:$0xf]
      %v260 = vld [vmem:[%s207 + $0x88] sm:$0xf]
      %v261 = vld [vmem:[%s207 + $0x8c] sm:$0xf]
      %v262 = vld [vmem:[%s207 + $0x90] sm:$0xf]
      %v263 = vld [vmem:[%s207 + $0x94] sm:$0xf]
      %v264 = vld [vmem:[%s207 + $0x98] sm:$0xf]
      %v265 = vld [vmem:[%s207 + $0x9c] sm:$0xf]
      %v266 = vld [vmem:[%s207 + $0xa0] sm:$0xf]
      %v267 = vld [vmem:[%s207 + $0xa4] sm:$0xf]
      %v268 = vld [vmem:[%s207 + $0xa8] sm:$0xf]
      %v269 = vld [vmem:[%s207 + $0xac] sm:$0xf]
      %v270 = vld [vmem:[%s207 + $0xb0] sm:$0xf]
      %v271 = vld [vmem:[%s207 + $0xb4] sm:$0xf]
      %v272 = vld [vmem:[%s207 + $0xb8] sm:$0xf]
      %v273 = vld [vmem:[%s207 + $0xbc] sm:$0xf]
      %v274 = vld [vmem:[%s207 + $0xc0] sm:$0xf]
      %v275 = vld [vmem:[%s207 + $0xc4] sm:$0xf]
      %v276 = vld [vmem:[%s207 + $0xc8] sm:$0xf]
      %v277 = vld [vmem:[%s207 + $0xcc] sm:$0xf]
      %v278 = vld [vmem:[%s207 + $0xd0] sm:$0xf]
      %v279 = vld [vmem:[%s207 + $0xd4] sm:$0xf]
      %v280 = vld [vmem:[%s207 + $0xd8] sm:$0xf]
      %v281 = vld [vmem:[%s207 + $0xdc] sm:$0xf]
      %v282 = vld [vmem:[%s207 + $0xe0] sm:$0xf]
      %v283 = vld [vmem:[%s207 + $0xe4] sm:$0xf]
      %v284 = vld [vmem:[%s207 + $0xe8] sm:$0xf]
      %v285 = vld [vmem:[%s207 + $0xec] sm:$0xf]
      %v286 = vld [vmem:[%s207 + $0xf0] sm:$0xf]
      %v287 = vld [vmem:[%s207 + $0xf4] sm:$0xf]
      %v288 = vld [vmem:[%s207 + $0xf8] sm:$0xf]
      %v289 = vld [vmem:[%s207 + $0xfc] sm:$0xf]
      %v290 = vld [vmem:[%s212] sm:$0xf]
      %v291 = vld [vmem:[%s212 + $0x4] sm:$0xf]
      %v292 = vld [vmem:[%s212 + $0x8] sm:$0xf]
      %v293 = vld [vmem:[%s212 + $0xc] sm:$0xf]
      %v294 = vld [vmem:[%s212 + $0x10] sm:$0xf]
      %v295 = vld [vmem:[%s212 + $0x14] sm:$0xf]
      %v296 = vld [vmem:[%s212 + $0x18] sm:$0xf]
      %v297 = vld [vmem:[%s212 + $0x1c] sm:$0xf]
      %v298 = vld [vmem:[%s212 + $0x20] sm:$0xf]
      %v299 = vld [vmem:[%s212 + $0x24] sm:$0x3]
      %v300 = vld [vmem:[%s215] sm:$0x1]
      %v302 = vperm.slane %v300, 0
      %v368 = vunpack.c.l.b16 %v226
      %v369 = vunpack.c.l.b16 %v227
      %v370 = vunpack.c.l.b16 %v228
      %v371 = vunpack.c.l.b16 %v229
      %v372 = vunpack.c.l.b16 %v230
      %v373 = vunpack.c.l.b16 %v231
      %v374 = vunpack.c.l.b16 %v232
      %v375 = vunpack.c.l.b16 %v233
      %v376 = vunpack.c.l.b16 %v234
      %v377 = vunpack.c.l.b16 %v235
      %v378 = vunpack.c.l.b16 %v236
      %v379 = vunpack.c.l.b16 %v237
      %v380 = vunpack.c.l.b16 %v238
      %v381 = vunpack.c.l.b16 %v239
      %v382 = vunpack.c.l.b16 %v240
      %v383 = vunpack.c.l.b16 %v241
      %v384 = vunpack.c.l.b16 %v242
      %v385 = vunpack.c.l.b16 %v243
      %v386 = vunpack.c.l.b16 %v244
      %v387 = vunpack.c.l.b16 %v245
      %v388 = vunpack.c.l.b16 %v246
      %v389 = vunpack.c.l.b16 %v247
      %v390 = vunpack.c.l.b16 %v248
      %v391 = vunpack.c.l.b16 %v249
      %v392 = vunpack.c.l.b16 %v250
      %v393 = vunpack.c.l.b16 %v251
      %v394 = vunpack.c.l.b16 %v252
      %v395 = vunpack.c.l.b16 %v253
      %v396 = vunpack.c.l.b16 %v254
      %v397 = vunpack.c.l.b16 %v255
      %v398 = vunpack.c.l.b16 %v256
      %v399 = vunpack.c.l.b16 %v257
      %v400 = vunpack.c.l.b16 %v258
      %v401 = vunpack.c.l.b16 %v259
      %v402 = vunpack.c.l.b16 %v260
      %v403 = vunpack.c.l.b16 %v261
      %v404 = vunpack.c.l.b16 %v262
      %v405 = vunpack.c.l.b16 %v263
      %v406 = vunpack.c.l.b16 %v264
      %v407 = vunpack.c.l.b16 %v265
      %v408 = vunpack.c.l.b16 %v266
      %v409 = vunpack.c.l.b16 %v267
      %v410 = vunpack.c.l.b16 %v268
      %v411 = vunpack.c.l.b16 %v269
      %v412 = vunpack.c.l.b16 %v270
      %v413 = vunpack.c.l.b16 %v271
      %v414 = vunpack.c.l.b16 %v272
      %v415 = vunpack.c.l.b16 %v273
      %v416 = vunpack.c.l.b16 %v274
      %v417 = vunpack.c.l.b16 %v275
      %v418 = vunpack.c.l.b16 %v276
      %v419 = vunpack.c.l.b16 %v277
      %v420 = vunpack.c.l.b16 %v278
      %v421 = vunpack.c.l.b16 %v279
      %v422 = vunpack.c.l.b16 %v280
      %v423 = vunpack.c.l.b16 %v281
      %v424 = vunpack.c.l.b16 %v282
      %v425 = vunpack.c.l.b16 %v283
      %v426 = vunpack.c.l.b16 %v284
      %v427 = vunpack.c.l.b16 %v285
      %v428 = vunpack.c.l.b16 %v286
      %v429 = vunpack.c.l.b16 %v287
      %v430 = vunpack.c.l.b16 %v288
      %v431 = vunpack.c.l.b16 %v289
      %v432 = vpack.c.b16 %v369, %v368
      %v433 = vpack.c.b16 %v371, %v370
      %v434 = vpack.c.b16 %v373, %v372
      %v435 = vpack.c.b16 %v375, %v374
      %v436 = vpack.c.b16 %v377, %v376
      %v437 = vpack.c.b16 %v379, %v378
      %v438 = vpack.c.b16 %v381, %v380
      %v439 = vpack.c.b16 %v383, %v382
      %v440 = vpack.c.b16 %v385, %v384
      %v441 = vpack.c.b16 %v387, %v386
      %v442 = vpack.c.b16 %v389, %v388
      %v443 = vpack.c.b16 %v391, %v390
      %v444 = vpack.c.b16 %v393, %v392
      %v445 = vpack.c.b16 %v395, %v394
      %v446 = vpack.c.b16 %v397, %v396
      %v447 = vpack.c.b16 %v399, %v398
      %v448 = vpack.c.b16 %v401, %v400
      %v449 = vpack.c.b16 %v403, %v402
      %v450 = vpack.c.b16 %v405, %v404
      %v451 = vpack.c.b16 %v407, %v406
      %v452 = vpack.c.b16 %v409, %v408
      %v453 = vpack.c.b16 %v411, %v410
      %v454 = vpack.c.b16 %v413, %v412
      %v455 = vpack.c.b16 %v415, %v414
      %v456 = vpack.c.b16 %v417, %v416
      %v457 = vpack.c.b16 %v419, %v418
      %v458 = vpack.c.b16 %v421, %v420
      %v459 = vpack.c.b16 %v423, %v422
      %v460 = vpack.c.b16 %v425, %v424
      %v461 = vpack.c.b16 %v427, %v426
      %v462 = vpack.c.b16 %v429, %v428
      %v463 = vpack.c.b16 %v431, %v430
      %v474 = vunpack.c.l.b16 %v290
      %v475 = vunpack.c.l.b16 %v291
      %v476 = vunpack.c.l.b16 %v292
      %v477 = vunpack.c.l.b16 %v293
      %v478 = vunpack.c.l.b16 %v294
      %v479 = vunpack.c.l.b16 %v295
      %v480 = vunpack.c.l.b16 %v296
      %v481 = vunpack.c.l.b16 %v297
      %v482 = vunpack.c.l.b16 %v298
      %v483 = vunpack.c.l.b16 %v299
      %v484 = vpack.c.b16 %v475, %v474
      %v485 = vpack.c.b16 %v477, %v476
      %v486 = vpack.c.b16 %v479, %v478
      %v487 = vpack.c.b16 %v481, %v480
      %v488 = vpack.c.b16 %v483, %v482
      %vm493 = vcmask 613376
      %v495 = vsel %vm493, %v432, 0
      %v498 = vsel %vm493, %v433, 0
      %v501 = vsel %vm493, %v434, 0
      %v504 = vsel %vm493, %v435, 0
      %v507 = vsel %vm493, %v436, 0
      %v510 = vsel %vm493, %v437, 0
      %v513 = vsel %vm493, %v438, 0
      %v516 = vsel %vm493, %v439, 0
      %v519 = vsel %vm493, %v440, 0
      %v522 = vsel %vm493, %v441, 0
      %v525 = vsel %vm493, %v442, 0
      %v528 = vsel %vm493, %v443, 0
      %v531 = vsel %vm493, %v444, 0
      %v534 = vsel %vm493, %v445, 0
      %v537 = vsel %vm493, %v446, 0
      %v540 = vsel %vm493, %v447, 0
      %v543 = vsel %vm493, %v448, 0
      %v546 = vsel %vm493, %v449, 0
      %v549 = vsel %vm493, %v450, 0
      %v552 = vsel %vm493, %v451, 0
      %v555 = vsel %vm493, %v452, 0
      %v558 = vsel %vm493, %v453, 0
      %v561 = vsel %vm493, %v454, 0
      %v564 = vsel %vm493, %v455, 0
      %v567 = vsel %vm493, %v456, 0
      %v570 = vsel %vm493, %v457, 0
      %v573 = vsel %vm493, %v458, 0
      %v576 = vsel %vm493, %v459, 0
      %v579 = vsel %vm493, %v460, 0
      %v582 = vsel %vm493, %v461, 0
      %v585 = vsel %vm493, %v462, 0
      %v588 = vsel %vm493, %v463, 0
      %vm590 = vcmask 1044480
      %vm591 = vcmask 1045504
      %v592 = vsel %vm590, 4294967295, 65535
      %v593 = vsel %vm591, %v592, 0
      %v595 = vand.u32 %v488, %v593
      %597 = vmatpush.bf16.msra.mxu0 0
      %598 = vmatpush.bf16.msra.mxu0 0
      %599 = vmatpush.bf16.msra.mxu0 0
      %600 = vmatpush.bf16.msra.mxu0 %v595
      %601 = vmatpush.bf16.msra.mxu0 %v487
      %602 = vmatpush.bf16.msra.mxu0 %v486
      %603 = vmatpush.bf16.msra.mxu0 %v485
      %604 = vmatpush.bf16.msra.mxu0 %v484
      %605 = vmatmul.bf16.gmra.mxu0 %v495
      %v606 = vpop.f32.mrf.mxu0
      %v607 = vadd.f32 %v302, %v606
      %v608 = vpop.f32.mrf.mxu0
      %v609 = vadd.f32 %v302, %v608
      %610 = vmatmul.bf16.gmra.mxu0 %v498
      %v611 = vpop.f32.mrf.mxu0
      %v612 = vadd.f32 %v302, %v611
      %v613 = vpop.f32.mrf.mxu0
      %v614 = vadd.f32 %v302, %v613
      %615 = vmatmul.bf16.gmra.mxu0 %v501
      %v616 = vpop.f32.mrf.mxu0
      %v617 = vadd.f32 %v302, %v616
      %v618 = vpop.f32.mrf.mxu0
      %v619 = vadd.f32 %v302, %v618
      %620 = vmatmul.bf16.gmra.mxu0 %v504
      %v621 = vpop.f32.mrf.mxu0
      %v622 = vadd.f32 %v302, %v621
      %v623 = vpop.f32.mrf.mxu0
      %v624 = vadd.f32 %v302, %v623
      %625 = vmatmul.bf16.gmra.mxu0 %v507
      %v626 = vpop.f32.mrf.mxu0
      %v627 = vadd.f32 %v302, %v626
      %v628 = vpop.f32.mrf.mxu0
      %v629 = vadd.f32 %v302, %v628
      %630 = vmatmul.bf16.gmra.mxu0 %v510
      %v631 = vpop.f32.mrf.mxu0
      %v632 = vadd.f32 %v302, %v631
      %v633 = vpop.f32.mrf.mxu0
      %v634 = vadd.f32 %v302, %v633
      %635 = vmatmul.bf16.gmra.mxu0 %v513
      %v636 = vpop.f32.mrf.mxu0
      %v637 = vadd.f32 %v302, %v636
      %v638 = vpop.f32.mrf.mxu0
      %v639 = vadd.f32 %v302, %v638
      %640 = vmatmul.bf16.gmra.mxu0 %v516
      %v641 = vpop.f32.mrf.mxu0
      %v642 = vadd.f32 %v302, %v641
      %v643 = vpop.f32.mrf.mxu0
      %v644 = vadd.f32 %v302, %v643
      %645 = vmatmul.bf16.gmra.mxu0 %v519
      %v646 = vpop.f32.mrf.mxu0
      %v647 = vadd.f32 %v302, %v646
      %v648 = vpop.f32.mrf.mxu0
      %v649 = vadd.f32 %v302, %v648
      %650 = vmatmul.bf16.gmra.mxu0 %v522
      %v651 = vpop.f32.mrf.mxu0
      %v652 = vadd.f32 %v302, %v651
      %v653 = vpop.f32.mrf.mxu0
      %v654 = vadd.f32 %v302, %v653
      %655 = vmatmul.bf16.gmra.mxu0 %v525
      %v656 = vpop.f32.mrf.mxu0
      %v657 = vadd.f32 %v302, %v656
      %v658 = vpop.f32.mrf.mxu0
      %v659 = vadd.f32 %v302, %v658
      %660 = vmatmul.bf16.gmra.mxu0 %v528
      %v661 = vpop.f32.mrf.mxu0
      %v662 = vadd.f32 %v302, %v661
      %v663 = vpop.f32.mrf.mxu0
      %v664 = vadd.f32 %v302, %v663
      %665 = vmatmul.bf16.gmra.mxu0 %v531
      %v666 = vpop.f32.mrf.mxu0
      %v667 = vadd.f32 %v302, %v666
      %v668 = vpop.f32.mrf.mxu0
      %v669 = vadd.f32 %v302, %v668
      %670 = vmatmul.bf16.gmra.mxu0 %v534
      %v671 = vpop.f32.mrf.mxu0
      %v672 = vadd.f32 %v302, %v671
      %v673 = vpop.f32.mrf.mxu0
      %v674 = vadd.f32 %v302, %v673
      %675 = vmatmul.bf16.gmra.mxu0 %v537
      %v676 = vpop.f32.mrf.mxu0
      %v677 = vadd.f32 %v302, %v676
      %v678 = vpop.f32.mrf.mxu0
      %v679 = vadd.f32 %v302, %v678
      %680 = vmatmul.bf16.gmra.mxu0 %v540
      %v681 = vpop.f32.mrf.mxu0
      %v682 = vadd.f32 %v302, %v681
      %v683 = vpop.f32.mrf.mxu0
      %v684 = vadd.f32 %v302, %v683
      %685 = vmatmul.bf16.gmra.mxu0 %v543
      %v686 = vpop.f32.mrf.mxu0
      %v687 = vadd.f32 %v302, %v686
      %v688 = vpop.f32.mrf.mxu0
      %v689 = vadd.f32 %v302, %v688
      %690 = vmatmul.bf16.gmra.mxu0 %v546
      %v691 = vpop.f32.mrf.mxu0
      %v692 = vadd.f32 %v302, %v691
      %v693 = vpop.f32.mrf.mxu0
      %v694 = vadd.f32 %v302, %v693
      %695 = vmatmul.bf16.gmra.mxu0 %v549
      %v696 = vpop.f32.mrf.mxu0
      %v697 = vadd.f32 %v302, %v696
      %v698 = vpop.f32.mrf.mxu0
      %v699 = vadd.f32 %v302, %v698
      %700 = vmatmul.bf16.gmra.mxu0 %v552
      %v701 = vpop.f32.mrf.mxu0
      %v702 = vadd.f32 %v302, %v701
      %v703 = vpop.f32.mrf.mxu0
      %v704 = vadd.f32 %v302, %v703
      %705 = vmatmul.bf16.gmra.mxu0 %v555
      %v706 = vpop.f32.mrf.mxu0
      %v707 = vadd.f32 %v302, %v706
      %v708 = vpop.f32.mrf.mxu0
      %v709 = vadd.f32 %v302, %v708
      %710 = vmatmul.bf16.gmra.mxu0 %v558
      %v711 = vpop.f32.mrf.mxu0
      %v712 = vadd.f32 %v302, %v711
      %v713 = vpop.f32.mrf.mxu0
      %v714 = vadd.f32 %v302, %v713
      %715 = vmatmul.bf16.gmra.mxu0 %v561
      %v716 = vpop.f32.mrf.mxu0
      %v717 = vadd.f32 %v302, %v716
      %v718 = vpop.f32.mrf.mxu0
      %v719 = vadd.f32 %v302, %v718
      %720 = vmatmul.bf16.gmra.mxu0 %v564
      %v721 = vpop.f32.mrf.mxu0
      %v722 = vadd.f32 %v302, %v721
      %v723 = vpop.f32.mrf.mxu0
      %v724 = vadd.f32 %v302, %v723
      %725 = vmatmul.bf16.gmra.mxu0 %v567
      %v726 = vpop.f32.mrf.mxu0
      %v727 = vadd.f32 %v302, %v726
      %v728 = vpop.f32.mrf.mxu0
      %v729 = vadd.f32 %v302, %v728
      %730 = vmatmul.bf16.gmra.mxu0 %v570
      %v731 = vpop.f32.mrf.mxu0
      %v732 = vadd.f32 %v302, %v731
      %v733 = vpop.f32.mrf.mxu0
      %v734 = vadd.f32 %v302, %v733
      %735 = vmatmul.bf16.gmra.mxu0 %v573
      %v736 = vpop.f32.mrf.mxu0
      %v737 = vadd.f32 %v302, %v736
      %v738 = vpop.f32.mrf.mxu0
      %v739 = vadd.f32 %v302, %v738
      %740 = vmatmul.bf16.gmra.mxu0 %v576
      %v741 = vpop.f32.mrf.mxu0
      %v742 = vadd.f32 %v302, %v741
      %v743 = vpop.f32.mrf.mxu0
      %v744 = vadd.f32 %v302, %v743
      %745 = vmatmul.bf16.gmra.mxu0 %v579
      %v746 = vpop.f32.mrf.mxu0
      %v747 = vadd.f32 %v302, %v746
      %v748 = vpop.f32.mrf.mxu0
      %v749 = vadd.f32 %v302, %v748
      %750 = vmatmul.bf16.gmra.mxu0 %v582
      %v751 = vpop.f32.mrf.mxu0
      %v752 = vadd.f32 %v302, %v751
      %v753 = vpop.f32.mrf.mxu0
      %v754 = vadd.f32 %v302, %v753
      %755 = vmatmul.bf16.gmra.mxu0 %v585
      %v756 = vpop.f32.mrf.mxu0
      %v757 = vadd.f32 %v302, %v756
      %v758 = vpop.f32.mrf.mxu0
      %v759 = vadd.f32 %v302, %v758
      %760 = vmatmul.bf16.gmra.mxu0 %v588
      %v761 = vpop.f32.mrf.mxu0
      %v762 = vadd.f32 %v302, %v761
      %v763 = vpop.f32.mrf.mxu0
      %v764 = vadd.f32 %v302, %v763
      %765 = vdwg.mxu0
      %vm766 = vcmp.gt.f32.partialorder %v607, 0.0
      %vm767 = vcmp.gt.f32.partialorder %v609, 0.0
      %vm768 = vcmp.gt.f32.partialorder %v612, 0.0
      %vm769 = vcmp.gt.f32.partialorder %v614, 0.0
      %vm770 = vcmp.gt.f32.partialorder %v617, 0.0
      %vm771 = vcmp.gt.f32.partialorder %v619, 0.0
      %vm772 = vcmp.gt.f32.partialorder %v622, 0.0
      %vm773 = vcmp.gt.f32.partialorder %v624, 0.0
      %vm774 = vcmp.gt.f32.partialorder %v627, 0.0
      %vm775 = vcmp.gt.f32.partialorder %v629, 0.0
      %vm776 = vcmp.gt.f32.partialorder %v632, 0.0
      %vm777 = vcmp.gt.f32.partialorder %v634, 0.0
      %vm778 = vcmp.gt.f32.partialorder %v637, 0.0
      %vm779 = vcmp.gt.f32.partialorder %v639, 0.0
      %vm780 = vcmp.gt.f32.partialorder %v642, 0.0
      %vm781 = vcmp.gt.f32.partialorder %v644, 0.0
      %vm782 = vcmp.gt.f32.partialorder %v647, 0.0
      %vm783 = vcmp.gt.f32.partialorder %v649, 0.0
      %vm784 = vcmp.gt.f32.partialorder %v652, 0.0
      %vm785 = vcmp.gt.f32.partialorder %v654, 0.0
      %vm786 = vcmp.gt.f32.partialorder %v657, 0.0
      %vm787 = vcmp.gt.f32.partialorder %v659, 0.0
      %vm788 = vcmp.gt.f32.partialorder %v662, 0.0
      %vm789 = vcmp.gt.f32.partialorder %v664, 0.0
      %vm790 = vcmp.gt.f32.partialorder %v667, 0.0
      %vm791 = vcmp.gt.f32.partialorder %v669, 0.0
      %vm792 = vcmp.gt.f32.partialorder %v672, 0.0
      %vm793 = vcmp.gt.f32.partialorder %v674, 0.0
      %vm794 = vcmp.gt.f32.partialorder %v677, 0.0
      %vm795 = vcmp.gt.f32.partialorder %v679, 0.0
      %vm796 = vcmp.gt.f32.partialorder %v682, 0.0
      %vm797 = vcmp.gt.f32.partialorder %v684, 0.0
      %vm798 = vcmp.gt.f32.partialorder %v687, 0.0
      %vm799 = vcmp.gt.f32.partialorder %v689, 0.0
      %vm800 = vcmp.gt.f32.partialorder %v692, 0.0
      %vm801 = vcmp.gt.f32.partialorder %v694, 0.0
      %vm802 = vcmp.gt.f32.partialorder %v697, 0.0
      %vm803 = vcmp.gt.f32.partialorder %v699, 0.0
      %vm804 = vcmp.gt.f32.partialorder %v702, 0.0
      %vm805 = vcmp.gt.f32.partialorder %v704, 0.0
      %vm806 = vcmp.gt.f32.partialorder %v707, 0.0
      %vm807 = vcmp.gt.f32.partialorder %v709, 0.0
      %vm808 = vcmp.gt.f32.partialorder %v712, 0.0
      %vm809 = vcmp.gt.f32.partialorder %v714, 0.0
      %vm810 = vcmp.gt.f32.partialorder %v717, 0.0
      %vm811 = vcmp.gt.f32.partialorder %v719, 0.0
      %vm812 = vcmp.gt.f32.partialorder %v722, 0.0
      %vm813 = vcmp.gt.f32.partialorder %v724, 0.0
      %vm814 = vcmp.gt.f32.partialorder %v727, 0.0
      %vm815 = vcmp.gt.f32.partialorder %v729, 0.0
      %vm816 = vcmp.gt.f32.partialorder %v732, 0.0
      %vm817 = vcmp.gt.f32.partialorder %v734, 0.0
      %vm818 = vcmp.gt.f32.partialorder %v737, 0.0
      %vm819 = vcmp.gt.f32.partialorder %v739, 0.0
      %vm820 = vcmp.gt.f32.partialorder %v742, 0.0
      %vm821 = vcmp.gt.f32.partialorder %v744, 0.0
      %vm822 = vcmp.gt.f32.partialorder %v747, 0.0
      %vm823 = vcmp.gt.f32.partialorder %v749, 0.0
      %vm824 = vcmp.gt.f32.partialorder %v752, 0.0
      %vm825 = vcmp.gt.f32.partialorder %v754, 0.0
      %vm826 = vcmp.gt.f32.partialorder %v757, 0.0
      %vm827 = vcmp.gt.f32.partialorder %v759, 0.0
      %vm828 = vcmp.gt.f32.partialorder %v762, 0.0
      %vm829 = vcmp.gt.f32.partialorder %v764, 0.0
      %v830 = vmin.f32 %v607, 0.0
      %v831 = vmin.f32 %v609, 0.0
      %v832 = vmin.f32 %v612, 0.0
      %v833 = vmin.f32 %v614, 0.0
      %v834 = vmin.f32 %v617, 0.0
      %v835 = vmin.f32 %v619, 0.0
      %v836 = vmin.f32 %v622, 0.0
      %v837 = vmin.f32 %v624, 0.0
      %v838 = vmin.f32 %v627, 0.0
      %v839 = vmin.f32 %v629, 0.0
      %v840 = vmin.f32 %v632, 0.0
      %v841 = vmin.f32 %v634, 0.0
      %v842 = vmin.f32 %v637, 0.0
      %v843 = vmin.f32 %v639, 0.0
      %v844 = vmin.f32 %v642, 0.0
      %v845 = vmin.f32 %v644, 0.0
      %v846 = vmin.f32 %v647, 0.0
      %v847 = vmin.f32 %v649, 0.0
      %v848 = vmin.f32 %v652, 0.0
      %v849 = vmin.f32 %v654, 0.0
      %v850 = vmin.f32 %v657, 0.0
      %v851 = vmin.f32 %v659, 0.0
      %v852 = vmin.f32 %v662, 0.0
      %v853 = vmin.f32 %v664, 0.0
      %v854 = vmin.f32 %v667, 0.0
      %v855 = vmin.f32 %v669, 0.0
      %v856 = vmin.f32 %v672, 0.0
      %v857 = vmin.f32 %v674, 0.0
      %v858 = vmin.f32 %v677, 0.0
      %v859 = vmin.f32 %v679, 0.0
      %v860 = vmin.f32 %v682, 0.0
      %v861 = vmin.f32 %v684, 0.0
      %v862 = vmin.f32 %v687, 0.0
      %v863 = vmin.f32 %v689, 0.0
      %v864 = vmin.f32 %v692, 0.0
      %v865 = vmin.f32 %v694, 0.0
      %v866 = vmin.f32 %v697, 0.0
      %v867 = vmin.f32 %v699, 0.0
      %v868 = vmin.f32 %v702, 0.0
      %v869 = vmin.f32 %v704, 0.0
      %v870 = vmin.f32 %v707, 0.0
      %v871 = vmin.f32 %v709, 0.0
      %v872 = vmin.f32 %v712, 0.0
      %v873 = vmin.f32 %v714, 0.0
      %v874 = vmin.f32 %v717, 0.0
      %v875 = vmin.f32 %v719, 0.0
      %v876 = vmin.f32 %v722, 0.0
      %v877 = vmin.f32 %v724, 0.0
      %v878 = vmin.f32 %v727, 0.0
      %v879 = vmin.f32 %v729, 0.0
      %v880 = vmin.f32 %v732, 0.0
      %v881 = vmin.f32 %v734, 0.0
      %v882 = vmin.f32 %v737, 0.0
      %v883 = vmin.f32 %v739, 0.0
      %v884 = vmin.f32 %v742, 0.0
      %v885 = vmin.f32 %v744, 0.0
      %v886 = vmin.f32 %v747, 0.0
      %v887 = vmin.f32 %v749, 0.0
      %v888 = vmin.f32 %v752, 0.0
      %v889 = vmin.f32 %v754, 0.0
      %v890 = vmin.f32 %v757, 0.0
      %v891 = vmin.f32 %v759, 0.0
      %v892 = vmin.f32 %v762, 0.0
      %v893 = vmin.f32 %v764, 0.0
      %v894 = vmul.f32 %v830, 1.442695
      %v895 = vpow.pop %v894
      %v896 = vmul.f32 %v831, 1.442695
      %v897 = vpow.pop %v896
      %v898 = vmul.f32 %v832, 1.442695
      %v899 = vpow.pop %v898
      %v900 = vmul.f32 %v833, 1.442695
      %v901 = vpow.pop %v900
      %v902 = vmul.f32 %v834, 1.442695
      %v903 = vpow.pop %v902
      %v904 = vmul.f32 %v835, 1.442695
      %v905 = vpow.pop %v904
      %v906 = vmul.f32 %v836, 1.442695
      %v907 = vpow.pop %v906
      %v908 = vmul.f32 %v837, 1.442695
      %v909 = vpow.pop %v908
      %v910 = vmul.f32 %v838, 1.442695
      %v911 = vpow.pop %v910
      %v912 = vmul.f32 %v839, 1.442695
      %v913 = vpow.pop %v912
      %v914 = vmul.f32 %v840, 1.442695
      %v915 = vpow.pop %v914
      %v916 = vmul.f32 %v841, 1.442695
      %v917 = vpow.pop %v916
      %v918 = vmul.f32 %v842, 1.442695
      %v919 = vpow.pop %v918
      %v920 = vmul.f32 %v843, 1.442695
      %v921 = vpow.pop %v920
      %v922 = vmul.f32 %v844, 1.442695
      %v923 = vpow.pop %v922
      %v924 = vmul.f32 %v845, 1.442695
      %v925 = vpow.pop %v924
      %v926 = vmul.f32 %v846, 1.442695
      %v927 = vpow.pop %v926
      %v928 = vmul.f32 %v847, 1.442695
      %v929 = vpow.pop %v928
      %v930 = vmul.f32 %v848, 1.442695
      %v931 = vpow.pop %v930
      %v932 = vmul.f32 %v849, 1.442695
      %v933 = vpow.pop %v932
      %v934 = vmul.f32 %v850, 1.442695
      %v935 = vpow.pop %v934
      %v936 = vmul.f32 %v851, 1.442695
      %v937 = vpow.pop %v936
      %v938 = vmul.f32 %v852, 1.442695
      %v939 = vpow.pop %v938
      %v940 = vmul.f32 %v853, 1.442695
      %v941 = vpow.pop %v940
      %v942 = vmul.f32 %v854, 1.442695
      %v943 = vpow.pop %v942
      %v944 = vmul.f32 %v855, 1.442695
      %v945 = vpow.pop %v944
      %v946 = vmul.f32 %v856, 1.442695
      %v947 = vpow.pop %v946
      %v948 = vmul.f32 %v857, 1.442695
      %v949 = vpow.pop %v948
      %v950 = vmul.f32 %v858, 1.442695
      %v951 = vpow.pop %v950
      %v952 = vmul.f32 %v859, 1.442695
      %v953 = vpow.pop %v952
      %v954 = vmul.f32 %v860, 1.442695
      %v955 = vpow.pop %v954
      %v956 = vmul.f32 %v861, 1.442695
      %v957 = vpow.pop %v956
      %v958 = vmul.f32 %v862, 1.442695
      %v959 = vpow.pop %v958
      %v960 = vmul.f32 %v863, 1.442695
      %v961 = vpow.pop %v960
      %v962 = vmul.f32 %v864, 1.442695
      %v963 = vpow.pop %v962
      %v964 = vmul.f32 %v865, 1.442695
      %v965 = vpow.pop %v964
      %v966 = vmul.f32 %v866, 1.442695
      %v967 = vpow.pop %v966
      %v968 = vmul.f32 %v867, 1.442695
      %v969 = vpow.pop %v968
      %v970 = vmul.f32 %v868, 1.442695
      %v971 = vpow.pop %v970
      %v972 = vmul.f32 %v869, 1.442695
      %v973 = vpow.pop %v972
      %v974 = vmul.f32 %v870, 1.442695
      %v975 = vpow.pop %v974
      %v976 = vmul.f32 %v871, 1.442695
      %v977 = vpow.pop %v976
      %v978 = vmul.f32 %v872, 1.442695
      %v979 = vpow.pop %v978
      %v980 = vmul.f32 %v873, 1.442695
      %v981 = vpow.pop %v980
      %v982 = vmul.f32 %v874, 1.442695
      %v983 = vpow.pop %v982
      %v984 = vmul.f32 %v875, 1.442695
      %v985 = vpow.pop %v984
      %v986 = vmul.f32 %v876, 1.442695
      %v987 = vpow.pop %v986
      %v988 = vmul.f32 %v877, 1.442695
      %v989 = vpow.pop %v988
      %v990 = vmul.f32 %v878, 1.442695
      %v991 = vpow.pop %v990
      %v992 = vmul.f32 %v879, 1.442695
      %v993 = vpow.pop %v992
      %v994 = vmul.f32 %v880, 1.442695
      %v995 = vpow.pop %v994
      %v996 = vmul.f32 %v881, 1.442695
      %v997 = vpow.pop %v996
      %v998 = vmul.f32 %v882, 1.442695
      %v999 = vpow.pop %v998
      %v1000 = vmul.f32 %v883, 1.442695
      %v1001 = vpow.pop %v1000
      %v1002 = vmul.f32 %v884, 1.442695
      %v1003 = vpow.pop %v1002
      %v1004 = vmul.f32 %v885, 1.442695
      %v1005 = vpow.pop %v1004
      %v1006 = vmul.f32 %v886, 1.442695
      %v1007 = vpow.pop %v1006
      %v1008 = vmul.f32 %v887, 1.442695
      %v1009 = vpow.pop %v1008
      %v1010 = vmul.f32 %v888, 1.442695
      %v1011 = vpow.pop %v1010
      %v1012 = vmul.f32 %v889, 1.442695
      %v1013 = vpow.pop %v1012
      %v1014 = vmul.f32 %v890, 1.442695
      %v1015 = vpow.pop %v1014
      %v1016 = vmul.f32 %v891, 1.442695
      %v1017 = vpow.pop %v1016
      %v1018 = vmul.f32 %v892, 1.442695
      %v1019 = vpow.pop %v1018
      %v1020 = vmul.f32 %v893, 1.442695
      %v1021 = vpow.pop %v1020
      %v1022 = vsub.f32 %v895, 1.0
      %v1023 = vsub.f32 %v897, 1.0
      %v1024 = vsub.f32 %v899, 1.0
      %v1025 = vsub.f32 %v901, 1.0
      %v1026 = vsub.f32 %v903, 1.0
      %v1027 = vsub.f32 %v905, 1.0
      %v1028 = vsub.f32 %v907, 1.0
      %v1029 = vsub.f32 %v909, 1.0
      %v1030 = vsub.f32 %v911, 1.0
      %v1031 = vsub.f32 %v913, 1.0
      %v1032 = vsub.f32 %v915, 1.0
      %v1033 = vsub.f32 %v917, 1.0
      %v1034 = vsub.f32 %v919, 1.0
      %v1035 = vsub.f32 %v921, 1.0
      %v1036 = vsub.f32 %v923, 1.0
      %v1037 = vsub.f32 %v925, 1.0
      %v1038 = vsub.f32 %v927, 1.0
      %v1039 = vsub.f32 %v929, 1.0
      %v1040 = vsub.f32 %v931, 1.0
      %v1041 = vsub.f32 %v933, 1.0
      %v1042 = vsub.f32 %v935, 1.0
      %v1043 = vsub.f32 %v937, 1.0
      %v1044 = vsub.f32 %v939, 1.0
      %v1045 = vsub.f32 %v941, 1.0
      %v1046 = vsub.f32 %v943, 1.0
      %v1047 = vsub.f32 %v945, 1.0
      %v1048 = vsub.f32 %v947, 1.0
      %v1049 = vsub.f32 %v949, 1.0
      %v1050 = vsub.f32 %v951, 1.0
      %v1051 = vsub.f32 %v953, 1.0
      %v1052 = vsub.f32 %v955, 1.0
      %v1053 = vsub.f32 %v957, 1.0
      %v1054 = vsub.f32 %v959, 1.0
      %v1055 = vsub.f32 %v961, 1.0
      %v1056 = vsub.f32 %v963, 1.0
      %v1057 = vsub.f32 %v965, 1.0
      %v1058 = vsub.f32 %v967, 1.0
      %v1059 = vsub.f32 %v969, 1.0
      %v1060 = vsub.f32 %v971, 1.0
      %v1061 = vsub.f32 %v973, 1.0
      %v1062 = vsub.f32 %v975, 1.0
      %v1063 = vsub.f32 %v977, 1.0
      %v1064 = vsub.f32 %v979, 1.0
      %v1065 = vsub.f32 %v981, 1.0
      %v1066 = vsub.f32 %v983, 1.0
      %v1067 = vsub.f32 %v985, 1.0
      %v1068 = vsub.f32 %v987, 1.0
      %v1069 = vsub.f32 %v989, 1.0
      %v1070 = vsub.f32 %v991, 1.0
      %v1071 = vsub.f32 %v993, 1.0
      %v1072 = vsub.f32 %v995, 1.0
      %v1073 = vsub.f32 %v997, 1.0
      %v1074 = vsub.f32 %v999, 1.0
      %v1075 = vsub.f32 %v1001, 1.0
      %v1076 = vsub.f32 %v1003, 1.0
      %v1077 = vsub.f32 %v1005, 1.0
      %v1078 = vsub.f32 %v1007, 1.0
      %v1079 = vsub.f32 %v1009, 1.0
      %v1080 = vsub.f32 %v1011, 1.0
      %v1081 = vsub.f32 %v1013, 1.0
      %v1082 = vsub.f32 %v1015, 1.0
      %v1083 = vsub.f32 %v1017, 1.0
      %v1084 = vsub.f32 %v1019, 1.0
      %v1085 = vsub.f32 %v1021, 1.0
      %v1086 = vsel %vm766, %v607, %v1022
      %v1087 = vsel %vm767, %v609, %v1023
      %v1088 = vsel %vm768, %v612, %v1024
      %v1089 = vsel %vm769, %v614, %v1025
      %v1090 = vsel %vm770, %v617, %v1026
      %v1091 = vsel %vm771, %v619, %v1027
      %v1092 = vsel %vm772, %v622, %v1028
      %v1093 = vsel %vm773, %v624, %v1029
      %v1094 = vsel %vm774, %v627, %v1030
      %v1095 = vsel %vm775, %v629, %v1031
      %v1096 = vsel %vm776, %v632, %v1032
      %v1097 = vsel %vm777, %v634, %v1033
      %v1098 = vsel %vm778, %v637, %v1034
      %v1099 = vsel %vm779, %v639, %v1035
      %v1100 = vsel %vm780, %v642, %v1036
      %v1101 = vsel %vm781, %v644, %v1037
      %v1102 = vsel %vm782, %v647, %v1038
      %v1103 = vsel %vm783, %v649, %v1039
      %v1104 = vsel %vm784, %v652, %v1040
      %v1105 = vsel %vm785, %v654, %v1041
      %v1106 = vsel %vm786, %v657, %v1042
      %v1107 = vsel %vm787, %v659, %v1043
      %v1108 = vsel %vm788, %v662, %v1044
      %v1109 = vsel %vm789, %v664, %v1045
      %v1110 = vsel %vm790, %v667, %v1046
      %v1111 = vsel %vm791, %v669, %v1047
      %v1112 = vsel %vm792, %v672, %v1048
      %v1113 = vsel %vm793, %v674, %v1049
      %v1114 = vsel %vm794, %v677, %v1050
      %v1115 = vsel %vm795, %v679, %v1051
      %v1116 = vsel %vm796, %v682, %v1052
      %v1117 = vsel %vm797, %v684, %v1053
      %v1118 = vsel %vm798, %v687, %v1054
      %v1119 = vsel %vm799, %v689, %v1055
      %v1120 = vsel %vm800, %v692, %v1056
      %v1121 = vsel %vm801, %v694, %v1057
      %v1122 = vsel %vm802, %v697, %v1058
      %v1123 = vsel %vm803, %v699, %v1059
      %v1124 = vsel %vm804, %v702, %v1060
      %v1125 = vsel %vm805, %v704, %v1061
      %v1126 = vsel %vm806, %v707, %v1062
      %v1127 = vsel %vm807, %v709, %v1063
      %v1128 = vsel %vm808, %v712, %v1064
      %v1129 = vsel %vm809, %v714, %v1065
      %v1130 = vsel %vm810, %v717, %v1066
      %v1131 = vsel %vm811, %v719, %v1067
      %v1132 = vsel %vm812, %v722, %v1068
      %v1133 = vsel %vm813, %v724, %v1069
      %v1134 = vsel %vm814, %v727, %v1070
      %v1135 = vsel %vm815, %v729, %v1071
      %v1136 = vsel %vm816, %v732, %v1072
      %v1137 = vsel %vm817, %v734, %v1073
      %v1138 = vsel %vm818, %v737, %v1074
      %v1139 = vsel %vm819, %v739, %v1075
      %v1140 = vsel %vm820, %v742, %v1076
      %v1141 = vsel %vm821, %v744, %v1077
      %v1142 = vsel %vm822, %v747, %v1078
      %v1143 = vsel %vm823, %v749, %v1079
      %v1144 = vsel %vm824, %v752, %v1080
      %v1145 = vsel %vm825, %v754, %v1081
      %v1146 = vsel %vm826, %v757, %v1082
      %v1147 = vsel %vm827, %v759, %v1083
      %v1148 = vsel %vm828, %v762, %v1084
      %v1149 = vsel %vm829, %v764, %v1085
      %v1150 = vpack.c.bf16 %v1086, %v1086
      %v1151 = vpack.c.bf16 %v1087, %v1087
      %v1152 = vpack.c.bf16 %v1088, %v1088
      %v1153 = vpack.c.bf16 %v1089, %v1089
      %v1154 = vpack.c.bf16 %v1090, %v1090
      %v1155 = vpack.c.bf16 %v1091, %v1091
      %v1156 = vpack.c.bf16 %v1092, %v1092
      %v1157 = vpack.c.bf16 %v1093, %v1093
      %v1158 = vpack.c.bf16 %v1094, %v1094
      %v1159 = vpack.c.bf16 %v1095, %v1095
      %v1160 = vpack.c.bf16 %v1096, %v1096
      %v1161 = vpack.c.bf16 %v1097, %v1097
      %v1162 = vpack.c.bf16 %v1098, %v1098
      %v1163 = vpack.c.bf16 %v1099, %v1099
      %v1164 = vpack.c.bf16 %v1100, %v1100
      %v1165 = vpack.c.bf16 %v1101, %v1101
      %v1166 = vpack.c.bf16 %v1102, %v1102
      %v1167 = vpack.c.bf16 %v1103, %v1103
      %v1168 = vpack.c.bf16 %v1104, %v1104
      %v1169 = vpack.c.bf16 %v1105, %v1105
      %v1170 = vpack.c.bf16 %v1106, %v1106
      %v1171 = vpack.c.bf16 %v1107, %v1107
      %v1172 = vpack.c.bf16 %v1108, %v1108
      %v1173 = vpack.c.bf16 %v1109, %v1109
      %v1174 = vpack.c.bf16 %v1110, %v1110
      %v1175 = vpack.c.bf16 %v1111, %v1111
      %v1176 = vpack.c.bf16 %v1112, %v1112
      %v1177 = vpack.c.bf16 %v1113, %v1113
      %v1178 = vpack.c.bf16 %v1114, %v1114
      %v1179 = vpack.c.bf16 %v1115, %v1115
      %v1180 = vpack.c.bf16 %v1116, %v1116
      %v1181 = vpack.c.bf16 %v1117, %v1117
      %v1182 = vpack.c.bf16 %v1118, %v1118
      %v1183 = vpack.c.bf16 %v1119, %v1119
      %v1184 = vpack.c.bf16 %v1120, %v1120
      %v1185 = vpack.c.bf16 %v1121, %v1121
      %v1186 = vpack.c.bf16 %v1122, %v1122
      %v1187 = vpack.c.bf16 %v1123, %v1123
      %v1188 = vpack.c.bf16 %v1124, %v1124
      %v1189 = vpack.c.bf16 %v1125, %v1125
      %v1190 = vpack.c.bf16 %v1126, %v1126
      %v1191 = vpack.c.bf16 %v1127, %v1127
      %v1192 = vpack.c.bf16 %v1128, %v1128
      %v1193 = vpack.c.bf16 %v1129, %v1129
      %v1194 = vpack.c.bf16 %v1130, %v1130
      %v1195 = vpack.c.bf16 %v1131, %v1131
      %v1196 = vpack.c.bf16 %v1132, %v1132
      %v1197 = vpack.c.bf16 %v1133, %v1133
      %v1198 = vpack.c.bf16 %v1134, %v1134
      %v1199 = vpack.c.bf16 %v1135, %v1135
      %v1200 = vpack.c.bf16 %v1136, %v1136
      %v1201 = vpack.c.bf16 %v1137, %v1137
      %v1202 = vpack.c.bf16 %v1138, %v1138
      %v1203 = vpack.c.bf16 %v1139, %v1139
      %v1204 = vpack.c.bf16 %v1140, %v1140
      %v1205 = vpack.c.bf16 %v1141, %v1141
      %v1206 = vpack.c.bf16 %v1142, %v1142
      %v1207 = vpack.c.bf16 %v1143, %v1143
      %v1208 = vpack.c.bf16 %v1144, %v1144
      %v1209 = vpack.c.bf16 %v1145, %v1145
      %v1210 = vpack.c.bf16 %v1146, %v1146
      %v1211 = vpack.c.bf16 %v1147, %v1147
      %v1212 = vpack.c.bf16 %v1148, %v1148
      %v1213 = vpack.c.bf16 %v1149, %v1149
      %vm1214 = vcmask 257024
      %1215 = vst.msk [vmem:[%s223] sm:$0xf] %vm1214, %v1150
      %1216 = vst.msk [vmem:[%s223 + $0x4] sm:$0xf] %vm1214, %v1151
      %1217 = vst.msk [vmem:[%s223 + $0x8] sm:$0xf] %vm1214, %v1152
      %1218 = vst.msk [vmem:[%s223 + $0xc] sm:$0xf] %vm1214, %v1153
      %1219 = vst.msk [vmem:[%s223 + $0x10] sm:$0xf] %vm1214, %v1154
      %1220 = vst.msk [vmem:[%s223 + $0x14] sm:$0xf] %vm1214, %v1155
      %1221 = vst.msk [vmem:[%s223 + $0x18] sm:$0xf] %vm1214, %v1156
      %1222 = vst.msk [vmem:[%s223 + $0x1c] sm:$0xf] %vm1214, %v1157
      %1223 = vst.msk [vmem:[%s223 + $0x20] sm:$0xf] %vm1214, %v1158
      %1224 = vst.msk [vmem:[%s223 + $0x24] sm:$0xf] %vm1214, %v1159
      %1225 = vst.msk [vmem:[%s223 + $0x28] sm:$0xf] %vm1214, %v1160
      %1226 = vst.msk [vmem:[%s223 + $0x2c] sm:$0xf] %vm1214, %v1161
      %1227 = vst.msk [vmem:[%s223 + $0x30] sm:$0xf] %vm1214, %v1162
      %1228 = vst.msk [vmem:[%s223 + $0x34] sm:$0xf] %vm1214, %v1163
      %1229 = vst.msk [vmem:[%s223 + $0x38] sm:$0xf] %vm1214, %v1164
      %1230 = vst.msk [vmem:[%s223 + $0x3c] sm:$0xf] %vm1214, %v1165
      %1231 = vst.msk [vmem:[%s223 + $0x40] sm:$0xf] %vm1214, %v1166
      %1232 = vst.msk [vmem:[%s223 + $0x44] sm:$0xf] %vm1214, %v1167
      %1233 = vst.msk [vmem:[%s223 + $0x48] sm:$0xf] %vm1214, %v1168
      %1234 = vst.msk [vmem:[%s223 + $0x4c] sm:$0xf] %vm1214, %v1169
      %1235 = vst.msk [vmem:[%s223 + $0x50] sm:$0xf] %vm1214, %v1170
      %1236 = vst.msk [vmem:[%s223 + $0x54] sm:$0xf] %vm1214, %v1171
      %1237 = vst.msk [vmem:[%s223 + $0x58] sm:$0xf] %vm1214, %v1172
      %1238 = vst.msk [vmem:[%s223 + $0x5c] sm:$0xf] %vm1214, %v1173
      %1239 = vst.msk [vmem:[%s223 + $0x60] sm:$0xf] %vm1214, %v1174
      %1240 = vst.msk [vmem:[%s223 + $0x64] sm:$0xf] %vm1214, %v1175
      %1241 = vst.msk [vmem:[%s223 + $0x68] sm:$0xf] %vm1214, %v1176
      %1242 = vst.msk [vmem:[%s223 + $0x6c] sm:$0xf] %vm1214, %v1177
      %1243 = vst.msk [vmem:[%s223 + $0x70] sm:$0xf] %vm1214, %v1178
      %1244 = vst.msk [vmem:[%s223 + $0x74] sm:$0xf] %vm1214, %v1179
      %1245 = vst.msk [vmem:[%s223 + $0x78] sm:$0xf] %vm1214, %v1180
      %1246 = vst.msk [vmem:[%s223 + $0x7c] sm:$0xf] %vm1214, %v1181
      %1247 = vst.msk [vmem:[%s223 + $0x80] sm:$0xf] %vm1214, %v1182
      %1248 = vst.msk [vmem:[%s223 + $0x84] sm:$0xf] %vm1214, %v1183
      %1249 = vst.msk [vmem:[%s223 + $0x88] sm:$0xf] %vm1214, %v1184
      %1250 = vst.msk [vmem:[%s223 + $0x8c] sm:$0xf] %vm1214, %v1185
      %1251 = vst.msk [vmem:[%s223 + $0x90] sm:$0xf] %vm1214, %v1186
      %1252 = vst.msk [vmem:[%s223 + $0x94] sm:$0xf] %vm1214, %v1187
      %1253 = vst.msk [vmem:[%s223 + $0x98] sm:$0xf] %vm1214, %v1188
      %1254 = vst.msk [vmem:[%s223 + $0x9c] sm:$0xf] %vm1214, %v1189
      %1255 = vst.msk [vmem:[%s223 + $0xa0] sm:$0xf] %vm1214, %v1190
      %1256 = vst.msk [vmem:[%s223 + $0xa4] sm:$0xf] %vm1214, %v1191
      %1257 = vst.msk [vmem:[%s223 + $0xa8] sm:$0xf] %vm1214, %v1192
      %1258 = vst.msk [vmem:[%s223 + $0xac] sm:$0xf] %vm1214, %v1193
      %1259 = vst.msk [vmem:[%s223 + $0xb0] sm:$0xf] %vm1214, %v1194
      %1260 = vst.msk [vmem:[%s223 + $0xb4] sm:$0xf] %vm1214, %v1195
      %1261 = vst.msk [vmem:[%s223 + $0xb8] sm:$0xf] %vm1214, %v1196
      %1262 = vst.msk [vmem:[%s223 + $0xbc] sm:$0xf] %vm1214, %v1197
      %1263 = vst.msk [vmem:[%s223 + $0xc0] sm:$0xf] %vm1214, %v1198
      %1264 = vst.msk [vmem:[%s223 + $0xc4] sm:$0xf] %vm1214, %v1199
      %1265 = vst.msk [vmem:[%s223 + $0xc8] sm:$0xf] %vm1214, %v1200
      %1266 = vst.msk [vmem:[%s223 + $0xcc] sm:$0xf] %vm1214, %v1201
      %1267 = vst.msk [vmem:[%s223 + $0xd0] sm:$0xf] %vm1214, %v1202
      %1268 = vst.msk [vmem:[%s223 + $0xd4] sm:$0xf] %vm1214, %v1203
      %1269 = vst.msk [vmem:[%s223 + $0xd8] sm:$0xf] %vm1214, %v1204
      %1270 = vst.msk [vmem:[%s223 + $0xdc] sm:$0xf] %vm1214, %v1205
      %1271 = vst.msk [vmem:[%s223 + $0xe0] sm:$0xf] %vm1214, %v1206
      %1272 = vst.msk [vmem:[%s223 + $0xe4] sm:$0xf] %vm1214, %v1207
      %1273 = vst.msk [vmem:[%s223 + $0xe8] sm:$0xf] %vm1214, %v1208
      %1274 = vst.msk [vmem:[%s223 + $0xec] sm:$0xf] %vm1214, %v1209
      %1275 = vst.msk [vmem:[%s223 + $0xf0] sm:$0xf] %vm1214, %v1210
      %1276 = vst.msk [vmem:[%s223 + $0xf4] sm:$0xf] %vm1214, %v1211
      %1277 = vst.msk [vmem:[%s223 + $0xf8] sm:$0xf] %vm1214, %v1212
      %1278 = vst.msk [vmem:[%s223 + $0xfc] sm:$0xf] %vm1214, %v1213
      %s1279 = smul.u32 64, %s18
      %p1280 = scmp.lt.s32.totalorder %s1279, 255
      %s1281 = scalar_select %p1280, %s1279, 255
      %p1282 = scmp.lt.s32.totalorder %s19, 0
      %s1283 = scalar_select %p1282, %s19, 0
      %s1284 = sadd.s32 %s1283, %s1281
      %s1285 = smul.addr %s1284, 4
      %s1286 = scalar_lea.vmem %s3, %s1285
      // Predicated region
      $region33: #{lapgan_discriminator_level3.4} parent=31 // pred_check
        %p1287 = pneg %p124
      $region34: #{lapgan_discriminator_level3.4} parent=31 // pred_check_branch
        %1289 = sbr.rel (%p1287) target = $region36
      $region35: #{lapgan_discriminator_level3.4} parent=31 // pred_region
        %s1290 = smul.u32 64, %s18
      $region36: #{lapgan_discriminator_level3.4} parent=31 // pred_fallthru
        _
    $region32: #{lapgan_discriminator_level3.4} parent=5 // pred_fallthru
      _
    %p1291 = scmp.le.s32.totalorder 2, %s9
    // Predicated region
    $region37: #{lapgan_discriminator_level3.4} parent=5 // pred_check
      %p1292 = pneg %p1291
    $region38: #{lapgan_discriminator_level3.4} parent=5 // pred_check_branch
      %1294 = sbr.rel (%p1292) target = $region40
    $region39: #{lapgan_discriminator_level3.4} parent=5 // pred_region
      %s1295 = ssub.s32 %s9, 2
      // Predicated region
      $region41: #{lapgan_discriminator_level3.4} parent=39 // pred_check
        %p1296 = pneg %p130
      $region42: #{lapgan_discriminator_level3.4} parent=39 // pred_check_branch
        %1298 = sbr.rel (%p1296) target = $region44
      $region43: #{lapgan_discriminator_level3.4} parent=39 // pred_region
        %s1299 = smul.u32 64, %s20
        %p1300 = scmp.lt.s32.totalorder %s1299, 255
        %s1301 = scalar_select %p1300, %s1299, 255
        %p1302 = scmp.lt.s32.totalorder %s21, 0
        %s1303 = scalar_select %p1302, %s21, 0
        %s1304 = sadd.s32 %s1303, %s1301
        %s1305 = smul.addr %s1304, 4
        %s1306 = scalar_lea.vmem %s3, %s1305
      $region44: #{lapgan_discriminator_level3.4} parent=39 // pred_fallthru
        _
    $region40: #{lapgan_discriminator_level3.4} parent=5 // pred_fallthru
      _
  $region6: #{lapgan_discriminator_level3.4} parent=0 // loop_footer
    %s13 = sadd.s32 1, %s9
  $region7: #{lapgan_discriminator_level3.4} parent=0 // loop_footer_branch
    %8 = sbr.rel target = $region3
  $region8: #{lapgan_discriminator_level3.4} parent=0 // loop_exit
    _

// kernel: lapgan_discriminator_level3.5
$region0: #{lapgan_discriminator_level3.5}
  #allocation0 [shape = 'u32[]', space=smem, size = 0x4, offset = 0x4, fixed_abs, tag = 'smem constant byte address 0x4 - core index']
  #allocation1 [shape = 'u32[72,128]{1,0:T(1,128)}', space=vmem, size = 0x9000, scoped, tag = 'internal scratch']
  %s0 = inlined_call_operand.vmem [shape: bf16[512,288], index: 0, kind: input, shape index: {}]
  %s1 = inlined_call_operand.vmem [shape: bf16[288,64], index: 1, kind: input, shape index: {}]
  %s2 = inlined_call_operand.vmem [shape: f32[1,64], index: 2, kind: input, shape index: {}]
  %s3 = inlined_call_operand.vmem [shape: bf16[512,64], index: 3, kind: output, shape index: {}]
  %s4 = sld [smem:[#allocation0]]
  $region45: #{lapgan_discriminator_level3.5} parent=0
    _
  %s6 = ssub.s32 1, %s4
  %s7 = scalar_select 0, %s6, %s4
  loop: start=0, step=1, limit=4
  $region2: #{lapgan_discriminator_level3.5} parent=0 // loop_pre_header
    _
  $region3: #{lapgan_discriminator_level3.5} parent=0 // loop_header
    %s9 = sphi 0, %s13
    %p10 = scmp.ge.s32.totalorder %s9, 4
    %s16 = sphi 0, %s28
    %s17 = sphi 0, %s24
    %s18 = sphi 0, %s16
    %s19 = sphi 0, %s17
    %s20 = sphi 0, %s18
    %s21 = sphi 0, %s19
    %s31 = sphi 0, %s33
    %s34 = sphi 0, %s31
    %s35 = sphi 0, %s34
    %s51 = sphi 0, %s35
    %s57 = sphi 0, %s59
    %s60 = sphi 0, %s57
    %s61 = sphi 0, %s60
    %s77 = sphi 0, %s61
    %s83 = sphi 0, %s85
    %s86 = sphi 0, %s83
    %s87 = sphi 0, %s86
    %s103 = sphi 0, %s87
    %s111 = sphi 0, %s113
    %s114 = sphi 0, %s111
    %s115 = sphi 0, %s114
    %s131 = sphi 0, %s115
  $region4: #{lapgan_discriminator_level3.5} parent=0 // loop_header_branch
    %12 = sbr.rel (%p10) target = $region8
  $region5: #{lapgan_discriminator_level3.5} parent=0 // loop_body
    %s14 = ssub.s32 %s9, 1
    %s15 = ssub.s32 %s9, 2
    %s22 = sadd.s32 1, %s17
    %p23 = scmp.ge.s32.totalorder %s22, 1
    %s24 = scalar_select %p23, 0, %s22
    %s25 = sadd.s32 1, %s16
    %s26 = scalar_select %p23, %s25, %s16
    %p27 = scmp.ge.s32.totalorder %s26, 2
    %s28 = scalar_select %p27, 0, %s26
    %s29 = ssub.s32 %s16, %s28
    %p30 = scmp.eq.s32.totalorder %s29, 0
    %s32 = sadd.s32 %s31, 1
    %s33 = scalar_select %p30, %s31, %s32
    %p36 = pneg %p30
    %p37 = scmp.eq.s32.totalorder %s9, 1
    %p38 = por %p36, %p37
    %p39 = scmp.ne.s32.totalorder %s31, %s34
    %p40 = scmp.eq.s32.totalorder %s9, 0
    %p41 = por %p39, %p40
    %p42 = scmp.ne.s32.totalorder %s31, %s34
    %p43 = scmp.eq.s32.totalorder %s14, 1
    %p44 = por %p42, %p43
    %p45 = scmp.ne.s32.totalorder %s34, %s35
    %p46 = scmp.eq.s32.totalorder %s14, 0
    %p47 = por %p45, %p46
    %p48 = scmp.ne.s32.totalorder %s34, %s35
    %p49 = scmp.eq.s32.totalorder %s15, 1
    %p50 = por %p48, %p49
    %p52 = scmp.ne.s32.totalorder %s35, %s51
    %p53 = scmp.eq.s32.totalorder %s15, 0
    %p54 = por %p52, %p53
    %s55 = ssub.s32 %s17, %s24
    %p56 = scmp.eq.s32.totalorder %s55, 0
    %s58 = sadd.s32 %s57, 1
    %s59 = scalar_select %p56, %s57, %s58
    %p62 = pneg %p56
    %p63 = scmp.eq.s32.totalorder %s9, 1
    %p64 = por %p62, %p63
    %p65 = scmp.ne.s32.totalorder %s57, %s60
    %p66 = scmp.eq.s32.totalorder %s9, 0
    %p67 = por %p65, %p66
    %p68 = scmp.ne.s32.totalorder %s57, %s60
    %p69 = scmp.eq.s32.totalorder %s14, 1
    %p70 = por %p68, %p69
    %p71 = scmp.ne.s32.totalorder %s60, %s61
    %p72 = scmp.eq.s32.totalorder %s14, 0
    %p73 = por %p71, %p72
    %p74 = scmp.ne.s32.totalorder %s60, %s61
    %p75 = scmp.eq.s32.totalorder %s15, 1
    %p76 = por %p74, %p75
    %p78 = scmp.ne.s32.totalorder %s61, %s77
    %p79 = scmp.eq.s32.totalorder %s15, 0
    %p80 = por %p78, %p79
    %s81 = ssub.s32 %s17, %s24
    %p82 = scmp.eq.s32.totalorder %s81, 0
    %s84 = sadd.s32 %s83, 1
    %s85 = scalar_select %p82, %s83, %s84
    %p88 = pneg %p82
    %p89 = scmp.eq.s32.totalorder %s9, 1
    %p90 = por %p88, %p89
    %p91 = scmp.ne.s32.totalorder %s83, %s86
    %p92 = scmp.eq.s32.totalorder %s9, 0
    %p93 = por %p91, %p92
    %p94 = scmp.ne.s32.totalorder %s83, %s86
    %p95 = scmp.eq.s32.totalorder %s14, 1
    %p96 = por %p94, %p95
    %p97 = scmp.ne.s32.totalorder %s86, %s87
    %p98 = scmp.eq.s32.totalorder %s14, 0
    %p99 = por %p97, %p98
    %p100 = scmp.ne.s32.totalorder %s86, %s87
    %p101 = scmp.eq.s32.totalorder %s15, 1
    %p102 = por %p100, %p101
    %p104 = scmp.ne.s32.totalorder %s87, %s103
    %p105 = scmp.eq.s32.totalorder %s15, 0
    %p106 = por %p104, %p105
    %s107 = ssub.s32 %s16, %s28
    %s108 = ssub.s32 %s17, %s24
    %s109 = sor.u32 %s107, %s108
    %p110 = scmp.eq.s32.totalorder %s109, 0
    %s112 = sadd.s32 %s111, 1
    %s113 = scalar_select %p110, %s111, %s112
    %p116 = pneg %p110
    %p117 = scmp.eq.s32.totalorder %s9, 1
    %p118 = por %p116, %p117
    %p119 = scmp.ne.s32.totalorder %s111, %s114
    %p120 = scmp.eq.s32.totalorder %s9, 0
    %p121 = por %p119, %p120
    %p122 = scmp.ne.s32.totalorder %s111, %s114
    %p123 = scmp.eq.s32.totalorder %s14, 1
    %p124 = por %p122, %p123
    %p125 = scmp.ne.s32.totalorder %s114, %s115
    %p126 = scmp.eq.s32.totalorder %s14, 0
    %p127 = por %p125, %p126
    %p128 = scmp.ne.s32.totalorder %s114, %s115
    %p129 = scmp.eq.s32.totalorder %s15, 1
    %p130 = por %p128, %p129
    %p132 = scmp.ne.s32.totalorder %s115, %s131
    %p133 = scmp.eq.s32.totalorder %s15, 0
    %p134 = por %p132, %p133
    %p135 = scmp.le.s32.totalorder 1, %s9
    %p136 = scmp.lt.s32.totalorder %s9, 3
    %p137 = pnand %p135, %p136
    %p138 = pneg %p137
    // Predicated region
    $region9: #{lapgan_discriminator_level3.5} parent=5 // pred_check
      _
    $region10: #{lapgan_discriminator_level3.5} parent=5 // pred_check_branch
      %140 = sbr.rel (%p137) target = $region12
    $region11: #{lapgan_discriminator_level3.5} parent=5 // pred_region
      %s141 = ssub.s32 %s9, 1
      // Predicated region
      $region13: #{lapgan_discriminator_level3.5} parent=11 // pred_check
        %p142 = pneg %p73
      $region14: #{lapgan_discriminator_level3.5} parent=11 // pred_check_branch
        %144 = sbr.rel (%p142) target = $region16
      $region15: #{lapgan_discriminator_level3.5} parent=11 // pred_region
        %p145 = scmp.lt.s32.totalorder %s19, 0
        %s146 = scalar_select %p145, %s19, 0
        %s147 = smul.addr %s146, 4
        %s148 = scalar_lea.vmem %s1, %s147
      $region16: #{lapgan_discriminator_level3.5} parent=11 // pred_fallthru
        _
      // Predicated region
      $region17: #{lapgan_discriminator_level3.5} parent=11 // pred_check
        %p149 = pneg %p99
      $region18: #{lapgan_discriminator_level3.5} parent=11 // pred_check_branch
        %151 = sbr.rel (%p149) target = $region20
      $region19: #{lapgan_discriminator_level3.5} parent=11 // pred_region
        %p152 = scmp.lt.s32.totalorder %s19, 0
        %s153 = scalar_select %p152, %s19, 0
        %s154 = scalar_lea.vmem %s2, %s153
      $region20: #{lapgan_discriminator_level3.5} parent=11 // pred_fallthru
        _
    $region12: #{lapgan_discriminator_level3.5} parent=5 // pred_fallthru
      _
    %p155 = scmp.lt.s32.totalorder %s9, 2
    // Predicated region
    $region21: #{lapgan_discriminator_level3.5} parent=5 // pred_check
      %p156 = pneg %p155
    $region22: #{lapgan_discriminator_level3.5} parent=5 // pred_check_branch
      %158 = sbr.rel (%p156) target = $region24
    $region23: #{lapgan_discriminator_level3.5} parent=5 // pred_region
      // Predicated region
      $region25: #{lapgan_discriminator_level3.5} parent=23 // pred_check
        %p159 = pneg %p41
      $region26: #{lapgan_discriminator_level3.5} parent=23 // pred_check_branch
        %161 = sbr.rel (%p159) target = $region28
      $region27: #{lapgan_discriminator_level3.5} parent=23 // pred_region
        %s162 = smul.u32 32, %s16
        %p163 = scmp.lt.s32.totalorder %s162, 63
        %s164 = scalar_select %p163, %s162, 63
        %s165 = smul.addr %s164, 3
        %s166 = smul.addr %s165, 4
        %s167 = scalar_lea.vmem %s0, %s166
        %s168 = smul.u32 32, %s16
      $region28: #{lapgan_discriminator_level3.5} parent=23 // pred_fallthru
        _
    $region24: #{lapgan_discriminator_level3.5} parent=5 // pred_fallthru
      _
    %p169 = scmp.le.s32.totalorder 1, %s9
    %p170 = scmp.lt.s32.totalorder %s9, 3
    %p171 = pnand %p169, %p170
    %p172 = pneg %p171
    // Predicated region
    $region29: #{lapgan_discriminator_level3.5} parent=5 // pred_check
      _
    $region30: #{lapgan_discriminator_level3.5} parent=5 // pred_check_branch
      %174 = sbr.rel (%p171) target = $region32
    $region31: #{lapgan_discriminator_level3.5} parent=5 // pred_region
      %s175 = ssub.s32 %s9, 1
      %s176 = smul.u32 32, %s18
      %p177 = scmp.lt.s32.totalorder %s176, 63
      %s178 = scalar_select %p177, %s176, 63
      %s179 = smul.addr %s178, 3
      %s180 = smul.addr %s179, 4
      %s181 = scalar_lea.vmem %s0, %s180
      %p182 = pneg %p47
      %p183 = pneg %p44
      %p184 = scmp.lt.s32.totalorder %s19, 0
      %s185 = scalar_select %p184, %s19, 0
      %s186 = smul.addr %s185, 4
      %s187 = scalar_lea.vmem %s1, %s186
      %p188 = pneg %p73
      %p189 = pneg %p70
      %p190 = scmp.lt.s32.totalorder %s19, 0
      %s191 = scalar_select %p190, %s19, 0
      %s192 = scalar_lea.vmem %s2, %s191
      %p193 = pneg %p99
      %p194 = pneg %p96
      %p195 = pneg %p127
      %p196 = pneg %p124
      %s197 = smul.u32 32, %s18
      %p198 = scmp.lt.s32.totalorder %s197, 63
      %s199 = scalar_select %p198, %s197, 63
      %p200 = scmp.lt.s32.totalorder %s19, 0
      %s201 = scalar_select %p200, %s19, 0
      %s202 = sadd.s32 %s201, %s199
      %s203 = smul.addr %s202, 4
      %s204 = scalar_lea.vmem %s3, %s203
      %s205 = smul.u32 32, %s18
      %p206 = scmp.lt.s32.totalorder %s205, 63
      %s207 = scalar_select %p206, %s205, 63
      %s208 = smul.addr %s207, 3
      %s209 = smul.addr %s208, 4
      %s210 = scalar_lea.vmem %s0, %s209
      %s211 = smul.u32 32, %s18
      %p212 = scmp.lt.s32.totalorder %s19, 0
      %s213 = scalar_select %p212, %s19, 0
      %s214 = smul.addr %s213, 4
      %s215 = scalar_lea.vmem %s1, %s214
      %p216 = scmp.lt.s32.totalorder %s19, 0
      %s217 = scalar_select %p216, %s19, 0
      %s218 = scalar_lea.vmem %s2, %s217
      %s219 = smul.u32 32, %s18
      %p220 = scmp.lt.s32.totalorder %s219, 63
      %s221 = scalar_select %p220, %s219, 63
      %p222 = scmp.lt.s32.totalorder %s19, 0
      %s223 = scalar_select %p222, %s19, 0
      %s224 = sadd.s32 %s223, %s221
      %s225 = smul.addr %s224, 4
      %s226 = scalar_lea.vmem %s3, %s225
      %s227 = smul.u32 32, %s18
      %v229 = vld [vmem:[%s210] sm:$0xff]
      %v230 = vld [vmem:[%s210 + $0x8] sm:$0xf]
      %v231 = vld [vmem:[%s210 + $0xc] sm:$0xff]
      %v232 = vld [vmem:[%s210 + $0x14] sm:$0xf]
      %v233 = vld [vmem:[%s210 + $0x18] sm:$0xff]
      %v234 = vld [vmem:[%s210 + $0x20] sm:$0xf]
      %v235 = vld [vmem:[%s210 + $0x24] sm:$0xff]
      %v236 = vld [vmem:[%s210 + $0x2c] sm:$0xf]
      %v237 = vld [vmem:[%s210 + $0x30] sm:$0xff]
      %v238 = vld [vmem:[%s210 + $0x38] sm:$0xf]
      %v239 = vld [vmem:[%s210 + $0x3c] sm:$0xff]
      %v240 = vld [vmem:[%s210 + $0x44] sm:$0xf]
      %v241 = vld [vmem:[%s210 + $0x48] sm:$0xff]
      %v242 = vld [vmem:[%s210 + $0x50] sm:$0xf]
      %v243 = vld [vmem:[%s210 + $0x54] sm:$0xff]
      %v244 = vld [vmem:[%s210 + $0x5c] sm:$0xf]
      %v245 = vld [vmem:[%s210 + $0x60] sm:$0xff]
      %v246 = vld [vmem:[%s210 + $0x68] sm:$0xf]
      %v247 = vld [vmem:[%s210 + $0x6c] sm:$0xff]
      %v248 = vld [vmem:[%s210 + $0x74] sm:$0xf]
      %v249 = vld [vmem:[%s210 + $0x78] sm:$0xff]
      %v250 = vld [vmem:[%s210 + $0x80] sm:$0xf]
      %v251 = vld [vmem:[%s210 + $0x84] sm:$0xff]
      %v252 = vld [vmem:[%s210 + $0x8c] sm:$0xf]
      %v253 = vld [vmem:[%s210 + $0x90] sm:$0xff]
      %v254 = vld [vmem:[%s210 + $0x98] sm:$0xf]
      %v255 = vld [vmem:[%s210 + $0x9c] sm:$0xff]
      %v256 = vld [vmem:[%s210 + $0xa4] sm:$0xf]
      %v257 = vld [vmem:[%s210 + $0xa8] sm:$0xff]
      %v258 = vld [vmem:[%s210 + $0xb0] sm:$0xf]
      %v259 = vld [vmem:[%s210 + $0xb4] sm:$0xff]
      %v260 = vld [vmem:[%s210 + $0xbc] sm:$0xf]
      %v261 = vld [vmem:[%s210 + $0xc0] sm:$0xff]
      %v262 = vld [vmem:[%s210 + $0xc8] sm:$0xf]
      %v263 = vld [vmem:[%s210 + $0xcc] sm:$0xff]
      %v264 = vld [vmem:[%s210 + $0xd4] sm:$0xf]
      %v265 = vld [vmem:[%s210 + $0xd8] sm:$0xff]
      %v266 = vld [vmem:[%s210 + $0xe0] sm:$0xf]
      %v267 = vld [vmem:[%s210 + $0xe4] sm:$0xff]
      %v268 = vld [vmem:[%s210 + $0xec] sm:$0xf]
      %v269 = vld [vmem:[%s210 + $0xf0] sm:$0xff]
      %v270 = vld [vmem:[%s210 + $0xf8] sm:$0xf]
      %v271 = vld [vmem:[%s210 + $0xfc] sm:$0xff]
      %v272 = vld [vmem:[%s210 + $0x104] sm:$0xf]
      %v273 = vld [vmem:[%s210 + $0x108] sm:$0xff]
      %v274 = vld [vmem:[%s210 + $0x110] sm:$0xf]
      %v275 = vld [vmem:[%s210 + $0x114] sm:$0xff]
      %v276 = vld [vmem:[%s210 + $0x11c] sm:$0xf]
      %v277 = vld [vmem:[%s210 + $0x120] sm:$0xff]
      %v278 = vld [vmem:[%s210 + $0x128] sm:$0xf]
      %v279 = vld [vmem:[%s210 + $0x12c] sm:$0xff]
      %v280 = vld [vmem:[%s210 + $0x134] sm:$0xf]
      %v281 = vld [vmem:[%s210 + $0x138] sm:$0xff]
      %v282 = vld [vmem:[%s210 + $0x140] sm:$0xf]
      %v283 = vld [vmem:[%s210 + $0x144] sm:$0xff]
      %v284 = vld [vmem:[%s210 + $0x14c] sm:$0xf]
      %v285 = vld [vmem:[%s210 + $0x150] sm:$0xff]
      %v286 = vld [vmem:[%s210 + $0x158] sm:$0xf]
      %v287 = vld [vmem:[%s210 + $0x15c] sm:$0xff]
      %v288 = vld [vmem:[%s210 + $0x164] sm:$0xf]
      %v289 = vld [vmem:[%s210 + $0x168] sm:$0xff]
      %v290 = vld [vmem:[%s210 + $0x170] sm:$0xf]
      %v291 = vld [vmem:[%s210 + $0x174] sm:$0xff]
      %v292 = vld [vmem:[%s210 + $0x17c] sm:$0xf]
      %v293 = vld [vmem:[%s215] sm:$0xf]
      %v294 = vld [vmem:[%s215 + $0x4] sm:$0xf]
      %v295 = vld [vmem:[%s215 + $0x8] sm:$0xf]
      %v296 = vld [vmem:[%s215 + $0xc] sm:$0xf]
      %v297 = vld [vmem:[%s215 + $0x10] sm:$0xf]
      %v298 = vld [vmem:[%s215 + $0x14] sm:$0xf]
      %v299 = vld [vmem:[%s215 + $0x18] sm:$0xf]
      %v300 = vld [vmem:[%s215 + $0x1c] sm:$0xf]
      %v301 = vld [vmem:[%s215 + $0x20] sm:$0xf]
      %v302 = vld [vmem:[%s215 + $0x24] sm:$0xf]
      %v303 = vld [vmem:[%s215 + $0x28] sm:$0xf]
      %v304 = vld [vmem:[%s215 + $0x2c] sm:$0xf]
      %v305 = vld [vmem:[%s215 + $0x30] sm:$0xf]
      %v306 = vld [vmem:[%s215 + $0x34] sm:$0xf]
      %v307 = vld [vmem:[%s215 + $0x38] sm:$0xf]
      %v308 = vld [vmem:[%s215 + $0x3c] sm:$0xf]
      %v309 = vld [vmem:[%s215 + $0x40] sm:$0xf]
      %v310 = vld [vmem:[%s215 + $0x44] sm:$0xf]
      %v311 = vld [vmem:[%s215 + $0x48] sm:$0xf]
      %v312 = vld [vmem:[%s215 + $0x4c] sm:$0xf]
      %v313 = vld [vmem:[%s215 + $0x50] sm:$0xf]
      %v314 = vld [vmem:[%s215 + $0x54] sm:$0xf]
      %v315 = vld [vmem:[%s215 + $0x58] sm:$0xf]
      %v316 = vld [vmem:[%s215 + $0x5c] sm:$0xf]
      %v317 = vld [vmem:[%s215 + $0x60] sm:$0xf]
      %v318 = vld [vmem:[%s215 + $0x64] sm:$0xf]
      %v319 = vld [vmem:[%s215 + $0x68] sm:$0xf]
      %v320 = vld [vmem:[%s215 + $0x6c] sm:$0xf]
      %v321 = vld [vmem:[%s215 + $0x70] sm:$0xf]
      %v322 = vld [vmem:[%s215 + $0x74] sm:$0xf]
      %v323 = vld [vmem:[%s215 + $0x78] sm:$0xf]
      %v324 = vld [vmem:[%s215 + $0x7c] sm:$0xf]
      %v325 = vld [vmem:[%s215 + $0x80] sm:$0xf]
      %v326 = vld [vmem:[%s215 + $0x84] sm:$0xf]
      %v327 = vld [vmem:[%s215 + $0x88] sm:$0xf]
      %v328 = vld [vmem:[%s215 + $0x8c] sm:$0xf]
      %v329 = vld [vmem:[%s218] sm:$0x1]
      %v331 = vperm.slane %v329, 0
      %v397 = vunpack.c.l.b16 %v229
      %v398 = vunpack.c.h.b16 %v229
      %v399 = vunpack.c.l.b16 %v230
      %v400 = vunpack.c.l.b16 %v231
      %v401 = vunpack.c.h.b16 %v231
      %v402 = vunpack.c.l.b16 %v232
      %v403 = vunpack.c.l.b16 %v233
      %v404 = vunpack.c.h.b16 %v233
      %v405 = vunpack.c.l.b16 %v234
      %v406 = vunpack.c.l.b16 %v235
      %v407 = vunpack.c.h.b16 %v235
      %v408 = vunpack.c.l.b16 %v236
      %v409 = vunpack.c.l.b16 %v237
      %v410 = vunpack.c.h.b16 %v237
      %v411 = vunpack.c.l.b16 %v238
      %v412 = vunpack.c.l.b16 %v239
      %v413 = vunpack.c.h.b16 %v239
      %v414 = vunpack.c.l.b16 %v240
      %v415 = vunpack.c.l.b16 %v241
      %v416 = vunpack.c.h.b16 %v241
      %v417 = vunpack.c.l.b16 %v242
      %v418 = vunpack.c.l.b16 %v243
      %v419 = vunpack.c.h.b16 %v243
      %v420 = vunpack.c.l.b16 %v244
      %v421 = vunpack.c.l.b16 %v245
      %v422 = vunpack.c.h.b16 %v245
      %v423 = vunpack.c.l.b16 %v246
      %v424 = vunpack.c.l.b16 %v247
      %v425 = vunpack.c.h.b16 %v247
      %v426 = vunpack.c.l.b16 %v248
      %v427 = vunpack.c.l.b16 %v249
      %v428 = vunpack.c.h.b16 %v249
      %v429 = vunpack.c.l.b16 %v250
      %v430 = vunpack.c.l.b16 %v251
      %v431 = vunpack.c.h.b16 %v251
      %v432 = vunpack.c.l.b16 %v252
      %v433 = vunpack.c.l.b16 %v253
      %v434 = vunpack.c.h.b16 %v253
      %v435 = vunpack.c.l.b16 %v254
      %v436 = vunpack.c.l.b16 %v255
      %v437 = vunpack.c.h.b16 %v255
      %v438 = vunpack.c.l.b16 %v256
      %v439 = vunpack.c.l.b16 %v257
      %v440 = vunpack.c.h.b16 %v257
      %v441 = vunpack.c.l.b16 %v258
      %v442 = vunpack.c.l.b16 %v259
      %v443 = vunpack.c.h.b16 %v259
      %v444 = vunpack.c.l.b16 %v260
      %v445 = vunpack.c.l.b16 %v261
      %v446 = vunpack.c.h.b16 %v261
      %v447 = vunpack.c.l.b16 %v262
      %v448 = vunpack.c.l.b16 %v263
      %v449 = vunpack.c.h.b16 %v263
      %v450 = vunpack.c.l.b16 %v264
      %v451 = vunpack.c.l.b16 %v265
      %v452 = vunpack.c.h.b16 %v265
      %v453 = vunpack.c.l.b16 %v266
      %v454 = vunpack.c.l.b16 %v267
      %v455 = vunpack.c.h.b16 %v267
      %v456 = vunpack.c.l.b16 %v268
      %v457 = vunpack.c.l.b16 %v269
      %v458 = vunpack.c.h.b16 %v269
      %v459 = vunpack.c.l.b16 %v270
      %v460 = vunpack.c.l.b16 %v271
      %v461 = vunpack.c.h.b16 %v271
      %v462 = vunpack.c.l.b16 %v272
      %v463 = vunpack.c.l.b16 %v273
      %v464 = vunpack.c.h.b16 %v273
      %v465 = vunpack.c.l.b16 %v274
      %v466 = vunpack.c.l.b16 %v275
      %v467 = vunpack.c.h.b16 %v275
      %v468 = vunpack.c.l.b16 %v276
      %v469 = vunpack.c.l.b16 %v277
      %v470 = vunpack.c.h.b16 %v277
      %v471 = vunpack.c.l.b16 %v278
      %v472 = vunpack.c.l.b16 %v279
      %v473 = vunpack.c.h.b16 %v279
      %v474 = vunpack.c.l.b16 %v280
      %v475 = vunpack.c.l.b16 %v281
      %v476 = vunpack.c.h.b16 %v281
      %v477 = vunpack.c.l.b16 %v282
      %v478 = vunpack.c.l.b16 %v283
      %v479 = vunpack.c.h.b16 %v283
      %v480 = vunpack.c.l.b16 %v284
      %v481 = vunpack.c.l.b16 %v285
      %v482 = vunpack.c.h.b16 %v285
      %v483 = vunpack.c.l.b16 %v286
      %v484 = vunpack.c.l.b16 %v287
      %v485 = vunpack.c.h.b16 %v287
      %v486 = vunpack.c.l.b16 %v288
      %v487 = vunpack.c.l.b16 %v289
      %v488 = vunpack.c.h.b16 %v289
      %v489 = vunpack.c.l.b16 %v290
      %v490 = vunpack.c.l.b16 %v291
      %v491 = vunpack.c.h.b16 %v291
      %v492 = vunpack.c.l.b16 %v292
      %v493 = vpack.c.b16 %v400, %v397
      %v494 = vpack.c.b16 %v401, %v398
      %v495 = vpack.c.b16 %v402, %v399
      %v496 = vpack.c.b16 %v406, %v403
      %v497 = vpack.c.b16 %v407, %v404
      %v498 = vpack.c.b16 %v408, %v405
      %v499 = vpack.c.b16 %v412, %v409
      %v500 = vpack.c.b16 %v413, %v410
      %v501 = vpack.c.b16 %v414, %v411
      %v502 = vpack.c.b16 %v418, %v415
      %v503 = vpack.c.b16 %v419, %v416
      %v504 = vpack.c.b16 %v420, %v417
      %v505 = vpack.c.b16 %v424, %v421
      %v506 = vpack.c.b16 %v425, %v422
      %v507 = vpack.c.b16 %v426, %v423
      %v508 = vpack.c.b16 %v430, %v427
      %v509 = vpack.c.b16 %v431, %v428
      %v510 = vpack.c.b16 %v432, %v429
      %v511 = vpack.c.b16 %v436, %v433
      %v512 = vpack.c.b16 %v437, %v434
      %v513 = vpack.c.b16 %v438, %v435
      %v514 = vpack.c.b16 %v442, %v439
      %v515 = vpack.c.b16 %v443, %v440
      %v516 = vpack.c.b16 %v444, %v441
      %v517 = vpack.c.b16 %v448, %v445
      %v518 = vpack.c.b16 %v449, %v446
      %v519 = vpack.c.b16 %v450, %v447
      %v520 = vpack.c.b16 %v454, %v451
      %v521 = vpack.c.b16 %v455, %v452
      %v522 = vpack.c.b16 %v456, %v453
      %v523 = vpack.c.b16 %v460, %v457
      %v524 = vpack.c.b16 %v461, %v458
      %v525 = vpack.c.b16 %v462, %v459
      %v526 = vpack.c.b16 %v466, %v463
      %v527 = vpack.c.b16 %v467, %v464
      %v528 = vpack.c.b16 %v468, %v465
      %v529 = vpack.c.b16 %v472, %v469
      %v530 = vpack.c.b16 %v473, %v470
      %v531 = vpack.c.b16 %v474, %v471
      %v532 = vpack.c.b16 %v478, %v475
      %v533 = vpack.c.b16 %v479, %v476
      %v534 = vpack.c.b16 %v480, %v477
      %v535 = vpack.c.b16 %v484, %v481
      %v536 = vpack.c.b16 %v485, %v482
      %v537 = vpack.c.b16 %v486, %v483
      %v538 = vpack.c.b16 %v490, %v487
      %v539 = vpack.c.b16 %v491, %v488
      %v540 = vpack.c.b16 %v492, %v489
      %v609 = vunpack.c.l.b16 %v293
      %v610 = vunpack.c.l.b16 %v294
      %v611 = vunpack.c.l.b16 %v295
      %v612 = vunpack.c.l.b16 %v296
      %v613 = vunpack.c.l.b16 %v297
      %v614 = vunpack.c.l.b16 %v298
      %v615 = vunpack.c.l.b16 %v299
      %v616 = vunpack.c.l.b16 %v300
      %v617 = vunpack.c.l.b16 %v301
      %v618 = vunpack.c.l.b16 %v302
      %v619 = vunpack.c.l.b16 %v303
      %v620 = vunpack.c.l.b16 %v304
      %v621 = vunpack.c.l.b16 %v305
      %v622 = vunpack.c.l.b16 %v306
      %v623 = vunpack.c.l.b16 %v307
      %v624 = vunpack.c.l.b16 %v308
      %v625 = vunpack.c.l.b16 %v309
      %v626 = vunpack.c.l.b16 %v310
      %v627 = vunpack.c.l.b16 %v311
      %v628 = vunpack.c.l.b16 %v312
      %v629 = vunpack.c.l.b16 %v313
      %v630 = vunpack.c.l.b16 %v314
      %v631 = vunpack.c.l.b16 %v315
      %v632 = vunpack.c.l.b16 %v316
      %v633 = vunpack.c.l.b16 %v317
      %v634 = vunpack.c.l.b16 %v318
      %v635 = vunpack.c.l.b16 %v319
      %v636 = vunpack.c.l.b16 %v320
      %v637 = vunpack.c.l.b16 %v321
      %v638 = vunpack.c.l.b16 %v322
      %v639 = vunpack.c.l.b16 %v323
      %v640 = vunpack.c.l.b16 %v324
      %v641 = vunpack.c.l.b16 %v325
      %v642 = vunpack.c.l.b16 %v326
      %v643 = vunpack.c.l.b16 %v327
      %v644 = vunpack.c.l.b16 %v328
      %v645 = vpack.c.b16 %v610, %v609
      %v646 = vpack.c.b16 %v612, %v611
      %v647 = vpack.c.b16 %v614, %v613
      %v648 = vpack.c.b16 %v616, %v615
      %v649 = vpack.c.b16 %v618, %v617
      %v650 = vpack.c.b16 %v620, %v619
      %v651 = vpack.c.b16 %v622, %v621
      %v652 = vpack.c.b16 %v624, %v623
      %v653 = vpack.c.b16 %v626, %v625
      %v654 = vpack.c.b16 %v628, %v627
      %v655 = vpack.c.b16 %v630, %v629
      %v656 = vpack.c.b16 %v632, %v631
      %v657 = vpack.c.b16 %v634, %v633
      %v658 = vpack.c.b16 %v636, %v635
      %v659 = vpack.c.b16 %v638, %v637
      %v660 = vpack.c.b16 %v640, %v639
      %v661 = vpack.c.b16 %v642, %v641
      %v662 = vpack.c.b16 %v644, %v643
      %vm681 = vcmask 261120
      %v683 = vsel %vm681, %v495, 0
      %v686 = vsel %vm681, %v498, 0
      %v689 = vsel %vm681, %v501, 0
      %v692 = vsel %vm681, %v504, 0
      %v695 = vsel %vm681, %v507, 0
      %v698 = vsel %vm681, %v510, 0
      %v701 = vsel %vm681, %v513, 0
      %v704 = vsel %vm681, %v516, 0
      %v707 = vsel %vm681, %v519, 0
      %v710 = vsel %vm681, %v522, 0
      %v713 = vsel %vm681, %v525, 0
      %v716 = vsel %vm681, %v528, 0
      %v719 = vsel %vm681, %v531, 0
      %v722 = vsel %vm681, %v534, 0
      %v725 = vsel %vm681, %v537, 0
      %v728 = vsel %vm681, %v540, 0
      %730 = vmatpush.bf16.msra.mxu0 %v652
      %731 = vmatpush.bf16.msra.mxu0 %v651
      %732 = vmatpush.bf16.msra.mxu0 %v650
      %733 = vmatpush.bf16.msra.mxu0 %v649
      %734 = vmatpush.bf16.msra.mxu0 %v648
      %735 = vmatpush.bf16.msra.mxu0 %v647
      %736 = vmatpush.bf16.msra.mxu0 %v646
      %737 = vmatpush.bf16.msra.mxu0 %v645
      %738 = vmatmul.bf16.gmra.mxu0 %v493
      %v739 = vpop.f32.mrf.mxu0
      %v740 = vadd.f32 %v331, %v739
      %v741 = vpop.f32.mrf.mxu0
      %v742 = vadd.f32 %v331, %v741
      %743 = vmatmul.bf16.gmra.mxu0 %v496
      %v744 = vpop.f32.mrf.mxu0
      %v745 = vadd.f32 %v331, %v744
      %v746 = vpop.f32.mrf.mxu0
      %v747 = vadd.f32 %v331, %v746
      %748 = vmatmul.bf16.gmra.mxu0 %v499
      %v749 = vpop.f32.mrf.mxu0
      %v750 = vadd.f32 %v331, %v749
      %v751 = vpop.f32.mrf.mxu0
      %v752 = vadd.f32 %v331, %v751
      %753 = vmatmul.bf16.gmra.mxu0 %v502
      %v754 = vpop.f32.mrf.mxu0
      %v755 = vadd.f32 %v331, %v754
      %v756 = vpop.f32.mrf.mxu0
      %v757 = vadd.f32 %v331, %v756
      %758 = vmatmul.bf16.gmra.mxu0 %v505
      %v759 = vpop.f32.mrf.mxu0
      %v760 = vadd.f32 %v331, %v759
      %v761 = vpop.f32.mrf.mxu0
      %v762 = vadd.f32 %v331, %v761
      %763 = vmatmul.bf16.gmra.mxu0 %v508
      %v764 = vpop.f32.mrf.mxu0
      %v765 = vadd.f32 %v331, %v764
      %v766 = vpop.f32.mrf.mxu0
      %v767 = vadd.f32 %v331, %v766
      %768 = vmatmul.bf16.gmra.mxu0 %v511
      %v769 = vpop.f32.mrf.mxu0
      %v770 = vadd.f32 %v331, %v769
      %v771 = vpop.f32.mrf.mxu0
      %v772 = vadd.f32 %v331, %v771
      %773 = vmatmul.bf16.gmra.mxu0 %v514
      %v774 = vpop.f32.mrf.mxu0
      %v775 = vadd.f32 %v331, %v774
      %v776 = vpop.f32.mrf.mxu0
      %v777 = vadd.f32 %v331, %v776
      %778 = vmatmul.bf16.gmra.mxu0 %v517
      %v779 = vpop.f32.mrf.mxu0
      %v780 = vadd.f32 %v331, %v779
      %v781 = vpop.f32.mrf.mxu0
      %v782 = vadd.f32 %v331, %v781
      %783 = vmatmul.bf16.gmra.mxu0 %v520
      %v784 = vpop.f32.mrf.mxu0
      %v785 = vadd.f32 %v331, %v784
      %v786 = vpop.f32.mrf.mxu0
      %v787 = vadd.f32 %v331, %v786
      %788 = vmatmul.bf16.gmra.mxu0 %v523
      %v789 = vpop.f32.mrf.mxu0
      %v790 = vadd.f32 %v331, %v789
      %v791 = vpop.f32.mrf.mxu0
      %v792 = vadd.f32 %v331, %v791
      %793 = vmatmul.bf16.gmra.mxu0 %v526
      %v794 = vpop.f32.mrf.mxu0
      %v795 = vadd.f32 %v331, %v794
      %v796 = vpop.f32.mrf.mxu0
      %v797 = vadd.f32 %v331, %v796
      %798 = vmatmul.bf16.gmra.mxu0 %v529
      %v799 = vpop.f32.mrf.mxu0
      %v800 = vadd.f32 %v331, %v799
      %v801 = vpop.f32.mrf.mxu0
      %v802 = vadd.f32 %v331, %v801
      %803 = vmatmul.bf16.gmra.mxu0 %v532
      %v804 = vpop.f32.mrf.mxu0
      %v805 = vadd.f32 %v331, %v804
      %v806 = vpop.f32.mrf.mxu0
      %v807 = vadd.f32 %v331, %v806
      %808 = vmatmul.bf16.gmra.mxu0 %v535
      %v809 = vpop.f32.mrf.mxu0
      %v810 = vadd.f32 %v331, %v809
      %v811 = vpop.f32.mrf.mxu0
      %v812 = vadd.f32 %v331, %v811
      %813 = vmatmul.bf16.gmra.mxu0 %v538
      %v814 = vpop.f32.mrf.mxu0
      %v815 = vadd.f32 %v331, %v814
      %v816 = vpop.f32.mrf.mxu0
      %v817 = vadd.f32 %v331, %v816
      %818 = vdwg.mxu0
      %819 = vmatpush.bf16.msra.mxu0 %v660
      %820 = vmatpush.bf16.msra.mxu0 %v659
      %821 = vmatpush.bf16.msra.mxu0 %v658
      %822 = vmatpush.bf16.msra.mxu0 %v657
      %823 = vmatpush.bf16.msra.mxu0 %v656
      %824 = vmatpush.bf16.msra.mxu0 %v655
      %825 = vmatpush.bf16.msra.mxu0 %v654
      %826 = vmatpush.bf16.msra.mxu0 %v653
      %827 = vmatmul.bf16.gmra.mxu0 %v494
      %v828 = vpop.f32.mrf.mxu0
      %v829 = vadd.f32 %v740, %v828
      %v830 = vpop.f32.mrf.mxu0
      %v831 = vadd.f32 %v742, %v830
      %832 = vmatmul.bf16.gmra.mxu0 %v497
      %v833 = vpop.f32.mrf.mxu0
      %v834 = vadd.f32 %v745, %v833
      %v835 = vpop.f32.mrf.mxu0
      %v836 = vadd.f32 %v747, %v835
      %837 = vmatmul.bf16.gmra.mxu0 %v500
      %v838 = vpop.f32.mrf.mxu0
      %v839 = vadd.f32 %v750, %v838
      %v840 = vpop.f32.mrf.mxu0
      %v841 = vadd.f32 %v752, %v840
      %842 = vmatmul.bf16.gmra.mxu0 %v503
      %v843 = vpop.f32.mrf.mxu0
      %v844 = vadd.f32 %v755, %v843
      %v845 = vpop.f32.mrf.mxu0
      %v846 = vadd.f32 %v757, %v845
      %847 = vmatmul.bf16.gmra.mxu0 %v506
      %v848 = vpop.f32.mrf.mxu0
      %v849 = vadd.f32 %v760, %v848
      %v850 = vpop.f32.mrf.mxu0
      %v851 = vadd.f32 %v762, %v850
      %852 = vmatmul.bf16.gmra.mxu0 %v509
      %v853 = vpop.f32.mrf.mxu0
      %v854 = vadd.f32 %v765, %v853
      %v855 = vpop.f32.mrf.mxu0
      %v856 = vadd.f32 %v767, %v855
      %857 = vmatmul.bf16.gmra.mxu0 %v512
      %v858 = vpop.f32.mrf.mxu0
      %v859 = vadd.f32 %v770, %v858
      %v860 = vpop.f32.mrf.mxu0
      %v861 = vadd.f32 %v772, %v860
      %862 = vmatmul.bf16.gmra.mxu0 %v515
      %v863 = vpop.f32.mrf.mxu0
      %v864 = vadd.f32 %v775, %v863
      %v865 = vpop.f32.mrf.mxu0
      %v866 = vadd.f32 %v777, %v865
      %867 = vmatmul.bf16.gmra.mxu0 %v518
      %v868 = vpop.f32.mrf.mxu0
      %v869 = vadd.f32 %v780, %v868
      %v870 = vpop.f32.mrf.mxu0
      %v871 = vadd.f32 %v782, %v870
      %872 = vmatmul.bf16.gmra.mxu0 %v521
      %v873 = vpop.f32.mrf.mxu0
      %v874 = vadd.f32 %v785, %v873
      %v875 = vpop.f32.mrf.mxu0
      %v876 = vadd.f32 %v787, %v875
      %877 = vmatmul.bf16.gmra.mxu0 %v524
      %v878 = vpop.f32.mrf.mxu0
      %v879 = vadd.f32 %v790, %v878
      %v880 = vpop.f32.mrf.mxu0
      %v881 = vadd.f32 %v792, %v880
      %882 = vmatmul.bf16.gmra.mxu0 %v527
      %v883 = vpop.f32.mrf.mxu0
      %v884 = vadd.f32 %v795, %v883
      %v885 = vpop.f32.mrf.mxu0
      %v886 = vadd.f32 %v797, %v885
      %887 = vmatmul.bf16.gmra.mxu0 %v530
      %v888 = vpop.f32.mrf.mxu0
      %v889 = vadd.f32 %v800, %v888
      %v890 = vpop.f32.mrf.mxu0
      %v891 = vadd.f32 %v802, %v890
      %892 = vmatmul.bf16.gmra.mxu0 %v533
      %v893 = vpop.f32.mrf.mxu0
      %v894 = vadd.f32 %v805, %v893
      %v895 = vpop.f32.mrf.mxu0
      %v896 = vadd.f32 %v807, %v895
      %897 = vmatmul.bf16.gmra.mxu0 %v536
      %v898 = vpop.f32.mrf.mxu0
      %v899 = vadd.f32 %v810, %v898
      %v900 = vpop.f32.mrf.mxu0
      %v901 = vadd.f32 %v812, %v900
      %902 = vmatmul.bf16.gmra.mxu0 %v539
      %v903 = vpop.f32.mrf.mxu0
      %v904 = vadd.f32 %v815, %v903
      %v905 = vpop.f32.mrf.mxu0
      %v906 = vadd.f32 %v817, %v905
      %907 = vdwg.mxu0
      %908 = vmatpush.bf16.msra.mxu0 0
      %909 = vmatpush.bf16.msra.mxu0 0
      %910 = vmatpush.bf16.msra.mxu0 0
      %911 = vmatpush.bf16.msra.mxu0 0
      %912 = vmatpush.bf16.msra.mxu0 0
      %913 = vmatpush.bf16.msra.mxu0 0
      %914 = vmatpush.bf16.msra.mxu0 %v662
      %915 = vmatpush.bf16.msra.mxu0 %v661
      %916 = vmatmul.bf16.gmra.mxu0 %v683
      %v917 = vpop.f32.mrf.mxu0
      %v918 = vadd.f32 %v829, %v917
      %v919 = vpop.f32.mrf.mxu0
      %v920 = vadd.f32 %v831, %v919
      %921 = vmatmul.bf16.gmra.mxu0 %v686
      %v922 = vpop.f32.mrf.mxu0
      %v923 = vadd.f32 %v834, %v922
      %v924 = vpop.f32.mrf.mxu0
      %v925 = vadd.f32 %v836, %v924
      %926 = vmatmul.bf16.gmra.mxu0 %v689
      %v927 = vpop.f32.mrf.mxu0
      %v928 = vadd.f32 %v839, %v927
      %v929 = vpop.f32.mrf.mxu0
      %v930 = vadd.f32 %v841, %v929
      %931 = vmatmul.bf16.gmra.mxu0 %v692
      %v932 = vpop.f32.mrf.mxu0
      %v933 = vadd.f32 %v844, %v932
      %v934 = vpop.f32.mrf.mxu0
      %v935 = vadd.f32 %v846, %v934
      %936 = vmatmul.bf16.gmra.mxu0 %v695
      %v937 = vpop.f32.mrf.mxu0
      %v938 = vadd.f32 %v849, %v937
      %v939 = vpop.f32.mrf.mxu0
      %v940 = vadd.f32 %v851, %v939
      %941 = vmatmul.bf16.gmra.mxu0 %v698
      %v942 = vpop.f32.mrf.mxu0
      %v943 = vadd.f32 %v854, %v942
      %v944 = vpop.f32.mrf.mxu0
      %v945 = vadd.f32 %v856, %v944
      %946 = vmatmul.bf16.gmra.mxu0 %v701
      %v947 = vpop.f32.mrf.mxu0
      %v948 = vadd.f32 %v859, %v947
      %v949 = vpop.f32.mrf.mxu0
      %v950 = vadd.f32 %v861, %v949
      %951 = vmatmul.bf16.gmra.mxu0 %v704
      %v952 = vpop.f32.mrf.mxu0
      %v953 = vadd.f32 %v864, %v952
      %v954 = vpop.f32.mrf.mxu0
      %v955 = vadd.f32 %v866, %v954
      %956 = vmatmul.bf16.gmra.mxu0 %v707
      %v957 = vpop.f32.mrf.mxu0
      %v958 = vadd.f32 %v869, %v957
      %v959 = vpop.f32.mrf.mxu0
      %v960 = vadd.f32 %v871, %v959
      %961 = vmatmul.bf16.gmra.mxu0 %v710
      %v962 = vpop.f32.mrf.mxu0
      %v963 = vadd.f32 %v874, %v962
      %v964 = vpop.f32.mrf.mxu0
      %v965 = vadd.f32 %v876, %v964
      %966 = vmatmul.bf16.gmra.mxu0 %v713
      %v967 = vpop.f32.mrf.mxu0
      %v968 = vadd.f32 %v879, %v967
      %v969 = vpop.f32.mrf.mxu0
      %v970 = vadd.f32 %v881, %v969
      %971 = vmatmul.bf16.gmra.mxu0 %v716
      %v972 = vpop.f32.mrf.mxu0
      %v973 = vadd.f32 %v884, %v972
      %v974 = vpop.f32.mrf.mxu0
      %v975 = vadd.f32 %v886, %v974
      %976 = vmatmul.bf16.gmra.mxu0 %v719
      %v977 = vpop.f32.mrf.mxu0
      %v978 = vadd.f32 %v889, %v977
      %v979 = vpop.f32.mrf.mxu0
      %v980 = vadd.f32 %v891, %v979
      %981 = vmatmul.bf16.gmra.mxu0 %v722
      %v982 = vpop.f32.mrf.mxu0
      %v983 = vadd.f32 %v894, %v982
      %v984 = vpop.f32.mrf.mxu0
      %v985 = vadd.f32 %v896, %v984
      %986 = vmatmul.bf16.gmra.mxu0 %v725
      %v987 = vpop.f32.mrf.mxu0
      %v988 = vadd.f32 %v899, %v987
      %v989 = vpop.f32.mrf.mxu0
      %v990 = vadd.f32 %v901, %v989
      %991 = vmatmul.bf16.gmra.mxu0 %v728
      %v992 = vpop.f32.mrf.mxu0
      %v993 = vadd.f32 %v904, %v992
      %v994 = vpop.f32.mrf.mxu0
      %v995 = vadd.f32 %v906, %v994
      %996 = vdwg.mxu0
      %vm997 = vcmp.gt.f32.partialorder %v918, 0.0
      %vm998 = vcmp.gt.f32.partialorder %v920, 0.0
      %vm999 = vcmp.gt.f32.partialorder %v923, 0.0
      %vm1000 = vcmp.gt.f32.partialorder %v925, 0.0
      %vm1001 = vcmp.gt.f32.partialorder %v928, 0.0
      %vm1002 = vcmp.gt.f32.partialorder %v930, 0.0
      %vm1003 = vcmp.gt.f32.partialorder %v933, 0.0
      %vm1004 = vcmp.gt.f32.partialorder %v935, 0.0
      %vm1005 = vcmp.gt.f32.partialorder %v938, 0.0
      %vm1006 = vcmp.gt.f32.partialorder %v940, 0.0
      %vm1007 = vcmp.gt.f32.partialorder %v943, 0.0
      %vm1008 = vcmp.gt.f32.partialorder %v945, 0.0
      %vm1009 = vcmp.gt.f32.partialorder %v948, 0.0
      %vm1010 = vcmp.gt.f32.partialorder %v950, 0.0
      %vm1011 = vcmp.gt.f32.partialorder %v953, 0.0
      %vm1012 = vcmp.gt.f32.partialorder %v955, 0.0
      %vm1013 = vcmp.gt.f32.partialorder %v958, 0.0
      %vm1014 = vcmp.gt.f32.partialorder %v960, 0.0
      %vm1015 = vcmp.gt.f32.partialorder %v963, 0.0
      %vm1016 = vcmp.gt.f32.partialorder %v965, 0.0
      %vm1017 = vcmp.gt.f32.partialorder %v968, 0.0
      %vm1018 = vcmp.gt.f32.partialorder %v970, 0.0
      %vm1019 = vcmp.gt.f32.partialorder %v973, 0.0
      %vm1020 = vcmp.gt.f32.partialorder %v975, 0.0
      %vm1021 = vcmp.gt.f32.partialorder %v978, 0.0
      %vm1022 = vcmp.gt.f32.partialorder %v980, 0.0
      %vm1023 = vcmp.gt.f32.partialorder %v983, 0.0
      %vm1024 = vcmp.gt.f32.partialorder %v985, 0.0
      %vm1025 = vcmp.gt.f32.partialorder %v988, 0.0
      %vm1026 = vcmp.gt.f32.partialorder %v990, 0.0
      %vm1027 = vcmp.gt.f32.partialorder %v993, 0.0
      %vm1028 = vcmp.gt.f32.partialorder %v995, 0.0
      %v1029 = vmin.f32 %v918, 0.0
      %v1030 = vmin.f32 %v920, 0.0
      %v1031 = vmin.f32 %v923, 0.0
      %v1032 = vmin.f32 %v925, 0.0
      %v1033 = vmin.f32 %v928, 0.0
      %v1034 = vmin.f32 %v930, 0.0
      %v1035 = vmin.f32 %v933, 0.0
      %v1036 = vmin.f32 %v935, 0.0
      %v1037 = vmin.f32 %v938, 0.0
      %v1038 = vmin.f32 %v940, 0.0
      %v1039 = vmin.f32 %v943, 0.0
      %v1040 = vmin.f32 %v945, 0.0
      %v1041 = vmin.f32 %v948, 0.0
      %v1042 = vmin.f32 %v950, 0.0
      %v1043 = vmin.f32 %v953, 0.0
      %v1044 = vmin.f32 %v955, 0.0
      %v1045 = vmin.f32 %v958, 0.0
      %v1046 = vmin.f32 %v960, 0.0
      %v1047 = vmin.f32 %v963, 0.0
      %v1048 = vmin.f32 %v965, 0.0
      %v1049 = vmin.f32 %v968, 0.0
      %v1050 = vmin.f32 %v970, 0.0
      %v1051 = vmin.f32 %v973, 0.0
      %v1052 = vmin.f32 %v975, 0.0
      %v1053 = vmin.f32 %v978, 0.0
      %v1054 = vmin.f32 %v980, 0.0
      %v1055 = vmin.f32 %v983, 0.0
      %v1056 = vmin.f32 %v985, 0.0
      %v1057 = vmin.f32 %v988, 0.0
      %v1058 = vmin.f32 %v990, 0.0
      %v1059 = vmin.f32 %v993, 0.0
      %v1060 = vmin.f32 %v995, 0.0
      %v1061 = vmul.f32 %v1029, 1.442695
      %v1062 = vpow.pop %v1061
      %v1063 = vmul.f32 %v1030, 1.442695
      %v1064 = vpow.pop %v1063
      %v1065 = vmul.f32 %v1031, 1.442695
      %v1066 = vpow.pop %v1065
      %v1067 = vmul.f32 %v1032, 1.442695
      %v1068 = vpow.pop %v1067
      %v1069 = vmul.f32 %v1033, 1.442695
      %v1070 = vpow.pop %v1069
      %v1071 = vmul.f32 %v1034, 1.442695
      %v1072 = vpow.pop %v1071
      %v1073 = vmul.f32 %v1035, 1.442695
      %v1074 = vpow.pop %v1073
      %v1075 = vmul.f32 %v1036, 1.442695
      %v1076 = vpow.pop %v1075
      %v1077 = vmul.f32 %v1037, 1.442695
      %v1078 = vpow.pop %v1077
      %v1079 = vmul.f32 %v1038, 1.442695
      %v1080 = vpow.pop %v1079
      %v1081 = vmul.f32 %v1039, 1.442695
      %v1082 = vpow.pop %v1081
      %v1083 = vmul.f32 %v1040, 1.442695
      %v1084 = vpow.pop %v1083
      %v1085 = vmul.f32 %v1041, 1.442695
      %v1086 = vpow.pop %v1085
      %v1087 = vmul.f32 %v1042, 1.442695
      %v1088 = vpow.pop %v1087
      %v1089 = vmul.f32 %v1043, 1.442695
      %v1090 = vpow.pop %v1089
      %v1091 = vmul.f32 %v1044, 1.442695
      %v1092 = vpow.pop %v1091
      %v1093 = vmul.f32 %v1045, 1.442695
      %v1094 = vpow.pop %v1093
      %v1095 = vmul.f32 %v1046, 1.442695
      %v1096 = vpow.pop %v1095
      %v1097 = vmul.f32 %v1047, 1.442695
      %v1098 = vpow.pop %v1097
      %v1099 = vmul.f32 %v1048, 1.442695
      %v1100 = vpow.pop %v1099
      %v1101 = vmul.f32 %v1049, 1.442695
      %v1102 = vpow.pop %v1101
      %v1103 = vmul.f32 %v1050, 1.442695
      %v1104 = vpow.pop %v1103
      %v1105 = vmul.f32 %v1051, 1.442695
      %v1106 = vpow.pop %v1105
      %v1107 = vmul.f32 %v1052, 1.442695
      %v1108 = vpow.pop %v1107
      %v1109 = vmul.f32 %v1053, 1.442695
      %v1110 = vpow.pop %v1109
      %v1111 = vmul.f32 %v1054, 1.442695
      %v1112 = vpow.pop %v1111
      %v1113 = vmul.f32 %v1055, 1.442695
      %v1114 = vpow.pop %v1113
      %v1115 = vmul.f32 %v1056, 1.442695
      %v1116 = vpow.pop %v1115
      %v1117 = vmul.f32 %v1057, 1.442695
      %v1118 = vpow.pop %v1117
      %v1119 = vmul.f32 %v1058, 1.442695
      %v1120 = vpow.pop %v1119
      %v1121 = vmul.f32 %v1059, 1.442695
      %v1122 = vpow.pop %v1121
      %v1123 = vmul.f32 %v1060, 1.442695
      %v1124 = vpow.pop %v1123
      %v1125 = vsub.f32 %v1062, 1.0
      %v1126 = vsub.f32 %v1064, 1.0
      %v1127 = vsub.f32 %v1066, 1.0
      %v1128 = vsub.f32 %v1068, 1.0
      %v1129 = vsub.f32 %v1070, 1.0
      %v1130 = vsub.f32 %v1072, 1.0
      %v1131 = vsub.f32 %v1074, 1.0
      %v1132 = vsub.f32 %v1076, 1.0
      %v1133 = vsub.f32 %v1078, 1.0
      %v1134 = vsub.f32 %v1080, 1.0
      %v1135 = vsub.f32 %v1082, 1.0
      %v1136 = vsub.f32 %v1084, 1.0
      %v1137 = vsub.f32 %v1086, 1.0
      %v1138 = vsub.f32 %v1088, 1.0
      %v1139 = vsub.f32 %v1090, 1.0
      %v1140 = vsub.f32 %v1092, 1.0
      %v1141 = vsub.f32 %v1094, 1.0
      %v1142 = vsub.f32 %v1096, 1.0
      %v1143 = vsub.f32 %v1098, 1.0
      %v1144 = vsub.f32 %v1100, 1.0
      %v1145 = vsub.f32 %v1102, 1.0
      %v1146 = vsub.f32 %v1104, 1.0
      %v1147 = vsub.f32 %v1106, 1.0
      %v1148 = vsub.f32 %v1108, 1.0
      %v1149 = vsub.f32 %v1110, 1.0
      %v1150 = vsub.f32 %v1112, 1.0
      %v1151 = vsub.f32 %v1114, 1.0
      %v1152 = vsub.f32 %v1116, 1.0
      %v1153 = vsub.f32 %v1118, 1.0
      %v1154 = vsub.f32 %v1120, 1.0
      %v1155 = vsub.f32 %v1122, 1.0
      %v1156 = vsub.f32 %v1124, 1.0
      %v1157 = vsel %vm997, %v918, %v1125
      %v1158 = vsel %vm998, %v920, %v1126
      %v1159 = vsel %vm999, %v923, %v1127
      %v1160 = vsel %vm1000, %v925, %v1128
      %v1161 = vsel %vm1001, %v928, %v1129
      %v1162 = vsel %vm1002, %v930, %v1130
      %v1163 = vsel %vm1003, %v933, %v1131
      %v1164 = vsel %vm1004, %v935, %v1132
      %v1165 = vsel %vm1005, %v938, %v1133
      %v1166 = vsel %vm1006, %v940, %v1134
      %v1167 = vsel %vm1007, %v943, %v1135
      %v1168 = vsel %vm1008, %v945, %v1136
      %v1169 = vsel %vm1009, %v948, %v1137
      %v1170 = vsel %vm1010, %v950, %v1138
      %v1171 = vsel %vm1011, %v953, %v1139
      %v1172 = vsel %vm1012, %v955, %v1140
      %v1173 = vsel %vm1013, %v958, %v1141
      %v1174 = vsel %vm1014, %v960, %v1142
      %v1175 = vsel %vm1015, %v963, %v1143
      %v1176 = vsel %vm1016, %v965, %v1144
      %v1177 = vsel %vm1017, %v968, %v1145
      %v1178 = vsel %vm1018, %v970, %v1146
      %v1179 = vsel %vm1019, %v973, %v1147
      %v1180 = vsel %vm1020, %v975, %v1148
      %v1181 = vsel %vm1021, %v978, %v1149
      %v1182 = vsel %vm1022, %v980, %v1150
      %v1183 = vsel %vm1023, %v983, %v1151
      %v1184 = vsel %vm1024, %v985, %v1152
      %v1185 = vsel %vm1025, %v988, %v1153
      %v1186 = vsel %vm1026, %v990, %v1154
      %v1187 = vsel %vm1027, %v993, %v1155
      %v1188 = vsel %vm1028, %v995, %v1156
      %v1189 = vpack.c.bf16 %v1157, %v1157
      %v1190 = vpack.c.bf16 %v1158, %v1158
      %v1191 = vpack.c.bf16 %v1159, %v1159
      %v1192 = vpack.c.bf16 %v1160, %v1160
      %v1193 = vpack.c.bf16 %v1161, %v1161
      %v1194 = vpack.c.bf16 %v1162, %v1162
      %v1195 = vpack.c.bf16 %v1163, %v1163
      %v1196 = vpack.c.bf16 %v1164, %v1164
      %v1197 = vpack.c.bf16 %v1165, %v1165
      %v1198 = vpack.c.bf16 %v1166, %v1166
      %v1199 = vpack.c.bf16 %v1167, %v1167
      %v1200 = vpack.c.bf16 %v1168, %v1168
      %v1201 = vpack.c.bf16 %v1169, %v1169
      %v1202 = vpack.c.bf16 %v1170, %v1170
      %v1203 = vpack.c.bf16 %v1171, %v1171
      %v1204 = vpack.c.bf16 %v1172, %v1172
      %v1205 = vpack.c.bf16 %v1173, %v1173
      %v1206 = vpack.c.bf16 %v1174, %v1174
      %v1207 = vpack.c.bf16 %v1175, %v1175
      %v1208 = vpack.c.bf16 %v1176, %v1176
      %v1209 = vpack.c.bf16 %v1177, %v1177
      %v1210 = vpack.c.bf16 %v1178, %v1178
      %v1211 = vpack.c.bf16 %v1179, %v1179
      %v1212 = vpack.c.bf16 %v1180, %v1180
      %v1213 = vpack.c.bf16 %v1181, %v1181
      %v1214 = vpack.c.bf16 %v1182, %v1182
      %v1215 = vpack.c.bf16 %v1183, %v1183
      %v1216 = vpack.c.bf16 %v1184, %v1184
      %v1217 = vpack.c.bf16 %v1185, %v1185
      %v1218 = vpack.c.bf16 %v1186, %v1186
      %v1219 = vpack.c.bf16 %v1187, %v1187
      %v1220 = vpack.c.bf16 %v1188, %v1188
      %vm1221 = vcmask 519168
      %1222 = vst.msk [vmem:[%s226] sm:$0xf] %vm1221, %v1189
      %1223 = vst.msk [vmem:[%s226 + $0x4] sm:$0xf] %vm1221, %v1190
      %1224 = vst.msk [vmem:[%s226 + $0x8] sm:$0xf] %vm1221, %v1191
      %1225 = vst.msk [vmem:[%s226 + $0xc] sm:$0xf] %vm1221, %v1192
      %1226 = vst.msk [vmem:[%s226 + $0x10] sm:$0xf] %vm1221, %v1193
      %1227 = vst.msk [vmem:[%s226 + $0x14] sm:$0xf] %vm1221, %v1194
      %1228 = vst.msk [vmem:[%s226 + $0x18] sm:$0xf] %vm1221, %v1195
      %1229 = vst.msk [vmem:[%s226 + $0x1c] sm:$0xf] %vm1221, %v1196
      %1230 = vst.msk [vmem:[%s226 + $0x20] sm:$0xf] %vm1221, %v1197
      %1231 = vst.msk [vmem:[%s226 + $0x24] sm:$0xf] %vm1221, %v1198
      %1232 = vst.msk [vmem:[%s226 + $0x28] sm:$0xf] %vm1221, %v1199
      %1233 = vst.msk [vmem:[%s226 + $0x2c] sm:$0xf] %vm1221, %v1200
      %1234 = vst.msk [vmem:[%s226 + $0x30] sm:$0xf] %vm1221, %v1201
      %1235 = vst.msk [vmem:[%s226 + $0x34] sm:$0xf] %vm1221, %v1202
      %1236 = vst.msk [vmem:[%s226 + $0x38] sm:$0xf] %vm1221, %v1203
      %1237 = vst.msk [vmem:[%s226 + $0x3c] sm:$0xf] %vm1221, %v1204
      %1238 = vst.msk [vmem:[%s226 + $0x40] sm:$0xf] %vm1221, %v1205
      %1239 = vst.msk [vmem:[%s226 + $0x44] sm:$0xf] %vm1221, %v1206
      %1240 = vst.msk [vmem:[%s226 + $0x48] sm:$0xf] %vm1221, %v1207
      %1241 = vst.msk [vmem:[%s226 + $0x4c] sm:$0xf] %vm1221, %v1208
      %1242 = vst.msk [vmem:[%s226 + $0x50] sm:$0xf] %vm1221, %v1209
      %1243 = vst.msk [vmem:[%s226 + $0x54] sm:$0xf] %vm1221, %v1210
      %1244 = vst.msk [vmem:[%s226 + $0x58] sm:$0xf] %vm1221, %v1211
      %1245 = vst.msk [vmem:[%s226 + $0x5c] sm:$0xf] %vm1221, %v1212
      %1246 = vst.msk [vmem:[%s226 + $0x60] sm:$0xf] %vm1221, %v1213
      %1247 = vst.msk [vmem:[%s226 + $0x64] sm:$0xf] %vm1221, %v1214
      %1248 = vst.msk [vmem:[%s226 + $0x68] sm:$0xf] %vm1221, %v1215
      %1249 = vst.msk [vmem:[%s226 + $0x6c] sm:$0xf] %vm1221, %v1216
      %1250 = vst.msk [vmem:[%s226 + $0x70] sm:$0xf] %vm1221, %v1217
      %1251 = vst.msk [vmem:[%s226 + $0x74] sm:$0xf] %vm1221, %v1218
      %1252 = vst.msk [vmem:[%s226 + $0x78] sm:$0xf] %vm1221, %v1219
      %1253 = vst.msk [vmem:[%s226 + $0x7c] sm:$0xf] %vm1221, %v1220
      %s1254 = smul.u32 32, %s18
      %p1255 = scmp.lt.s32.totalorder %s1254, 63
      %s1256 = scalar_select %p1255, %s1254, 63
      %p1257 = scmp.lt.s32.totalorder %s19, 0
      %s1258 = scalar_select %p1257, %s19, 0
      %s1259 = sadd.s32 %s1258, %s1256
      %s1260 = smul.addr %s1259, 4
      %s1261 = scalar_lea.vmem %s3, %s1260
      // Predicated region
      $region33: #{lapgan_discriminator_level3.5} parent=31 // pred_check
        %p1262 = pneg %p124
      $region34: #{lapgan_discriminator_level3.5} parent=31 // pred_check_branch
        %1264 = sbr.rel (%p1262) target = $region36
      $region35: #{lapgan_discriminator_level3.5} parent=31 // pred_region
        %s1265 = smul.u32 32, %s18
      $region36: #{lapgan_discriminator_level3.5} parent=31 // pred_fallthru
        _
    $region32: #{lapgan_discriminator_level3.5} parent=5 // pred_fallthru
      _
    %p1266 = scmp.le.s32.totalorder 2, %s9
    // Predicated region
    $region37: #{lapgan_discriminator_level3.5} parent=5 // pred_check
      %p1267 = pneg %p1266
    $region38: #{lapgan_discriminator_level3.5} parent=5 // pred_check_branch
      %1269 = sbr.rel (%p1267) target = $region40
    $region39: #{lapgan_discriminator_level3.5} parent=5 // pred_region
      %s1270 = ssub.s32 %s9, 2
      // Predicated region
      $region41: #{lapgan_discriminator_level3.5} parent=39 // pred_check
        %p1271 = pneg %p130
      $region42: #{lapgan_discriminator_level3.5} parent=39 // pred_check_branch
        %1273 = sbr.rel (%p1271) target = $region44
      $region43: #{lapgan_discriminator_level3.5} parent=39 // pred_region
        %s1274 = smul.u32 32, %s20
        %p1275 = scmp.lt.s32.totalorder %s1274, 63
        %s1276 = scalar_select %p1275, %s1274, 63
        %p1277 = scmp.lt.s32.totalorder %s21, 0
        %s1278 = scalar_select %p1277, %s21, 0
        %s1279 = sadd.s32 %s1278, %s1276
        %s1280 = smul.addr %s1279, 4
        %s1281 = scalar_lea.vmem %s3, %s1280
      $region44: #{lapgan_discriminator_level3.5} parent=39 // pred_fallthru
        _
    $region40: #{lapgan_discriminator_level3.5} parent=5 // pred_fallthru
      _
  $region6: #{lapgan_discriminator_level3.5} parent=0 // loop_footer
    %s13 = sadd.s32 1, %s9
  $region7: #{lapgan_discriminator_level3.5} parent=0 // loop_footer_branch
    %8 = sbr.rel target = $region3
  $region8: #{lapgan_discriminator_level3.5} parent=0 // loop_exit
    _

// kernel: lapgan_discriminator_level3.6
$region0: #{lapgan_discriminator_level3.6}
  #allocation0 [shape = 'u32[]', space=smem, size = 0x4, offset = 0x4, fixed_abs, tag = 'smem constant byte address 0x4 - core index']
  #allocation1 [shape = 'u32[72,128]{1,0:T(1,128)}', space=vmem, size = 0x9000, scoped, tag = 'internal scratch']
  %s0 = inlined_call_operand.vmem [shape: bf16[128,576], index: 0, kind: input, shape index: {}]
  %s1 = inlined_call_operand.vmem [shape: bf16[576,128], index: 1, kind: input, shape index: {}]
  %s2 = inlined_call_operand.vmem [shape: f32[1,128], index: 2, kind: input, shape index: {}]
  %s3 = inlined_call_operand.vmem [shape: bf16[128,128], index: 3, kind: output, shape index: {}]
  %s4 = sld [smem:[#allocation0]]
  $region45: #{lapgan_discriminator_level3.6} parent=0
    _
  %s6 = ssub.s32 1, %s4
  %s7 = scalar_select 0, %s6, %s4
  loop: start=0, step=1, limit=4
  $region2: #{lapgan_discriminator_level3.6} parent=0 // loop_pre_header
    _
  $region3: #{lapgan_discriminator_level3.6} parent=0 // loop_header
    %s9 = sphi 0, %s13
    %p10 = scmp.ge.s32.totalorder %s9, 4
    %s16 = sphi 0, %s28
    %s17 = sphi 0, %s24
    %s18 = sphi 0, %s16
    %s19 = sphi 0, %s17
    %s20 = sphi 0, %s18
    %s21 = sphi 0, %s19
    %s31 = sphi 0, %s33
    %s34 = sphi 0, %s31
    %s35 = sphi 0, %s34
    %s51 = sphi 0, %s35
    %s57 = sphi 0, %s59
    %s60 = sphi 0, %s57
    %s61 = sphi 0, %s60
    %s77 = sphi 0, %s61
    %s83 = sphi 0, %s85
    %s86 = sphi 0, %s83
    %s87 = sphi 0, %s86
    %s103 = sphi 0, %s87
    %s111 = sphi 0, %s113
    %s114 = sphi 0, %s111
    %s115 = sphi 0, %s114
    %s131 = sphi 0, %s115
  $region4: #{lapgan_discriminator_level3.6} parent=0 // loop_header_branch
    %12 = sbr.rel (%p10) target = $region8
  $region5: #{lapgan_discriminator_level3.6} parent=0 // loop_body
    %s14 = ssub.s32 %s9, 1
    %s15 = ssub.s32 %s9, 2
    %s22 = sadd.s32 1, %s17
    %p23 = scmp.ge.s32.totalorder %s22, 1
    %s24 = scalar_select %p23, 0, %s22
    %s25 = sadd.s32 1, %s16
    %s26 = scalar_select %p23, %s25, %s16
    %p27 = scmp.ge.s32.totalorder %s26, 2
    %s28 = scalar_select %p27, 0, %s26
    %s29 = ssub.s32 %s16, %s28
    %p30 = scmp.eq.s32.totalorder %s29, 0
    %s32 = sadd.s32 %s31, 1
    %s33 = scalar_select %p30, %s31, %s32
    %p36 = pneg %p30
    %p37 = scmp.eq.s32.totalorder %s9, 1
    %p38 = por %p36, %p37
    %p39 = scmp.ne.s32.totalorder %s31, %s34
    %p40 = scmp.eq.s32.totalorder %s9, 0
    %p41 = por %p39, %p40
    %p42 = scmp.ne.s32.totalorder %s31, %s34
    %p43 = scmp.eq.s32.totalorder %s14, 1
    %p44 = por %p42, %p43
    %p45 = scmp.ne.s32.totalorder %s34, %s35
    %p46 = scmp.eq.s32.totalorder %s14, 0
    %p47 = por %p45, %p46
    %p48 = scmp.ne.s32.totalorder %s34, %s35
    %p49 = scmp.eq.s32.totalorder %s15, 1
    %p50 = por %p48, %p49
    %p52 = scmp.ne.s32.totalorder %s35, %s51
    %p53 = scmp.eq.s32.totalorder %s15, 0
    %p54 = por %p52, %p53
    %s55 = ssub.s32 %s17, %s24
    %p56 = scmp.eq.s32.totalorder %s55, 0
    %s58 = sadd.s32 %s57, 1
    %s59 = scalar_select %p56, %s57, %s58
    %p62 = pneg %p56
    %p63 = scmp.eq.s32.totalorder %s9, 1
    %p64 = por %p62, %p63
    %p65 = scmp.ne.s32.totalorder %s57, %s60
    %p66 = scmp.eq.s32.totalorder %s9, 0
    %p67 = por %p65, %p66
    %p68 = scmp.ne.s32.totalorder %s57, %s60
    %p69 = scmp.eq.s32.totalorder %s14, 1
    %p70 = por %p68, %p69
    %p71 = scmp.ne.s32.totalorder %s60, %s61
    %p72 = scmp.eq.s32.totalorder %s14, 0
    %p73 = por %p71, %p72
    %p74 = scmp.ne.s32.totalorder %s60, %s61
    %p75 = scmp.eq.s32.totalorder %s15, 1
    %p76 = por %p74, %p75
    %p78 = scmp.ne.s32.totalorder %s61, %s77
    %p79 = scmp.eq.s32.totalorder %s15, 0
    %p80 = por %p78, %p79
    %s81 = ssub.s32 %s17, %s24
    %p82 = scmp.eq.s32.totalorder %s81, 0
    %s84 = sadd.s32 %s83, 1
    %s85 = scalar_select %p82, %s83, %s84
    %p88 = pneg %p82
    %p89 = scmp.eq.s32.totalorder %s9, 1
    %p90 = por %p88, %p89
    %p91 = scmp.ne.s32.totalorder %s83, %s86
    %p92 = scmp.eq.s32.totalorder %s9, 0
    %p93 = por %p91, %p92
    %p94 = scmp.ne.s32.totalorder %s83, %s86
    %p95 = scmp.eq.s32.totalorder %s14, 1
    %p96 = por %p94, %p95
    %p97 = scmp.ne.s32.totalorder %s86, %s87
    %p98 = scmp.eq.s32.totalorder %s14, 0
    %p99 = por %p97, %p98
    %p100 = scmp.ne.s32.totalorder %s86, %s87
    %p101 = scmp.eq.s32.totalorder %s15, 1
    %p102 = por %p100, %p101
    %p104 = scmp.ne.s32.totalorder %s87, %s103
    %p105 = scmp.eq.s32.totalorder %s15, 0
    %p106 = por %p104, %p105
    %s107 = ssub.s32 %s16, %s28
    %s108 = ssub.s32 %s17, %s24
    %s109 = sor.u32 %s107, %s108
    %p110 = scmp.eq.s32.totalorder %s109, 0
    %s112 = sadd.s32 %s111, 1
    %s113 = scalar_select %p110, %s111, %s112
    %p116 = pneg %p110
    %p117 = scmp.eq.s32.totalorder %s9, 1
    %p118 = por %p116, %p117
    %p119 = scmp.ne.s32.totalorder %s111, %s114
    %p120 = scmp.eq.s32.totalorder %s9, 0
    %p121 = por %p119, %p120
    %p122 = scmp.ne.s32.totalorder %s111, %s114
    %p123 = scmp.eq.s32.totalorder %s14, 1
    %p124 = por %p122, %p123
    %p125 = scmp.ne.s32.totalorder %s114, %s115
    %p126 = scmp.eq.s32.totalorder %s14, 0
    %p127 = por %p125, %p126
    %p128 = scmp.ne.s32.totalorder %s114, %s115
    %p129 = scmp.eq.s32.totalorder %s15, 1
    %p130 = por %p128, %p129
    %p132 = scmp.ne.s32.totalorder %s115, %s131
    %p133 = scmp.eq.s32.totalorder %s15, 0
    %p134 = por %p132, %p133
    %p135 = scmp.le.s32.totalorder 1, %s9
    %p136 = scmp.lt.s32.totalorder %s9, 3
    %p137 = pnand %p135, %p136
    %p138 = pneg %p137
    // Predicated region
    $region9: #{lapgan_discriminator_level3.6} parent=5 // pred_check
      _
    $region10: #{lapgan_discriminator_level3.6} parent=5 // pred_check_branch
      %140 = sbr.rel (%p137) target = $region12
    $region11: #{lapgan_discriminator_level3.6} parent=5 // pred_region
      %s141 = ssub.s32 %s9, 1
      // Predicated region
      $region13: #{lapgan_discriminator_level3.6} parent=11 // pred_check
        %p142 = pneg %p73
      $region14: #{lapgan_discriminator_level3.6} parent=11 // pred_check_branch
        %144 = sbr.rel (%p142) target = $region16
      $region15: #{lapgan_discriminator_level3.6} parent=11 // pred_region
        %p145 = scmp.lt.s32.totalorder %s19, 0
        %s146 = scalar_select %p145, %s19, 0
        %s147 = smul.addr %s146, 4
        %s148 = scalar_lea.vmem %s1, %s147
      $region16: #{lapgan_discriminator_level3.6} parent=11 // pred_fallthru
        _
      // Predicated region
      $region17: #{lapgan_discriminator_level3.6} parent=11 // pred_check
        %p149 = pneg %p99
      $region18: #{lapgan_discriminator_level3.6} parent=11 // pred_check_branch
        %151 = sbr.rel (%p149) target = $region20
      $region19: #{lapgan_discriminator_level3.6} parent=11 // pred_region
        %p152 = scmp.lt.s32.totalorder %s19, 0
        %s153 = scalar_select %p152, %s19, 0
        %s154 = scalar_lea.vmem %s2, %s153
      $region20: #{lapgan_discriminator_level3.6} parent=11 // pred_fallthru
        _
    $region12: #{lapgan_discriminator_level3.6} parent=5 // pred_fallthru
      _
    %p155 = scmp.lt.s32.totalorder %s9, 2
    // Predicated region
    $region21: #{lapgan_discriminator_level3.6} parent=5 // pred_check
      %p156 = pneg %p155
    $region22: #{lapgan_discriminator_level3.6} parent=5 // pred_check_branch
      %158 = sbr.rel (%p156) target = $region24
    $region23: #{lapgan_discriminator_level3.6} parent=5 // pred_region
      // Predicated region
      $region25: #{lapgan_discriminator_level3.6} parent=23 // pred_check
        %p159 = pneg %p41
      $region26: #{lapgan_discriminator_level3.6} parent=23 // pred_check_branch
        %161 = sbr.rel (%p159) target = $region28
      $region27: #{lapgan_discriminator_level3.6} parent=23 // pred_region
        %s162 = smul.u32 8, %s16
        %p163 = scmp.lt.s32.totalorder %s162, 15
        %s164 = scalar_select %p163, %s162, 15
        %s165 = smul.addr %s164, 5
        %s166 = smul.addr %s165, 4
        %s167 = scalar_lea.vmem %s0, %s166
        %s168 = smul.u32 8, %s16
      $region28: #{lapgan_discriminator_level3.6} parent=23 // pred_fallthru
        _
    $region24: #{lapgan_discriminator_level3.6} parent=5 // pred_fallthru
      _
    %p169 = scmp.le.s32.totalorder 1, %s9
    %p170 = scmp.lt.s32.totalorder %s9, 3
    %p171 = pnand %p169, %p170
    %p172 = pneg %p171
    // Predicated region
    $region29: #{lapgan_discriminator_level3.6} parent=5 // pred_check
      _
    $region30: #{lapgan_discriminator_level3.6} parent=5 // pred_check_branch
      %174 = sbr.rel (%p171) target = $region32
    $region31: #{lapgan_discriminator_level3.6} parent=5 // pred_region
      %s175 = ssub.s32 %s9, 1
      %s176 = smul.u32 8, %s18
      %p177 = scmp.lt.s32.totalorder %s176, 15
      %s178 = scalar_select %p177, %s176, 15
      %s179 = smul.addr %s178, 5
      %s180 = smul.addr %s179, 4
      %s181 = scalar_lea.vmem %s0, %s180
      %p182 = pneg %p47
      %p183 = pneg %p44
      %p184 = scmp.lt.s32.totalorder %s19, 0
      %s185 = scalar_select %p184, %s19, 0
      %s186 = smul.addr %s185, 4
      %s187 = scalar_lea.vmem %s1, %s186
      %p188 = pneg %p73
      %p189 = pneg %p70
      %p190 = scmp.lt.s32.totalorder %s19, 0
      %s191 = scalar_select %p190, %s19, 0
      %s192 = scalar_lea.vmem %s2, %s191
      %p193 = pneg %p99
      %p194 = pneg %p96
      %p195 = pneg %p127
      %p196 = pneg %p124
      %s197 = smul.u32 8, %s18
      %p198 = scmp.lt.s32.totalorder %s197, 15
      %s199 = scalar_select %p198, %s197, 15
      %p200 = scmp.lt.s32.totalorder %s19, 0
      %s201 = scalar_select %p200, %s19, 0
      %s202 = sadd.s32 %s201, %s199
      %s203 = smul.addr %s202, 4
      %s204 = scalar_lea.vmem %s3, %s203
      %s205 = smul.u32 8, %s18
      %p206 = scmp.lt.s32.totalorder %s205, 15
      %s207 = scalar_select %p206, %s205, 15
      %s208 = smul.addr %s207, 5
      %s209 = smul.addr %s208, 4
      %s210 = scalar_lea.vmem %s0, %s209
      %s211 = smul.u32 8, %s18
      %p212 = scmp.lt.s32.totalorder %s19, 0
      %s213 = scalar_select %p212, %s19, 0
      %s214 = smul.addr %s213, 4
      %s215 = scalar_lea.vmem %s1, %s214
      %p216 = scmp.lt.s32.totalorder %s19, 0
      %s217 = scalar_select %p216, %s19, 0
      %s218 = scalar_lea.vmem %s2, %s217
      %s219 = smul.u32 8, %s18
      %p220 = scmp.lt.s32.totalorder %s219, 15
      %s221 = scalar_select %p220, %s219, 15
      %p222 = scmp.lt.s32.totalorder %s19, 0
      %s223 = scalar_select %p222, %s19, 0
      %s224 = sadd.s32 %s223, %s221
      %s225 = smul.addr %s224, 4
      %s226 = scalar_lea.vmem %s3, %s225
      %s227 = smul.u32 8, %s18
      %v229 = vld [vmem:[%s210] sm:$0xff]
      %v230 = vld [vmem:[%s210 + $0x8] sm:$0xff]
      %v231 = vld [vmem:[%s210 + $0x10] sm:$0xf]
      %v232 = vld [vmem:[%s210 + $0x14] sm:$0xff]
      %v233 = vld [vmem:[%s210 + $0x1c] sm:$0xff]
      %v234 = vld [vmem:[%s210 + $0x24] sm:$0xf]
      %v235 = vld [vmem:[%s210 + $0x28] sm:$0xff]
      %v236 = vld [vmem:[%s210 + $0x30] sm:$0xff]
      %v237 = vld [vmem:[%s210 + $0x38] sm:$0xf]
      %v238 = vld [vmem:[%s210 + $0x3c] sm:$0xff]
      %v239 = vld [vmem:[%s210 + $0x44] sm:$0xff]
      %v240 = vld [vmem:[%s210 + $0x4c] sm:$0xf]
      %v241 = vld [vmem:[%s210 + $0x50] sm:$0xff]
      %v242 = vld [vmem:[%s210 + $0x58] sm:$0xff]
      %v243 = vld [vmem:[%s210 + $0x60] sm:$0xf]
      %v244 = vld [vmem:[%s210 + $0x64] sm:$0xff]
      %v245 = vld [vmem:[%s210 + $0x6c] sm:$0xff]
      %v246 = vld [vmem:[%s210 + $0x74] sm:$0xf]
      %v247 = vld [vmem:[%s210 + $0x78] sm:$0xff]
      %v248 = vld [vmem:[%s210 + $0x80] sm:$0xff]
      %v249 = vld [vmem:[%s210 + $0x88] sm:$0xf]
      %v250 = vld [vmem:[%s210 + $0x8c] sm:$0xff]
      %v251 = vld [vmem:[%s210 + $0x94] sm:$0xff]
      %v252 = vld [vmem:[%s210 + $0x9c] sm:$0xf]
      %v253 = vld [vmem:[%s215] sm:$0xf]
      %v254 = vld [vmem:[%s215 + $0x4] sm:$0xf]
      %v255 = vld [vmem:[%s215 + $0x8] sm:$0xf]
      %v256 = vld [vmem:[%s215 + $0xc] sm:$0xf]
      %v257 = vld [vmem:[%s215 + $0x10] sm:$0xf]
      %v258 = vld [vmem:[%s215 + $0x14] sm:$0xf]
      %v259 = vld [vmem:[%s215 + $0x18] sm:$0xf]
      %v260 = vld [vmem:[%s215 + $0x1c] sm:$0xf]
      %v261 = vld [vmem:[%s215 + $0x20] sm:$0xf]
      %v262 = vld [vmem:[%s215 + $0x24] sm:$0xf]
      %v263 = vld [vmem:[%s215 + $0x28] sm:$0xf]
      %v264 = vld [vmem:[%s215 + $0x2c] sm:$0xf]
      %v265 = vld [vmem:[%s215 + $0x30] sm:$0xf]
      %v266 = vld [vmem:[%s215 + $0x34] sm:$0xf]
      %v267 = vld [vmem:[%s215 + $0x38] sm:$0xf]
      %v268 = vld [vmem:[%s215 + $0x3c] sm:$0xf]
      %v269 = vld [vmem:[%s215 + $0x40] sm:$0xf]
      %v270 = vld [vmem:[%s215 + $0x44] sm:$0xf]
      %v271 = vld [vmem:[%s215 + $0x48] sm:$0xf]
      %v272 = vld [vmem:[%s215 + $0x4c] sm:$0xf]
      %v273 = vld [vmem:[%s215 + $0x50] sm:$0xf]
      %v274 = vld [vmem:[%s215 + $0x54] sm:$0xf]
      %v275 = vld [vmem:[%s215 + $0x58] sm:$0xf]
      %v276 = vld [vmem:[%s215 + $0x5c] sm:$0xf]
      %v277 = vld [vmem:[%s215 + $0x60] sm:$0xf]
      %v278 = vld [vmem:[%s215 + $0x64] sm:$0xf]
      %v279 = vld [vmem:[%s215 + $0x68] sm:$0xf]
      %v280 = vld [vmem:[%s215 + $0x6c] sm:$0xf]
      %v281 = vld [vmem:[%s215 + $0x70] sm:$0xf]
      %v282 = vld [vmem:[%s215 + $0x74] sm:$0xf]
      %v283 = vld [vmem:[%s215 + $0x78] sm:$0xf]
      %v284 = vld [vmem:[%s215 + $0x7c] sm:$0xf]
      %v285 = vld [vmem:[%s215 + $0x80] sm:$0xf]
      %v286 = vld [vmem:[%s215 + $0x84] sm:$0xf]
      %v287 = vld [vmem:[%s215 + $0x88] sm:$0xf]
      %v288 = vld [vmem:[%s215 + $0x8c] sm:$0xf]
      %v289 = vld [vmem:[%s215 + $0x90] sm:$0xf]
      %v290 = vld [vmem:[%s215 + $0x94] sm:$0xf]
      %v291 = vld [vmem:[%s215 + $0x98] sm:$0xf]
      %v292 = vld [vmem:[%s215 + $0x9c] sm:$0xf]
      %v293 = vld [vmem:[%s215 + $0xa0] sm:$0xf]
      %v294 = vld [vmem:[%s215 + $0xa4] sm:$0xf]
      %v295 = vld [vmem:[%s215 + $0xa8] sm:$0xf]
      %v296 = vld [vmem:[%s215 + $0xac] sm:$0xf]
      %v297 = vld [vmem:[%s215 + $0xb0] sm:$0xf]
      %v298 = vld [vmem:[%s215 + $0xb4] sm:$0xf]
      %v299 = vld [vmem:[%s215 + $0xb8] sm:$0xf]
      %v300 = vld [vmem:[%s215 + $0xbc] sm:$0xf]
      %v301 = vld [vmem:[%s215 + $0xc0] sm:$0xf]
      %v302 = vld [vmem:[%s215 + $0xc4] sm:$0xf]
      %v303 = vld [vmem:[%s215 + $0xc8] sm:$0xf]
      %v304 = vld [vmem:[%s215 + $0xcc] sm:$0xf]
      %v305 = vld [vmem:[%s215 + $0xd0] sm:$0xf]
      %v306 = vld [vmem:[%s215 + $0xd4] sm:$0xf]
      %v307 = vld [vmem:[%s215 + $0xd8] sm:$0xf]
      %v308 = vld [vmem:[%s215 + $0xdc] sm:$0xf]
      %v309 = vld [vmem:[%s215 + $0xe0] sm:$0xf]
      %v310 = vld [vmem:[%s215 + $0xe4] sm:$0xf]
      %v311 = vld [vmem:[%s215 + $0xe8] sm:$0xf]
      %v312 = vld [vmem:[%s215 + $0xec] sm:$0xf]
      %v313 = vld [vmem:[%s215 + $0xf0] sm:$0xf]
      %v314 = vld [vmem:[%s215 + $0xf4] sm:$0xf]
      %v315 = vld [vmem:[%s215 + $0xf8] sm:$0xf]
      %v316 = vld [vmem:[%s215 + $0xfc] sm:$0xf]
      %v317 = vld [vmem:[%s215 + $0x100] sm:$0xf]
      %v318 = vld [vmem:[%s215 + $0x104] sm:$0xf]
      %v319 = vld [vmem:[%s215 + $0x108] sm:$0xf]
      %v320 = vld [vmem:[%s215 + $0x10c] sm:$0xf]
      %v321 = vld [vmem:[%s215 + $0x110] sm:$0xf]
      %v322 = vld [vmem:[%s215 + $0x114] sm:$0xf]
      %v323 = vld [vmem:[%s215 + $0x118] sm:$0xf]
      %v324 = vld [vmem:[%s215 + $0x11c] sm:$0xf]
      %v325 = vld [vmem:[%s218] sm:$0x1]
      %v327 = vperm.slane %v325, 0
      %v353 = vunpack.c.l.b16 %v229
      %v354 = vunpack.c.h.b16 %v229
      %v355 = vunpack.c.l.b16 %v230
      %v356 = vunpack.c.h.b16 %v230
      %v357 = vunpack.c.l.b16 %v231
      %v358 = vunpack.c.l.b16 %v232
      %v359 = vunpack.c.h.b16 %v232
      %v360 = vunpack.c.l.b16 %v233
      %v361 = vunpack.c.h.b16 %v233
      %v362 = vunpack.c.l.b16 %v234
      %v363 = vunpack.c.l.b16 %v235
      %v364 = vunpack.c.h.b16 %v235
      %v365 = vunpack.c.l.b16 %v236
      %v366 = vunpack.c.h.b16 %v236
      %v367 = vunpack.c.l.b16 %v237
      %v368 = vunpack.c.l.b16 %v238
      %v369 = vunpack.c.h.b16 %v238
      %v370 = vunpack.c.l.b16 %v239
      %v371 = vunpack.c.h.b16 %v239
      %v372 = vunpack.c.l.b16 %v240
      %v373 = vunpack.c.l.b16 %v241
      %v374 = vunpack.c.h.b16 %v241
      %v375 = vunpack.c.l.b16 %v242
      %v376 = vunpack.c.h.b16 %v242
      %v377 = vunpack.c.l.b16 %v243
      %v378 = vunpack.c.l.b16 %v244
      %v379 = vunpack.c.h.b16 %v244
      %v380 = vunpack.c.l.b16 %v245
      %v381 = vunpack.c.h.b16 %v245
      %v382 = vunpack.c.l.b16 %v246
      %v383 = vunpack.c.l.b16 %v247
      %v384 = vunpack.c.h.b16 %v247
      %v385 = vunpack.c.l.b16 %v248
      %v386 = vunpack.c.h.b16 %v248
      %v387 = vunpack.c.l.b16 %v249
      %v388 = vunpack.c.l.b16 %v250
      %v389 = vunpack.c.h.b16 %v250
      %v390 = vunpack.c.l.b16 %v251
      %v391 = vunpack.c.h.b16 %v251
      %v392 = vunpack.c.l.b16 %v252
      %v393 = vpack.c.b16 %v358, %v353
      %v394 = vpack.c.b16 %v359, %v354
      %v395 = vpack.c.b16 %v360, %v355
      %v396 = vpack.c.b16 %v361, %v356
      %v397 = vpack.c.b16 %v362, %v357
      %v398 = vpack.c.b16 %v368, %v363
      %v399 = vpack.c.b16 %v369, %v364
      %v400 = vpack.c.b16 %v370, %v365
      %v401 = vpack.c.b16 %v371, %v366
      %v402 = vpack.c.b16 %v372, %v367
      %v403 = vpack.c.b16 %v378, %v373
      %v404 = vpack.c.b16 %v379, %v374
      %v405 = vpack.c.b16 %v380, %v375
      %v406 = vpack.c.b16 %v381, %v376
      %v407 = vpack.c.b16 %v382, %v377
      %v408 = vpack.c.b16 %v388, %v383
      %v409 = vpack.c.b16 %v389, %v384
      %v410 = vpack.c.b16 %v390, %v385
      %v411 = vpack.c.b16 %v391, %v386
      %v412 = vpack.c.b16 %v392, %v387
      %v501 = vunpack.c.l.b16 %v253
      %v502 = vunpack.c.l.b16 %v254
      %v503 = vunpack.c.l.b16 %v255
      %v504 = vunpack.c.l.b16 %v256
      %v505 = vunpack.c.l.b16 %v257
      %v506 = vunpack.c.l.b16 %v258
      %v507 = vunpack.c.l.b16 %v259
      %v508 = vunpack.c.l.b16 %v260
      %v509 = vunpack.c.l.b16 %v261
      %v510 = vunpack.c.l.b16 %v262
      %v511 = vunpack.c.l.b16 %v263
      %v512 = vunpack.c.l.b16 %v264
      %v513 = vunpack.c.l.b16 %v265
      %v514 = vunpack.c.l.b16 %v266
      %v515 = vunpack.c.l.b16 %v267
      %v516 = vunpack.c.l.b16 %v268
      %v517 = vunpack.c.l.b16 %v269
      %v518 = vunpack.c.l.b16 %v270
      %v519 = vunpack.c.l.b16 %v271
      %v520 = vunpack.c.l.b16 %v272
      %v521 = vunpack.c.l.b16 %v273
      %v522 = vunpack.c.l.b16 %v274
      %v523 = vunpack.c.l.b16 %v275
      %v524 = vunpack.c.l.b16 %v276
      %v525 = vunpack.c.l.b16 %v277
      %v526 = vunpack.c.l.b16 %v278
      %v527 = vunpack.c.l.b16 %v279
      %v528 = vunpack.c.l.b16 %v280
      %v529 = vunpack.c.l.b16 %v281
      %v530 = vunpack.c.l.b16 %v282
      %v531 = vunpack.c.l.b16 %v283
      %v532 = vunpack.c.l.b16 %v284
      %v533 = vunpack.c.l.b16 %v285
      %v534 = vunpack.c.l.b16 %v286
      %v535 = vunpack.c.l.b16 %v287
      %v536 = vunpack.c.l.b16 %v288
      %v537 = vunpack.c.l.b16 %v289
      %v538 = vunpack.c.l.b16 %v290
      %v539 = vunpack.c.l.b16 %v291
      %v540 = vunpack.c.l.b16 %v292
      %v541 = vunpack.c.l.b16 %v293
      %v542 = vunpack.c.l.b16 %v294
      %v543 = vunpack.c.l.b16 %v295
      %v544 = vunpack.c.l.b16 %v296
      %v545 = vunpack.c.l.b16 %v297
      %v546 = vunpack.c.l.b16 %v298
      %v547 = vunpack.c.l.b16 %v299
      %v548 = vunpack.c.l.b16 %v300
      %v549 = vunpack.c.l.b16 %v301
      %v550 = vunpack.c.l.b16 %v302
      %v551 = vunpack.c.l.b16 %v303
      %v552 = vunpack.c.l.b16 %v304
      %v553 = vunpack.c.l.b16 %v305
      %v554 = vunpack.c.l.b16 %v306
      %v555 = vunpack.c.l.b16 %v307
      %v556 = vunpack.c.l.b16 %v308
      %v557 = vunpack.c.l.b16 %v309
      %v558 = vunpack.c.l.b16 %v310
      %v559 = vunpack.c.l.b16 %v311
      %v560 = vunpack.c.l.b16 %v312
      %v561 = vunpack.c.l.b16 %v313
      %v562 = vunpack.c.l.b16 %v314
      %v563 = vunpack.c.l.b16 %v315
      %v564 = vunpack.c.l.b16 %v316
      %v565 = vunpack.c.l.b16 %v317
      %v566 = vunpack.c.l.b16 %v318
      %v567 = vunpack.c.l.b16 %v319
      %v568 = vunpack.c.l.b16 %v320
      %v569 = vunpack.c.l.b16 %v321
      %v570 = vunpack.c.l.b16 %v322
      %v571 = vunpack.c.l.b16 %v323
      %v572 = vunpack.c.l.b16 %v324
      %v573 = vpack.c.b16 %v502, %v501
      %v574 = vpack.c.b16 %v504, %v503
      %v575 = vpack.c.b16 %v506, %v505
      %v576 = vpack.c.b16 %v508, %v507
      %v577 = vpack.c.b16 %v510, %v509
      %v578 = vpack.c.b16 %v512, %v511
      %v579 = vpack.c.b16 %v514, %v513
      %v580 = vpack.c.b16 %v516, %v515
      %v581 = vpack.c.b16 %v518, %v517
      %v582 = vpack.c.b16 %v520, %v519
      %v583 = vpack.c.b16 %v522, %v521
      %v584 = vpack.c.b16 %v524, %v523
      %v585 = vpack.c.b16 %v526, %v525
      %v586 = vpack.c.b16 %v528, %v527
      %v587 = vpack.c.b16 %v530, %v529
      %v588 = vpack.c.b16 %v532, %v531
      %v589 = vpack.c.b16 %v534, %v533
      %v590 = vpack.c.b16 %v536, %v535
      %v591 = vpack.c.b16 %v538, %v537
      %v592 = vpack.c.b16 %v540, %v539
      %v593 = vpack.c.b16 %v542, %v541
      %v594 = vpack.c.b16 %v544, %v543
      %v595 = vpack.c.b16 %v546, %v545
      %v596 = vpack.c.b16 %v548, %v547
      %v597 = vpack.c.b16 %v550, %v549
      %v598 = vpack.c.b16 %v552, %v551
      %v599 = vpack.c.b16 %v554, %v553
      %v600 = vpack.c.b16 %v556, %v555
      %v601 = vpack.c.b16 %v558, %v557
      %v602 = vpack.c.b16 %v560, %v559
      %v603 = vpack.c.b16 %v562, %v561
      %v604 = vpack.c.b16 %v564, %v563
      %v605 = vpack.c.b16 %v566, %v565
      %v606 = vpack.c.b16 %v568, %v567
      %v607 = vpack.c.b16 %v570, %v569
      %v608 = vpack.c.b16 %v572, %v571
      %vm645 = vcmask 523264
      %v647 = vsel %vm645, %v397, 0
      %v650 = vsel %vm645, %v402, 0
      %v653 = vsel %vm645, %v407, 0
      %v656 = vsel %vm645, %v412, 0
      %658 = vmatpush.bf16.msra.mxu0 %v580
      %659 = vmatpush.bf16.msra.mxu0 %v579
      %660 = vmatpush.bf16.msra.mxu0 %v578
      %661 = vmatpush.bf16.msra.mxu0 %v577
      %662 = vmatpush.bf16.msra.mxu0 %v576
      %663 = vmatpush.bf16.msra.mxu0 %v575
      %664 = vmatpush.bf16.msra.mxu0 %v574
      %665 = vmatpush.bf16.msra.mxu0 %v573
      %666 = vmatmul.bf16.gmra.mxu0 %v393
      %v667 = vpop.f32.mrf.mxu0
      %v668 = vadd.f32 %v327, %v667
      %v669 = vpop.f32.mrf.mxu0
      %v670 = vadd.f32 %v327, %v669
      %671 = vmatmul.bf16.gmra.mxu0 %v398
      %v672 = vpop.f32.mrf.mxu0
      %v673 = vadd.f32 %v327, %v672
      %v674 = vpop.f32.mrf.mxu0
      %v675 = vadd.f32 %v327, %v674
      %676 = vmatmul.bf16.gmra.mxu0 %v403
      %v677 = vpop.f32.mrf.mxu0
      %v678 = vadd.f32 %v327, %v677
      %v679 = vpop.f32.mrf.mxu0
      %v680 = vadd.f32 %v327, %v679
      %681 = vmatmul.bf16.gmra.mxu0 %v408
      %v682 = vpop.f32.mrf.mxu0
      %v683 = vadd.f32 %v327, %v682
      %v684 = vpop.f32.mrf.mxu0
      %v685 = vadd.f32 %v327, %v684
      %686 = vdwg.mxu0
      %687 = vmatpush.bf16.msra.mxu0 %v588
      %688 = vmatpush.bf16.msra.mxu0 %v587
      %689 = vmatpush.bf16.msra.mxu0 %v586
      %690 = vmatpush.bf16.msra.mxu0 %v585
      %691 = vmatpush.bf16.msra.mxu0 %v584
      %692 = vmatpush.bf16.msra.mxu0 %v583
      %693 = vmatpush.bf16.msra.mxu0 %v582
      %694 = vmatpush.bf16.msra.mxu0 %v581
      %695 = vmatmul.bf16.gmra.mxu0 %v394
      %v696 = vpop.f32.mrf.mxu0
      %v697 = vadd.f32 %v668, %v696
      %v698 = vpop.f32.mrf.mxu0
      %v699 = vadd.f32 %v670, %v698
      %700 = vmatmul.bf16.gmra.mxu0 %v399
      %v701 = vpop.f32.mrf.mxu0
      %v702 = vadd.f32 %v673, %v701
      %v703 = vpop.f32.mrf.mxu0
      %v704 = vadd.f32 %v675, %v703
      %705 = vmatmul.bf16.gmra.mxu0 %v404
      %v706 = vpop.f32.mrf.mxu0
      %v707 = vadd.f32 %v678, %v706
      %v708 = vpop.f32.mrf.mxu0
      %v709 = vadd.f32 %v680, %v708
      %710 = vmatmul.bf16.gmra.mxu0 %v409
      %v711 = vpop.f32.mrf.mxu0
      %v712 = vadd.f32 %v683, %v711
      %v713 = vpop.f32.mrf.mxu0
      %v714 = vadd.f32 %v685, %v713
      %715 = vdwg.mxu0
      %716 = vmatpush.bf16.msra.mxu0 %v596
      %717 = vmatpush.bf16.msra.mxu0 %v595
      %718 = vmatpush.bf16.msra.mxu0 %v594
      %719 = vmatpush.bf16.msra.mxu0 %v593
      %720 = vmatpush.bf16.msra.mxu0 %v592
      %721 = vmatpush.bf16.msra.mxu0 %v591
      %722 = vmatpush.bf16.msra.mxu0 %v590
      %723 = vmatpush.bf16.msra.mxu0 %v589
      %724 = vmatmul.bf16.gmra.mxu0 %v395
      %v725 = vpop.f32.mrf.mxu0
      %v726 = vadd.f32 %v697, %v725
      %v727 = vpop.f32.mrf.mxu0
      %v728 = vadd.f32 %v699, %v727
      %729 = vmatmul.bf16.gmra.mxu0 %v400
      %v730 = vpop.f32.mrf.mxu0
      %v731 = vadd.f32 %v702, %v730
      %v732 = vpop.f32.mrf.mxu0
      %v733 = vadd.f32 %v704, %v732
      %734 = vmatmul.bf16.gmra.mxu0 %v405
      %v735 = vpop.f32.mrf.mxu0
      %v736 = vadd.f32 %v707, %v735
      %v737 = vpop.f32.mrf.mxu0
      %v738 = vadd.f32 %v709, %v737
      %739 = vmatmul.bf16.gmra.mxu0 %v410
      %v740 = vpop.f32.mrf.mxu0
      %v741 = vadd.f32 %v712, %v740
      %v742 = vpop.f32.mrf.mxu0
      %v743 = vadd.f32 %v714, %v742
      %744 = vdwg.mxu0
      %745 = vmatpush.bf16.msra.mxu0 %v604
      %746 = vmatpush.bf16.msra.mxu0 %v603
      %747 = vmatpush.bf16.msra.mxu0 %v602
      %748 = vmatpush.bf16.msra.mxu0 %v601
      %749 = vmatpush.bf16.msra.mxu0 %v600
      %750 = vmatpush.bf16.msra.mxu0 %v599
      %751 = vmatpush.bf16.msra.mxu0 %v598
      %752 = vmatpush.bf16.msra.mxu0 %v597
      %753 = vmatmul.bf16.gmra.mxu0 %v396
      %v754 = vpop.f32.mrf.mxu0
      %v755 = vadd.f32 %v726, %v754
      %v756 = vpop.f32.mrf.mxu0
      %v757 = vadd.f32 %v728, %v756
      %758 = vmatmul.bf16.gmra.mxu0 %v401
      %v759 = vpop.f32.mrf.mxu0
      %v760 = vadd.f32 %v731, %v759
      %v761 = vpop.f32.mrf.mxu0
      %v762 = vadd.f32 %v733, %v761
      %763 = vmatmul.bf16.gmra.mxu0 %v406
      %v764 = vpop.f32.mrf.mxu0
      %v765 = vadd.f32 %v736, %v764
      %v766 = vpop.f32.mrf.mxu0
      %v767 = vadd.f32 %v738, %v766
      %768 = vmatmul.bf16.gmra.mxu0 %v411
      %v769 = vpop.f32.mrf.mxu0
      %v770 = vadd.f32 %v741, %v769
      %v771 = vpop.f32.mrf.mxu0
      %v772 = vadd.f32 %v743, %v771
      %773 = vdwg.mxu0
      %774 = vmatpush.bf16.msra.mxu0 0
      %775 = vmatpush.bf16.msra.mxu0 0
      %776 = vmatpush.bf16.msra.mxu0 0
      %777 = vmatpush.bf16.msra.mxu0 0
      %778 = vmatpush.bf16.msra.mxu0 %v608
      %779 = vmatpush.bf16.msra.mxu0 %v607
      %780 = vmatpush.bf16.msra.mxu0 %v606
      %781 = vmatpush.bf16.msra.mxu0 %v605
      %782 = vmatmul.bf16.gmra.mxu0 %v647
      %v783 = vpop.f32.mrf.mxu0
      %v784 = vadd.f32 %v755, %v783
      %v785 = vpop.f32.mrf.mxu0
      %v786 = vadd.f32 %v757, %v785
      %787 = vmatmul.bf16.gmra.mxu0 %v650
      %v788 = vpop.f32.mrf.mxu0
      %v789 = vadd.f32 %v760, %v788
      %v790 = vpop.f32.mrf.mxu0
      %v791 = vadd.f32 %v762, %v790
      %792 = vmatmul.bf16.gmra.mxu0 %v653
      %v793 = vpop.f32.mrf.mxu0
      %v794 = vadd.f32 %v765, %v793
      %v795 = vpop.f32.mrf.mxu0
      %v796 = vadd.f32 %v767, %v795
      %797 = vmatmul.bf16.gmra.mxu0 %v656
      %v798 = vpop.f32.mrf.mxu0
      %v799 = vadd.f32 %v770, %v798
      %v800 = vpop.f32.mrf.mxu0
      %v801 = vadd.f32 %v772, %v800
      %802 = vdwg.mxu0
      %vm803 = vcmp.gt.f32.partialorder %v784, 0.0
      %vm804 = vcmp.gt.f32.partialorder %v786, 0.0
      %vm805 = vcmp.gt.f32.partialorder %v789, 0.0
      %vm806 = vcmp.gt.f32.partialorder %v791, 0.0
      %vm807 = vcmp.gt.f32.partialorder %v794, 0.0
      %vm808 = vcmp.gt.f32.partialorder %v796, 0.0
      %vm809 = vcmp.gt.f32.partialorder %v799, 0.0
      %vm810 = vcmp.gt.f32.partialorder %v801, 0.0
      %v811 = vmin.f32 %v784, 0.0
      %v812 = vmin.f32 %v786, 0.0
      %v813 = vmin.f32 %v789, 0.0
      %v814 = vmin.f32 %v791, 0.0
      %v815 = vmin.f32 %v794, 0.0
      %v816 = vmin.f32 %v796, 0.0
      %v817 = vmin.f32 %v799, 0.0
      %v818 = vmin.f32 %v801, 0.0
      %v819 = vmul.f32 %v811, 1.442695
      %v820 = vpow.pop %v819
      %v821 = vmul.f32 %v812, 1.442695
      %v822 = vpow.pop %v821
      %v823 = vmul.f32 %v813, 1.442695
      %v824 = vpow.pop %v823
      %v825 = vmul.f32 %v814, 1.442695
      %v826 = vpow.pop %v825
      %v827 = vmul.f32 %v815, 1.442695
      %v828 = vpow.pop %v827
      %v829 = vmul.f32 %v816, 1.442695
      %v830 = vpow.pop %v829
      %v831 = vmul.f32 %v817, 1.442695
      %v832 = vpow.pop %v831
      %v833 = vmul.f32 %v818, 1.442695
      %v834 = vpow.pop %v833
      %v835 = vsub.f32 %v820, 1.0
      %v836 = vsub.f32 %v822, 1.0
      %v837 = vsub.f32 %v824, 1.0
      %v838 = vsub.f32 %v826, 1.0
      %v839 = vsub.f32 %v828, 1.0
      %v840 = vsub.f32 %v830, 1.0
      %v841 = vsub.f32 %v832, 1.0
      %v842 = vsub.f32 %v834, 1.0
      %v843 = vsel %vm803, %v784, %v835
      %v844 = vsel %vm804, %v786, %v836
      %v845 = vsel %vm805, %v789, %v837
      %v846 = vsel %vm806, %v791, %v838
      %v847 = vsel %vm807, %v794, %v839
      %v848 = vsel %vm808, %v796, %v840
      %v849 = vsel %vm809, %v799, %v841
      %v850 = vsel %vm810, %v801, %v842
      %v851 = vpack.c.bf16 %v843, %v843
      %v852 = vpack.c.bf16 %v844, %v844
      %v853 = vpack.c.bf16 %v845, %v845
      %v854 = vpack.c.bf16 %v846, %v846
      %v855 = vpack.c.bf16 %v847, %v847
      %v856 = vpack.c.bf16 %v848, %v848
      %v857 = vpack.c.bf16 %v849, %v849
      %v858 = vpack.c.bf16 %v850, %v850
      %859 = vst [vmem:[%s226] sm:$0xf] %v851
      %860 = vst [vmem:[%s226 + $0x4] sm:$0xf] %v852
      %861 = vst [vmem:[%s226 + $0x8] sm:$0xf] %v853
      %862 = vst [vmem:[%s226 + $0xc] sm:$0xf] %v854
      %863 = vst [vmem:[%s226 + $0x10] sm:$0xf] %v855
      %864 = vst [vmem:[%s226 + $0x14] sm:$0xf] %v856
      %865 = vst [vmem:[%s226 + $0x18] sm:$0xf] %v857
      %866 = vst [vmem:[%s226 + $0x1c] sm:$0xf] %v858
      %s867 = smul.u32 8, %s18
      %p868 = scmp.lt.s32.totalorder %s867, 15
      %s869 = scalar_select %p868, %s867, 15
      %p870 = scmp.lt.s32.totalorder %s19, 0
      %s871 = scalar_select %p870, %s19, 0
      %s872 = sadd.s32 %s871, %s869
      %s873 = smul.addr %s872, 4
      %s874 = scalar_lea.vmem %s3, %s873
      // Predicated region
      $region33: #{lapgan_discriminator_level3.6} parent=31 // pred_check
        %p875 = pneg %p124
      $region34: #{lapgan_discriminator_level3.6} parent=31 // pred_check_branch
        %877 = sbr.rel (%p875) target = $region36
      $region35: #{lapgan_discriminator_level3.6} parent=31 // pred_region
        %s878 = smul.u32 8, %s18
      $region36: #{lapgan_discriminator_level3.6} parent=31 // pred_fallthru
        _
    $region32: #{lapgan_discriminator_level3.6} parent=5 // pred_fallthru
      _
    %p879 = scmp.le.s32.totalorder 2, %s9
    // Predicated region
    $region37: #{lapgan_discriminator_level3.6} parent=5 // pred_check
      %p880 = pneg %p879
    $region38: #{lapgan_discriminator_level3.6} parent=5 // pred_check_branch
      %882 = sbr.rel (%p880) target = $region40
    $region39: #{lapgan_discriminator_level3.6} parent=5 // pred_region
      %s883 = ssub.s32 %s9, 2
      // Predicated region
      $region41: #{lapgan_discriminator_level3.6} parent=39 // pred_check
        %p884 = pneg %p130
      $region42: #{lapgan_discriminator_level3.6} parent=39 // pred_check_branch
        %886 = sbr.rel (%p884) target = $region44
      $region43: #{lapgan_discriminator_level3.6} parent=39 // pred_region
        %s887 = smul.u32 8, %s20
        %p888 = scmp.lt.s32.totalorder %s887, 15
        %s889 = scalar_select %p888, %s887, 15
        %p890 = scmp.lt.s32.totalorder %s21, 0
        %s891 = scalar_select %p890, %s21, 0
        %s892 = sadd.s32 %s891, %s889
        %s893 = smul.addr %s892, 4
        %s894 = scalar_lea.vmem %s3, %s893
      $region44: #{lapgan_discriminator_level3.6} parent=39 // pred_fallthru
        _
    $region40: #{lapgan_discriminator_level3.6} parent=5 // pred_fallthru
      _
  $region6: #{lapgan_discriminator_level3.6} parent=0 // loop_footer
    %s13 = sadd.s32 1, %s9
  $region7: #{lapgan_discriminator_level3.6} parent=0 // loop_footer_branch
    %8 = sbr.rel target = $region3
  $region8: #{lapgan_discriminator_level3.6} parent=0 // loop_exit
    _

// kernel: lapgan_discriminator_level3.7
$region0: #{lapgan_discriminator_level3.7}
  #allocation0 [shape = 'u32[]', space=smem, size = 0x4, offset = 0x4, fixed_abs, tag = 'smem constant byte address 0x4 - core index']
  #allocation1 [shape = 'u32[72,128]{1,0:T(1,128)}', space=vmem, size = 0x9000, scoped, tag = 'internal scratch']
  %s0 = inlined_call_operand.vmem [shape: bf16[2,16,1152], index: 0, kind: input, shape index: {}]
  %s1 = inlined_call_operand.vmem [shape: bf16[1152,256], index: 1, kind: input, shape index: {}]
  %s2 = inlined_call_operand.vmem [shape: f32[1,256], index: 2, kind: input, shape index: {}]
  %s3 = inlined_call_operand.vmem [shape: bf16[16,256,128], index: 3, kind: input, shape index: {}]
  %s4 = inlined_call_operand.vmem [shape: f32[1,128], index: 4, kind: input, shape index: {}]
  %s5 = inlined_call_operand.vmem [shape: f32[2,1,128], index: 5, kind: output, shape index: {}]
  %s6 = sld [smem:[#allocation0]]
  $region53: #{lapgan_discriminator_level3.7} parent=0
    _
  %s8 = ssub.s32 1, %s6
  %s9 = scalar_select 0, %s8, %s6
  loop: start=0, step=1, limit=4
  $region2: #{lapgan_discriminator_level3.7} parent=0 // loop_pre_header
    _
  $region3: #{lapgan_discriminator_level3.7} parent=0 // loop_header
    %s11 = sphi 0, %s15
    %p12 = scmp.ge.s32.totalorder %s11, 4
    %s21 = sphi 0, %s23
    %s24 = sphi 0, %s21
    %s25 = sphi 0, %s24
    %s41 = sphi 0, %s25
    %s45 = sphi 0, %s45
    %s47 = sphi 0, %s45
    %s48 = sphi 0, %s47
    %s62 = sphi 0, %s48
    %s66 = sphi 0, %s66
    %s68 = sphi 0, %s66
    %s69 = sphi 0, %s68
    %s83 = sphi 0, %s69
    %s87 = sphi 0, %s87
    %s89 = sphi 0, %s87
    %s90 = sphi 0, %s89
    %s104 = sphi 0, %s90
    %s108 = sphi 0, %s108
    %s110 = sphi 0, %s108
    %s111 = sphi 0, %s110
    %s125 = sphi 0, %s111
    %s131 = sphi 0, %s133
    %s134 = sphi 0, %s131
    %s135 = sphi 0, %s134
    %s151 = sphi 0, %s135
  $region4: #{lapgan_discriminator_level3.7} parent=0 // loop_header_branch
    %14 = sbr.rel (%p12) target = $region8
  $region5: #{lapgan_discriminator_level3.7} parent=0 // loop_body
    %s16 = ssub.s32 %s11, 1
    %s17 = ssub.s32 %s11, 2
    %s18 = sadd.s32 %s11, 1
    %s19 = ssub.s32 %s11, %s18
    %p20 = scmp.eq.s32.totalorder %s19, 0
    %s22 = sadd.s32 %s21, 1
    %s23 = scalar_select %p20, %s21, %s22
    %p26 = pneg %p20
    %p27 = scmp.eq.s32.totalorder %s11, 1
    %p28 = por %p26, %p27
    %p29 = scmp.ne.s32.totalorder %s21, %s24
    %p30 = scmp.eq.s32.totalorder %s11, 0
    %p31 = por %p29, %p30
    %p32 = scmp.ne.s32.totalorder %s21, %s24
    %p33 = scmp.eq.s32.totalorder %s16, 1
    %p34 = por %p32, %p33
    %p35 = scmp.ne.s32.totalorder %s24, %s25
    %p36 = scmp.eq.s32.totalorder %s16, 0
    %p37 = por %p35, %p36
    %p38 = scmp.ne.s32.totalorder %s24, %s25
    %p39 = scmp.eq.s32.totalorder %s17, 1
    %p40 = por %p38, %p39
    %p42 = scmp.ne.s32.totalorder %s25, %s41
    %p43 = scmp.eq.s32.totalorder %s17, 0
    %p44 = por %p42, %p43
    %s46 = sadd.s32 %s45, 1
    %p49 = scmp.eq.s32.totalorder %s11, 1
    %p50 = scmp.ne.s32.totalorder %s45, %s47
    %p51 = scmp.eq.s32.totalorder %s11, 0
    %p52 = por %p50, %p51
    %p53 = scmp.ne.s32.totalorder %s45, %s47
    %p54 = scmp.eq.s32.totalorder %s16, 1
    %p55 = por %p53, %p54
    %p56 = scmp.ne.s32.totalorder %s47, %s48
    %p57 = scmp.eq.s32.totalorder %s16, 0
    %p58 = por %p56, %p57
    %p59 = scmp.ne.s32.totalorder %s47, %s48
    %p60 = scmp.eq.s32.totalorder %s17, 1
    %p61 = por %p59, %p60
    %p63 = scmp.ne.s32.totalorder %s48, %s62
    %p64 = scmp.eq.s32.totalorder %s17, 0
    %p65 = por %p63, %p64
    %s67 = sadd.s32 %s66, 1
    %p70 = scmp.eq.s32.totalorder %s11, 1
    %p71 = scmp.ne.s32.totalorder %s66, %s68
    %p72 = scmp.eq.s32.totalorder %s11, 0
    %p73 = por %p71, %p72
    %p74 = scmp.ne.s32.totalorder %s66, %s68
    %p75 = scmp.eq.s32.totalorder %s16, 1
    %p76 = por %p74, %p75
    %p77 = scmp.ne.s32.totalorder %s68, %s69
    %p78 = scmp.eq.s32.totalorder %s16, 0
    %p79 = por %p77, %p78
    %p80 = scmp.ne.s32.totalorder %s68, %s69
    %p81 = scmp.eq.s32.totalorder %s17, 1
    %p82 = por %p80, %p81
    %p84 = scmp.ne.s32.totalorder %s69, %s83
    %p85 = scmp.eq.s32.totalorder %s17, 0
    %p86 = por %p84, %p85
    %s88 = sadd.s32 %s87, 1
    %p91 = scmp.eq.s32.totalorder %s11, 1
    %p92 = scmp.ne.s32.totalorder %s87, %s89
    %p93 = scmp.eq.s32.totalorder %s11, 0
    %p94 = por %p92, %p93
    %p95 = scmp.ne.s32.totalorder %s87, %s89
    %p96 = scmp.eq.s32.totalorder %s16, 1
    %p97 = por %p95, %p96
    %p98 = scmp.ne.s32.totalorder %s89, %s90
    %p99 = scmp.eq.s32.totalorder %s16, 0
    %p100 = por %p98, %p99
    %p101 = scmp.ne.s32.totalorder %s89, %s90
    %p102 = scmp.eq.s32.totalorder %s17, 1
    %p103 = por %p101, %p102
    %p105 = scmp.ne.s32.totalorder %s90, %s104
    %p106 = scmp.eq.s32.totalorder %s17, 0
    %p107 = por %p105, %p106
    %s109 = sadd.s32 %s108, 1
    %p112 = scmp.eq.s32.totalorder %s11, 1
    %p113 = scmp.ne.s32.totalorder %s108, %s110
    %p114 = scmp.eq.s32.totalorder %s11, 0
    %p115 = por %p113, %p114
    %p116 = scmp.ne.s32.totalorder %s108, %s110
    %p117 = scmp.eq.s32.totalorder %s16, 1
    %p118 = por %p116, %p117
    %p119 = scmp.ne.s32.totalorder %s110, %s111
    %p120 = scmp.eq.s32.totalorder %s16, 0
    %p121 = por %p119, %p120
    %p122 = scmp.ne.s32.totalorder %s110, %s111
    %p123 = scmp.eq.s32.totalorder %s17, 1
    %p124 = por %p122, %p123
    %p126 = scmp.ne.s32.totalorder %s111, %s125
    %p127 = scmp.eq.s32.totalorder %s17, 0
    %p128 = por %p126, %p127
    %s129 = ssub.s32 %s11, %s18
    %p130 = scmp.eq.s32.totalorder %s129, 0
    %s132 = sadd.s32 %s131, 1
    %s133 = scalar_select %p130, %s131, %s132
    %p136 = pneg %p130
    %p137 = scmp.eq.s32.totalorder %s11, 1
    %p138 = por %p136, %p137
    %p139 = scmp.ne.s32.totalorder %s131, %s134
    %p140 = scmp.eq.s32.totalorder %s11, 0
    %p141 = por %p139, %p140
    %p142 = scmp.ne.s32.totalorder %s131, %s134
    %p143 = scmp.eq.s32.totalorder %s16, 1
    %p144 = por %p142, %p143
    %p145 = scmp.ne.s32.totalorder %s134, %s135
    %p146 = scmp.eq.s32.totalorder %s16, 0
    %p147 = por %p145, %p146
    %p148 = scmp.ne.s32.totalorder %s134, %s135
    %p149 = scmp.eq.s32.totalorder %s17, 1
    %p150 = por %p148, %p149
    %p152 = scmp.ne.s32.totalorder %s135, %s151
    %p153 = scmp.eq.s32.totalorder %s17, 0
    %p154 = por %p152, %p153
    %p155 = scmp.le.s32.totalorder 1, %s11
    %p156 = scmp.lt.s32.totalorder %s11, 3
    %p157 = pnand %p155, %p156
    %p158 = pneg %p157
    // Predicated region
    $region9: #{lapgan_discriminator_level3.7} parent=5 // pred_check
      _
    $region10: #{lapgan_discriminator_level3.7} parent=5 // pred_check_branch
      %160 = sbr.rel (%p157) target = $region12
    $region11: #{lapgan_discriminator_level3.7} parent=5 // pred_region
      %s161 = ssub.s32 %s11, 1
      // Predicated region
      $region13: #{lapgan_discriminator_level3.7} parent=11 // pred_check
        %p162 = pneg %p58
      $region14: #{lapgan_discriminator_level3.7} parent=11 // pred_check_branch
        %164 = sbr.rel (%p162) target = $region16
      $region15: #{lapgan_discriminator_level3.7} parent=11 // pred_region
        _
      $region16: #{lapgan_discriminator_level3.7} parent=11 // pred_fallthru
        _
      // Predicated region
      $region17: #{lapgan_discriminator_level3.7} parent=11 // pred_check
        %p165 = pneg %p79
      $region18: #{lapgan_discriminator_level3.7} parent=11 // pred_check_branch
        %167 = sbr.rel (%p165) target = $region20
      $region19: #{lapgan_discriminator_level3.7} parent=11 // pred_region
        _
      $region20: #{lapgan_discriminator_level3.7} parent=11 // pred_fallthru
        _
      // Predicated region
      $region21: #{lapgan_discriminator_level3.7} parent=11 // pred_check
        %p168 = pneg %p100
      $region22: #{lapgan_discriminator_level3.7} parent=11 // pred_check_branch
        %170 = sbr.rel (%p168) target = $region24
      $region23: #{lapgan_discriminator_level3.7} parent=11 // pred_region
        _
      $region24: #{lapgan_discriminator_level3.7} parent=11 // pred_fallthru
        _
      // Predicated region
      $region25: #{lapgan_discriminator_level3.7} parent=11 // pred_check
        %p171 = pneg %p121
      $region26: #{lapgan_discriminator_level3.7} parent=11 // pred_check_branch
        %173 = sbr.rel (%p171) target = $region28
      $region27: #{lapgan_discriminator_level3.7} parent=11 // pred_region
        _
      $region28: #{lapgan_discriminator_level3.7} parent=11 // pred_fallthru
        _
    $region12: #{lapgan_discriminator_level3.7} parent=5 // pred_fallthru
      _
    %p174 = scmp.lt.s32.totalorder %s11, 2
    // Predicated region
    $region29: #{lapgan_discriminator_level3.7} parent=5 // pred_check
      %p175 = pneg %p174
    $region30: #{lapgan_discriminator_level3.7} parent=5 // pred_check_branch
      %177 = sbr.rel (%p175) target = $region32
    $region31: #{lapgan_discriminator_level3.7} parent=5 // pred_region
      // Predicated region
      $region33: #{lapgan_discriminator_level3.7} parent=31 // pred_check
        %p178 = pneg %p31
      $region34: #{lapgan_discriminator_level3.7} parent=31 // pred_check_branch
        %180 = sbr.rel (%p178) target = $region36
      $region35: #{lapgan_discriminator_level3.7} parent=31 // pred_region
        %p181 = scmp.lt.s32.totalorder %s11, 1
        %s182 = scalar_select %p181, %s11, 1
        %s183 = smul.addr %s182, 18
        %s184 = smul.addr %s183, 4
        %s185 = scalar_lea.vmem %s0, %s184
      $region36: #{lapgan_discriminator_level3.7} parent=31 // pred_fallthru
        _
    $region32: #{lapgan_discriminator_level3.7} parent=5 // pred_fallthru
      _
    %p186 = scmp.le.s32.totalorder 1, %s11
    %p187 = scmp.lt.s32.totalorder %s11, 3
    %p188 = pnand %p186, %p187
    %p189 = pneg %p188
    // Predicated region
    $region37: #{lapgan_discriminator_level3.7} parent=5 // pred_check
      _
    $region38: #{lapgan_discriminator_level3.7} parent=5 // pred_check_branch
      %191 = sbr.rel (%p188) target = $region40
    $region39: #{lapgan_discriminator_level3.7} parent=5 // pred_region
      %s192 = ssub.s32 %s11, 1
      %p193 = scmp.lt.s32.totalorder %s16, 1
      %s194 = scalar_select %p193, %s16, 1
      %s195 = smul.addr %s194, 18
      %s196 = smul.addr %s195, 4
      %s197 = scalar_lea.vmem %s0, %s196
      %p198 = pneg %p37
      %p199 = pneg %p34
      %p200 = pneg %p58
      %p201 = pneg %p55
      %p202 = pneg %p79
      %p203 = pneg %p76
      %p204 = pneg %p100
      %p205 = pneg %p97
      %p206 = pneg %p121
      %p207 = pneg %p118
      %p208 = pneg %p147
      %p209 = pneg %p144
      %p210 = scmp.lt.s32.totalorder %s16, 1
      %s211 = scalar_select %p210, %s16, 1
      %s212 = scalar_lea.vmem %s5, %s211
      %p213 = scmp.lt.s32.totalorder %s16, 1
      %s214 = scalar_select %p213, %s16, 1
      %s215 = smul.addr %s214, 18
      %s216 = smul.addr %s215, 4
      %s217 = scalar_lea.vmem %s0, %s216
      %p218 = scmp.lt.s32.totalorder %s16, 1
      %s219 = scalar_select %p218, %s16, 1
      %s220 = scalar_lea.vmem %s5, %s219
      %v221 = vld [vmem:[%s217] sm:$0xff]
      %v222 = vld [vmem:[%s217 + $0x8] sm:$0xff]
      %v223 = vld [vmem:[%s217 + $0x10] sm:$0xff]
      %v224 = vld [vmem:[%s217 + $0x18] sm:$0xff]
      %v225 = vld [vmem:[%s217 + $0x20] sm:$0xf]
      %v226 = vld [vmem:[%s217 + $0x24] sm:$0xff]
      %v227 = vld [vmem:[%s217 + $0x2c] sm:$0xff]
      %v228 = vld [vmem:[%s217 + $0x34] sm:$0xff]
      %v229 = vld [vmem:[%s217 + $0x3c] sm:$0xff]
      %v230 = vld [vmem:[%s217 + $0x44] sm:$0xf]
      %v231 = vld [vmem:[%s1] sm:$0xff]
      %v232 = vld [vmem:[%s1 + $0x8] sm:$0xff]
      %v233 = vld [vmem:[%s1 + $0x10] sm:$0xff]
      %v234 = vld [vmem:[%s1 + $0x18] sm:$0xff]
      %v235 = vld [vmem:[%s1 + $0x20] sm:$0xff]
      %v236 = vld [vmem:[%s1 + $0x28] sm:$0xff]
      %v237 = vld [vmem:[%s1 + $0x30] sm:$0xff]
      %v238 = vld [vmem:[%s1 + $0x38] sm:$0xff]
      %v239 = vld [vmem:[%s1 + $0x40] sm:$0xff]
      %v240 = vld [vmem:[%s1 + $0x48] sm:$0xff]
      %v241 = vld [vmem:[%s1 + $0x50] sm:$0xff]
      %v242 = vld [vmem:[%s1 + $0x58] sm:$0xff]
      %v243 = vld [vmem:[%s1 + $0x60] sm:$0xff]
      %v244 = vld [vmem:[%s1 + $0x68] sm:$0xff]
      %v245 = vld [vmem:[%s1 + $0x70] sm:$0xff]
      %v246 = vld [vmem:[%s1 + $0x78] sm:$0xff]
      %v247 = vld [vmem:[%s1 + $0x80] sm:$0xff]
      %v248 = vld [vmem:[%s1 + $0x88] sm:$0xff]
      %v249 = vld [vmem:[%s1 + $0x90] sm:$0xff]
      %v250 = vld [vmem:[%s1 + $0x98] sm:$0xff]
      %v251 = vld [vmem:[%s1 + $0xa0] sm:$0xff]
      %v252 = vld [vmem:[%s1 + $0xa8] sm:$0xff]
      %v253 = vld [vmem:[%s1 + $0xb0] sm:$0xff]
      %v254 = vld [vmem:[%s1 + $0xb8] sm:$0xff]
      %v255 = vld [vmem:[%s1 + $0xc0] sm:$0xff]
      %v256 = vld [vmem:[%s1 + $0xc8] sm:$0xff]
      %v257 = vld [vmem:[%s1 + $0xd0] sm:$0xff]
      %v258 = vld [vmem:[%s1 + $0xd8] sm:$0xff]
      %v259 = vld [vmem:[%s1 + $0xe0] sm:$0xff]
      %v260 = vld [vmem:[%s1 + $0xe8] sm:$0xff]
      %v261 = vld [vmem:[%s1 + $0xf0] sm:$0xff]
      %v262 = vld [vmem:[%s1 + $0xf8] sm:$0xff]
      %v263 = vld [vmem:[%s1 + $0x100] sm:$0xff]
      %v264 = vld [vmem:[%s1 + $0x108] sm:$0xff]
      %v265 = vld [vmem:[%s1 + $0x110] sm:$0xff]
      %v266 = vld [vmem:[%s1 + $0x118] sm:$0xff]
      %v267 = vld [vmem:[%s1 + $0x120] sm:$0xff]
      %v268 = vld [vmem:[%s1 + $0x128] sm:$0xff]
      %v269 = vld [vmem:[%s1 + $0x130] sm:$0xff]
      %v270 = vld [vmem:[%s1 + $0x138] sm:$0xff]
      %v271 = vld [vmem:[%s1 + $0x140] sm:$0xff]
      %v272 = vld [vmem:[%s1 + $0x148] sm:$0xff]
      %v273 = vld [vmem:[%s1 + $0x150] sm:$0xff]
      %v274 = vld [vmem:[%s1 + $0x158] sm:$0xff]
      %v275 = vld [vmem:[%s1 + $0x160] sm:$0xff]
      %v276 = vld [vmem:[%s1 + $0x168] sm:$0xff]
      %v277 = vld [vmem:[%s1 + $0x170] sm:$0xff]
      %v278 = vld [vmem:[%s1 + $0x178] sm:$0xff]
      %v279 = vld [vmem:[%s1 + $0x180] sm:$0xff]
      %v280 = vld [vmem:[%s1 + $0x188] sm:$0xff]
      %v281 = vld [vmem:[%s1 + $0x190] sm:$0xff]
      %v282 = vld [vmem:[%s1 + $0x198] sm:$0xff]
      %v283 = vld [vmem:[%s1 + $0x1a0] sm:$0xff]
      %v284 = vld [vmem:[%s1 + $0x1a8] sm:$0xff]
      %v285 = vld [vmem:[%s1 + $0x1b0] sm:$0xff]
      %v286 = vld [vmem:[%s1 + $0x1b8] sm:$0xff]
      %v287 = vld [vmem:[%s1 + $0x1c0] sm:$0xff]
      %v288 = vld [vmem:[%s1 + $0x1c8] sm:$0xff]
      %v289 = vld [vmem:[%s1 + $0x1d0] sm:$0xff]
      %v290 = vld [vmem:[%s1 + $0x1d8] sm:$0xff]
      %v291 = vld [vmem:[%s1 + $0x1e0] sm:$0xff]
      %v292 = vld [vmem:[%s1 + $0x1e8] sm:$0xff]
      %v293 = vld [vmem:[%s1 + $0x1f0] sm:$0xff]
      %v294 = vld [vmem:[%s1 + $0x1f8] sm:$0xff]
      %v295 = vld [vmem:[%s1 + $0x200] sm:$0xff]
      %v296 = vld [vmem:[%s1 + $0x208] sm:$0xff]
      %v297 = vld [vmem:[%s1 + $0x210] sm:$0xff]
      %v298 = vld [vmem:[%s1 + $0x218] sm:$0xff]
      %v299 = vld [vmem:[%s1 + $0x220] sm:$0xff]
      %v300 = vld [vmem:[%s1 + $0x228] sm:$0xff]
      %v301 = vld [vmem:[%s1 + $0x230] sm:$0xff]
      %v302 = vld [vmem:[%s1 + $0x238] sm:$0xff]
      %v303 = vld [vmem:[%s1 + $0x240] sm:$0xff]
      %v304 = vld [vmem:[%s1 + $0x248] sm:$0xff]
      %v305 = vld [vmem:[%s1 + $0x250] sm:$0xff]
      %v306 = vld [vmem:[%s1 + $0x258] sm:$0xff]
      %v307 = vld [vmem:[%s1 + $0x260] sm:$0xff]
      %v308 = vld [vmem:[%s1 + $0x268] sm:$0xff]
      %v309 = vld [vmem:[%s1 + $0x270] sm:$0xff]
      %v310 = vld [vmem:[%s1 + $0x278] sm:$0xff]
      %v311 = vld [vmem:[%s1 + $0x280] sm:$0xff]
      %v312 = vld [vmem:[%s1 + $0x288] sm:$0xff]
      %v313 = vld [vmem:[%s1 + $0x290] sm:$0xff]
      %v314 = vld [vmem:[%s1 + $0x298] sm:$0xff]
      %v315 = vld [vmem:[%s1 + $0x2a0] sm:$0xff]
      %v316 = vld [vmem:[%s1 + $0x2a8] sm:$0xff]
      %v317 = vld [vmem:[%s1 + $0x2b0] sm:$0xff]
      %v318 = vld [vmem:[%s1 + $0x2b8] sm:$0xff]
      %v319 = vld [vmem:[%s1 + $0x2c0] sm:$0xff]
      %v320 = vld [vmem:[%s1 + $0x2c8] sm:$0xff]
      %v321 = vld [vmem:[%s1 + $0x2d0] sm:$0xff]
      %v322 = vld [vmem:[%s1 + $0x2d8] sm:$0xff]
      %v323 = vld [vmem:[%s1 + $0x2e0] sm:$0xff]
      %v324 = vld [vmem:[%s1 + $0x2e8] sm:$0xff]
      %v325 = vld [vmem:[%s1 + $0x2f0] sm:$0xff]
      %v326 = vld [vmem:[%s1 + $0x2f8] sm:$0xff]
      %v327 = vld [vmem:[%s1 + $0x300] sm:$0xff]
      %v328 = vld [vmem:[%s1 + $0x308] sm:$0xff]
      %v329 = vld [vmem:[%s1 + $0x310] sm:$0xff]
      %v330 = vld [vmem:[%s1 + $0x318] sm:$0xff]
      %v331 = vld [vmem:[%s1 + $0x320] sm:$0xff]
      %v332 = vld [vmem:[%s1 + $0x328] sm:$0xff]
      %v333 = vld [vmem:[%s1 + $0x330] sm:$0xff]
      %v334 = vld [vmem:[%s1 + $0x338] sm:$0xff]
      %v335 = vld [vmem:[%s1 + $0x340] sm:$0xff]
      %v336 = vld [vmem:[%s1 + $0x348] sm:$0xff]
      %v337 = vld [vmem:[%s1 + $0x350] sm:$0xff]
      %v338 = vld [vmem:[%s1 + $0x358] sm:$0xff]
      %v339 = vld [vmem:[%s1 + $0x360] sm:$0xff]
      %v340 = vld [vmem:[%s1 + $0x368] sm:$0xff]
      %v341 = vld [vmem:[%s1 + $0x370] sm:$0xff]
      %v342 = vld [vmem:[%s1 + $0x378] sm:$0xff]
      %v343 = vld [vmem:[%s1 + $0x380] sm:$0xff]
      %v344 = vld [vmem:[%s1 + $0x388] sm:$0xff]
      %v345 = vld [vmem:[%s1 + $0x390] sm:$0xff]
      %v346 = vld [vmem:[%s1 + $0x398] sm:$0xff]
      %v347 = vld [vmem:[%s1 + $0x3a0] sm:$0xff]
      %v348 = vld [vmem:[%s1 + $0x3a8] sm:$0xff]
      %v349 = vld [vmem:[%s1 + $0x3b0] sm:$0xff]
      %v350 = vld [vmem:[%s1 + $0x3b8] sm:$0xff]
      %v351 = vld [vmem:[%s1 + $0x3c0] sm:$0xff]
      %v352 = vld [vmem:[%s1 + $0x3c8] sm:$0xff]
      %v353 = vld [vmem:[%s1 + $0x3d0] sm:$0xff]
      %v354 = vld [vmem:[%s1 + $0x3d8] sm:$0xff]
      %v355 = vld [vmem:[%s1 + $0x3e0] sm:$0xff]
      %v356 = vld [vmem:[%s1 + $0x3e8] sm:$0xff]
      %v357 = vld [vmem:[%s1 + $0x3f0] sm:$0xff]
      %v358 = vld [vmem:[%s1 + $0x3f8] sm:$0xff]
      %v359 = vld [vmem:[%s1 + $0x400] sm:$0xff]
      %v360 = vld [vmem:[%s1 + $0x408] sm:$0xff]
      %v361 = vld [vmem:[%s1 + $0x410] sm:$0xff]
      %v362 = vld [vmem:[%s1 + $0x418] sm:$0xff]
      %v363 = vld [vmem:[%s1 + $0x420] sm:$0xff]
      %v364 = vld [vmem:[%s1 + $0x428] sm:$0xff]
      %v365 = vld [vmem:[%s1 + $0x430] sm:$0xff]
      %v366 = vld [vmem:[%s1 + $0x438] sm:$0xff]
      %v367 = vld [vmem:[%s1 + $0x440] sm:$0xff]
      %v368 = vld [vmem:[%s1 + $0x448] sm:$0xff]
      %v369 = vld [vmem:[%s1 + $0x450] sm:$0xff]
      %v370 = vld [vmem:[%s1 + $0x458] sm:$0xff]
      %v371 = vld [vmem:[%s1 + $0x460] sm:$0xff]
      %v372 = vld [vmem:[%s1 + $0x468] sm:$0xff]
      %v373 = vld [vmem:[%s1 + $0x470] sm:$0xff]
      %v374 = vld [vmem:[%s1 + $0x478] sm:$0xff]
      %v375 = vld [vmem:[%s2] sm:$0x3]
      %v377 = vperm.slane %v375, 0
      %v378 = vperm.slane %v375, 1
      %v391 = vunpack.c.l.b16 %v221
      %v392 = vunpack.c.h.b16 %v221
      %v393 = vunpack.c.l.b16 %v222
      %v394 = vunpack.c.h.b16 %v222
      %v395 = vunpack.c.l.b16 %v223
      %v396 = vunpack.c.h.b16 %v223
      %v397 = vunpack.c.l.b16 %v224
      %v398 = vunpack.c.h.b16 %v224
      %v399 = vunpack.c.l.b16 %v225
      %v400 = vunpack.c.l.b16 %v226
      %v401 = vunpack.c.h.b16 %v226
      %v402 = vunpack.c.l.b16 %v227
      %v403 = vunpack.c.h.b16 %v227
      %v404 = vunpack.c.l.b16 %v228
      %v405 = vunpack.c.h.b16 %v228
      %v406 = vunpack.c.l.b16 %v229
      %v407 = vunpack.c.h.b16 %v229
      %v408 = vunpack.c.l.b16 %v230
      %v409 = vpack.c.b16 %v400, %v391
      %v410 = vpack.c.b16 %v401, %v392
      %v411 = vpack.c.b16 %v402, %v393
      %v412 = vpack.c.b16 %v403, %v394
      %v413 = vpack.c.b16 %v404, %v395
      %v414 = vpack.c.b16 %v405, %v396
      %v415 = vpack.c.b16 %v406, %v397
      %v416 = vpack.c.b16 %v407, %v398
      %v417 = vpack.c.b16 %v408, %v399
      %v571 = vunpack.c.l.b16 %v231
      %v572 = vunpack.c.h.b16 %v231
      %v573 = vunpack.c.l.b16 %v232
      %v574 = vunpack.c.h.b16 %v232
      %v575 = vunpack.c.l.b16 %v233
      %v576 = vunpack.c.h.b16 %v233
      %v577 = vunpack.c.l.b16 %v234
      %v578 = vunpack.c.h.b16 %v234
      %v579 = vunpack.c.l.b16 %v235
      %v580 = vunpack.c.h.b16 %v235
      %v581 = vunpack.c.l.b16 %v236
      %v582 = vunpack.c.h.b16 %v236
      %v583 = vunpack.c.l.b16 %v237
      %v584 = vunpack.c.h.b16 %v237
      %v585 = vunpack.c.l.b16 %v238
      %v586 = vunpack.c.h.b16 %v238
      %v587 = vunpack.c.l.b16 %v239
      %v588 = vunpack.c.h.b16 %v239
      %v589 = vunpack.c.l.b16 %v240
      %v590 = vunpack.c.h.b16 %v240
      %v591 = vunpack.c.l.b16 %v241
      %v592 = vunpack.c.h.b16 %v241
      %v593 = vunpack.c.l.b16 %v242
      %v594 = vunpack.c.h.b16 %v242
      %v595 = vunpack.c.l.b16 %v243
      %v596 = vunpack.c.h.b16 %v243
      %v597 = vunpack.c.l.b16 %v244
      %v598 = vunpack.c.h.b16 %v244
      %v599 = vunpack.c.l.b16 %v245
      %v600 = vunpack.c.h.b16 %v245
      %v601 = vunpack.c.l.b16 %v246
      %v602 = vunpack.c.h.b16 %v246
      %v603 = vunpack.c.l.b16 %v247
      %v604 = vunpack.c.h.b16 %v247
      %v605 = vunpack.c.l.b16 %v248
      %v606 = vunpack.c.h.b16 %v248
      %v607 = vunpack.c.l.b16 %v249
      %v608 = vunpack.c.h.b16 %v249
      %v609 = vunpack.c.l.b16 %v250
      %v610 = vunpack.c.h.b16 %v250
      %v611 = vunpack.c.l.b16 %v251
      %v612 = vunpack.c.h.b16 %v251
      %v613 = vunpack.c.l.b16 %v252
      %v614 = vunpack.c.h.b16 %v252
      %v615 = vunpack.c.l.b16 %v253
      %v616 = vunpack.c.h.b16 %v253
      %v617 = vunpack.c.l.b16 %v254
      %v618 = vunpack.c.h.b16 %v254
      %v619 = vunpack.c.l.b16 %v255
      %v620 = vunpack.c.h.b16 %v255
      %v621 = vunpack.c.l.b16 %v256
      %v622 = vunpack.c.h.b16 %v256
      %v623 = vunpack.c.l.b16 %v257
      %v624 = vunpack.c.h.b16 %v257
      %v625 = vunpack.c.l.b16 %v258
      %v626 = vunpack.c.h.b16 %v258
      %v627 = vunpack.c.l.b16 %v259
      %v628 = vunpack.c.h.b16 %v259
      %v629 = vunpack.c.l.b16 %v260
      %v630 = vunpack.c.h.b16 %v260
      %v631 = vunpack.c.l.b16 %v261
      %v632 = vunpack.c.h.b16 %v261
      %v633 = vunpack.c.l.b16 %v262
      %v634 = vunpack.c.h.b16 %v262
      %v635 = vunpack.c.l.b16 %v263
      %v636 = vunpack.c.h.b16 %v263
      %v637 = vunpack.c.l.b16 %v264
      %v638 = vunpack.c.h.b16 %v264
      %v639 = vunpack.c.l.b16 %v265
      %v640 = vunpack.c.h.b16 %v265
      %v641 = vunpack.c.l.b16 %v266
      %v642 = vunpack.c.h.b16 %v266
      %v643 = vunpack.c.l.b16 %v267
      %v644 = vunpack.c.h.b16 %v267
      %v645 = vunpack.c.l.b16 %v268
      %v646 = vunpack.c.h.b16 %v268
      %v647 = vunpack.c.l.b16 %v269
      %v648 = vunpack.c.h.b16 %v269
      %v649 = vunpack.c.l.b16 %v270
      %v650 = vunpack.c.h.b16 %v270
      %v651 = vunpack.c.l.b16 %v271
      %v652 = vunpack.c.h.b16 %v271
      %v653 = vunpack.c.l.b16 %v272
      %v654 = vunpack.c.h.b16 %v272
      %v655 = vunpack.c.l.b16 %v273
      %v656 = vunpack.c.h.b16 %v273
      %v657 = vunpack.c.l.b16 %v274
      %v658 = vunpack.c.h.b16 %v274
      %v659 = vunpack.c.l.b16 %v275
      %v660 = vunpack.c.h.b16 %v275
      %v661 = vunpack.c.l.b16 %v276
      %v662 = vunpack.c.h.b16 %v276
      %v663 = vunpack.c.l.b16 %v277
      %v664 = vunpack.c.h.b16 %v277
      %v665 = vunpack.c.l.b16 %v278
      %v666 = vunpack.c.h.b16 %v278
      %v667 = vunpack.c.l.b16 %v279
      %v668 = vunpack.c.h.b16 %v279
      %v669 = vunpack.c.l.b16 %v280
      %v670 = vunpack.c.h.b16 %v280
      %v671 = vunpack.c.l.b16 %v281
      %v672 = vunpack.c.h.b16 %v281
      %v673 = vunpack.c.l.b16 %v282
      %v674 = vunpack.c.h.b16 %v282
      %v675 = vunpack.c.l.b16 %v283
      %v676 = vunpack.c.h.b16 %v283
      %v677 = vunpack.c.l.b16 %v284
      %v678 = vunpack.c.h.b16 %v284
      %v679 = vunpack.c.l.b16 %v285
      %v680 = vunpack.c.h.b16 %v285
      %v681 = vunpack.c.l.b16 %v286
      %v682 = vunpack.c.h.b16 %v286
      %v683 = vunpack.c.l.b16 %v287
      %v684 = vunpack.c.h.b16 %v287
      %v685 = vunpack.c.l.b16 %v288
      %v686 = vunpack.c.h.b16 %v288
      %v687 = vunpack.c.l.b16 %v289
      %v688 = vunpack.c.h.b16 %v289
      %v689 = vunpack.c.l.b16 %v290
      %v690 = vunpack.c.h.b16 %v290
      %v691 = vunpack.c.l.b16 %v291
      %v692 = vunpack.c.h.b16 %v291
      %v693 = vunpack.c.l.b16 %v292
      %v694 = vunpack.c.h.b16 %v292
      %v695 = vunpack.c.l.b16 %v293
      %v696 = vunpack.c.h.b16 %v293
      %v697 = vunpack.c.l.b16 %v294
      %v698 = vunpack.c.h.b16 %v294
      %v699 = vunpack.c.l.b16 %v295
      %v700 = vunpack.c.h.b16 %v295
      %v701 = vunpack.c.l.b16 %v296
      %v702 = vunpack.c.h.b16 %v296
      %v703 = vunpack.c.l.b16 %v297
      %v704 = vunpack.c.h.b16 %v297
      %v705 = vunpack.c.l.b16 %v298
      %v706 = vunpack.c.h.b16 %v298
      %v707 = vunpack.c.l.b16 %v299
      %v708 = vunpack.c.h.b16 %v299
      %v709 = vunpack.c.l.b16 %v300
      %v710 = vunpack.c.h.b16 %v300
      %v711 = vunpack.c.l.b16 %v301
      %v712 = vunpack.c.h.b16 %v301
      %v713 = vunpack.c.l.b16 %v302
      %v714 = vunpack.c.h.b16 %v302
      %v715 = vunpack.c.l.b16 %v303
      %v716 = vunpack.c.h.b16 %v303
      %v717 = vunpack.c.l.b16 %v304
      %v718 = vunpack.c.h.b16 %v304
      %v719 = vunpack.c.l.b16 %v305
      %v720 = vunpack.c.h.b16 %v305
      %v721 = vunpack.c.l.b16 %v306
      %v722 = vunpack.c.h.b16 %v306
      %v723 = vunpack.c.l.b16 %v307
      %v724 = vunpack.c.h.b16 %v307
      %v725 = vunpack.c.l.b16 %v308
      %v726 = vunpack.c.h.b16 %v308
      %v727 = vunpack.c.l.b16 %v309
      %v728 = vunpack.c.h.b16 %v309
      %v729 = vunpack.c.l.b16 %v310
      %v730 = vunpack.c.h.b16 %v310
      %v731 = vunpack.c.l.b16 %v311
      %v732 = vunpack.c.h.b16 %v311
      %v733 = vunpack.c.l.b16 %v312
      %v734 = vunpack.c.h.b16 %v312
      %v735 = vunpack.c.l.b16 %v313
      %v736 = vunpack.c.h.b16 %v313
      %v737 = vunpack.c.l.b16 %v314
      %v738 = vunpack.c.h.b16 %v314
      %v739 = vunpack.c.l.b16 %v315
      %v740 = vunpack.c.h.b16 %v315
      %v741 = vunpack.c.l.b16 %v316
      %v742 = vunpack.c.h.b16 %v316
      %v743 = vunpack.c.l.b16 %v317
      %v744 = vunpack.c.h.b16 %v317
      %v745 = vunpack.c.l.b16 %v318
      %v746 = vunpack.c.h.b16 %v318
      %v747 = vunpack.c.l.b16 %v319
      %v748 = vunpack.c.h.b16 %v319
      %v749 = vunpack.c.l.b16 %v320
      %v750 = vunpack.c.h.b16 %v320
      %v751 = vunpack.c.l.b16 %v321
      %v752 = vunpack.c.h.b16 %v321
      %v753 = vunpack.c.l.b16 %v322
      %v754 = vunpack.c.h.b16 %v322
      %v755 = vunpack.c.l.b16 %v323
      %v756 = vunpack.c.h.b16 %v323
      %v757 = vunpack.c.l.b16 %v324
      %v758 = vunpack.c.h.b16 %v324
      %v759 = vunpack.c.l.b16 %v325
      %v760 = vunpack.c.h.b16 %v325
      %v761 = vunpack.c.l.b16 %v326
      %v762 = vunpack.c.h.b16 %v326
      %v763 = vunpack.c.l.b16 %v327
      %v764 = vunpack.c.h.b16 %v327
      %v765 = vunpack.c.l.b16 %v328
      %v766 = vunpack.c.h.b16 %v328
      %v767 = vunpack.c.l.b16 %v329
      %v768 = vunpack.c.h.b16 %v329
      %v769 = vunpack.c.l.b16 %v330
      %v770 = vunpack.c.h.b16 %v330
      %v771 = vunpack.c.l.b16 %v331
      %v772 = vunpack.c.h.b16 %v331
      %v773 = vunpack.c.l.b16 %v332
      %v774 = vunpack.c.h.b16 %v332
      %v775 = vunpack.c.l.b16 %v333
      %v776 = vunpack.c.h.b16 %v333
      %v777 = vunpack.c.l.b16 %v334
      %v778 = vunpack.c.h.b16 %v334
      %v779 = vunpack.c.l.b16 %v335
      %v780 = vunpack.c.h.b16 %v335
      %v781 = vunpack.c.l.b16 %v336
      %v782 = vunpack.c.h.b16 %v336
      %v783 = vunpack.c.l.b16 %v337
      %v784 = vunpack.c.h.b16 %v337
      %v785 = vunpack.c.l.b16 %v338
      %v786 = vunpack.c.h.b16 %v338
      %v787 = vunpack.c.l.b16 %v339
      %v788 = vunpack.c.h.b16 %v339
      %v789 = vunpack.c.l.b16 %v340
      %v790 = vunpack.c.h.b16 %v340
      %v791 = vunpack.c.l.b16 %v341
      %v792 = vunpack.c.h.b16 %v341
      %v793 = vunpack.c.l.b16 %v342
      %v794 = vunpack.c.h.b16 %v342
      %v795 = vunpack.c.l.b16 %v343
      %v796 = vunpack.c.h.b16 %v343
      %v797 = vunpack.c.l.b16 %v344
      %v798 = vunpack.c.h.b16 %v344
      %v799 = vunpack.c.l.b16 %v345
      %v800 = vunpack.c.h.b16 %v345
      %v801 = vunpack.c.l.b16 %v346
      %v802 = vunpack.c.h.b16 %v346
      %v803 = vunpack.c.l.b16 %v347
      %v804 = vunpack.c.h.b16 %v347
      %v805 = vunpack.c.l.b16 %v348
      %v806 = vunpack.c.h.b16 %v348
      %v807 = vunpack.c.l.b16 %v349
      %v808 = vunpack.c.h.b16 %v349
      %v809 = vunpack.c.l.b16 %v350
      %v810 = vunpack.c.h.b16 %v350
      %v811 = vunpack.c.l.b16 %v351
      %v812 = vunpack.c.h.b16 %v351
      %v813 = vunpack.c.l.b16 %v352
      %v814 = vunpack.c.h.b16 %v352
      %v815 = vunpack.c.l.b16 %v353
      %v816 = vunpack.c.h.b16 %v353
      %v817 = vunpack.c.l.b16 %v354
      %v818 = vunpack.c.h.b16 %v354
      %v819 = vunpack.c.l.b16 %v355
      %v820 = vunpack.c.h.b16 %v355
      %v821 = vunpack.c.l.b16 %v356
      %v822 = vunpack.c.h.b16 %v356
      %v823 = vunpack.c.l.b16 %v357
      %v824 = vunpack.c.h.b16 %v357
      %v825 = vunpack.c.l.b16 %v358
      %v826 = vunpack.c.h.b16 %v358
      %v827 = vunpack.c.l.b16 %v359
      %v828 = vunpack.c.h.b16 %v359
      %v829 = vunpack.c.l.b16 %v360
      %v830 = vunpack.c.h.b16 %v360
      %v831 = vunpack.c.l.b16 %v361
      %v832 = vunpack.c.h.b16 %v361
      %v833 = vunpack.c.l.b16 %v362
      %v834 = vunpack.c.h.b16 %v362
      %v835 = vunpack.c.l.b16 %v363
      %v836 = vunpack.c.h.b16 %v363
      %v837 = vunpack.c.l.b16 %v364
      %v838 = vunpack.c.h.b16 %v364
      %v839 = vunpack.c.l.b16 %v365
      %v840 = vunpack.c.h.b16 %v365
      %v841 = vunpack.c.l.b16 %v366
      %v842 = vunpack.c.h.b16 %v366
      %v843 = vunpack.c.l.b16 %v367
      %v844 = vunpack.c.h.b16 %v367
      %v845 = vunpack.c.l.b16 %v368
      %v846 = vunpack.c.h.b16 %v368
      %v847 = vunpack.c.l.b16 %v369
      %v848 = vunpack.c.h.b16 %v369
      %v849 = vunpack.c.l.b16 %v370
      %v850 = vunpack.c.h.b16 %v370
      %v851 = vunpack.c.l.b16 %v371
      %v852 = vunpack.c.h.b16 %v371
      %v853 = vunpack.c.l.b16 %v372
      %v854 = vunpack.c.h.b16 %v372
      %v855 = vunpack.c.l.b16 %v373
      %v856 = vunpack.c.h.b16 %v373
      %v857 = vunpack.c.l.b16 %v374
      %v858 = vunpack.c.h.b16 %v374
      %v859 = vpack.c.b16 %v573, %v571
      %v860 = vpack.c.b16 %v574, %v572
      %v861 = vpack.c.b16 %v577, %v575
      %v862 = vpack.c.b16 %v578, %v576
      %v863 = vpack.c.b16 %v581, %v579
      %v864 = vpack.c.b16 %v582, %v580
      %v865 = vpack.c.b16 %v585, %v583
      %v866 = vpack.c.b16 %v586, %v584
      %v867 = vpack.c.b16 %v589, %v587
      %v868 = vpack.c.b16 %v590, %v588
      %v869 = vpack.c.b16 %v593, %v591
      %v870 = vpack.c.b16 %v594, %v592
      %v871 = vpack.c.b16 %v597, %v595
      %v872 = vpack.c.b16 %v598, %v596
      %v873 = vpack.c.b16 %v601, %v599
      %v874 = vpack.c.b16 %v602, %v600
      %v875 = vpack.c.b16 %v605, %v603
      %v876 = vpack.c.b16 %v606, %v604
      %v877 = vpack.c.b16 %v609, %v607
      %v878 = vpack.c.b16 %v610, %v608
      %v879 = vpack.c.b16 %v613, %v611
      %v880 = vpack.c.b16 %v614, %v612
      %v881 = vpack.c.b16 %v617, %v615
      %v882 = vpack.c.b16 %v618, %v616
      %v883 = vpack.c.b16 %v621, %v619
      %v884 = vpack.c.b16 %v622, %v620
      %v885 = vpack.c.b16 %v625, %v623
      %v886 = vpack.c.b16 %v626, %v624
      %v887 = vpack.c.b16 %v629, %v627
      %v888 = vpack.c.b16 %v630, %v628
      %v889 = vpack.c.b16 %v633, %v631
      %v890 = vpack.c.b16 %v634, %v632
      %v891 = vpack.c.b16 %v637, %v635
      %v892 = vpack.c.b16 %v638, %v636
      %v893 = vpack.c.b16 %v641, %v639
      %v894 = vpack.c.b16 %v642, %v640
      %v895 = vpack.c.b16 %v645, %v643
      %v896 = vpack.c.b16 %v646, %v644
      %v897 = vpack.c.b16 %v649, %v647
      %v898 = vpack.c.b16 %v650, %v648
      %v899 = vpack.c.b16 %v653, %v651
      %v900 = vpack.c.b16 %v654, %v652
      %v901 = vpack.c.b16 %v657, %v655
      %v902 = vpack.c.b16 %v658, %v656
      %v903 = vpack.c.b16 %v661, %v659
      %v904 = vpack.c.b16 %v662, %v660
      %v905 = vpack.c.b16 %v665, %v663
      %v906 = vpack.c.b16 %v666, %v664
      %v907 = vpack.c.b16 %v669, %v667
      %v908 = vpack.c.b16 %v670, %v668
      %v909 = vpack.c.b16 %v673, %v671
      %v910 = vpack.c.b16 %v674, %v672
      %v911 = vpack.c.b16 %v677, %v675
      %v912 = vpack.c.b16 %v678, %v676
      %v913 = vpack.c.b16 %v681, %v679
      %v914 = vpack.c.b16 %v682, %v680
      %v915 = vpack.c.b16 %v685, %v683
      %v916 = vpack.c.b16 %v686, %v684
      %v917 = vpack.c.b16 %v689, %v687
      %v918 = vpack.c.b16 %v690, %v688
      %v919 = vpack.c.b16 %v693, %v691
      %v920 = vpack.c.b16 %v694, %v692
      %v921 = vpack.c.b16 %v697, %v695
      %v922 = vpack.c.b16 %v698, %v696
      %v923 = vpack.c.b16 %v701, %v699
      %v924 = vpack.c.b16 %v702, %v700
      %v925 = vpack.c.b16 %v705, %v703
      %v926 = vpack.c.b16 %v706, %v704
      %v927 = vpack.c.b16 %v709, %v707
      %v928 = vpack.c.b16 %v710, %v708
      %v929 = vpack.c.b16 %v713, %v711
      %v930 = vpack.c.b16 %v714, %v712
      %v931 = vpack.c.b16 %v717, %v715
      %v932 = vpack.c.b16 %v718, %v716
      %v933 = vpack.c.b16 %v721, %v719
      %v934 = vpack.c.b16 %v722, %v720
      %v935 = vpack.c.b16 %v725, %v723
      %v936 = vpack.c.b16 %v726, %v724
      %v937 = vpack.c.b16 %v729, %v727
      %v938 = vpack.c.b16 %v730, %v728
      %v939 = vpack.c.b16 %v733, %v731
      %v940 = vpack.c.b16 %v734, %v732
      %v941 = vpack.c.b16 %v737, %v735
      %v942 = vpack.c.b16 %v738, %v736
      %v943 = vpack.c.b16 %v741, %v739
      %v944 = vpack.c.b16 %v742, %v740
      %v945 = vpack.c.b16 %v745, %v743
      %v946 = vpack.c.b16 %v746, %v744
      %v947 = vpack.c.b16 %v749, %v747
      %v948 = vpack.c.b16 %v750, %v748
      %v949 = vpack.c.b16 %v753, %v751
      %v950 = vpack.c.b16 %v754, %v752
      %v951 = vpack.c.b16 %v757, %v755
      %v952 = vpack.c.b16 %v758, %v756
      %v953 = vpack.c.b16 %v761, %v759
      %v954 = vpack.c.b16 %v762, %v760
      %v955 = vpack.c.b16 %v765, %v763
      %v956 = vpack.c.b16 %v766, %v764
      %v957 = vpack.c.b16 %v769, %v767
      %v958 = vpack.c.b16 %v770, %v768
      %v959 = vpack.c.b16 %v773, %v771
      %v960 = vpack.c.b16 %v774, %v772
      %v961 = vpack.c.b16 %v777, %v775
      %v962 = vpack.c.b16 %v778, %v776
      %v963 = vpack.c.b16 %v781, %v779
      %v964 = vpack.c.b16 %v782, %v780
      %v965 = vpack.c.b16 %v785, %v783
      %v966 = vpack.c.b16 %v786, %v784
      %v967 = vpack.c.b16 %v789, %v787
      %v968 = vpack.c.b16 %v790, %v788
      %v969 = vpack.c.b16 %v793, %v791
      %v970 = vpack.c.b16 %v794, %v792
      %v971 = vpack.c.b16 %v797, %v795
      %v972 = vpack.c.b16 %v798, %v796
      %v973 = vpack.c.b16 %v801, %v799
      %v974 = vpack.c.b16 %v802, %v800
      %v975 = vpack.c.b16 %v805, %v803
      %v976 = vpack.c.b16 %v806, %v804
      %v977 = vpack.c.b16 %v809, %v807
      %v978 = vpack.c.b16 %v810, %v808
      %v979 = vpack.c.b16 %v813, %v811
      %v980 = vpack.c.b16 %v814, %v812
      %v981 = vpack.c.b16 %v817, %v815
      %v982 = vpack.c.b16 %v818, %v816
      %v983 = vpack.c.b16 %v821, %v819
      %v984 = vpack.c.b16 %v822, %v820
      %v985 = vpack.c.b16 %v825, %v823
      %v986 = vpack.c.b16 %v826, %v824
      %v987 = vpack.c.b16 %v829, %v827
      %v988 = vpack.c.b16 %v830, %v828
      %v989 = vpack.c.b16 %v833, %v831
      %v990 = vpack.c.b16 %v834, %v832
      %v991 = vpack.c.b16 %v837, %v835
      %v992 = vpack.c.b16 %v838, %v836
      %v993 = vpack.c.b16 %v841, %v839
      %v994 = vpack.c.b16 %v842, %v840
      %v995 = vpack.c.b16 %v845, %v843
      %v996 = vpack.c.b16 %v846, %v844
      %v997 = vpack.c.b16 %v849, %v847
      %v998 = vpack.c.b16 %v850, %v848
      %v999 = vpack.c.b16 %v853, %v851
      %v1000 = vpack.c.b16 %v854, %v852
      %v1001 = vpack.c.b16 %v857, %v855
      %v1002 = vpack.c.b16 %v858, %v856
      %1147 = vmatpush.bf16.msra.mxu0 %v873
      %1148 = vmatpush.bf16.msra.mxu0 %v871
      %1149 = vmatpush.bf16.msra.mxu0 %v869
      %1150 = vmatpush.bf16.msra.mxu0 %v867
      %1151 = vmatpush.bf16.msra.mxu0 %v865
      %1152 = vmatpush.bf16.msra.mxu0 %v863
      %1153 = vmatpush.bf16.msra.mxu0 %v861
      %1154 = vmatpush.bf16.msra.mxu0 %v859
      %1155 = vmatmul.bf16.gmra.mxu0 %v409
      %v1156 = vpop.f32.mrf.mxu0
      %v1157 = vadd.f32 %v377, %v1156
      %v1158 = vpop.f32.mrf.mxu0
      %v1159 = vadd.f32 %v377, %v1158
      %1160 = vdwg.mxu0
      %1161 = vmatpush.bf16.msra.mxu0 %v889
      %1162 = vmatpush.bf16.msra.mxu0 %v887
      %1163 = vmatpush.bf16.msra.mxu0 %v885
      %1164 = vmatpush.bf16.msra.mxu0 %v883
      %1165 = vmatpush.bf16.msra.mxu0 %v881
      %1166 = vmatpush.bf16.msra.mxu0 %v879
      %1167 = vmatpush.bf16.msra.mxu0 %v877
      %1168 = vmatpush.bf16.msra.mxu0 %v875
      %1169 = vmatmul.bf16.gmra.mxu0 %v410
      %v1170 = vpop.f32.mrf.mxu0
      %v1171 = vadd.f32 %v1157, %v1170
      %v1172 = vpop.f32.mrf.mxu0
      %v1173 = vadd.f32 %v1159, %v1172
      %1174 = vdwg.mxu0
      %1175 = vmatpush.bf16.msra.mxu0 %v905
      %1176 = vmatpush.bf16.msra.mxu0 %v903
      %1177 = vmatpush.bf16.msra.mxu0 %v901
      %1178 = vmatpush.bf16.msra.mxu0 %v899
      %1179 = vmatpush.bf16.msra.mxu0 %v897
      %1180 = vmatpush.bf16.msra.mxu0 %v895
      %1181 = vmatpush.bf16.msra.mxu0 %v893
      %1182 = vmatpush.bf16.msra.mxu0 %v891
      %1183 = vmatmul.bf16.gmra.mxu0 %v411
      %v1184 = vpop.f32.mrf.mxu0
      %v1185 = vadd.f32 %v1171, %v1184
      %v1186 = vpop.f32.mrf.mxu0
      %v1187 = vadd.f32 %v1173, %v1186
      %1188 = vdwg.mxu0
      %1189 = vmatpush.bf16.msra.mxu0 %v921
      %1190 = vmatpush.bf16.msra.mxu0 %v919
      %1191 = vmatpush.bf16.msra.mxu0 %v917
      %1192 = vmatpush.bf16.msra.mxu0 %v915
      %1193 = vmatpush.bf16.msra.mxu0 %v913
      %1194 = vmatpush.bf16.msra.mxu0 %v911
      %1195 = vmatpush.bf16.msra.mxu0 %v909
      %1196 = vmatpush.bf16.msra.mxu0 %v907
      %1197 = vmatmul.bf16.gmra.mxu0 %v412
      %v1198 = vpop.f32.mrf.mxu0
      %v1199 = vadd.f32 %v1185, %v1198
      %v1200 = vpop.f32.mrf.mxu0
      %v1201 = vadd.f32 %v1187, %v1200
      %1202 = vdwg.mxu0
      %1203 = vmatpush.bf16.msra.mxu0 %v937
      %1204 = vmatpush.bf16.msra.mxu0 %v935
      %1205 = vmatpush.bf16.msra.mxu0 %v933
      %1206 = vmatpush.bf16.msra.mxu0 %v931
      %1207 = vmatpush.bf16.msra.mxu0 %v929
      %1208 = vmatpush.bf16.msra.mxu0 %v927
      %1209 = vmatpush.bf16.msra.mxu0 %v925
      %1210 = vmatpush.bf16.msra.mxu0 %v923
      %1211 = vmatmul.bf16.gmra.mxu0 %v413
      %v1212 = vpop.f32.mrf.mxu0
      %v1213 = vadd.f32 %v1199, %v1212
      %v1214 = vpop.f32.mrf.mxu0
      %v1215 = vadd.f32 %v1201, %v1214
      %1216 = vdwg.mxu0
      %1217 = vmatpush.bf16.msra.mxu0 %v953
      %1218 = vmatpush.bf16.msra.mxu0 %v951
      %1219 = vmatpush.bf16.msra.mxu0 %v949
      %1220 = vmatpush.bf16.msra.mxu0 %v947
      %1221 = vmatpush.bf16.msra.mxu0 %v945
      %1222 = vmatpush.bf16.msra.mxu0 %v943
      %1223 = vmatpush.bf16.msra.mxu0 %v941
      %1224 = vmatpush.bf16.msra.mxu0 %v939
      %1225 = vmatmul.bf16.gmra.mxu0 %v414
      %v1226 = vpop.f32.mrf.mxu0
      %v1227 = vadd.f32 %v1213, %v1226
      %v1228 = vpop.f32.mrf.mxu0
      %v1229 = vadd.f32 %v1215, %v1228
      %1230 = vdwg.mxu0
      %1231 = vmatpush.bf16.msra.mxu0 %v969
      %1232 = vmatpush.bf16.msra.mxu0 %v967
      %1233 = vmatpush.bf16.msra.mxu0 %v965
      %1234 = vmatpush.bf16.msra.mxu0 %v963
      %1235 = vmatpush.bf16.msra.mxu0 %v961
      %1236 = vmatpush.bf16.msra.mxu0 %v959
      %1237 = vmatpush.bf16.msra.mxu0 %v957
      %1238 = vmatpush.bf16.msra.mxu0 %v955
      %1239 = vmatmul.bf16.gmra.mxu0 %v415
      %v1240 = vpop.f32.mrf.mxu0
      %v1241 = vadd.f32 %v1227, %v1240
      %v1242 = vpop.f32.mrf.mxu0
      %v1243 = vadd.f32 %v1229, %v1242
      %1244 = vdwg.mxu0
      %1245 = vmatpush.bf16.msra.mxu0 %v985
      %1246 = vmatpush.bf16.msra.mxu0 %v983
      %1247 = vmatpush.bf16.msra.mxu0 %v981
      %1248 = vmatpush.bf16.msra.mxu0 %v979
      %1249 = vmatpush.bf16.msra.mxu0 %v977
      %1250 = vmatpush.bf16.msra.mxu0 %v975
      %1251 = vmatpush.bf16.msra.mxu0 %v973
      %1252 = vmatpush.bf16.msra.mxu0 %v971
      %1253 = vmatmul.bf16.gmra.mxu0 %v416
      %v1254 = vpop.f32.mrf.mxu0
      %v1255 = vadd.f32 %v1241, %v1254
      %v1256 = vpop.f32.mrf.mxu0
      %v1257 = vadd.f32 %v1243, %v1256
      %1258 = vdwg.mxu0
      %1259 = vmatpush.bf16.msra.mxu0 %v1001
      %1260 = vmatpush.bf16.msra.mxu0 %v999
      %1261 = vmatpush.bf16.msra.mxu0 %v997
      %1262 = vmatpush.bf16.msra.mxu0 %v995
      %1263 = vmatpush.bf16.msra.mxu0 %v993
      %1264 = vmatpush.bf16.msra.mxu0 %v991
      %1265 = vmatpush.bf16.msra.mxu0 %v989
      %1266 = vmatpush.bf16.msra.mxu0 %v987
      %1267 = vmatmul.bf16.gmra.mxu0 %v417
      %v1268 = vpop.f32.mrf.mxu0
      %v1269 = vadd.f32 %v1255, %v1268
      %v1270 = vpop.f32.mrf.mxu0
      %v1271 = vadd.f32 %v1257, %v1270
      %1272 = vdwg.mxu0
      %1273 = vmatpush.bf16.msra.mxu0 %v874
      %1274 = vmatpush.bf16.msra.mxu0 %v872
      %1275 = vmatpush.bf16.msra.mxu0 %v870
      %1276 = vmatpush.bf16.msra.mxu0 %v868
      %1277 = vmatpush.bf16.msra.mxu0 %v866
      %1278 = vmatpush.bf16.msra.mxu0 %v864
      %1279 = vmatpush.bf16.msra.mxu0 %v862
      %1280 = vmatpush.bf16.msra.mxu0 %v860
      %1281 = vmatmul.bf16.gmra.mxu0 %v409
      %v1282 = vpop.f32.mrf.mxu0
      %v1283 = vadd.f32 %v378, %v1282
      %v1284 = vpop.f32.mrf.mxu0
      %v1285 = vadd.f32 %v378, %v1284
      %1286 = vdwg.mxu0
      %1287 = vmatpush.bf16.msra.mxu0 %v890
      %1288 = vmatpush.bf16.msra.mxu0 %v888
      %1289 = vmatpush.bf16.msra.mxu0 %v886
      %1290 = vmatpush.bf16.msra.mxu0 %v884
      %1291 = vmatpush.bf16.msra.mxu0 %v882
      %1292 = vmatpush.bf16.msra.mxu0 %v880
      %1293 = vmatpush.bf16.msra.mxu0 %v878
      %1294 = vmatpush.bf16.msra.mxu0 %v876
      %1295 = vmatmul.bf16.gmra.mxu0 %v410
      %v1296 = vpop.f32.mrf.mxu0
      %v1297 = vadd.f32 %v1283, %v1296
      %v1298 = vpop.f32.mrf.mxu0
      %v1299 = vadd.f32 %v1285, %v1298
      %1300 = vdwg.mxu0
      %1301 = vmatpush.bf16.msra.mxu0 %v906
      %1302 = vmatpush.bf16.msra.mxu0 %v904
      %1303 = vmatpush.bf16.msra.mxu0 %v902
      %1304 = vmatpush.bf16.msra.mxu0 %v900
      %1305 = vmatpush.bf16.msra.mxu0 %v898
      %1306 = vmatpush.bf16.msra.mxu0 %v896
      %1307 = vmatpush.bf16.msra.mxu0 %v894
      %1308 = vmatpush.bf16.msra.mxu0 %v892
      %1309 = vmatmul.bf16.gmra.mxu0 %v411
      %v1310 = vpop.f32.mrf.mxu0
      %v1311 = vadd.f32 %v1297, %v1310
      %v1312 = vpop.f32.mrf.mxu0
      %v1313 = vadd.f32 %v1299, %v1312
      %1314 = vdwg.mxu0
      %1315 = vmatpush.bf16.msra.mxu0 %v922
      %1316 = vmatpush.bf16.msra.mxu0 %v920
      %1317 = vmatpush.bf16.msra.mxu0 %v918
      %1318 = vmatpush.bf16.msra.mxu0 %v916
      %1319 = vmatpush.bf16.msra.mxu0 %v914
      %1320 = vmatpush.bf16.msra.mxu0 %v912
      %1321 = vmatpush.bf16.msra.mxu0 %v910
      %1322 = vmatpush.bf16.msra.mxu0 %v908
      %1323 = vmatmul.bf16.gmra.mxu0 %v412
      %v1324 = vpop.f32.mrf.mxu0
      %v1325 = vadd.f32 %v1311, %v1324
      %v1326 = vpop.f32.mrf.mxu0
      %v1327 = vadd.f32 %v1313, %v1326
      %1328 = vdwg.mxu0
      %1329 = vmatpush.bf16.msra.mxu0 %v938
      %1330 = vmatpush.bf16.msra.mxu0 %v936
      %1331 = vmatpush.bf16.msra.mxu0 %v934
      %1332 = vmatpush.bf16.msra.mxu0 %v932
      %1333 = vmatpush.bf16.msra.mxu0 %v930
      %1334 = vmatpush.bf16.msra.mxu0 %v928
      %1335 = vmatpush.bf16.msra.mxu0 %v926
      %1336 = vmatpush.bf16.msra.mxu0 %v924
      %1337 = vmatmul.bf16.gmra.mxu0 %v413
      %v1338 = vpop.f32.mrf.mxu0
      %v1339 = vadd.f32 %v1325, %v1338
      %v1340 = vpop.f32.mrf.mxu0
      %v1341 = vadd.f32 %v1327, %v1340
      %1342 = vdwg.mxu0
      %1343 = vmatpush.bf16.msra.mxu0 %v954
      %1344 = vmatpush.bf16.msra.mxu0 %v952
      %1345 = vmatpush.bf16.msra.mxu0 %v950
      %1346 = vmatpush.bf16.msra.mxu0 %v948
      %1347 = vmatpush.bf16.msra.mxu0 %v946
      %1348 = vmatpush.bf16.msra.mxu0 %v944
      %1349 = vmatpush.bf16.msra.mxu0 %v942
      %1350 = vmatpush.bf16.msra.mxu0 %v940
      %1351 = vmatmul.bf16.gmra.mxu0 %v414
      %v1352 = vpop.f32.mrf.mxu0
      %v1353 = vadd.f32 %v1339, %v1352
      %v1354 = vpop.f32.mrf.mxu0
      %v1355 = vadd.f32 %v1341, %v1354
      %1356 = vdwg.mxu0
      %1357 = vmatpush.bf16.msra.mxu0 %v970
      %1358 = vmatpush.bf16.msra.mxu0 %v968
      %1359 = vmatpush.bf16.msra.mxu0 %v966
      %1360 = vmatpush.bf16.msra.mxu0 %v964
      %1361 = vmatpush.bf16.msra.mxu0 %v962
      %1362 = vmatpush.bf16.msra.mxu0 %v960
      %1363 = vmatpush.bf16.msra.mxu0 %v958
      %1364 = vmatpush.bf16.msra.mxu0 %v956
      %1365 = vmatmul.bf16.gmra.mxu0 %v415
      %v1366 = vpop.f32.mrf.mxu0
      %v1367 = vadd.f32 %v1353, %v1366
      %v1368 = vpop.f32.mrf.mxu0
      %v1369 = vadd.f32 %v1355, %v1368
      %1370 = vdwg.mxu0
      %1371 = vmatpush.bf16.msra.mxu0 %v986
      %1372 = vmatpush.bf16.msra.mxu0 %v984
      %1373 = vmatpush.bf16.msra.mxu0 %v982
      %1374 = vmatpush.bf16.msra.mxu0 %v980
      %1375 = vmatpush.bf16.msra.mxu0 %v978
      %1376 = vmatpush.bf16.msra.mxu0 %v976
      %1377 = vmatpush.bf16.msra.mxu0 %v974
      %1378 = vmatpush.bf16.msra.mxu0 %v972
      %1379 = vmatmul.bf16.gmra.mxu0 %v416
      %v1380 = vpop.f32.mrf.mxu0
      %v1381 = vadd.f32 %v1367, %v1380
      %v1382 = vpop.f32.mrf.mxu0
      %v1383 = vadd.f32 %v1369, %v1382
      %1384 = vdwg.mxu0
      %1385 = vmatpush.bf16.msra.mxu0 %v1002
      %1386 = vmatpush.bf16.msra.mxu0 %v1000
      %1387 = vmatpush.bf16.msra.mxu0 %v998
      %1388 = vmatpush.bf16.msra.mxu0 %v996
      %1389 = vmatpush.bf16.msra.mxu0 %v994
      %1390 = vmatpush.bf16.msra.mxu0 %v992
      %1391 = vmatpush.bf16.msra.mxu0 %v990
      %1392 = vmatpush.bf16.msra.mxu0 %v988
      %1393 = vmatmul.bf16.gmra.mxu0 %v417
      %v1394 = vpop.f32.mrf.mxu0
      %v1395 = vadd.f32 %v1381, %v1394
      %v1396 = vpop.f32.mrf.mxu0
      %v1397 = vadd.f32 %v1383, %v1396
      %1398 = vdwg.mxu0
      %vm1399 = vcmp.gt.f32.partialorder %v1269, 0.0
      %vm1400 = vcmp.gt.f32.partialorder %v1395, 0.0
      %vm1401 = vcmp.gt.f32.partialorder %v1271, 0.0
      %vm1402 = vcmp.gt.f32.partialorder %v1397, 0.0
      %v1403 = vmin.f32 %v1269, 0.0
      %v1404 = vmin.f32 %v1395, 0.0
      %v1405 = vmin.f32 %v1271, 0.0
      %v1406 = vmin.f32 %v1397, 0.0
      %v1407 = vmul.f32 %v1403, 1.442695
      %v1408 = vpow.pop %v1407
      %v1409 = vmul.f32 %v1404, 1.442695
      %v1410 = vpow.pop %v1409
      %v1411 = vmul.f32 %v1405, 1.442695
      %v1412 = vpow.pop %v1411
      %v1413 = vmul.f32 %v1406, 1.442695
      %v1414 = vpow.pop %v1413
      %v1415 = vsub.f32 %v1408, 1.0
      %v1416 = vsub.f32 %v1410, 1.0
      %v1417 = vsub.f32 %v1412, 1.0
      %v1418 = vsub.f32 %v1414, 1.0
      %v1419 = vsel %vm1399, %v1269, %v1415
      %v1420 = vsel %vm1400, %v1395, %v1416
      %v1421 = vsel %vm1401, %v1271, %v1417
      %v1422 = vsel %vm1402, %v1397, %v1418
      %v1423 = vld [vmem:[%s4] sm:$0x1]
      %v1424 = vpack.c.bf16 %v1419, %v1419
      %v1425 = vpack.c.bf16 %v1420, %v1420
      %v1426 = vld [vmem:[%s3] sm:$0xf]
      %v1427 = vld [vmem:[%s3 + $0x4] sm:$0xf]
      %v1428 = vld [vmem:[%s3 + $0x8] sm:$0xf]
      %v1429 = vld [vmem:[%s3 + $0xc] sm:$0xf]
      %v1430 = vld [vmem:[%s3 + $0x10] sm:$0xf]
      %v1431 = vld [vmem:[%s3 + $0x14] sm:$0xf]
      %v1432 = vld [vmem:[%s3 + $0x18] sm:$0xf]
      %v1433 = vld [vmem:[%s3 + $0x1c] sm:$0xf]
      %v1434 = vld [vmem:[%s3 + $0x20] sm:$0xf]
      %v1435 = vld [vmem:[%s3 + $0x24] sm:$0xf]
      %v1436 = vld [vmem:[%s3 + $0x28] sm:$0xf]
      %v1437 = vld [vmem:[%s3 + $0x2c] sm:$0xf]
      %v1438 = vld [vmem:[%s3 + $0x30] sm:$0xf]
      %v1439 = vld [vmem:[%s3 + $0x34] sm:$0xf]
      %v1440 = vld [vmem:[%s3 + $0x38] sm:$0xf]
      %v1441 = vld [vmem:[%s3 + $0x3c] sm:$0xf]
      %v1442 = vld [vmem:[%s3 + $0x40] sm:$0xf]
      %v1443 = vld [vmem:[%s3 + $0x44] sm:$0xf]
      %v1444 = vld [vmem:[%s3 + $0x48] sm:$0xf]
      %v1445 = vld [vmem:[%s3 + $0x4c] sm:$0xf]
      %v1446 = vld [vmem:[%s3 + $0x50] sm:$0xf]
      %v1447 = vld [vmem:[%s3 + $0x54] sm:$0xf]
      %v1448 = vld [vmem:[%s3 + $0x58] sm:$0xf]
      %v1449 = vld [vmem:[%s3 + $0x5c] sm:$0xf]
      %v1450 = vld [vmem:[%s3 + $0x60] sm:$0xf]
      %v1451 = vld [vmem:[%s3 + $0x64] sm:$0xf]
      %v1452 = vld [vmem:[%s3 + $0x68] sm:$0xf]
      %v1453 = vld [vmem:[%s3 + $0x6c] sm:$0xf]
      %v1454 = vld [vmem:[%s3 + $0x70] sm:$0xf]
      %v1455 = vld [vmem:[%s3 + $0x74] sm:$0xf]
      %v1456 = vld [vmem:[%s3 + $0x78] sm:$0xf]
      %v1457 = vld [vmem:[%s3 + $0x7c] sm:$0xf]
      %v1490 = vunpack.c.l.b16 %v1426
      %v1491 = vunpack.c.l.b16 %v1427
      %v1492 = vunpack.c.l.b16 %v1428
      %v1493 = vunpack.c.l.b16 %v1429
      %v1494 = vunpack.c.l.b16 %v1430
      %v1495 = vunpack.c.l.b16 %v1431
      %v1496 = vunpack.c.l.b16 %v1432
      %v1497 = vunpack.c.l.b16 %v1433
      %v1498 = vunpack.c.l.b16 %v1434
      %v1499 = vunpack.c.l.b16 %v1435
      %v1500 = vunpack.c.l.b16 %v1436
      %v1501 = vunpack.c.l.b16 %v1437
      %v1502 = vunpack.c.l.b16 %v1438
      %v1503 = vunpack.c.l.b16 %v1439
      %v1504 = vunpack.c.l.b16 %v1440
      %v1505 = vunpack.c.l.b16 %v1441
      %v1506 = vunpack.c.l.b16 %v1442
      %v1507 = vunpack.c.l.b16 %v1443
      %v1508 = vunpack.c.l.b16 %v1444
      %v1509 = vunpack.c.l.b16 %v1445
      %v1510 = vunpack.c.l.b16 %v1446
      %v1511 = vunpack.c.l.b16 %v1447
      %v1512 = vunpack.c.l.b16 %v1448
      %v1513 = vunpack.c.l.b16 %v1449
      %v1514 = vunpack.c.l.b16 %v1450
      %v1515 = vunpack.c.l.b16 %v1451
      %v1516 = vunpack.c.l.b16 %v1452
      %v1517 = vunpack.c.l.b16 %v1453
      %v1518 = vunpack.c.l.b16 %v1454
      %v1519 = vunpack.c.l.b16 %v1455
      %v1520 = vunpack.c.l.b16 %v1456
      %v1521 = vunpack.c.l.b16 %v1457
      %v1522 = vpack.c.b16 %v1491, %v1490
      %v1523 = vpack.c.b16 %v1493, %v1492
      %v1524 = vpack.c.b16 %v1495, %v1494
      %v1525 = vpack.c.b16 %v1497, %v1496
      %v1526 = vpack.c.b16 %v1499, %v1498
      %v1527 = vpack.c.b16 %v1501, %v1500
      %v1528 = vpack.c.b16 %v1503, %v1502
      %v1529 = vpack.c.b16 %v1505, %v1504
      %v1530 = vpack.c.b16 %v1507, %v1506
      %v1531 = vpack.c.b16 %v1509, %v1508
      %v1532 = vpack.c.b16 %v1511, %v1510
      %v1533 = vpack.c.b16 %v1513, %v1512
      %v1534 = vpack.c.b16 %v1515, %v1514
      %v1535 = vpack.c.b16 %v1517, %v1516
      %v1536 = vpack.c.b16 %v1519, %v1518
      %v1537 = vpack.c.b16 %v1521, %v1520
      %1554 = vmatpush.bf16.msra.mxu0 %v1529
      %1555 = vmatpush.bf16.msra.mxu0 %v1528
      %1556 = vmatpush.bf16.msra.mxu0 %v1527
      %1557 = vmatpush.bf16.msra.mxu0 %v1526
      %1558 = vmatpush.bf16.msra.mxu0 %v1525
      %1559 = vmatpush.bf16.msra.mxu0 %v1524
      %1560 = vmatpush.bf16.msra.mxu0 %v1523
      %1561 = vmatpush.bf16.msra.mxu0 %v1522
      %1562 = vmatmul.bf16.gmra.mxu0 %v1424
      %v1563 = vpop.f32.mrf.mxu0
      %v1564 = vadd.f32 0.0, %v1563
      %v1565 = vpop.f32.mrf.mxu0
      %1566 = vdwg.mxu0
      %1567 = vmatpush.bf16.msra.mxu0 %v1537
      %1568 = vmatpush.bf16.msra.mxu0 %v1536
      %1569 = vmatpush.bf16.msra.mxu0 %v1535
      %1570 = vmatpush.bf16.msra.mxu0 %v1534
      %1571 = vmatpush.bf16.msra.mxu0 %v1533
      %1572 = vmatpush.bf16.msra.mxu0 %v1532
      %1573 = vmatpush.bf16.msra.mxu0 %v1531
      %1574 = vmatpush.bf16.msra.mxu0 %v1530
      %1575 = vmatmul.bf16.gmra.mxu0 %v1425
      %v1576 = vpop.f32.mrf.mxu0
      %v1577 = vadd.f32 %v1564, %v1576
      %v1578 = vpop.f32.mrf.mxu0
      %1579 = vdwg.mxu0
      %v1580 = vadd.f32 %v1423, %v1577
      %s1581 = scalar_lea.vmem %s3, 128
      %v1582 = vld [vmem:[%s1581] sm:$0xf]
      %v1583 = vld [vmem:[%s1581 + $0x4] sm:$0xf]
      %v1584 = vld [vmem:[%s1581 + $0x8] sm:$0xf]
      %v1585 = vld [vmem:[%s1581 + $0xc] sm:$0xf]
      %v1586 = vld [vmem:[%s1581 + $0x10] sm:$0xf]
      %v1587 = vld [vmem:[%s1581 + $0x14] sm:$0xf]
      %v1588 = vld [vmem:[%s1581 + $0x18] sm:$0xf]
      %v1589 = vld [vmem:[%s1581 + $0x1c] sm:$0xf]
      %v1590 = vld [vmem:[%s1581 + $0x20] sm:$0xf]
      %v1591 = vld [vmem:[%s1581 + $0x24] sm:$0xf]
      %v1592 = vld [vmem:[%s1581 + $0x28] sm:$0xf]
      %v1593 = vld [vmem:[%s1581 + $0x2c] sm:$0xf]
      %v1594 = vld [vmem:[%s1581 + $0x30] sm:$0xf]
      %v1595 = vld [vmem:[%s1581 + $0x34] sm:$0xf]
      %v1596 = vld [vmem:[%s1581 + $0x38] sm:$0xf]
      %v1597 = vld [vmem:[%s1581 + $0x3c] sm:$0xf]
      %v1598 = vld [vmem:[%s1581 + $0x40] sm:$0xf]
      %v1599 = vld [vmem:[%s1581 + $0x44] sm:$0xf]
      %v1600 = vld [vmem:[%s1581 + $0x48] sm:$0xf]
      %v1601 = vld [vmem:[%s1581 + $0x4c] sm:$0xf]
      %v1602 = vld [vmem:[%s1581 + $0x50] sm:$0xf]
      %v1603 = vld [vmem:[%s1581 + $0x54] sm:$0xf]
      %v1604 = vld [vmem:[%s1581 + $0x58] sm:$0xf]
      %v1605 = vld [vmem:[%s1581 + $0x5c] sm:$0xf]
      %v1606 = vld [vmem:[%s1581 + $0x60] sm:$0xf]
      %v1607 = vld [vmem:[%s1581 + $0x64] sm:$0xf]
      %v1608 = vld [vmem:[%s1581 + $0x68] sm:$0xf]
      %v1609 = vld [vmem:[%s1581 + $0x6c] sm:$0xf]
      %v1610 = vld [vmem:[%s1581 + $0x70] sm:$0xf]
      %v1611 = vld [vmem:[%s1581 + $0x74] sm:$0xf]
      %v1612 = vld [vmem:[%s1581 + $0x78] sm:$0xf]
      %v1613 = vld [vmem:[%s1581 + $0x7c] sm:$0xf]
      %v1615 = vshrl.u32 %v1424, 16
      %v1618 = vshrl.u32 %v1425, 16
      %v1654 = vunpack.c.l.b16 %v1582
      %v1655 = vunpack.c.l.b16 %v1583
      %v1656 = vunpack.c.l.b16 %v1584
      %v1657 = vunpack.c.l.b16 %v1585
      %v1658 = vunpack.c.l.b16 %v1586
      %v1659 = vunpack.c.l.b16 %v1587
      %v1660 = vunpack.c.l.b16 %v1588
      %v1661 = vunpack.c.l.b16 %v1589
      %v1662 = vunpack.c.l.b16 %v1590
      %v1663 = vunpack.c.l.b16 %v1591
      %v1664 = vunpack.c.l.b16 %v1592
      %v1665 = vunpack.c.l.b16 %v1593
      %v1666 = vunpack.c.l.b16 %v1594
      %v1667 = vunpack.c.l.b16 %v1595
      %v1668 = vunpack.c.l.b16 %v1596
      %v1669 = vunpack.c.l.b16 %v1597
      %v1670 = vunpack.c.l.b16 %v1598
      %v1671 = vunpack.c.l.b16 %v1599
      %v1672 = vunpack.c.l.b16 %v1600
      %v1673 = vunpack.c.l.b16 %v1601
      %v1674 = vunpack.c.l.b16 %v1602
      %v1675 = vunpack.c.l.b16 %v1603
      %v1676 = vunpack.c.l.b16 %v1604
      %v1677 = vunpack.c.l.b16 %v1605
      %v1678 = vunpack.c.l.b16 %v1606
      %v1679 = vunpack.c.l.b16 %v1607
      %v1680 = vunpack.c.l.b16 %v1608
      %v1681 = vunpack.c.l.b16 %v1609
      %v1682 = vunpack.c.l.b16 %v1610
      %v1683 = vunpack.c.l.b16 %v1611
      %v1684 = vunpack.c.l.b16 %v1612
      %v1685 = vunpack.c.l.b16 %v1613
      %v1686 = vpack.c.b16 %v1655, %v1654
      %v1687 = vpack.c.b16 %v1657, %v1656
      %v1688 = vpack.c.b16 %v1659, %v1658
      %v1689 = vpack.c.b16 %v1661, %v1660
      %v1690 = vpack.c.b16 %v1663, %v1662
      %v1691 = vpack.c.b16 %v1665, %v1664
      %v1692 = vpack.c.b16 %v1667, %v1666
      %v1693 = vpack.c.b16 %v1669, %v1668
      %v1694 = vpack.c.b16 %v1671, %v1670
      %v1695 = vpack.c.b16 %v1673, %v1672
      %v1696 = vpack.c.b16 %v1675, %v1674
      %v1697 = vpack.c.b16 %v1677, %v1676
      %v1698 = vpack.c.b16 %v1679, %v1678
      %v1699 = vpack.c.b16 %v1681, %v1680
      %v1700 = vpack.c.b16 %v1683, %v1682
      %v1701 = vpack.c.b16 %v1685, %v1684
      %1718 = vmatpush.bf16.msra.mxu0 %v1693
      %1719 = vmatpush.bf16.msra.mxu0 %v1692
      %1720 = vmatpush.bf16.msra.mxu0 %v1691
      %1721 = vmatpush.bf16.msra.mxu0 %v1690
      %1722 = vmatpush.bf16.msra.mxu0 %v1689
      %1723 = vmatpush.bf16.msra.mxu0 %v1688
      %1724 = vmatpush.bf16.msra.mxu0 %v1687
      %1725 = vmatpush.bf16.msra.mxu0 %v1686
      %1726 = vmatmul.bf16.gmra.mxu0 %v1615
      %v1727 = vpop.f32.mrf.mxu0
      %v1728 = vadd.f32 0.0, %v1727
      %v1729 = vpop.f32.mrf.mxu0
      %1730 = vdwg.mxu0
      %1731 = vmatpush.bf16.msra.mxu0 %v1701
      %1732 = vmatpush.bf16.msra.mxu0 %v1700
      %1733 = vmatpush.bf16.msra.mxu0 %v1699
      %1734 = vmatpush.bf16.msra.mxu0 %v1698
      %1735 = vmatpush.bf16.msra.mxu0 %v1697
      %1736 = vmatpush.bf16.msra.mxu0 %v1696
      %1737 = vmatpush.bf16.msra.mxu0 %v1695
      %1738 = vmatpush.bf16.msra.mxu0 %v1694
      %1739 = vmatmul.bf16.gmra.mxu0 %v1618
      %v1740 = vpop.f32.mrf.mxu0
      %v1741 = vadd.f32 %v1728, %v1740
      %v1742 = vpop.f32.mrf.mxu0
      %1743 = vdwg.mxu0
      %v1744 = vadd.f32 %v1580, %v1741
      %s1745 = scalar_lea.vmem %s3, 256
      %v1746 = vld [vmem:[%s1745] sm:$0xf]
      %v1747 = vld [vmem:[%s1745 + $0x4] sm:$0xf]
      %v1748 = vld [vmem:[%s1745 + $0x8] sm:$0xf]
      %v1749 = vld [vmem:[%s1745 + $0xc] sm:$0xf]
      %v1750 = vld [vmem:[%s1745 + $0x10] sm:$0xf]
      %v1751 = vld [vmem:[%s1745 + $0x14] sm:$0xf]
      %v1752 = vld [vmem:[%s1745 + $0x18] sm:$0xf]
      %v1753 = vld [vmem:[%s1745 + $0x1c] sm:$0xf]
      %v1754 = vld [vmem:[%s1745 + $0x20] sm:$0xf]
      %v1755 = vld [vmem:[%s1745 + $0x24] sm:$0xf]
      %v1756 = vld [vmem:[%s1745 + $0x28] sm:$0xf]
      %v1757 = vld [vmem:[%s1745 + $0x2c] sm:$0xf]
      %v1758 = vld [vmem:[%s1745 + $0x30] sm:$0xf]
      %v1759 = vld [vmem:[%s1745 + $0x34] sm:$0xf]
      %v1760 = vld [vmem:[%s1745 + $0x38] sm:$0xf]
      %v1761 = vld [vmem:[%s1745 + $0x3c] sm:$0xf]
      %v1762 = vld [vmem:[%s1745 + $0x40] sm:$0xf]
      %v1763 = vld [vmem:[%s1745 + $0x44] sm:$0xf]
      %v1764 = vld [vmem:[%s1745 + $0x48] sm:$0xf]
      %v1765 = vld [vmem:[%s1745 + $0x4c] sm:$0xf]
      %v1766 = vld [vmem:[%s1745 + $0x50] sm:$0xf]
      %v1767 = vld [vmem:[%s1745 + $0x54] sm:$0xf]
      %v1768 = vld [vmem:[%s1745 + $0x58] sm:$0xf]
      %v1769 = vld [vmem:[%s1745 + $0x5c] sm:$0xf]
      %v1770 = vld [vmem:[%s1745 + $0x60] sm:$0xf]
      %v1771 = vld [vmem:[%s1745 + $0x64] sm:$0xf]
      %v1772 = vld [vmem:[%s1745 + $0x68] sm:$0xf]
      %v1773 = vld [vmem:[%s1745 + $0x6c] sm:$0xf]
      %v1774 = vld [vmem:[%s1745 + $0x70] sm:$0xf]
      %v1775 = vld [vmem:[%s1745 + $0x74] sm:$0xf]
      %v1776 = vld [vmem:[%s1745 + $0x78] sm:$0xf]
      %v1777 = vld [vmem:[%s1745 + $0x7c] sm:$0xf]
      %v1780 = vrot.slane %v1424, 1
      %v1781 = vrot.slane %v1425, 1
      %v1816 = vunpack.c.l.b16 %v1746
      %v1817 = vunpack.c.l.b16 %v1747
      %v1818 = vunpack.c.l.b16 %v1748
      %v1819 = vunpack.c.l.b16 %v1749
      %v1820 = vunpack.c.l.b16 %v1750
      %v1821 = vunpack.c.l.b16 %v1751
      %v1822 = vunpack.c.l.b16 %v1752
      %v1823 = vunpack.c.l.b16 %v1753
      %v1824 = vunpack.c.l.b16 %v1754
      %v1825 = vunpack.c.l.b16 %v1755
      %v1826 = vunpack.c.l.b16 %v1756
      %v1827 = vunpack.c.l.b16 %v1757
      %v1828 = vunpack.c.l.b16 %v1758
      %v1829 = vunpack.c.l.b16 %v1759
      %v1830 = vunpack.c.l.b16 %v1760
      %v1831 = vunpack.c.l.b16 %v1761
      %v1832 = vunpack.c.l.b16 %v1762
      %v1833 = vunpack.c.l.b16 %v1763
      %v1834 = vunpack.c.l.b16 %v1764
      %v1835 = vunpack.c.l.b16 %v1765
      %v1836 = vunpack.c.l.b16 %v1766
      %v1837 = vunpack.c.l.b16 %v1767
      %v1838 = vunpack.c.l.b16 %v1768
      %v1839 = vunpack.c.l.b16 %v1769
      %v1840 = vunpack.c.l.b16 %v1770
      %v1841 = vunpack.c.l.b16 %v1771
      %v1842 = vunpack.c.l.b16 %v1772
      %v1843 = vunpack.c.l.b16 %v1773
      %v1844 = vunpack.c.l.b16 %v1774
      %v1845 = vunpack.c.l.b16 %v1775
      %v1846 = vunpack.c.l.b16 %v1776
      %v1847 = vunpack.c.l.b16 %v1777
      %v1848 = vpack.c.b16 %v1817, %v1816
      %v1849 = vpack.c.b16 %v1819, %v1818
      %v1850 = vpack.c.b16 %v1821, %v1820
      %v1851 = vpack.c.b16 %v1823, %v1822
      %v1852 = vpack.c.b16 %v1825, %v1824
      %v1853 = vpack.c.b16 %v1827, %v1826
      %v1854 = vpack.c.b16 %v1829, %v1828
      %v1855 = vpack.c.b16 %v1831, %v1830
      %v1856 = vpack.c.b16 %v1833, %v1832
      %v1857 = vpack.c.b16 %v1835, %v1834
      %v1858 = vpack.c.b16 %v1837, %v1836
      %v1859 = vpack.c.b16 %v1839, %v1838
      %v1860 = vpack.c.b16 %v1841, %v1840
      %v1861 = vpack.c.b16 %v1843, %v1842
      %v1862 = vpack.c.b16 %v1845, %v1844
      %v1863 = vpack.c.b16 %v1847, %v1846
      %1880 = vmatpush.bf16.msra.mxu0 %v1855
      %1881 = vmatpush.bf16.msra.mxu0 %v1854
      %1882 = vmatpush.bf16.msra.mxu0 %v1853
      %1883 = vmatpush.bf16.msra.mxu0 %v1852
      %1884 = vmatpush.bf16.msra.mxu0 %v1851
      %1885 = vmatpush.bf16.msra.mxu0 %v1850
      %1886 = vmatpush.bf16.msra.mxu0 %v1849
      %1887 = vmatpush.bf16.msra.mxu0 %v1848
      %1888 = vmatmul.bf16.gmra.mxu0 %v1780
      %v1889 = vpop.f32.mrf.mxu0
      %v1890 = vadd.f32 0.0, %v1889
      %v1891 = vpop.f32.mrf.mxu0
      %1892 = vdwg.mxu0
      %1893 = vmatpush.bf16.msra.mxu0 %v1863
      %1894 = vmatpush.bf16.msra.mxu0 %v1862
      %1895 = vmatpush.bf16.msra.mxu0 %v1861
      %1896 = vmatpush.bf16.msra.mxu0 %v1860
      %1897 = vmatpush.bf16.msra.mxu0 %v1859
      %1898 = vmatpush.bf16.msra.mxu0 %v1858
      %1899 = vmatpush.bf16.msra.mxu0 %v1857
      %1900 = vmatpush.bf16.msra.mxu0 %v1856
      %1901 = vmatmul.bf16.gmra.mxu0 %v1781
      %v1902 = vpop.f32.mrf.mxu0
      %v1903 = vadd.f32 %v1890, %v1902
      %v1904 = vpop.f32.mrf.mxu0
      %1905 = vdwg.mxu0
      %v1906 = vadd.f32 %v1744, %v1903
      %s1907 = scalar_lea.vmem %s3, 384
      %v1908 = vld [vmem:[%s1907] sm:$0xf]
      %v1909 = vld [vmem:[%s1907 + $0x4] sm:$0xf]
      %v1910 = vld [vmem:[%s1907 + $0x8] sm:$0xf]
      %v1911 = vld [vmem:[%s1907 + $0xc] sm:$0xf]
      %v1912 = vld [vmem:[%s1907 + $0x10] sm:$0xf]
      %v1913 = vld [vmem:[%s1907 + $0x14] sm:$0xf]
      %v1914 = vld [vmem:[%s1907 + $0x18] sm:$0xf]
      %v1915 = vld [vmem:[%s1907 + $0x1c] sm:$0xf]
      %v1916 = vld [vmem:[%s1907 + $0x20] sm:$0xf]
      %v1917 = vld [vmem:[%s1907 + $0x24] sm:$0xf]
      %v1918 = vld [vmem:[%s1907 + $0x28] sm:$0xf]
      %v1919 = vld [vmem:[%s1907 + $0x2c] sm:$0xf]
      %v1920 = vld [vmem:[%s1907 + $0x30] sm:$0xf]
      %v1921 = vld [vmem:[%s1907 + $0x34] sm:$0xf]
      %v1922 = vld [vmem:[%s1907 + $0x38] sm:$0xf]
      %v1923 = vld [vmem:[%s1907 + $0x3c] sm:$0xf]
      %v1924 = vld [vmem:[%s1907 + $0x40] sm:$0xf]
      %v1925 = vld [vmem:[%s1907 + $0x44] sm:$0xf]
      %v1926 = vld [vmem:[%s1907 + $0x48] sm:$0xf]
      %v1927 = vld [vmem:[%s1907 + $0x4c] sm:$0xf]
      %v1928 = vld [vmem:[%s1907 + $0x50] sm:$0xf]
      %v1929 = vld [vmem:[%s1907 + $0x54] sm:$0xf]
      %v1930 = vld [vmem:[%s1907 + $0x58] sm:$0xf]
      %v1931 = vld [vmem:[%s1907 + $0x5c] sm:$0xf]
      %v1932 = vld [vmem:[%s1907 + $0x60] sm:$0xf]
      %v1933 = vld [vmem:[%s1907 + $0x64] sm:$0xf]
      %v1934 = vld [vmem:[%s1907 + $0x68] sm:$0xf]
      %v1935 = vld [vmem:[%s1907 + $0x6c] sm:$0xf]
      %v1936 = vld [vmem:[%s1907 + $0x70] sm:$0xf]
      %v1937 = vld [vmem:[%s1907 + $0x74] sm:$0xf]
      %v1938 = vld [vmem:[%s1907 + $0x78] sm:$0xf]
      %v1939 = vld [vmem:[%s1907 + $0x7c] sm:$0xf]
      %v1940 = vrot.slane %v1615, 1
      %v1941 = vrot.slane %v1618, 1
      %v1976 = vunpack.c.l.b16 %v1908
      %v1977 = vunpack.c.l.b16 %v1909
      %v1978 = vunpack.c.l.b16 %v1910
      %v1979 = vunpack.c.l.b16 %v1911
      %v1980 = vunpack.c.l.b16 %v1912
      %v1981 = vunpack.c.l.b16 %v1913
      %v1982 = vunpack.c.l.b16 %v1914
      %v1983 = vunpack.c.l.b16 %v1915
      %v1984 = vunpack.c.l.b16 %v1916
      %v1985 = vunpack.c.l.b16 %v1917
      %v1986 = vunpack.c.l.b16 %v1918
      %v1987 = vunpack.c.l.b16 %v1919
      %v1988 = vunpack.c.l.b16 %v1920
      %v1989 = vunpack.c.l.b16 %v1921
      %v1990 = vunpack.c.l.b16 %v1922
      %v1991 = vunpack.c.l.b16 %v1923
      %v1992 = vunpack.c.l.b16 %v1924
      %v1993 = vunpack.c.l.b16 %v1925
      %v1994 = vunpack.c.l.b16 %v1926
      %v1995 = vunpack.c.l.b16 %v1927
      %v1996 = vunpack.c.l.b16 %v1928
      %v1997 = vunpack.c.l.b16 %v1929
      %v1998 = vunpack.c.l.b16 %v1930
      %v1999 = vunpack.c.l.b16 %v1931
      %v2000 = vunpack.c.l.b16 %v1932
      %v2001 = vunpack.c.l.b16 %v1933
      %v2002 = vunpack.c.l.b16 %v1934
      %v2003 = vunpack.c.l.b16 %v1935
      %v2004 = vunpack.c.l.b16 %v1936
      %v2005 = vunpack.c.l.b16 %v1937
      %v2006 = vunpack.c.l.b16 %v1938
      %v2007 = vunpack.c.l.b16 %v1939
      %v2008 = vpack.c.b16 %v1977, %v1976
      %v2009 = vpack.c.b16 %v1979, %v1978
      %v2010 = vpack.c.b16 %v1981, %v1980
      %v2011 = vpack.c.b16 %v1983, %v1982
      %v2012 = vpack.c.b16 %v1985, %v1984
      %v2013 = vpack.c.b16 %v1987, %v1986
      %v2014 = vpack.c.b16 %v1989, %v1988
      %v2015 = vpack.c.b16 %v1991, %v1990
      %v2016 = vpack.c.b16 %v1993, %v1992
      %v2017 = vpack.c.b16 %v1995, %v1994
      %v2018 = vpack.c.b16 %v1997, %v1996
      %v2019 = vpack.c.b16 %v1999, %v1998
      %v2020 = vpack.c.b16 %v2001, %v2000
      %v2021 = vpack.c.b16 %v2003, %v2002
      %v2022 = vpack.c.b16 %v2005, %v2004
      %v2023 = vpack.c.b16 %v2007, %v2006
      %2040 = vmatpush.bf16.msra.mxu0 %v2015
      %2041 = vmatpush.bf16.msra.mxu0 %v2014
      %2042 = vmatpush.bf16.msra.mxu0 %v2013
      %2043 = vmatpush.bf16.msra.mxu0 %v2012
      %2044 = vmatpush.bf16.msra.mxu0 %v2011
      %2045 = vmatpush.bf16.msra.mxu0 %v2010
      %2046 = vmatpush.bf16.msra.mxu0 %v2009
      %2047 = vmatpush.bf16.msra.mxu0 %v2008
      %2048 = vmatmul.bf16.gmra.mxu0 %v1940
      %v2049 = vpop.f32.mrf.mxu0
      %v2050 = vadd.f32 0.0, %v2049
      %v2051 = vpop.f32.mrf.mxu0
      %2052 = vdwg.mxu0
      %2053 = vmatpush.bf16.msra.mxu0 %v2023
      %2054 = vmatpush.bf16.msra.mxu0 %v2022
      %2055 = vmatpush.bf16.msra.mxu0 %v2021
      %2056 = vmatpush.bf16.msra.mxu0 %v2020
      %2057 = vmatpush.bf16.msra.mxu0 %v2019
      %2058 = vmatpush.bf16.msra.mxu0 %v2018
      %2059 = vmatpush.bf16.msra.mxu0 %v2017
      %2060 = vmatpush.bf16.msra.mxu0 %v2016
      %2061 = vmatmul.bf16.gmra.mxu0 %v1941
      %v2062 = vpop.f32.mrf.mxu0
      %v2063 = vadd.f32 %v2050, %v2062
      %v2064 = vpop.f32.mrf.mxu0
      %2065 = vdwg.mxu0
      %v2066 = vadd.f32 %v1906, %v2063
      %s2067 = scalar_lea.vmem %s3, 512
      %v2068 = vld [vmem:[%s2067] sm:$0xf]
      %v2069 = vld [vmem:[%s2067 + $0x4] sm:$0xf]
      %v2070 = vld [vmem:[%s2067 + $0x8] sm:$0xf]
      %v2071 = vld [vmem:[%s2067 + $0xc] sm:$0xf]
      %v2072 = vld [vmem:[%s2067 + $0x10] sm:$0xf]
      %v2073 = vld [vmem:[%s2067 + $0x14] sm:$0xf]
      %v2074 = vld [vmem:[%s2067 + $0x18] sm:$0xf]
      %v2075 = vld [vmem:[%s2067 + $0x1c] sm:$0xf]
      %v2076 = vld [vmem:[%s2067 + $0x20] sm:$0xf]
      %v2077 = vld [vmem:[%s2067 + $0x24] sm:$0xf]
      %v2078 = vld [vmem:[%s2067 + $0x28] sm:$0xf]
      %v2079 = vld [vmem:[%s2067 + $0x2c] sm:$0xf]
      %v2080 = vld [vmem:[%s2067 + $0x30] sm:$0xf]
      %v2081 = vld [vmem:[%s2067 + $0x34] sm:$0xf]
      %v2082 = vld [vmem:[%s2067 + $0x38] sm:$0xf]
      %v2083 = vld [vmem:[%s2067 + $0x3c] sm:$0xf]
      %v2084 = vld [vmem:[%s2067 + $0x40] sm:$0xf]
      %v2085 = vld [vmem:[%s2067 + $0x44] sm:$0xf]
      %v2086 = vld [vmem:[%s2067 + $0x48] sm:$0xf]
      %v2087 = vld [vmem:[%s2067 + $0x4c] sm:$0xf]
      %v2088 = vld [vmem:[%s2067 + $0x50] sm:$0xf]
      %v2089 = vld [vmem:[%s2067 + $0x54] sm:$0xf]
      %v2090 = vld [vmem:[%s2067 + $0x58] sm:$0xf]
      %v2091 = vld [vmem:[%s2067 + $0x5c] sm:$0xf]
      %v2092 = vld [vmem:[%s2067 + $0x60] sm:$0xf]
      %v2093 = vld [vmem:[%s2067 + $0x64] sm:$0xf]
      %v2094 = vld [vmem:[%s2067 + $0x68] sm:$0xf]
      %v2095 = vld [vmem:[%s2067 + $0x6c] sm:$0xf]
      %v2096 = vld [vmem:[%s2067 + $0x70] sm:$0xf]
      %v2097 = vld [vmem:[%s2067 + $0x74] sm:$0xf]
      %v2098 = vld [vmem:[%s2067 + $0x78] sm:$0xf]
      %v2099 = vld [vmem:[%s2067 + $0x7c] sm:$0xf]
      %v2100 = vrot.slane %v1424, 2
      %v2101 = vrot.slane %v1425, 2
      %v2136 = vunpack.c.l.b16 %v2068
      %v2137 = vunpack.c.l.b16 %v2069
      %v2138 = vunpack.c.l.b16 %v2070
      %v2139 = vunpack.c.l.b16 %v2071
      %v2140 = vunpack.c.l.b16 %v2072
      %v2141 = vunpack.c.l.b16 %v2073
      %v2142 = vunpack.c.l.b16 %v2074
      %v2143 = vunpack.c.l.b16 %v2075
      %v2144 = vunpack.c.l.b16 %v2076
      %v2145 = vunpack.c.l.b16 %v2077
      %v2146 = vunpack.c.l.b16 %v2078
      %v2147 = vunpack.c.l.b16 %v2079
      %v2148 = vunpack.c.l.b16 %v2080
      %v2149 = vunpack.c.l.b16 %v2081
      %v2150 = vunpack.c.l.b16 %v2082
      %v2151 = vunpack.c.l.b16 %v2083
      %v2152 = vunpack.c.l.b16 %v2084
      %v2153 = vunpack.c.l.b16 %v2085
      %v2154 = vunpack.c.l.b16 %v2086
      %v2155 = vunpack.c.l.b16 %v2087
      %v2156 = vunpack.c.l.b16 %v2088
      %v2157 = vunpack.c.l.b16 %v2089
      %v2158 = vunpack.c.l.b16 %v2090
      %v2159 = vunpack.c.l.b16 %v2091
      %v2160 = vunpack.c.l.b16 %v2092
      %v2161 = vunpack.c.l.b16 %v2093
      %v2162 = vunpack.c.l.b16 %v2094
      %v2163 = vunpack.c.l.b16 %v2095
      %v2164 = vunpack.c.l.b16 %v2096
      %v2165 = vunpack.c.l.b16 %v2097
      %v2166 = vunpack.c.l.b16 %v2098
      %v2167 = vunpack.c.l.b16 %v2099
      %v2168 = vpack.c.b16 %v2137, %v2136
      %v2169 = vpack.c.b16 %v2139, %v2138
      %v2170 = vpack.c.b16 %v2141, %v2140
      %v2171 = vpack.c.b16 %v2143, %v2142
      %v2172 = vpack.c.b16 %v2145, %v2144
      %v2173 = vpack.c.b16 %v2147, %v2146
      %v2174 = vpack.c.b16 %v2149, %v2148
      %v2175 = vpack.c.b16 %v2151, %v2150
      %v2176 = vpack.c.b16 %v2153, %v2152
      %v2177 = vpack.c.b16 %v2155, %v2154
      %v2178 = vpack.c.b16 %v2157, %v2156
      %v2179 = vpack.c.b16 %v2159, %v2158
      %v2180 = vpack.c.b16 %v2161, %v2160
      %v2181 = vpack.c.b16 %v2163, %v2162
      %v2182 = vpack.c.b16 %v2165, %v2164
      %v2183 = vpack.c.b16 %v2167, %v2166
      %2200 = vmatpush.bf16.msra.mxu0 %v2175
      %2201 = vmatpush.bf16.msra.mxu0 %v2174
      %2202 = vmatpush.bf16.msra.mxu0 %v2173
      %2203 = vmatpush.bf16.msra.mxu0 %v2172
      %2204 = vmatpush.bf16.msra.mxu0 %v2171
      %2205 = vmatpush.bf16.msra.mxu0 %v2170
      %2206 = vmatpush.bf16.msra.mxu0 %v2169
      %2207 = vmatpush.bf16.msra.mxu0 %v2168
      %2208 = vmatmul.bf16.gmra.mxu0 %v2100
      %v2209 = vpop.f32.mrf.mxu0
      %v2210 = vadd.f32 0.0, %v2209
      %v2211 = vpop.f32.mrf.mxu0
      %2212 = vdwg.mxu0
      %2213 = vmatpush.bf16.msra.mxu0 %v2183
      %2214 = vmatpush.bf16.msra.mxu0 %v2182
      %2215 = vmatpush.bf16.msra.mxu0 %v2181
      %2216 = vmatpush.bf16.msra.mxu0 %v2180
      %2217 = vmatpush.bf16.msra.mxu0 %v2179
      %2218 = vmatpush.bf16.msra.mxu0 %v2178
      %2219 = vmatpush.bf16.msra.mxu0 %v2177
      %2220 = vmatpush.bf16.msra.mxu0 %v2176
      %2221 = vmatmul.bf16.gmra.mxu0 %v2101
      %v2222 = vpop.f32.mrf.mxu0
      %v2223 = vadd.f32 %v2210, %v2222
      %v2224 = vpop.f32.mrf.mxu0
      %2225 = vdwg.mxu0
      %v2226 = vadd.f32 %v2066, %v2223
      %s2227 = scalar_lea.vmem %s3, 640
      %v2228 = vld [vmem:[%s2227] sm:$0xf]
      %v2229 = vld [vmem:[%s2227 + $0x4] sm:$0xf]
      %v2230 = vld [vmem:[%s2227 + $0x8] sm:$0xf]
      %v2231 = vld [vmem:[%s2227 + $0xc] sm:$0xf]
      %v2232 = vld [vmem:[%s2227 + $0x10] sm:$0xf]
      %v2233 = vld [vmem:[%s2227 + $0x14] sm:$0xf]
      %v2234 = vld [vmem:[%s2227 + $0x18] sm:$0xf]
      %v2235 = vld [vmem:[%s2227 + $0x1c] sm:$0xf]
      %v2236 = vld [vmem:[%s2227 + $0x20] sm:$0xf]
      %v2237 = vld [vmem:[%s2227 + $0x24] sm:$0xf]
      %v2238 = vld [vmem:[%s2227 + $0x28] sm:$0xf]
      %v2239 = vld [vmem:[%s2227 + $0x2c] sm:$0xf]
      %v2240 = vld [vmem:[%s2227 + $0x30] sm:$0xf]
      %v2241 = vld [vmem:[%s2227 + $0x34] sm:$0xf]
      %v2242 = vld [vmem:[%s2227 + $0x38] sm:$0xf]
      %v2243 = vld [vmem:[%s2227 + $0x3c] sm:$0xf]
      %v2244 = vld [vmem:[%s2227 + $0x40] sm:$0xf]
      %v2245 = vld [vmem:[%s2227 + $0x44] sm:$0xf]
      %v2246 = vld [vmem:[%s2227 + $0x48] sm:$0xf]
      %v2247 = vld [vmem:[%s2227 + $0x4c] sm:$0xf]
      %v2248 = vld [vmem:[%s2227 + $0x50] sm:$0xf]
      %v2249 = vld [vmem:[%s2227 + $0x54] sm:$0xf]
      %v2250 = vld [vmem:[%s2227 + $0x58] sm:$0xf]
      %v2251 = vld [vmem:[%s2227 + $0x5c] sm:$0xf]
      %v2252 = vld [vmem:[%s2227 + $0x60] sm:$0xf]
      %v2253 = vld [vmem:[%s2227 + $0x64] sm:$0xf]
      %v2254 = vld [vmem:[%s2227 + $0x68] sm:$0xf]
      %v2255 = vld [vmem:[%s2227 + $0x6c] sm:$0xf]
      %v2256 = vld [vmem:[%s2227 + $0x70] sm:$0xf]
      %v2257 = vld [vmem:[%s2227 + $0x74] sm:$0xf]
      %v2258 = vld [vmem:[%s2227 + $0x78] sm:$0xf]
      %v2259 = vld [vmem:[%s2227 + $0x7c] sm:$0xf]
      %v2260 = vrot.slane %v1615, 2
      %v2261 = vrot.slane %v1618, 2
      %v2296 = vunpack.c.l.b16 %v2228
      %v2297 = vunpack.c.l.b16 %v2229
      %v2298 = vunpack.c.l.b16 %v2230
      %v2299 = vunpack.c.l.b16 %v2231
      %v2300 = vunpack.c.l.b16 %v2232
      %v2301 = vunpack.c.l.b16 %v2233
      %v2302 = vunpack.c.l.b16 %v2234
      %v2303 = vunpack.c.l.b16 %v2235
      %v2304 = vunpack.c.l.b16 %v2236
      %v2305 = vunpack.c.l.b16 %v2237
      %v2306 = vunpack.c.l.b16 %v2238
      %v2307 = vunpack.c.l.b16 %v2239
      %v2308 = vunpack.c.l.b16 %v2240
      %v2309 = vunpack.c.l.b16 %v2241
      %v2310 = vunpack.c.l.b16 %v2242
      %v2311 = vunpack.c.l.b16 %v2243
      %v2312 = vunpack.c.l.b16 %v2244
      %v2313 = vunpack.c.l.b16 %v2245
      %v2314 = vunpack.c.l.b16 %v2246
      %v2315 = vunpack.c.l.b16 %v2247
      %v2316 = vunpack.c.l.b16 %v2248
      %v2317 = vunpack.c.l.b16 %v2249
      %v2318 = vunpack.c.l.b16 %v2250
      %v2319 = vunpack.c.l.b16 %v2251
      %v2320 = vunpack.c.l.b16 %v2252
      %v2321 = vunpack.c.l.b16 %v2253
      %v2322 = vunpack.c.l.b16 %v2254
      %v2323 = vunpack.c.l.b16 %v2255
      %v2324 = vunpack.c.l.b16 %v2256
      %v2325 = vunpack.c.l.b16 %v2257
      %v2326 = vunpack.c.l.b16 %v2258
      %v2327 = vunpack.c.l.b16 %v2259
      %v2328 = vpack.c.b16 %v2297, %v2296
      %v2329 = vpack.c.b16 %v2299, %v2298
      %v2330 = vpack.c.b16 %v2301, %v2300
      %v2331 = vpack.c.b16 %v2303, %v2302
      %v2332 = vpack.c.b16 %v2305, %v2304
      %v2333 = vpack.c.b16 %v2307, %v2306
      %v2334 = vpack.c.b16 %v2309, %v2308
      %v2335 = vpack.c.b16 %v2311, %v2310
      %v2336 = vpack.c.b16 %v2313, %v2312
      %v2337 = vpack.c.b16 %v2315, %v2314
      %v2338 = vpack.c.b16 %v2317, %v2316
      %v2339 = vpack.c.b16 %v2319, %v2318
      %v2340 = vpack.c.b16 %v2321, %v2320
      %v2341 = vpack.c.b16 %v2323, %v2322
      %v2342 = vpack.c.b16 %v2325, %v2324
      %v2343 = vpack.c.b16 %v2327, %v2326
      %2360 = vmatpush.bf16.msra.mxu0 %v2335
      %2361 = vmatpush.bf16.msra.mxu0 %v2334
      %2362 = vmatpush.bf16.msra.mxu0 %v2333
      %2363 = vmatpush.bf16.msra.mxu0 %v2332
      %2364 = vmatpush.bf16.msra.mxu0 %v2331
      %2365 = vmatpush.bf16.msra.mxu0 %v2330
      %2366 = vmatpush.bf16.msra.mxu0 %v2329
      %2367 = vmatpush.bf16.msra.mxu0 %v2328
      %2368 = vmatmul.bf16.gmra.mxu0 %v2260
      %v2369 = vpop.f32.mrf.mxu0
      %v2370 = vadd.f32 0.0, %v2369
      %v2371 = vpop.f32.mrf.mxu0
      %2372 = vdwg.mxu0
      %2373 = vmatpush.bf16.msra.mxu0 %v2343
      %2374 = vmatpush.bf16.msra.mxu0 %v2342
      %2375 = vmatpush.bf16.msra.mxu0 %v2341
      %2376 = vmatpush.bf16.msra.mxu0 %v2340
      %2377 = vmatpush.bf16.msra.mxu0 %v2339
      %2378 = vmatpush.bf16.msra.mxu0 %v2338
      %2379 = vmatpush.bf16.msra.mxu0 %v2337
      %2380 = vmatpush.bf16.msra.mxu0 %v2336
      %2381 = vmatmul.bf16.gmra.mxu0 %v2261
      %v2382 = vpop.f32.mrf.mxu0
      %v2383 = vadd.f32 %v2370, %v2382
      %v2384 = vpop.f32.mrf.mxu0
      %2385 = vdwg.mxu0
      %v2386 = vadd.f32 %v2226, %v2383
      %s2387 = scalar_lea.vmem %s3, 768
      %v2388 = vld [vmem:[%s2387] sm:$0xf]
      %v2389 = vld [vmem:[%s2387 + $0x4] sm:$0xf]
      %v2390 = vld [vmem:[%s2387 + $0x8] sm:$0xf]
      %v2391 = vld [vmem:[%s2387 + $0xc] sm:$0xf]
      %v2392 = vld [vmem:[%s2387 + $0x10] sm:$0xf]
      %v2393 = vld [vmem:[%s2387 + $0x14] sm:$0xf]
      %v2394 = vld [vmem:[%s2387 + $0x18] sm:$0xf]
      %v2395 = vld [vmem:[%s2387 + $0x1c] sm:$0xf]
      %v2396 = vld [vmem:[%s2387 + $0x20] sm:$0xf]
      %v2397 = vld [vmem:[%s2387 + $0x24] sm:$0xf]
      %v2398 = vld [vmem:[%s2387 + $0x28] sm:$0xf]
      %v2399 = vld [vmem:[%s2387 + $0x2c] sm:$0xf]
      %v2400 = vld [vmem:[%s2387 + $0x30] sm:$0xf]
      %v2401 = vld [vmem:[%s2387 + $0x34] sm:$0xf]
      %v2402 = vld [vmem:[%s2387 + $0x38] sm:$0xf]
      %v2403 = vld [vmem:[%s2387 + $0x3c] sm:$0xf]
      %v2404 = vld [vmem:[%s2387 + $0x40] sm:$0xf]
      %v2405 = vld [vmem:[%s2387 + $0x44] sm:$0xf]
      %v2406 = vld [vmem:[%s2387 + $0x48] sm:$0xf]
      %v2407 = vld [vmem:[%s2387 + $0x4c] sm:$0xf]
      %v2408 = vld [vmem:[%s2387 + $0x50] sm:$0xf]
      %v2409 = vld [vmem:[%s2387 + $0x54] sm:$0xf]
      %v2410 = vld [vmem:[%s2387 + $0x58] sm:$0xf]
      %v2411 = vld [vmem:[%s2387 + $0x5c] sm:$0xf]
      %v2412 = vld [vmem:[%s2387 + $0x60] sm:$0xf]
      %v2413 = vld [vmem:[%s2387 + $0x64] sm:$0xf]
      %v2414 = vld [vmem:[%s2387 + $0x68] sm:$0xf]
      %v2415 = vld [vmem:[%s2387 + $0x6c] sm:$0xf]
      %v2416 = vld [vmem:[%s2387 + $0x70] sm:$0xf]
      %v2417 = vld [vmem:[%s2387 + $0x74] sm:$0xf]
      %v2418 = vld [vmem:[%s2387 + $0x78] sm:$0xf]
      %v2419 = vld [vmem:[%s2387 + $0x7c] sm:$0xf]
      %v2420 = vrot.slane %v1424, 3
      %v2421 = vrot.slane %v1425, 3
      %v2456 = vunpack.c.l.b16 %v2388
      %v2457 = vunpack.c.l.b16 %v2389
      %v2458 = vunpack.c.l.b16 %v2390
      %v2459 = vunpack.c.l.b16 %v2391
      %v2460 = vunpack.c.l.b16 %v2392
      %v2461 = vunpack.c.l.b16 %v2393
      %v2462 = vunpack.c.l.b16 %v2394
      %v2463 = vunpack.c.l.b16 %v2395
      %v2464 = vunpack.c.l.b16 %v2396
      %v2465 = vunpack.c.l.b16 %v2397
      %v2466 = vunpack.c.l.b16 %v2398
      %v2467 = vunpack.c.l.b16 %v2399
      %v2468 = vunpack.c.l.b16 %v2400
      %v2469 = vunpack.c.l.b16 %v2401
      %v2470 = vunpack.c.l.b16 %v2402
      %v2471 = vunpack.c.l.b16 %v2403
      %v2472 = vunpack.c.l.b16 %v2404
      %v2473 = vunpack.c.l.b16 %v2405
      %v2474 = vunpack.c.l.b16 %v2406
      %v2475 = vunpack.c.l.b16 %v2407
      %v2476 = vunpack.c.l.b16 %v2408
      %v2477 = vunpack.c.l.b16 %v2409
      %v2478 = vunpack.c.l.b16 %v2410
      %v2479 = vunpack.c.l.b16 %v2411
      %v2480 = vunpack.c.l.b16 %v2412
      %v2481 = vunpack.c.l.b16 %v2413
      %v2482 = vunpack.c.l.b16 %v2414
      %v2483 = vunpack.c.l.b16 %v2415
      %v2484 = vunpack.c.l.b16 %v2416
      %v2485 = vunpack.c.l.b16 %v2417
      %v2486 = vunpack.c.l.b16 %v2418
      %v2487 = vunpack.c.l.b16 %v2419
      %v2488 = vpack.c.b16 %v2457, %v2456
      %v2489 = vpack.c.b16 %v2459, %v2458
      %v2490 = vpack.c.b16 %v2461, %v2460
      %v2491 = vpack.c.b16 %v2463, %v2462
      %v2492 = vpack.c.b16 %v2465, %v2464
      %v2493 = vpack.c.b16 %v2467, %v2466
      %v2494 = vpack.c.b16 %v2469, %v2468
      %v2495 = vpack.c.b16 %v2471, %v2470
      %v2496 = vpack.c.b16 %v2473, %v2472
      %v2497 = vpack.c.b16 %v2475, %v2474
      %v2498 = vpack.c.b16 %v2477, %v2476
      %v2499 = vpack.c.b16 %v2479, %v2478
      %v2500 = vpack.c.b16 %v2481, %v2480
      %v2501 = vpack.c.b16 %v2483, %v2482
      %v2502 = vpack.c.b16 %v2485, %v2484
      %v2503 = vpack.c.b16 %v2487, %v2486
      %2520 = vmatpush.bf16.msra.mxu0 %v2495
      %2521 = vmatpush.bf16.msra.mxu0 %v2494
      %2522 = vmatpush.bf16.msra.mxu0 %v2493
      %2523 = vmatpush.bf16.msra.mxu0 %v2492
      %2524 = vmatpush.bf16.msra.mxu0 %v2491
      %2525 = vmatpush.bf16.msra.mxu0 %v2490
      %2526 = vmatpush.bf16.msra.mxu0 %v2489
      %2527 = vmatpush.bf16.msra.mxu0 %v2488
      %2528 = vmatmul.bf16.gmra.mxu0 %v2420
      %v2529 = vpop.f32.mrf.mxu0
      %v2530 = vadd.f32 0.0, %v2529
      %v2531 = vpop.f32.mrf.mxu0
      %2532 = vdwg.mxu0
      %2533 = vmatpush.bf16.msra.mxu0 %v2503
      %2534 = vmatpush.bf16.msra.mxu0 %v2502
      %2535 = vmatpush.bf16.msra.mxu0 %v2501
      %2536 = vmatpush.bf16.msra.mxu0 %v2500
      %2537 = vmatpush.bf16.msra.mxu0 %v2499
      %2538 = vmatpush.bf16.msra.mxu0 %v2498
      %2539 = vmatpush.bf16.msra.mxu0 %v2497
      %2540 = vmatpush.bf16.msra.mxu0 %v2496
      %2541 = vmatmul.bf16.gmra.mxu0 %v2421
      %v2542 = vpop.f32.mrf.mxu0
      %v2543 = vadd.f32 %v2530, %v2542
      %v2544 = vpop.f32.mrf.mxu0
      %2545 = vdwg.mxu0
      %v2546 = vadd.f32 %v2386, %v2543
      %s2547 = scalar_lea.vmem %s3, 896
      %v2548 = vld [vmem:[%s2547] sm:$0xf]
      %v2549 = vld [vmem:[%s2547 + $0x4] sm:$0xf]
      %v2550 = vld [vmem:[%s2547 + $0x8] sm:$0xf]
      %v2551 = vld [vmem:[%s2547 + $0xc] sm:$0xf]
      %v2552 = vld [vmem:[%s2547 + $0x10] sm:$0xf]
      %v2553 = vld [vmem:[%s2547 + $0x14] sm:$0xf]
      %v2554 = vld [vmem:[%s2547 + $0x18] sm:$0xf]
      %v2555 = vld [vmem:[%s2547 + $0x1c] sm:$0xf]
      %v2556 = vld [vmem:[%s2547 + $0x20] sm:$0xf]
      %v2557 = vld [vmem:[%s2547 + $0x24] sm:$0xf]
      %v2558 = vld [vmem:[%s2547 + $0x28] sm:$0xf]
      %v2559 = vld [vmem:[%s2547 + $0x2c] sm:$0xf]
      %v2560 = vld [vmem:[%s2547 + $0x30] sm:$0xf]
      %v2561 = vld [vmem:[%s2547 + $0x34] sm:$0xf]
      %v2562 = vld [vmem:[%s2547 + $0x38] sm:$0xf]
      %v2563 = vld [vmem:[%s2547 + $0x3c] sm:$0xf]
      %v2564 = vld [vmem:[%s2547 + $0x40] sm:$0xf]
      %v2565 = vld [vmem:[%s2547 + $0x44] sm:$0xf]
      %v2566 = vld [vmem:[%s2547 + $0x48] sm:$0xf]
      %v2567 = vld [vmem:[%s2547 + $0x4c] sm:$0xf]
      %v2568 = vld [vmem:[%s2547 + $0x50] sm:$0xf]
      %v2569 = vld [vmem:[%s2547 + $0x54] sm:$0xf]
      %v2570 = vld [vmem:[%s2547 + $0x58] sm:$0xf]
      %v2571 = vld [vmem:[%s2547 + $0x5c] sm:$0xf]
      %v2572 = vld [vmem:[%s2547 + $0x60] sm:$0xf]
      %v2573 = vld [vmem:[%s2547 + $0x64] sm:$0xf]
      %v2574 = vld [vmem:[%s2547 + $0x68] sm:$0xf]
      %v2575 = vld [vmem:[%s2547 + $0x6c] sm:$0xf]
      %v2576 = vld [vmem:[%s2547 + $0x70] sm:$0xf]
      %v2577 = vld [vmem:[%s2547 + $0x74] sm:$0xf]
      %v2578 = vld [vmem:[%s2547 + $0x78] sm:$0xf]
      %v2579 = vld [vmem:[%s2547 + $0x7c] sm:$0xf]
      %v2580 = vrot.slane %v1615, 3
      %v2581 = vrot.slane %v1618, 3
      %v2616 = vunpack.c.l.b16 %v2548
      %v2617 = vunpack.c.l.b16 %v2549
      %v2618 = vunpack.c.l.b16 %v2550
      %v2619 = vunpack.c.l.b16 %v2551
      %v2620 = vunpack.c.l.b16 %v2552
      %v2621 = vunpack.c.l.b16 %v2553
      %v2622 = vunpack.c.l.b16 %v2554
      %v2623 = vunpack.c.l.b16 %v2555
      %v2624 = vunpack.c.l.b16 %v2556
      %v2625 = vunpack.c.l.b16 %v2557
      %v2626 = vunpack.c.l.b16 %v2558
      %v2627 = vunpack.c.l.b16 %v2559
      %v2628 = vunpack.c.l.b16 %v2560
      %v2629 = vunpack.c.l.b16 %v2561
      %v2630 = vunpack.c.l.b16 %v2562
      %v2631 = vunpack.c.l.b16 %v2563
      %v2632 = vunpack.c.l.b16 %v2564
      %v2633 = vunpack.c.l.b16 %v2565
      %v2634 = vunpack.c.l.b16 %v2566
      %v2635 = vunpack.c.l.b16 %v2567
      %v2636 = vunpack.c.l.b16 %v2568
      %v2637 = vunpack.c.l.b16 %v2569
      %v2638 = vunpack.c.l.b16 %v2570
      %v2639 = vunpack.c.l.b16 %v2571
      %v2640 = vunpack.c.l.b16 %v2572
      %v2641 = vunpack.c.l.b16 %v2573
      %v2642 = vunpack.c.l.b16 %v2574
      %v2643 = vunpack.c.l.b16 %v2575
      %v2644 = vunpack.c.l.b16 %v2576
      %v2645 = vunpack.c.l.b16 %v2577
      %v2646 = vunpack.c.l.b16 %v2578
      %v2647 = vunpack.c.l.b16 %v2579
      %v2648 = vpack.c.b16 %v2617, %v2616
      %v2649 = vpack.c.b16 %v2619, %v2618
      %v2650 = vpack.c.b16 %v2621, %v2620
      %v2651 = vpack.c.b16 %v2623, %v2622
      %v2652 = vpack.c.b16 %v2625, %v2624
      %v2653 = vpack.c.b16 %v2627, %v2626
      %v2654 = vpack.c.b16 %v2629, %v2628
      %v2655 = vpack.c.b16 %v2631, %v2630
      %v2656 = vpack.c.b16 %v2633, %v2632
      %v2657 = vpack.c.b16 %v2635, %v2634
      %v2658 = vpack.c.b16 %v2637, %v2636
      %v2659 = vpack.c.b16 %v2639, %v2638
      %v2660 = vpack.c.b16 %v2641, %v2640
      %v2661 = vpack.c.b16 %v2643, %v2642
      %v2662 = vpack.c.b16 %v2645, %v2644
      %v2663 = vpack.c.b16 %v2647, %v2646
      %2680 = vmatpush.bf16.msra.mxu0 %v2655
      %2681 = vmatpush.bf16.msra.mxu0 %v2654
      %2682 = vmatpush.bf16.msra.mxu0 %v2653
      %2683 = vmatpush.bf16.msra.mxu0 %v2652
      %2684 = vmatpush.bf16.msra.mxu0 %v2651
      %2685 = vmatpush.bf16.msra.mxu0 %v2650
      %2686 = vmatpush.bf16.msra.mxu0 %v2649
      %2687 = vmatpush.bf16.msra.mxu0 %v2648
      %2688 = vmatmul.bf16.gmra.mxu0 %v2580
      %v2689 = vpop.f32.mrf.mxu0
      %v2690 = vadd.f32 0.0, %v2689
      %v2691 = vpop.f32.mrf.mxu0
      %2692 = vdwg.mxu0
      %2693 = vmatpush.bf16.msra.mxu0 %v2663
      %2694 = vmatpush.bf16.msra.mxu0 %v2662
      %2695 = vmatpush.bf16.msra.mxu0 %v2661
      %2696 = vmatpush.bf16.msra.mxu0 %v2660
      %2697 = vmatpush.bf16.msra.mxu0 %v2659
      %2698 = vmatpush.bf16.msra.mxu0 %v2658
      %2699 = vmatpush.bf16.msra.mxu0 %v2657
      %2700 = vmatpush.bf16.msra.mxu0 %v2656
      %2701 = vmatmul.bf16.gmra.mxu0 %v2581
      %v2702 = vpop.f32.mrf.mxu0
      %v2703 = vadd.f32 %v2690, %v2702
      %v2704 = vpop.f32.mrf.mxu0
      %2705 = vdwg.mxu0
      %v2706 = vadd.f32 %v2546, %v2703
      %v2707 = vpack.c.bf16 %v1421, %v1421
      %v2708 = vpack.c.bf16 %v1422, %v1422
      %s2709 = scalar_lea.vmem %s3, 1024
      %v2710 = vld [vmem:[%s2709] sm:$0xf]
      %v2711 = vld [vmem:[%s2709 + $0x4] sm:$0xf]
      %v2712 = vld [vmem:[%s2709 + $0x8] sm:$0xf]
      %v2713 = vld [vmem:[%s2709 + $0xc] sm:$0xf]
      %v2714 = vld [vmem:[%s2709 + $0x10] sm:$0xf]
      %v2715 = vld [vmem:[%s2709 + $0x14] sm:$0xf]
      %v2716 = vld [vmem:[%s2709 + $0x18] sm:$0xf]
      %v2717 = vld [vmem:[%s2709 + $0x1c] sm:$0xf]
      %v2718 = vld [vmem:[%s2709 + $0x20] sm:$0xf]
      %v2719 = vld [vmem:[%s2709 + $0x24] sm:$0xf]
      %v2720 = vld [vmem:[%s2709 + $0x28] sm:$0xf]
      %v2721 = vld [vmem:[%s2709 + $0x2c] sm:$0xf]
      %v2722 = vld [vmem:[%s2709 + $0x30] sm:$0xf]
      %v2723 = vld [vmem:[%s2709 + $0x34] sm:$0xf]
      %v2724 = vld [vmem:[%s2709 + $0x38] sm:$0xf]
      %v2725 = vld [vmem:[%s2709 + $0x3c] sm:$0xf]
      %v2726 = vld [vmem:[%s2709 + $0x40] sm:$0xf]
      %v2727 = vld [vmem:[%s2709 + $0x44] sm:$0xf]
      %v2728 = vld [vmem:[%s2709 + $0x48] sm:$0xf]
      %v2729 = vld [vmem:[%s2709 + $0x4c] sm:$0xf]
      %v2730 = vld [vmem:[%s2709 + $0x50] sm:$0xf]
      %v2731 = vld [vmem:[%s2709 + $0x54] sm:$0xf]
      %v2732 = vld [vmem:[%s2709 + $0x58] sm:$0xf]
      %v2733 = vld [vmem:[%s2709 + $0x5c] sm:$0xf]
      %v2734 = vld [vmem:[%s2709 + $0x60] sm:$0xf]
      %v2735 = vld [vmem:[%s2709 + $0x64] sm:$0xf]
      %v2736 = vld [vmem:[%s2709 + $0x68] sm:$0xf]
      %v2737 = vld [vmem:[%s2709 + $0x6c] sm:$0xf]
      %v2738 = vld [vmem:[%s2709 + $0x70] sm:$0xf]
      %v2739 = vld [vmem:[%s2709 + $0x74] sm:$0xf]
      %v2740 = vld [vmem:[%s2709 + $0x78] sm:$0xf]
      %v2741 = vld [vmem:[%s2709 + $0x7c] sm:$0xf]
      %v2774 = vunpack.c.l.b16 %v2710
      %v2775 = vunpack.c.l.b16 %v2711
      %v2776 = vunpack.c.l.b16 %v2712
      %v2777 = vunpack.c.l.b16 %v2713
      %v2778 = vunpack.c.l.b16 %v2714
      %v2779 = vunpack.c.l.b16 %v2715
      %v2780 = vunpack.c.l.b16 %v2716
      %v2781 = vunpack.c.l.b16 %v2717
      %v2782 = vunpack.c.l.b16 %v2718
      %v2783 = vunpack.c.l.b16 %v2719
      %v2784 = vunpack.c.l.b16 %v2720
      %v2785 = vunpack.c.l.b16 %v2721
      %v2786 = vunpack.c.l.b16 %v2722
      %v2787 = vunpack.c.l.b16 %v2723
      %v2788 = vunpack.c.l.b16 %v2724
      %v2789 = vunpack.c.l.b16 %v2725
      %v2790 = vunpack.c.l.b16 %v2726
      %v2791 = vunpack.c.l.b16 %v2727
      %v2792 = vunpack.c.l.b16 %v2728
      %v2793 = vunpack.c.l.b16 %v2729
      %v2794 = vunpack.c.l.b16 %v2730
      %v2795 = vunpack.c.l.b16 %v2731
      %v2796 = vunpack.c.l.b16 %v2732
      %v2797 = vunpack.c.l.b16 %v2733
      %v2798 = vunpack.c.l.b16 %v2734
      %v2799 = vunpack.c.l.b16 %v2735
      %v2800 = vunpack.c.l.b16 %v2736
      %v2801 = vunpack.c.l.b16 %v2737
      %v2802 = vunpack.c.l.b16 %v2738
      %v2803 = vunpack.c.l.b16 %v2739
      %v2804 = vunpack.c.l.b16 %v2740
      %v2805 = vunpack.c.l.b16 %v2741
      %v2806 = vpack.c.b16 %v2775, %v2774
      %v2807 = vpack.c.b16 %v2777, %v2776
      %v2808 = vpack.c.b16 %v2779, %v2778
      %v2809 = vpack.c.b16 %v2781, %v2780
      %v2810 = vpack.c.b16 %v2783, %v2782
      %v2811 = vpack.c.b16 %v2785, %v2784
      %v2812 = vpack.c.b16 %v2787, %v2786
      %v2813 = vpack.c.b16 %v2789, %v2788
      %v2814 = vpack.c.b16 %v2791, %v2790
      %v2815 = vpack.c.b16 %v2793, %v2792
      %v2816 = vpack.c.b16 %v2795, %v2794
      %v2817 = vpack.c.b16 %v2797, %v2796
      %v2818 = vpack.c.b16 %v2799, %v2798
      %v2819 = vpack.c.b16 %v2801, %v2800
      %v2820 = vpack.c.b16 %v2803, %v2802
      %v2821 = vpack.c.b16 %v2805, %v2804
      %2838 = vmatpush.bf16.msra.mxu0 %v2813
      %2839 = vmatpush.bf16.msra.mxu0 %v2812
      %2840 = vmatpush.bf16.msra.mxu0 %v2811
      %2841 = vmatpush.bf16.msra.mxu0 %v2810
      %2842 = vmatpush.bf16.msra.mxu0 %v2809
      %2843 = vmatpush.bf16.msra.mxu0 %v2808
      %2844 = vmatpush.bf16.msra.mxu0 %v2807
      %2845 = vmatpush.bf16.msra.mxu0 %v2806
      %2846 = vmatmul.bf16.gmra.mxu0 %v2707
      %v2847 = vpop.f32.mrf.mxu0
      %v2848 = vadd.f32 0.0, %v2847
      %v2849 = vpop.f32.mrf.mxu0
      %2850 = vdwg.mxu0
      %2851 = vmatpush.bf16.msra.mxu0 %v2821
      %2852 = vmatpush.bf16.msra.mxu0 %v2820
      %2853 = vmatpush.bf16.msra.mxu0 %v2819
      %2854 = vmatpush.bf16.msra.mxu0 %v2818
      %2855 = vmatpush.bf16.msra.mxu0 %v2817
      %2856 = vmatpush.bf16.msra.mxu0 %v2816
      %2857 = vmatpush.bf16.msra.mxu0 %v2815
      %2858 = vmatpush.bf16.msra.mxu0 %v2814
      %2859 = vmatmul.bf16.gmra.mxu0 %v2708
      %v2860 = vpop.f32.mrf.mxu0
      %v2861 = vadd.f32 %v2848, %v2860
      %v2862 = vpop.f32.mrf.mxu0
      %2863 = vdwg.mxu0
      %v2864 = vadd.f32 %v2706, %v2861
      %s2865 = scalar_lea.vmem %s3, 1152
      %v2866 = vld [vmem:[%s2865] sm:$0xf]
      %v2867 = vld [vmem:[%s2865 + $0x4] sm:$0xf]
      %v2868 = vld [vmem:[%s2865 + $0x8] sm:$0xf]
      %v2869 = vld [vmem:[%s2865 + $0xc] sm:$0xf]
      %v2870 = vld [vmem:[%s2865 + $0x10] sm:$0xf]
      %v2871 = vld [vmem:[%s2865 + $0x14] sm:$0xf]
      %v2872 = vld [vmem:[%s2865 + $0x18] sm:$0xf]
      %v2873 = vld [vmem:[%s2865 + $0x1c] sm:$0xf]
      %v2874 = vld [vmem:[%s2865 + $0x20] sm:$0xf]
      %v2875 = vld [vmem:[%s2865 + $0x24] sm:$0xf]
      %v2876 = vld [vmem:[%s2865 + $0x28] sm:$0xf]
      %v2877 = vld [vmem:[%s2865 + $0x2c] sm:$0xf]
      %v2878 = vld [vmem:[%s2865 + $0x30] sm:$0xf]
      %v2879 = vld [vmem:[%s2865 + $0x34] sm:$0xf]
      %v2880 = vld [vmem:[%s2865 + $0x38] sm:$0xf]
      %v2881 = vld [vmem:[%s2865 + $0x3c] sm:$0xf]
      %v2882 = vld [vmem:[%s2865 + $0x40] sm:$0xf]
      %v2883 = vld [vmem:[%s2865 + $0x44] sm:$0xf]
      %v2884 = vld [vmem:[%s2865 + $0x48] sm:$0xf]
      %v2885 = vld [vmem:[%s2865 + $0x4c] sm:$0xf]
      %v2886 = vld [vmem:[%s2865 + $0x50] sm:$0xf]
      %v2887 = vld [vmem:[%s2865 + $0x54] sm:$0xf]
      %v2888 = vld [vmem:[%s2865 + $0x58] sm:$0xf]
      %v2889 = vld [vmem:[%s2865 + $0x5c] sm:$0xf]
      %v2890 = vld [vmem:[%s2865 + $0x60] sm:$0xf]
      %v2891 = vld [vmem:[%s2865 + $0x64] sm:$0xf]
      %v2892 = vld [vmem:[%s2865 + $0x68] sm:$0xf]
      %v2893 = vld [vmem:[%s2865 + $0x6c] sm:$0xf]
      %v2894 = vld [vmem:[%s2865 + $0x70] sm:$0xf]
      %v2895 = vld [vmem:[%s2865 + $0x74] sm:$0xf]
      %v2896 = vld [vmem:[%s2865 + $0x78] sm:$0xf]
      %v2897 = vld [vmem:[%s2865 + $0x7c] sm:$0xf]
      %v2899 = vshrl.u32 %v2707, 16
      %v2902 = vshrl.u32 %v2708, 16
      %v2938 = vunpack.c.l.b16 %v2866
      %v2939 = vunpack.c.l.b16 %v2867
      %v2940 = vunpack.c.l.b16 %v2868
      %v2941 = vunpack.c.l.b16 %v2869
      %v2942 = vunpack.c.l.b16 %v2870
      %v2943 = vunpack.c.l.b16 %v2871
      %v2944 = vunpack.c.l.b16 %v2872
      %v2945 = vunpack.c.l.b16 %v2873
      %v2946 = vunpack.c.l.b16 %v2874
      %v2947 = vunpack.c.l.b16 %v2875
      %v2948 = vunpack.c.l.b16 %v2876
      %v2949 = vunpack.c.l.b16 %v2877
      %v2950 = vunpack.c.l.b16 %v2878
      %v2951 = vunpack.c.l.b16 %v2879
      %v2952 = vunpack.c.l.b16 %v2880
      %v2953 = vunpack.c.l.b16 %v2881
      %v2954 = vunpack.c.l.b16 %v2882
      %v2955 = vunpack.c.l.b16 %v2883
      %v2956 = vunpack.c.l.b16 %v2884
      %v2957 = vunpack.c.l.b16 %v2885
      %v2958 = vunpack.c.l.b16 %v2886
      %v2959 = vunpack.c.l.b16 %v2887
      %v2960 = vunpack.c.l.b16 %v2888
      %v2961 = vunpack.c.l.b16 %v2889
      %v2962 = vunpack.c.l.b16 %v2890
      %v2963 = vunpack.c.l.b16 %v2891
      %v2964 = vunpack.c.l.b16 %v2892
      %v2965 = vunpack.c.l.b16 %v2893
      %v2966 = vunpack.c.l.b16 %v2894
      %v2967 = vunpack.c.l.b16 %v2895
      %v2968 = vunpack.c.l.b16 %v2896
      %v2969 = vunpack.c.l.b16 %v2897
      %v2970 = vpack.c.b16 %v2939, %v2938
      %v2971 = vpack.c.b16 %v2941, %v2940
      %v2972 = vpack.c.b16 %v2943, %v2942
      %v2973 = vpack.c.b16 %v2945, %v2944
      %v2974 = vpack.c.b16 %v2947, %v2946
      %v2975 = vpack.c.b16 %v2949, %v2948
      %v2976 = vpack.c.b16 %v2951, %v2950
      %v2977 = vpack.c.b16 %v2953, %v2952
      %v2978 = vpack.c.b16 %v2955, %v2954
      %v2979 = vpack.c.b16 %v2957, %v2956
      %v2980 = vpack.c.b16 %v2959, %v2958
      %v2981 = vpack.c.b16 %v2961, %v2960
      %v2982 = vpack.c.b16 %v2963, %v2962
      %v2983 = vpack.c.b16 %v2965, %v2964
      %v2984 = vpack.c.b16 %v2967, %v2966
      %v2985 = vpack.c.b16 %v2969, %v2968
      %3002 = vmatpush.bf16.msra.mxu0 %v2977
      %3003 = vmatpush.bf16.msra.mxu0 %v2976
      %3004 = vmatpush.bf16.msra.mxu0 %v2975
      %3005 = vmatpush.bf16.msra.mxu0 %v2974
      %3006 = vmatpush.bf16.msra.mxu0 %v2973
      %3007 = vmatpush.bf16.msra.mxu0 %v2972
      %3008 = vmatpush.bf16.msra.mxu0 %v2971
      %3009 = vmatpush.bf16.msra.mxu0 %v2970
      %3010 = vmatmul.bf16.gmra.mxu0 %v2899
      %v3011 = vpop.f32.mrf.mxu0
      %v3012 = vadd.f32 0.0, %v3011
      %v3013 = vpop.f32.mrf.mxu0
      %3014 = vdwg.mxu0
      %3015 = vmatpush.bf16.msra.mxu0 %v2985
      %3016 = vmatpush.bf16.msra.mxu0 %v2984
      %3017 = vmatpush.bf16.msra.mxu0 %v2983
      %3018 = vmatpush.bf16.msra.mxu0 %v2982
      %3019 = vmatpush.bf16.msra.mxu0 %v2981
      %3020 = vmatpush.bf16.msra.mxu0 %v2980
      %3021 = vmatpush.bf16.msra.mxu0 %v2979
      %3022 = vmatpush.bf16.msra.mxu0 %v2978
      %3023 = vmatmul.bf16.gmra.mxu0 %v2902
      %v3024 = vpop.f32.mrf.mxu0
      %v3025 = vadd.f32 %v3012, %v3024
      %v3026 = vpop.f32.mrf.mxu0
      %3027 = vdwg.mxu0
      %v3028 = vadd.f32 %v2864, %v3025
      %s3029 = scalar_lea.vmem %s3, 1280
      %v3030 = vld [vmem:[%s3029] sm:$0xf]
      %v3031 = vld [vmem:[%s3029 + $0x4] sm:$0xf]
      %v3032 = vld [vmem:[%s3029 + $0x8] sm:$0xf]
      %v3033 = vld [vmem:[%s3029 + $0xc] sm:$0xf]
      %v3034 = vld [vmem:[%s3029 + $0x10] sm:$0xf]
      %v3035 = vld [vmem:[%s3029 + $0x14] sm:$0xf]
      %v3036 = vld [vmem:[%s3029 + $0x18] sm:$0xf]
      %v3037 = vld [vmem:[%s3029 + $0x1c] sm:$0xf]
      %v3038 = vld [vmem:[%s3029 + $0x20] sm:$0xf]
      %v3039 = vld [vmem:[%s3029 + $0x24] sm:$0xf]
      %v3040 = vld [vmem:[%s3029 + $0x28] sm:$0xf]
      %v3041 = vld [vmem:[%s3029 + $0x2c] sm:$0xf]
      %v3042 = vld [vmem:[%s3029 + $0x30] sm:$0xf]
      %v3043 = vld [vmem:[%s3029 + $0x34] sm:$0xf]
      %v3044 = vld [vmem:[%s3029 + $0x38] sm:$0xf]
      %v3045 = vld [vmem:[%s3029 + $0x3c] sm:$0xf]
      %v3046 = vld [vmem:[%s3029 + $0x40] sm:$0xf]
      %v3047 = vld [vmem:[%s3029 + $0x44] sm:$0xf]
      %v3048 = vld [vmem:[%s3029 + $0x48] sm:$0xf]
      %v3049 = vld [vmem:[%s3029 + $0x4c] sm:$0xf]
      %v3050 = vld [vmem:[%s3029 + $0x50] sm:$0xf]
      %v3051 = vld [vmem:[%s3029 + $0x54] sm:$0xf]
      %v3052 = vld [vmem:[%s3029 + $0x58] sm:$0xf]
      %v3053 = vld [vmem:[%s3029 + $0x5c] sm:$0xf]
      %v3054 = vld [vmem:[%s3029 + $0x60] sm:$0xf]
      %v3055 = vld [vmem:[%s3029 + $0x64] sm:$0xf]
      %v3056 = vld [vmem:[%s3029 + $0x68] sm:$0xf]
      %v3057 = vld [vmem:[%s3029 + $0x6c] sm:$0xf]
      %v3058 = vld [vmem:[%s3029 + $0x70] sm:$0xf]
      %v3059 = vld [vmem:[%s3029 + $0x74] sm:$0xf]
      %v3060 = vld [vmem:[%s3029 + $0x78] sm:$0xf]
      %v3061 = vld [vmem:[%s3029 + $0x7c] sm:$0xf]
      %v3064 = vrot.slane %v2707, 1
      %v3065 = vrot.slane %v2708, 1
      %v3100 = vunpack.c.l.b16 %v3030
      %v3101 = vunpack.c.l.b16 %v3031
      %v3102 = vunpack.c.l.b16 %v3032
      %v3103 = vunpack.c.l.b16 %v3033
      %v3104 = vunpack.c.l.b16 %v3034
      %v3105 = vunpack.c.l.b16 %v3035
      %v3106 = vunpack.c.l.b16 %v3036
      %v3107 = vunpack.c.l.b16 %v3037
      %v3108 = vunpack.c.l.b16 %v3038
      %v3109 = vunpack.c.l.b16 %v3039
      %v3110 = vunpack.c.l.b16 %v3040
      %v3111 = vunpack.c.l.b16 %v3041
      %v3112 = vunpack.c.l.b16 %v3042
      %v3113 = vunpack.c.l.b16 %v3043
      %v3114 = vunpack.c.l.b16 %v3044
      %v3115 = vunpack.c.l.b16 %v3045
      %v3116 = vunpack.c.l.b16 %v3046
      %v3117 = vunpack.c.l.b16 %v3047
      %v3118 = vunpack.c.l.b16 %v3048
      %v3119 = vunpack.c.l.b16 %v3049
      %v3120 = vunpack.c.l.b16 %v3050
      %v3121 = vunpack.c.l.b16 %v3051
      %v3122 = vunpack.c.l.b16 %v3052
      %v3123 = vunpack.c.l.b16 %v3053
      %v3124 = vunpack.c.l.b16 %v3054
      %v3125 = vunpack.c.l.b16 %v3055
      %v3126 = vunpack.c.l.b16 %v3056
      %v3127 = vunpack.c.l.b16 %v3057
      %v3128 = vunpack.c.l.b16 %v3058
      %v3129 = vunpack.c.l.b16 %v3059
      %v3130 = vunpack.c.l.b16 %v3060
      %v3131 = vunpack.c.l.b16 %v3061
      %v3132 = vpack.c.b16 %v3101, %v3100
      %v3133 = vpack.c.b16 %v3103, %v3102
      %v3134 = vpack.c.b16 %v3105, %v3104
      %v3135 = vpack.c.b16 %v3107, %v3106
      %v3136 = vpack.c.b16 %v3109, %v3108
      %v3137 = vpack.c.b16 %v3111, %v3110
      %v3138 = vpack.c.b16 %v3113, %v3112
      %v3139 = vpack.c.b16 %v3115, %v3114
      %v3140 = vpack.c.b16 %v3117, %v3116
      %v3141 = vpack.c.b16 %v3119, %v3118
      %v3142 = vpack.c.b16 %v3121, %v3120
      %v3143 = vpack.c.b16 %v3123, %v3122
      %v3144 = vpack.c.b16 %v3125, %v3124
      %v3145 = vpack.c.b16 %v3127, %v3126
      %v3146 = vpack.c.b16 %v3129, %v3128
      %v3147 = vpack.c.b16 %v3131, %v3130
      %3164 = vmatpush.bf16.msra.mxu0 %v3139
      %3165 = vmatpush.bf16.msra.mxu0 %v3138
      %3166 = vmatpush.bf16.msra.mxu0 %v3137
      %3167 = vmatpush.bf16.msra.mxu0 %v3136
      %3168 = vmatpush.bf16.msra.mxu0 %v3135
      %3169 = vmatpush.bf16.msra.mxu0 %v3134
      %3170 = vmatpush.bf16.msra.mxu0 %v3133
      %3171 = vmatpush.bf16.msra.mxu0 %v3132
      %3172 = vmatmul.bf16.gmra.mxu0 %v3064
      %v3173 = vpop.f32.mrf.mxu0
      %v3174 = vadd.f32 0.0, %v3173
      %v3175 = vpop.f32.mrf.mxu0
      %3176 = vdwg.mxu0
      %3177 = vmatpush.bf16.msra.mxu0 %v3147
      %3178 = vmatpush.bf16.msra.mxu0 %v3146
      %3179 = vmatpush.bf16.msra.mxu0 %v3145
      %3180 = vmatpush.bf16.msra.mxu0 %v3144
      %3181 = vmatpush.bf16.msra.mxu0 %v3143
      %3182 = vmatpush.bf16.msra.mxu0 %v3142
      %3183 = vmatpush.bf16.msra.mxu0 %v3141
      %3184 = vmatpush.bf16.msra.mxu0 %v3140
      %3185 = vmatmul.bf16.gmra.mxu0 %v3065
      %v3186 = vpop.f32.mrf.mxu0
      %v3187 = vadd.f32 %v3174, %v3186
      %v3188 = vpop.f32.mrf.mxu0
      %3189 = vdwg.mxu0
      %v3190 = vadd.f32 %v3028, %v3187
      %s3191 = scalar_lea.vmem %s3, 1408
      %v3192 = vld [vmem:[%s3191] sm:$0xf]
      %v3193 = vld [vmem:[%s3191 + $0x4] sm:$0xf]
      %v3194 = vld [vmem:[%s3191 + $0x8] sm:$0xf]
      %v3195 = vld [vmem:[%s3191 + $0xc] sm:$0xf]
      %v3196 = vld [vmem:[%s3191 + $0x10] sm:$0xf]
      %v3197 = vld [vmem:[%s3191 + $0x14] sm:$0xf]
      %v3198 = vld [vmem:[%s3191 + $0x18] sm:$0xf]
      %v3199 = vld [vmem:[%s3191 + $0x1c] sm:$0xf]
      %v3200 = vld [vmem:[%s3191 + $0x20] sm:$0xf]
      %v3201 = vld [vmem:[%s3191 + $0x24] sm:$0xf]
      %v3202 = vld [vmem:[%s3191 + $0x28] sm:$0xf]
      %v3203 = vld [vmem:[%s3191 + $0x2c] sm:$0xf]
      %v3204 = vld [vmem:[%s3191 + $0x30] sm:$0xf]
      %v3205 = vld [vmem:[%s3191 + $0x34] sm:$0xf]
      %v3206 = vld [vmem:[%s3191 + $0x38] sm:$0xf]
      %v3207 = vld [vmem:[%s3191 + $0x3c] sm:$0xf]
      %v3208 = vld [vmem:[%s3191 + $0x40] sm:$0xf]
      %v3209 = vld [vmem:[%s3191 + $0x44] sm:$0xf]
      %v3210 = vld [vmem:[%s3191 + $0x48] sm:$0xf]
      %v3211 = vld [vmem:[%s3191 + $0x4c] sm:$0xf]
      %v3212 = vld [vmem:[%s3191 + $0x50] sm:$0xf]
      %v3213 = vld [vmem:[%s3191 + $0x54] sm:$0xf]
      %v3214 = vld [vmem:[%s3191 + $0x58] sm:$0xf]
      %v3215 = vld [vmem:[%s3191 + $0x5c] sm:$0xf]
      %v3216 = vld [vmem:[%s3191 + $0x60] sm:$0xf]
      %v3217 = vld [vmem:[%s3191 + $0x64] sm:$0xf]
      %v3218 = vld [vmem:[%s3191 + $0x68] sm:$0xf]
      %v3219 = vld [vmem:[%s3191 + $0x6c] sm:$0xf]
      %v3220 = vld [vmem:[%s3191 + $0x70] sm:$0xf]
      %v3221 = vld [vmem:[%s3191 + $0x74] sm:$0xf]
      %v3222 = vld [vmem:[%s3191 + $0x78] sm:$0xf]
      %v3223 = vld [vmem:[%s3191 + $0x7c] sm:$0xf]
      %v3224 = vrot.slane %v2899, 1
      %v3225 = vrot.slane %v2902, 1
      %v3260 = vunpack.c.l.b16 %v3192
      %v3261 = vunpack.c.l.b16 %v3193
      %v3262 = vunpack.c.l.b16 %v3194
      %v3263 = vunpack.c.l.b16 %v3195
      %v3264 = vunpack.c.l.b16 %v3196
      %v3265 = vunpack.c.l.b16 %v3197
      %v3266 = vunpack.c.l.b16 %v3198
      %v3267 = vunpack.c.l.b16 %v3199
      %v3268 = vunpack.c.l.b16 %v3200
      %v3269 = vunpack.c.l.b16 %v3201
      %v3270 = vunpack.c.l.b16 %v3202
      %v3271 = vunpack.c.l.b16 %v3203
      %v3272 = vunpack.c.l.b16 %v3204
      %v3273 = vunpack.c.l.b16 %v3205
      %v3274 = vunpack.c.l.b16 %v3206
      %v3275 = vunpack.c.l.b16 %v3207
      %v3276 = vunpack.c.l.b16 %v3208
      %v3277 = vunpack.c.l.b16 %v3209
      %v3278 = vunpack.c.l.b16 %v3210
      %v3279 = vunpack.c.l.b16 %v3211
      %v3280 = vunpack.c.l.b16 %v3212
      %v3281 = vunpack.c.l.b16 %v3213
      %v3282 = vunpack.c.l.b16 %v3214
      %v3283 = vunpack.c.l.b16 %v3215
      %v3284 = vunpack.c.l.b16 %v3216
      %v3285 = vunpack.c.l.b16 %v3217
      %v3286 = vunpack.c.l.b16 %v3218
      %v3287 = vunpack.c.l.b16 %v3219
      %v3288 = vunpack.c.l.b16 %v3220
      %v3289 = vunpack.c.l.b16 %v3221
      %v3290 = vunpack.c.l.b16 %v3222
      %v3291 = vunpack.c.l.b16 %v3223
      %v3292 = vpack.c.b16 %v3261, %v3260
      %v3293 = vpack.c.b16 %v3263, %v3262
      %v3294 = vpack.c.b16 %v3265, %v3264
      %v3295 = vpack.c.b16 %v3267, %v3266
      %v3296 = vpack.c.b16 %v3269, %v3268
      %v3297 = vpack.c.b16 %v3271, %v3270
      %v3298 = vpack.c.b16 %v3273, %v3272
      %v3299 = vpack.c.b16 %v3275, %v3274
      %v3300 = vpack.c.b16 %v3277, %v3276
      %v3301 = vpack.c.b16 %v3279, %v3278
      %v3302 = vpack.c.b16 %v3281, %v3280
      %v3303 = vpack.c.b16 %v3283, %v3282
      %v3304 = vpack.c.b16 %v3285, %v3284
      %v3305 = vpack.c.b16 %v3287, %v3286
      %v3306 = vpack.c.b16 %v3289, %v3288
      %v3307 = vpack.c.b16 %v3291, %v3290
      %3324 = vmatpush.bf16.msra.mxu0 %v3299
      %3325 = vmatpush.bf16.msra.mxu0 %v3298
      %3326 = vmatpush.bf16.msra.mxu0 %v3297
      %3327 = vmatpush.bf16.msra.mxu0 %v3296
      %3328 = vmatpush.bf16.msra.mxu0 %v3295
      %3329 = vmatpush.bf16.msra.mxu0 %v3294
      %3330 = vmatpush.bf16.msra.mxu0 %v3293
      %3331 = vmatpush.bf16.msra.mxu0 %v3292
      %3332 = vmatmul.bf16.gmra.mxu0 %v3224
      %v3333 = vpop.f32.mrf.mxu0
      %v3334 = vadd.f32 0.0, %v3333
      %v3335 = vpop.f32.mrf.mxu0
      %3336 = vdwg.mxu0
      %3337 = vmatpush.bf16.msra.mxu0 %v3307
      %3338 = vmatpush.bf16.msra.mxu0 %v3306
      %3339 = vmatpush.bf16.msra.mxu0 %v3305
      %3340 = vmatpush.bf16.msra.mxu0 %v3304
      %3341 = vmatpush.bf16.msra.mxu0 %v3303
      %3342 = vmatpush.bf16.msra.mxu0 %v3302
      %3343 = vmatpush.bf16.msra.mxu0 %v3301
      %3344 = vmatpush.bf16.msra.mxu0 %v3300
      %3345 = vmatmul.bf16.gmra.mxu0 %v3225
      %v3346 = vpop.f32.mrf.mxu0
      %v3347 = vadd.f32 %v3334, %v3346
      %v3348 = vpop.f32.mrf.mxu0
      %3349 = vdwg.mxu0
      %v3350 = vadd.f32 %v3190, %v3347
      %s3351 = scalar_lea.vmem %s3, 1536
      %v3352 = vld [vmem:[%s3351] sm:$0xf]
      %v3353 = vld [vmem:[%s3351 + $0x4] sm:$0xf]
      %v3354 = vld [vmem:[%s3351 + $0x8] sm:$0xf]
      %v3355 = vld [vmem:[%s3351 + $0xc] sm:$0xf]
      %v3356 = vld [vmem:[%s3351 + $0x10] sm:$0xf]
      %v3357 = vld [vmem:[%s3351 + $0x14] sm:$0xf]
      %v3358 = vld [vmem:[%s3351 + $0x18] sm:$0xf]
      %v3359 = vld [vmem:[%s3351 + $0x1c] sm:$0xf]
      %v3360 = vld [vmem:[%s3351 + $0x20] sm:$0xf]
      %v3361 = vld [vmem:[%s3351 + $0x24] sm:$0xf]
      %v3362 = vld [vmem:[%s3351 + $0x28] sm:$0xf]
      %v3363 = vld [vmem:[%s3351 + $0x2c] sm:$0xf]
      %v3364 = vld [vmem:[%s3351 + $0x30] sm:$0xf]
      %v3365 = vld [vmem:[%s3351 + $0x34] sm:$0xf]
      %v3366 = vld [vmem:[%s3351 + $0x38] sm:$0xf]
      %v3367 = vld [vmem:[%s3351 + $0x3c] sm:$0xf]
      %v3368 = vld [vmem:[%s3351 + $0x40] sm:$0xf]
      %v3369 = vld [vmem:[%s3351 + $0x44] sm:$0xf]
      %v3370 = vld [vmem:[%s3351 + $0x48] sm:$0xf]
      %v3371 = vld [vmem:[%s3351 + $0x4c] sm:$0xf]
      %v3372 = vld [vmem:[%s3351 + $0x50] sm:$0xf]
      %v3373 = vld [vmem:[%s3351 + $0x54] sm:$0xf]
      %v3374 = vld [vmem:[%s3351 + $0x58] sm:$0xf]
      %v3375 = vld [vmem:[%s3351 + $0x5c] sm:$0xf]
      %v3376 = vld [vmem:[%s3351 + $0x60] sm:$0xf]
      %v3377 = vld [vmem:[%s3351 + $0x64] sm:$0xf]
      %v3378 = vld [vmem:[%s3351 + $0x68] sm:$0xf]
      %v3379 = vld [vmem:[%s3351 + $0x6c] sm:$0xf]
      %v3380 = vld [vmem:[%s3351 + $0x70] sm:$0xf]
      %v3381 = vld [vmem:[%s3351 + $0x74] sm:$0xf]
      %v3382 = vld [vmem:[%s3351 + $0x78] sm:$0xf]
      %v3383 = vld [vmem:[%s3351 + $0x7c] sm:$0xf]
      %v3384 = vrot.slane %v2707, 2
      %v3385 = vrot.slane %v2708, 2
      %v3420 = vunpack.c.l.b16 %v3352
      %v3421 = vunpack.c.l.b16 %v3353
      %v3422 = vunpack.c.l.b16 %v3354
      %v3423 = vunpack.c.l.b16 %v3355
      %v3424 = vunpack.c.l.b16 %v3356
      %v3425 = vunpack.c.l.b16 %v3357
      %v3426 = vunpack.c.l.b16 %v3358
      %v3427 = vunpack.c.l.b16 %v3359
      %v3428 = vunpack.c.l.b16 %v3360
      %v3429 = vunpack.c.l.b16 %v3361
      %v3430 = vunpack.c.l.b16 %v3362
      %v3431 = vunpack.c.l.b16 %v3363
      %v3432 = vunpack.c.l.b16 %v3364
      %v3433 = vunpack.c.l.b16 %v3365
      %v3434 = vunpack.c.l.b16 %v3366
      %v3435 = vunpack.c.l.b16 %v3367
      %v3436 = vunpack.c.l.b16 %v3368
      %v3437 = vunpack.c.l.b16 %v3369
      %v3438 = vunpack.c.l.b16 %v3370
      %v3439 = vunpack.c.l.b16 %v3371
      %v3440 = vunpack.c.l.b16 %v3372
      %v3441 = vunpack.c.l.b16 %v3373
      %v3442 = vunpack.c.l.b16 %v3374
      %v3443 = vunpack.c.l.b16 %v3375
      %v3444 = vunpack.c.l.b16 %v3376
      %v3445 = vunpack.c.l.b16 %v3377
      %v3446 = vunpack.c.l.b16 %v3378
      %v3447 = vunpack.c.l.b16 %v3379
      %v3448 = vunpack.c.l.b16 %v3380
      %v3449 = vunpack.c.l.b16 %v3381
      %v3450 = vunpack.c.l.b16 %v3382
      %v3451 = vunpack.c.l.b16 %v3383
      %v3452 = vpack.c.b16 %v3421, %v3420
      %v3453 = vpack.c.b16 %v3423, %v3422
      %v3454 = vpack.c.b16 %v3425, %v3424
      %v3455 = vpack.c.b16 %v3427, %v3426
      %v3456 = vpack.c.b16 %v3429, %v3428
      %v3457 = vpack.c.b16 %v3431, %v3430
      %v3458 = vpack.c.b16 %v3433, %v3432
      %v3459 = vpack.c.b16 %v3435, %v3434
      %v3460 = vpack.c.b16 %v3437, %v3436
      %v3461 = vpack.c.b16 %v3439, %v3438
      %v3462 = vpack.c.b16 %v3441, %v3440
      %v3463 = vpack.c.b16 %v3443, %v3442
      %v3464 = vpack.c.b16 %v3445, %v3444
      %v3465 = vpack.c.b16 %v3447, %v3446
      %v3466 = vpack.c.b16 %v3449, %v3448
      %v3467 = vpack.c.b16 %v3451, %v3450
      %3484 = vmatpush.bf16.msra.mxu0 %v3459
      %3485 = vmatpush.bf16.msra.mxu0 %v3458
      %3486 = vmatpush.bf16.msra.mxu0 %v3457
      %3487 = vmatpush.bf16.msra.mxu0 %v3456
      %3488 = vmatpush.bf16.msra.mxu0 %v3455
      %3489 = vmatpush.bf16.msra.mxu0 %v3454
      %3490 = vmatpush.bf16.msra.mxu0 %v3453
      %3491 = vmatpush.bf16.msra.mxu0 %v3452
      %3492 = vmatmul.bf16.gmra.mxu0 %v3384
      %v3493 = vpop.f32.mrf.mxu0
      %v3494 = vadd.f32 0.0, %v3493
      %v3495 = vpop.f32.mrf.mxu0
      %3496 = vdwg.mxu0
      %3497 = vmatpush.bf16.msra.mxu0 %v3467
      %3498 = vmatpush.bf16.msra.mxu0 %v3466
      %3499 = vmatpush.bf16.msra.mxu0 %v3465
      %3500 = vmatpush.bf16.msra.mxu0 %v3464
      %3501 = vmatpush.bf16.msra.mxu0 %v3463
      %3502 = vmatpush.bf16.msra.mxu0 %v3462
      %3503 = vmatpush.bf16.msra.mxu0 %v3461
      %3504 = vmatpush.bf16.msra.mxu0 %v3460
      %3505 = vmatmul.bf16.gmra.mxu0 %v3385
      %v3506 = vpop.f32.mrf.mxu0
      %v3507 = vadd.f32 %v3494, %v3506
      %v3508 = vpop.f32.mrf.mxu0
      %3509 = vdwg.mxu0
      %v3510 = vadd.f32 %v3350, %v3507
      %s3511 = scalar_lea.vmem %s3, 1664
      %v3512 = vld [vmem:[%s3511] sm:$0xf]
      %v3513 = vld [vmem:[%s3511 + $0x4] sm:$0xf]
      %v3514 = vld [vmem:[%s3511 + $0x8] sm:$0xf]
      %v3515 = vld [vmem:[%s3511 + $0xc] sm:$0xf]
      %v3516 = vld [vmem:[%s3511 + $0x10] sm:$0xf]
      %v3517 = vld [vmem:[%s3511 + $0x14] sm:$0xf]
      %v3518 = vld [vmem:[%s3511 + $0x18] sm:$0xf]
      %v3519 = vld [vmem:[%s3511 + $0x1c] sm:$0xf]
      %v3520 = vld [vmem:[%s3511 + $0x20] sm:$0xf]
      %v3521 = vld [vmem:[%s3511 + $0x24] sm:$0xf]
      %v3522 = vld [vmem:[%s3511 + $0x28] sm:$0xf]
      %v3523 = vld [vmem:[%s3511 + $0x2c] sm:$0xf]
      %v3524 = vld [vmem:[%s3511 + $0x30] sm:$0xf]
      %v3525 = vld [vmem:[%s3511 + $0x34] sm:$0xf]
      %v3526 = vld [vmem:[%s3511 + $0x38] sm:$0xf]
      %v3527 = vld [vmem:[%s3511 + $0x3c] sm:$0xf]
      %v3528 = vld [vmem:[%s3511 + $0x40] sm:$0xf]
      %v3529 = vld [vmem:[%s3511 + $0x44] sm:$0xf]
      %v3530 = vld [vmem:[%s3511 + $0x48] sm:$0xf]
      %v3531 = vld [vmem:[%s3511 + $0x4c] sm:$0xf]
      %v3532 = vld [vmem:[%s3511 + $0x50] sm:$0xf]
      %v3533 = vld [vmem:[%s3511 + $0x54] sm:$0xf]
      %v3534 = vld [vmem:[%s3511 + $0x58] sm:$0xf]
      %v3535 = vld [vmem:[%s3511 + $0x5c] sm:$0xf]
      %v3536 = vld [vmem:[%s3511 + $0x60] sm:$0xf]
      %v3537 = vld [vmem:[%s3511 + $0x64] sm:$0xf]
      %v3538 = vld [vmem:[%s3511 + $0x68] sm:$0xf]
      %v3539 = vld [vmem:[%s3511 + $0x6c] sm:$0xf]
      %v3540 = vld [vmem:[%s3511 + $0x70] sm:$0xf]
      %v3541 = vld [vmem:[%s3511 + $0x74] sm:$0xf]
      %v3542 = vld [vmem:[%s3511 + $0x78] sm:$0xf]
      %v3543 = vld [vmem:[%s3511 + $0x7c] sm:$0xf]
      %v3544 = vrot.slane %v2899, 2
      %v3545 = vrot.slane %v2902, 2
      %v3580 = vunpack.c.l.b16 %v3512
      %v3581 = vunpack.c.l.b16 %v3513
      %v3582 = vunpack.c.l.b16 %v3514
      %v3583 = vunpack.c.l.b16 %v3515
      %v3584 = vunpack.c.l.b16 %v3516
      %v3585 = vunpack.c.l.b16 %v3517
      %v3586 = vunpack.c.l.b16 %v3518
      %v3587 = vunpack.c.l.b16 %v3519
      %v3588 = vunpack.c.l.b16 %v3520
      %v3589 = vunpack.c.l.b16 %v3521
      %v3590 = vunpack.c.l.b16 %v3522
      %v3591 = vunpack.c.l.b16 %v3523
      %v3592 = vunpack.c.l.b16 %v3524
      %v3593 = vunpack.c.l.b16 %v3525
      %v3594 = vunpack.c.l.b16 %v3526
      %v3595 = vunpack.c.l.b16 %v3527
      %v3596 = vunpack.c.l.b16 %v3528
      %v3597 = vunpack.c.l.b16 %v3529
      %v3598 = vunpack.c.l.b16 %v3530
      %v3599 = vunpack.c.l.b16 %v3531
      %v3600 = vunpack.c.l.b16 %v3532
      %v3601 = vunpack.c.l.b16 %v3533
      %v3602 = vunpack.c.l.b16 %v3534
      %v3603 = vunpack.c.l.b16 %v3535
      %v3604 = vunpack.c.l.b16 %v3536
      %v3605 = vunpack.c.l.b16 %v3537
      %v3606 = vunpack.c.l.b16 %v3538
      %v3607 = vunpack.c.l.b16 %v3539
      %v3608 = vunpack.c.l.b16 %v3540
      %v3609 = vunpack.c.l.b16 %v3541
      %v3610 = vunpack.c.l.b16 %v3542
      %v3611 = vunpack.c.l.b16 %v3543
      %v3612 = vpack.c.b16 %v3581, %v3580
      %v3613 = vpack.c.b16 %v3583, %v3582
      %v3614 = vpack.c.b16 %v3585, %v3584
      %v3615 = vpack.c.b16 %v3587, %v3586
      %v3616 = vpack.c.b16 %v3589, %v3588
      %v3617 = vpack.c.b16 %v3591, %v3590
      %v3618 = vpack.c.b16 %v3593, %v3592
      %v3619 = vpack.c.b16 %v3595, %v3594
      %v3620 = vpack.c.b16 %v3597, %v3596
      %v3621 = vpack.c.b16 %v3599, %v3598
      %v3622 = vpack.c.b16 %v3601, %v3600
      %v3623 = vpack.c.b16 %v3603, %v3602
      %v3624 = vpack.c.b16 %v3605, %v3604
      %v3625 = vpack.c.b16 %v3607, %v3606
      %v3626 = vpack.c.b16 %v3609, %v3608
      %v3627 = vpack.c.b16 %v3611, %v3610
      %3644 = vmatpush.bf16.msra.mxu0 %v3619
      %3645 = vmatpush.bf16.msra.mxu0 %v3618
      %3646 = vmatpush.bf16.msra.mxu0 %v3617
      %3647 = vmatpush.bf16.msra.mxu0 %v3616
      %3648 = vmatpush.bf16.msra.mxu0 %v3615
      %3649 = vmatpush.bf16.msra.mxu0 %v3614
      %3650 = vmatpush.bf16.msra.mxu0 %v3613
      %3651 = vmatpush.bf16.msra.mxu0 %v3612
      %3652 = vmatmul.bf16.gmra.mxu0 %v3544
      %v3653 = vpop.f32.mrf.mxu0
      %v3654 = vadd.f32 0.0, %v3653
      %v3655 = vpop.f32.mrf.mxu0
      %3656 = vdwg.mxu0
      %3657 = vmatpush.bf16.msra.mxu0 %v3627
      %3658 = vmatpush.bf16.msra.mxu0 %v3626
      %3659 = vmatpush.bf16.msra.mxu0 %v3625
      %3660 = vmatpush.bf16.msra.mxu0 %v3624
      %3661 = vmatpush.bf16.msra.mxu0 %v3623
      %3662 = vmatpush.bf16.msra.mxu0 %v3622
      %3663 = vmatpush.bf16.msra.mxu0 %v3621
      %3664 = vmatpush.bf16.msra.mxu0 %v3620
      %3665 = vmatmul.bf16.gmra.mxu0 %v3545
      %v3666 = vpop.f32.mrf.mxu0
      %v3667 = vadd.f32 %v3654, %v3666
      %v3668 = vpop.f32.mrf.mxu0
      %3669 = vdwg.mxu0
      %v3670 = vadd.f32 %v3510, %v3667
      %s3671 = scalar_lea.vmem %s3, 1792
      %v3672 = vld [vmem:[%s3671] sm:$0xf]
      %v3673 = vld [vmem:[%s3671 + $0x4] sm:$0xf]
      %v3674 = vld [vmem:[%s3671 + $0x8] sm:$0xf]
      %v3675 = vld [vmem:[%s3671 + $0xc] sm:$0xf]
      %v3676 = vld [vmem:[%s3671 + $0x10] sm:$0xf]
      %v3677 = vld [vmem:[%s3671 + $0x14] sm:$0xf]
      %v3678 = vld [vmem:[%s3671 + $0x18] sm:$0xf]
      %v3679 = vld [vmem:[%s3671 + $0x1c] sm:$0xf]
      %v3680 = vld [vmem:[%s3671 + $0x20] sm:$0xf]
      %v3681 = vld [vmem:[%s3671 + $0x24] sm:$0xf]
      %v3682 = vld [vmem:[%s3671 + $0x28] sm:$0xf]
      %v3683 = vld [vmem:[%s3671 + $0x2c] sm:$0xf]
      %v3684 = vld [vmem:[%s3671 + $0x30] sm:$0xf]
      %v3685 = vld [vmem:[%s3671 + $0x34] sm:$0xf]
      %v3686 = vld [vmem:[%s3671 + $0x38] sm:$0xf]
      %v3687 = vld [vmem:[%s3671 + $0x3c] sm:$0xf]
      %v3688 = vld [vmem:[%s3671 + $0x40] sm:$0xf]
      %v3689 = vld [vmem:[%s3671 + $0x44] sm:$0xf]
      %v3690 = vld [vmem:[%s3671 + $0x48] sm:$0xf]
      %v3691 = vld [vmem:[%s3671 + $0x4c] sm:$0xf]
      %v3692 = vld [vmem:[%s3671 + $0x50] sm:$0xf]
      %v3693 = vld [vmem:[%s3671 + $0x54] sm:$0xf]
      %v3694 = vld [vmem:[%s3671 + $0x58] sm:$0xf]
      %v3695 = vld [vmem:[%s3671 + $0x5c] sm:$0xf]
      %v3696 = vld [vmem:[%s3671 + $0x60] sm:$0xf]
      %v3697 = vld [vmem:[%s3671 + $0x64] sm:$0xf]
      %v3698 = vld [vmem:[%s3671 + $0x68] sm:$0xf]
      %v3699 = vld [vmem:[%s3671 + $0x6c] sm:$0xf]
      %v3700 = vld [vmem:[%s3671 + $0x70] sm:$0xf]
      %v3701 = vld [vmem:[%s3671 + $0x74] sm:$0xf]
      %v3702 = vld [vmem:[%s3671 + $0x78] sm:$0xf]
      %v3703 = vld [vmem:[%s3671 + $0x7c] sm:$0xf]
      %v3704 = vrot.slane %v2707, 3
      %v3705 = vrot.slane %v2708, 3
      %v3740 = vunpack.c.l.b16 %v3672
      %v3741 = vunpack.c.l.b16 %v3673
      %v3742 = vunpack.c.l.b16 %v3674
      %v3743 = vunpack.c.l.b16 %v3675
      %v3744 = vunpack.c.l.b16 %v3676
      %v3745 = vunpack.c.l.b16 %v3677
      %v3746 = vunpack.c.l.b16 %v3678
      %v3747 = vunpack.c.l.b16 %v3679
      %v3748 = vunpack.c.l.b16 %v3680
      %v3749 = vunpack.c.l.b16 %v3681
      %v3750 = vunpack.c.l.b16 %v3682
      %v3751 = vunpack.c.l.b16 %v3683
      %v3752 = vunpack.c.l.b16 %v3684
      %v3753 = vunpack.c.l.b16 %v3685
      %v3754 = vunpack.c.l.b16 %v3686
      %v3755 = vunpack.c.l.b16 %v3687
      %v3756 = vunpack.c.l.b16 %v3688
      %v3757 = vunpack.c.l.b16 %v3689
      %v3758 = vunpack.c.l.b16 %v3690
      %v3759 = vunpack.c.l.b16 %v3691
      %v3760 = vunpack.c.l.b16 %v3692
      %v3761 = vunpack.c.l.b16 %v3693
      %v3762 = vunpack.c.l.b16 %v3694
      %v3763 = vunpack.c.l.b16 %v3695
      %v3764 = vunpack.c.l.b16 %v3696
      %v3765 = vunpack.c.l.b16 %v3697
      %v3766 = vunpack.c.l.b16 %v3698
      %v3767 = vunpack.c.l.b16 %v3699
      %v3768 = vunpack.c.l.b16 %v3700
      %v3769 = vunpack.c.l.b16 %v3701
      %v3770 = vunpack.c.l.b16 %v3702
      %v3771 = vunpack.c.l.b16 %v3703
      %v3772 = vpack.c.b16 %v3741, %v3740
      %v3773 = vpack.c.b16 %v3743, %v3742
      %v3774 = vpack.c.b16 %v3745, %v3744
      %v3775 = vpack.c.b16 %v3747, %v3746
      %v3776 = vpack.c.b16 %v3749, %v3748
      %v3777 = vpack.c.b16 %v3751, %v3750
      %v3778 = vpack.c.b16 %v3753, %v3752
      %v3779 = vpack.c.b16 %v3755, %v3754
      %v3780 = vpack.c.b16 %v3757, %v3756
      %v3781 = vpack.c.b16 %v3759, %v3758
      %v3782 = vpack.c.b16 %v3761, %v3760
      %v3783 = vpack.c.b16 %v3763, %v3762
      %v3784 = vpack.c.b16 %v3765, %v3764
      %v3785 = vpack.c.b16 %v3767, %v3766
      %v3786 = vpack.c.b16 %v3769, %v3768
      %v3787 = vpack.c.b16 %v3771, %v3770
      %3804 = vmatpush.bf16.msra.mxu0 %v3779
      %3805 = vmatpush.bf16.msra.mxu0 %v3778
      %3806 = vmatpush.bf16.msra.mxu0 %v3777
      %3807 = vmatpush.bf16.msra.mxu0 %v3776
      %3808 = vmatpush.bf16.msra.mxu0 %v3775
      %3809 = vmatpush.bf16.msra.mxu0 %v3774
      %3810 = vmatpush.bf16.msra.mxu0 %v3773
      %3811 = vmatpush.bf16.msra.mxu0 %v3772
      %3812 = vmatmul.bf16.gmra.mxu0 %v3704
      %v3813 = vpop.f32.mrf.mxu0
      %v3814 = vadd.f32 0.0, %v3813
      %v3815 = vpop.f32.mrf.mxu0
      %3816 = vdwg.mxu0
      %3817 = vmatpush.bf16.msra.mxu0 %v3787
      %3818 = vmatpush.bf16.msra.mxu0 %v3786
      %3819 = vmatpush.bf16.msra.mxu0 %v3785
      %3820 = vmatpush.bf16.msra.mxu0 %v3784
      %3821 = vmatpush.bf16.msra.mxu0 %v3783
      %3822 = vmatpush.bf16.msra.mxu0 %v3782
      %3823 = vmatpush.bf16.msra.mxu0 %v3781
      %3824 = vmatpush.bf16.msra.mxu0 %v3780
      %3825 = vmatmul.bf16.gmra.mxu0 %v3705
      %v3826 = vpop.f32.mrf.mxu0
      %v3827 = vadd.f32 %v3814, %v3826
      %v3828 = vpop.f32.mrf.mxu0
      %3829 = vdwg.mxu0
      %v3830 = vadd.f32 %v3670, %v3827
      %s3831 = scalar_lea.vmem %s3, 1920
      %v3832 = vld [vmem:[%s3831] sm:$0xf]
      %v3833 = vld [vmem:[%s3831 + $0x4] sm:$0xf]
      %v3834 = vld [vmem:[%s3831 + $0x8] sm:$0xf]
      %v3835 = vld [vmem:[%s3831 + $0xc] sm:$0xf]
      %v3836 = vld [vmem:[%s3831 + $0x10] sm:$0xf]
      %v3837 = vld [vmem:[%s3831 + $0x14] sm:$0xf]
      %v3838 = vld [vmem:[%s3831 + $0x18] sm:$0xf]
      %v3839 = vld [vmem:[%s3831 + $0x1c] sm:$0xf]
      %v3840 = vld [vmem:[%s3831 + $0x20] sm:$0xf]
      %v3841 = vld [vmem:[%s3831 + $0x24] sm:$0xf]
      %v3842 = vld [vmem:[%s3831 + $0x28] sm:$0xf]
      %v3843 = vld [vmem:[%s3831 + $0x2c] sm:$0xf]
      %v3844 = vld [vmem:[%s3831 + $0x30] sm:$0xf]
      %v3845 = vld [vmem:[%s3831 + $0x34] sm:$0xf]
      %v3846 = vld [vmem:[%s3831 + $0x38] sm:$0xf]
      %v3847 = vld [vmem:[%s3831 + $0x3c] sm:$0xf]
      %v3848 = vld [vmem:[%s3831 + $0x40] sm:$0xf]
      %v3849 = vld [vmem:[%s3831 + $0x44] sm:$0xf]
      %v3850 = vld [vmem:[%s3831 + $0x48] sm:$0xf]
      %v3851 = vld [vmem:[%s3831 + $0x4c] sm:$0xf]
      %v3852 = vld [vmem:[%s3831 + $0x50] sm:$0xf]
      %v3853 = vld [vmem:[%s3831 + $0x54] sm:$0xf]
      %v3854 = vld [vmem:[%s3831 + $0x58] sm:$0xf]
      %v3855 = vld [vmem:[%s3831 + $0x5c] sm:$0xf]
      %v3856 = vld [vmem:[%s3831 + $0x60] sm:$0xf]
      %v3857 = vld [vmem:[%s3831 + $0x64] sm:$0xf]
      %v3858 = vld [vmem:[%s3831 + $0x68] sm:$0xf]
      %v3859 = vld [vmem:[%s3831 + $0x6c] sm:$0xf]
      %v3860 = vld [vmem:[%s3831 + $0x70] sm:$0xf]
      %v3861 = vld [vmem:[%s3831 + $0x74] sm:$0xf]
      %v3862 = vld [vmem:[%s3831 + $0x78] sm:$0xf]
      %v3863 = vld [vmem:[%s3831 + $0x7c] sm:$0xf]
      %v3864 = vrot.slane %v2899, 3
      %v3865 = vrot.slane %v2902, 3
      %v3900 = vunpack.c.l.b16 %v3832
      %v3901 = vunpack.c.l.b16 %v3833
      %v3902 = vunpack.c.l.b16 %v3834
      %v3903 = vunpack.c.l.b16 %v3835
      %v3904 = vunpack.c.l.b16 %v3836
      %v3905 = vunpack.c.l.b16 %v3837
      %v3906 = vunpack.c.l.b16 %v3838
      %v3907 = vunpack.c.l.b16 %v3839
      %v3908 = vunpack.c.l.b16 %v3840
      %v3909 = vunpack.c.l.b16 %v3841
      %v3910 = vunpack.c.l.b16 %v3842
      %v3911 = vunpack.c.l.b16 %v3843
      %v3912 = vunpack.c.l.b16 %v3844
      %v3913 = vunpack.c.l.b16 %v3845
      %v3914 = vunpack.c.l.b16 %v3846
      %v3915 = vunpack.c.l.b16 %v3847
      %v3916 = vunpack.c.l.b16 %v3848
      %v3917 = vunpack.c.l.b16 %v3849
      %v3918 = vunpack.c.l.b16 %v3850
      %v3919 = vunpack.c.l.b16 %v3851
      %v3920 = vunpack.c.l.b16 %v3852
      %v3921 = vunpack.c.l.b16 %v3853
      %v3922 = vunpack.c.l.b16 %v3854
      %v3923 = vunpack.c.l.b16 %v3855
      %v3924 = vunpack.c.l.b16 %v3856
      %v3925 = vunpack.c.l.b16 %v3857
      %v3926 = vunpack.c.l.b16 %v3858
      %v3927 = vunpack.c.l.b16 %v3859
      %v3928 = vunpack.c.l.b16 %v3860
      %v3929 = vunpack.c.l.b16 %v3861
      %v3930 = vunpack.c.l.b16 %v3862
      %v3931 = vunpack.c.l.b16 %v3863
      %v3932 = vpack.c.b16 %v3901, %v3900
      %v3933 = vpack.c.b16 %v3903, %v3902
      %v3934 = vpack.c.b16 %v3905, %v3904
      %v3935 = vpack.c.b16 %v3907, %v3906
      %v3936 = vpack.c.b16 %v3909, %v3908
      %v3937 = vpack.c.b16 %v3911, %v3910
      %v3938 = vpack.c.b16 %v3913, %v3912
      %v3939 = vpack.c.b16 %v3915, %v3914
      %v3940 = vpack.c.b16 %v3917, %v3916
      %v3941 = vpack.c.b16 %v3919, %v3918
      %v3942 = vpack.c.b16 %v3921, %v3920
      %v3943 = vpack.c.b16 %v3923, %v3922
      %v3944 = vpack.c.b16 %v3925, %v3924
      %v3945 = vpack.c.b16 %v3927, %v3926
      %v3946 = vpack.c.b16 %v3929, %v3928
      %v3947 = vpack.c.b16 %v3931, %v3930
      %3964 = vmatpush.bf16.msra.mxu0 %v3939
      %3965 = vmatpush.bf16.msra.mxu0 %v3938
      %3966 = vmatpush.bf16.msra.mxu0 %v3937
      %3967 = vmatpush.bf16.msra.mxu0 %v3936
      %3968 = vmatpush.bf16.msra.mxu0 %v3935
      %3969 = vmatpush.bf16.msra.mxu0 %v3934
      %3970 = vmatpush.bf16.msra.mxu0 %v3933
      %3971 = vmatpush.bf16.msra.mxu0 %v3932
      %3972 = vmatmul.bf16.gmra.mxu0 %v3864
      %v3973 = vpop.f32.mrf.mxu0
      %v3974 = vadd.f32 0.0, %v3973
      %v3975 = vpop.f32.mrf.mxu0
      %3976 = vdwg.mxu0
      %3977 = vmatpush.bf16.msra.mxu0 %v3947
      %3978 = vmatpush.bf16.msra.mxu0 %v3946
      %3979 = vmatpush.bf16.msra.mxu0 %v3945
      %3980 = vmatpush.bf16.msra.mxu0 %v3944
      %3981 = vmatpush.bf16.msra.mxu0 %v3943
      %3982 = vmatpush.bf16.msra.mxu0 %v3942
      %3983 = vmatpush.bf16.msra.mxu0 %v3941
      %3984 = vmatpush.bf16.msra.mxu0 %v3940
      %3985 = vmatmul.bf16.gmra.mxu0 %v3865
      %v3986 = vpop.f32.mrf.mxu0
      %v3987 = vadd.f32 %v3974, %v3986
      %v3988 = vpop.f32.mrf.mxu0
      %3989 = vdwg.mxu0
      %v3990 = vadd.f32 %v3830, %v3987
      %v3991 = vsub.f32 0.0, %v3990
      %v3992 = vmul.f32 %v3991, 1.442695
      %v3993 = vpow.pop %v3992
      %v3994 = vadd.f32 %v3993, 1.0
      %v3995 = vrcp.pop %v3994
      %3996 = vst [vmem:[%s220] sm:$0x1] %v3995
      %p3997 = scmp.lt.s32.totalorder %s16, 1
      %s3998 = scalar_select %p3997, %s16, 1
      %s3999 = scalar_lea.vmem %s5, %s3998
      // Predicated region
      $region41: #{lapgan_discriminator_level3.7} parent=39 // pred_check
        %p4000 = pneg %p144
      $region42: #{lapgan_discriminator_level3.7} parent=39 // pred_check_branch
        %4002 = sbr.rel (%p4000) target = $region44
      $region43: #{lapgan_discriminator_level3.7} parent=39 // pred_region
        _
      $region44: #{lapgan_discriminator_level3.7} parent=39 // pred_fallthru
        _
    $region40: #{lapgan_discriminator_level3.7} parent=5 // pred_fallthru
      _
    %p4003 = scmp.le.s32.totalorder 2, %s11
    // Predicated region
    $region45: #{lapgan_discriminator_level3.7} parent=5 // pred_check
      %p4004 = pneg %p4003
    $region46: #{lapgan_discriminator_level3.7} parent=5 // pred_check_branch
      %4006 = sbr.rel (%p4004) target = $region48
    $region47: #{lapgan_discriminator_level3.7} parent=5 // pred_region
      %s4007 = ssub.s32 %s11, 2
      // Predicated region
      $region49: #{lapgan_discriminator_level3.7} parent=47 // pred_check
        %p4008 = pneg %p150
      $region50: #{lapgan_discriminator_level3.7} parent=47 // pred_check_branch
        %4010 = sbr.rel (%p4008) target = $region52
      $region51: #{lapgan_discriminator_level3.7} parent=47 // pred_region
        %p4011 = scmp.lt.s32.totalorder %s17, 1
        %s4012 = scalar_select %p4011, %s17, 1
        %s4013 = scalar_lea.vmem %s5, %s4012
      $region52: #{lapgan_discriminator_level3.7} parent=47 // pred_fallthru
        _
    $region48: #{lapgan_discriminator_level3.7} parent=5 // pred_fallthru
      _
  $region6: #{lapgan_discriminator_level3.7} parent=0 // loop_footer
    %s15 = sadd.s32 1, %s11
  $region7: #{lapgan_discriminator_level3.7} parent=0 // loop_footer_branch
    %10 = sbr.rel target = $region3
  $region8: #{lapgan_discriminator_level3.7} parent=0 // loop_exit
    _

</llo_original>
